<compile_context>
chip_gen: v6e
topology: v6e:2x2x1
jax: 0.10.0
libtpu: 0.0.40
codegen_flags: <defaults>
</compile_context>

<pallas_src>
import functools

import jax
import jax.numpy as jnp
from jax.experimental import pallas as pl
from jax.experimental.pallas import tpu as pltpu

EPS = 1e-5  # nn.BatchNorm3d default eps


@functools.lru_cache(maxsize=None)
def _vmem_limit_bytes():
    """Generation-aware scoped-VMEM limit: ~5/8 of physical, capped at 96 MiB."""
    try:
        cap = int(pltpu.get_tpu_info().vmem_capacity_bytes)
    except Exception:
        return None  # fall back to the compiler default (safe everywhere)
    return int(min(cap * 5 // 8, 96 * 1024 * 1024))


def _cparams(*sems):
    kw = {}
    lim = _vmem_limit_bytes()
    if lim:
        kw["vmem_limit_bytes"] = lim
    return pltpu.CompilerParams(dimension_semantics=sems, **kw)


def _row_tile(m):
    """Largest row tile <= 1024 dividing m, preferring >= 4 grid steps (v7x megacore +
    double buffering); falls back to >= 2 steps, then a single block."""
    tiles = (1024, 512, 256, 128, 64, 32, 16, 8)
    for t in tiles:
        if m % t == 0 and m // t >= 4:
            return t
    for t in tiles:
        if m % t == 0 and m // t >= 2:
            return t
    return m


# ---------------------------------------------------------------------------
# Kernels
# ---------------------------------------------------------------------------
def _conv1x1_stats_kernel(x_ref, w_ref, y_ref, s_ref, ss_ref):
    """y = x @ w (bf16 operands, f32 accum) + per-tile channel sum / sum-of-squares."""
    y = jnp.dot(x_ref[...].astype(jnp.bfloat16), w_ref[...],
                preferred_element_type=jnp.float32)
    y_ref[...] = y
    c = y.shape[-1]
    s_ref[...] = jnp.sum(y, axis=0, keepdims=True).reshape(1, 1, c)
    ss_ref[...] = jnp.sum(y * y, axis=0, keepdims=True).reshape(1, 1, c)


def _conv2_fused_kernel(y1_ref, sc_ref, sh_ref, w_ref, y2_ref, s_ref, ss_ref, pad_ref):
    """Fused BN1-apply + ReLU + zero-pad + 3x3x3 grouped conv (stride 1) + BN2 partials.

    y1_ref:  (1, D, H, W, C) f32 pre-BN conv1 output for one sample.
    sc/sh:   (1, C) folded BN1 scale / shift.
    w_ref:   (3, 9*C, C) bf16 conv2 weight, taps packed along the contraction dim
             (kd major; per kd the 9 (kh,kw) taps are stacked kh-major, kw-minor).
    y2_ref:  (1, D*H*W, C) f32 conv2 output.
    pad_ref: (D+2, H+2, W+2, C) f32 VMEM scratch holding the zero-padded post-ReLU slab.
    """
    _, d, hh, ww, c = y1_ref.shape
    hw = hh * ww

    sc = sc_ref[...].reshape(1, 1, 1, c)
    sh = sh_ref[...].reshape(1, 1, 1, c)
    h1 = jnp.maximum(y1_ref[0] * sc + sh, 0.0)                     # (D, H, W, C) f32

    # Zero-padded slab in VMEM (re-zero every step: scratch persists across steps and,
    # on v7x, each core owns its own instance).
    pad_ref[...] = jnp.zeros(pad_ref.shape, pad_ref.dtype)
    pad_ref[1:d + 1, 1:hh + 1, 1:ww + 1, :] = h1

    # 3 deep matmuls (K = 9*C): per kd, concatenate the nine (kh,kw) shifted windows
    # along lanes and contract against the packed weight. Accumulate into the VMEM
    # output block (short dependency chain, MXU/MRB-friendly).
    for kd in range(3):
        cols = [
            pad_ref[kd:kd + d, kh:kh + hh, kw:kw + ww, :]
            .reshape(d * hw, c).astype(jnp.bfloat16)
            for kh in range(3) for kw in range(3)
        ]
        xk = jnp.concatenate(cols, axis=-1)                        # (D*H*W, 9C) bf16
        part = jnp.dot(xk, w_ref[kd], preferred_element_type=jnp.float32)
        if kd == 0:
            y2_ref[0] = part
        else:
            y2_ref[0] += part

    y2 = y2_ref[0]
    s_ref[...] = jnp.sum(y2, axis=0, keepdims=True).reshape(1, 1, c)
    ss_ref[...] = jnp.sum(y2 * y2, axis=0, keepdims=True).reshape(1, 1, c)


def _bn_relu_matmul_stats_kernel(y_ref, scale_ref, shift_ref, w_ref,
                                 o_ref, s_ref, ss_ref):
    """h = relu(y*scale+shift); o = h @ w (bf16/f32) + per-tile stats of o."""
    h = jnp.maximum(y_ref[...] * scale_ref[...] + shift_ref[...], 0.0)
    o = jnp.dot(h.astype(jnp.bfloat16), w_ref[...],
                preferred_element_type=jnp.float32)
    o_ref[...] = o
    c = o.shape[-1]
    s_ref[...] = jnp.sum(o, axis=0, keepdims=True).reshape(1, 1, c)
    ss_ref[...] = jnp.sum(o * o, axis=0, keepdims=True).reshape(1, 1, c)


def _bn_add_relu_kernel(y_ref, res_ref, scale_ref, shift_ref, o_ref):
    """o = relu(y*scale + shift + residual)."""
    o_ref[...] = jnp.maximum(
        y_ref[...] * scale_ref[...] + shift_ref[...] + res_ref[...], 0.0)


# ---------------------------------------------------------------------------
# pallas_call wrappers
# ---------------------------------------------------------------------------
def _conv1x1_with_stats(x, w):
    m, cin = x.shape
    cout = w.shape[1]
    tm = _row_tile(m)
    nt = m // tm
    y, s, ss = pl.pallas_call(
        _conv1x1_stats_kernel,
        grid=(nt,),
        in_specs=[
            pl.BlockSpec((tm, cin), lambda i: (i, 0)),
            pl.BlockSpec((cin, cout), lambda i: (0, 0)),
        ],
        out_specs=[
            pl.BlockSpec((tm, cout), lambda i: (i, 0)),
            pl.BlockSpec((1, 1, cout), lambda i: (i, 0, 0)),
            pl.BlockSpec((1, 1, cout), lambda i: (i, 0, 0)),
        ],
        out_shape=[
            jax.ShapeDtypeStruct((m, cout), jnp.float32),
            jax.ShapeDtypeStruct((nt, 1, cout), jnp.float32),
            jax.ShapeDtypeStruct((nt, 1, cout), jnp.float32),
        ],
        compiler_params=_cparams("parallel"),
    )(x, w)
    return y, jnp.sum(s, axis=0), jnp.sum(ss, axis=0)


def _conv2_fused(y1_5d, scale1, shift1, w2p):
    """Per-sample slab: BN1-apply + ReLU + pad (VMEM) + 3x3x3 conv + BN2 partials."""
    n, d, h, w, c = y1_5d.shape
    hw = h * w
    y2, s, ss = pl.pallas_call(
        _conv2_fused_kernel,
        grid=(n,),
        in_specs=[
            pl.BlockSpec((1, d, h, w, c), lambda ni: (ni, 0, 0, 0, 0)),
            pl.BlockSpec((1, c), lambda ni: (0, 0)),
            pl.BlockSpec((1, c), lambda ni: (0, 0)),
            pl.BlockSpec((3, 9 * c, c), lambda ni: (0, 0, 0)),
        ],
        out_specs=[
            pl.BlockSpec((1, d * hw, c), lambda ni: (ni, 0, 0)),
            pl.BlockSpec((1, 1, c), lambda ni: (ni, 0, 0)),
            pl.BlockSpec((1, 1, c), lambda ni: (ni, 0, 0)),
        ],
        out_shape=[
            jax.ShapeDtypeStruct((n, d * hw, c), jnp.float32),
            jax.ShapeDtypeStruct((n, 1, c), jnp.float32),
            jax.ShapeDtypeStruct((n, 1, c), jnp.float32),
        ],
        scratch_shapes=[pltpu.VMEM((d + 2, h + 2, w + 2, c), jnp.float32)],
        compiler_params=_cparams("parallel"),
    )(y1_5d, scale1, shift1, w2p)
    return y2.reshape(n * d * hw, c), jnp.sum(s, axis=0), jnp.sum(ss, axis=0)


def _bn_relu_conv1x1_with_stats(y, scale, shift, w):
    m, cin = y.shape
    cout = w.shape[1]
    tm = _row_tile(m)
    nt = m // tm
    o, s, ss = pl.pallas_call(
        _bn_relu_matmul_stats_kernel,
        grid=(nt,),
        in_specs=[
            pl.BlockSpec((tm, cin), lambda i: (i, 0)),
            pl.BlockSpec((1, cin), lambda i: (0, 0)),
            pl.BlockSpec((1, cin), lambda i: (0, 0)),
            pl.BlockSpec((cin, cout), lambda i: (0, 0)),
        ],
        out_specs=[
            pl.BlockSpec((tm, cout), lambda i: (i, 0)),
            pl.BlockSpec((1, 1, cout), lambda i: (i, 0, 0)),
            pl.BlockSpec((1, 1, cout), lambda i: (i, 0, 0)),
        ],
        out_shape=[
            jax.ShapeDtypeStruct((m, cout), jnp.float32),
            jax.ShapeDtypeStruct((nt, 1, cout), jnp.float32),
            jax.ShapeDtypeStruct((nt, 1, cout), jnp.float32),
        ],
        compiler_params=_cparams("parallel"),
    )(y, scale, shift, w)
    return o, jnp.sum(s, axis=0), jnp.sum(ss, axis=0)


def _bn_add_relu_apply(y, residual, scale, shift):
    m, c = y.shape
    tm = _row_tile(m)
    return pl.pallas_call(
        _bn_add_relu_kernel,
        grid=(m // tm,),
        in_specs=[
            pl.BlockSpec((tm, c), lambda i: (i, 0)),
            pl.BlockSpec((tm, c), lambda i: (i, 0)),
            pl.BlockSpec((1, c), lambda i: (0, 0)),
            pl.BlockSpec((1, c), lambda i: (0, 0)),
        ],
        out_specs=pl.BlockSpec((tm, c), lambda i: (i, 0)),
        out_shape=jax.ShapeDtypeStruct((m, c), jnp.float32),
        compiler_params=_cparams("parallel"),
    )(y, residual, scale, shift)


def _fold_bn(sum_, sumsq, count, gamma, beta):
    mean = sum_ / count
    var = sumsq / count - mean * mean          # biased variance (training-mode BN)
    inv = jax.lax.rsqrt(var + EPS)
    scale = gamma * inv
    shift = beta - mean * scale
    return scale, shift


# ---------------------------------------------------------------------------
# ResNeXtBottleneck forward (stride=1, downsample=None)
# ---------------------------------------------------------------------------
def resnext_bottleneck_forward(x_ncdhw, params):
    (w1, g1, b1, w2d, g2, b2, w3, g3, b3) = params
    n, cin, d, h, w = x_ncdhw.shape
    mid = w1.shape[1]
    cout = w3.shape[1]
    m = n * d * h * w
    count = float(m)

    # Pack conv2 taps along the contraction dim: (27, C, C) -> (3, 9C, C) (free reshape).
    w2p = w2d.reshape(3, 9 * mid, mid)

    # NCDHW -> NDHWC once, flatten rows (channels lane-dense).
    x_flat = jnp.transpose(x_ncdhw, (0, 2, 3, 4, 1)).astype(jnp.float32).reshape(m, cin)

    # stage 1: conv1 (1x1x1) + BN1 stats
    y1, s1, ss1 = _conv1x1_with_stats(x_flat, w1)
    scale1, shift1 = _fold_bn(s1, ss1, count, g1, b1)

    # stage 2: fused BN1-apply + ReLU + zero-pad (VMEM) + conv2 (3x3x3, grouped) + BN2 stats
    y1_5d = y1.reshape(n, d, h, w, mid)
    y2, s2, ss2 = _conv2_fused(y1_5d, scale1, shift1, w2p)
    scale2, shift2 = _fold_bn(s2, ss2, count, g2, b2)

    # stage 3: BN2 apply + ReLU fused with conv3 (1x1x1) + BN3 stats
    y3, s3, ss3 = _bn_relu_conv1x1_with_stats(y2, scale2, shift2, w3)
    scale3, shift3 = _fold_bn(s3, ss3, count, g3, b3)

    # stage 4: BN3 apply + identity residual + ReLU
    out_flat = _bn_add_relu_apply(y3, x_flat, scale3, shift3)

    out = out_flat.reshape(n, d, h, w, cout)
    return jnp.transpose(out, (0, 4, 1, 2, 3))                      # back to NCDHW


# ---------------------------------------------------------------------------
# Parameter construction (deterministic, synthetic)
# ---------------------------------------------------------------------------
def make_params(key, inplanes, planes, cardinality):
    expansion = 2
    mid = cardinality * int(planes / 32)
    cout = planes * expansion
    assert inplanes == cout, "identity residual requires inplanes == planes * 2"
    cg = mid // cardinality

    keys = jax.random.split(key, 8)
    # conv1: PyTorch (mid, inplanes, 1,1,1) -> matmul weight (inplanes, mid), bf16.
    w1 = (0.1 * jax.random.normal(keys[0], (inplanes, mid), jnp.float32)
          ).astype(jnp.bfloat16)
    # conv2 grouped: PyTorch (mid, mid//G, 3, 3, 3).
    w2_grouped = 0.1 * jax.random.normal(keys[1], (mid, cg, 3, 3, 3), jnp.float32)
    # Per-tap block-diagonal dense weight (27, mid, mid):
    #   w2d[tap, g*cg + ci, g*cg + co] = w2_grouped[g*cg + co, ci, kd, kh, kw]
    wg27 = jnp.transpose(w2_grouped, (2, 3, 4, 0, 1)).reshape(27, cardinality, cg, cg)
    eye_g = jnp.eye(cardinality, dtype=jnp.float32)
    w2d = jnp.einsum("tgoi,gh->tgiho", wg27, eye_g).reshape(27, mid, mid)
    w2d = w2d.astype(jnp.bfloat16)
    # conv3: PyTorch (cout, mid, 1,1,1) -> (mid, cout), bf16.
    w3 = (0.1 * jax.random.normal(keys[2], (mid, cout), jnp.float32)
          ).astype(jnp.bfloat16)

    # BatchNorm affine params, shaped (1, C) for broadcasting.
    g1 = 1.0 + 0.1 * jax.random.normal(keys[3], (1, mid), jnp.float32)
    b1 = 0.1 * jax.random.normal(keys[4], (1, mid), jnp.float32)
    g2 = 1.0 + 0.1 * jax.random.normal(keys[5], (1, mid), jnp.float32)
    b2 = 0.1 * jax.random.normal(keys[6], (1, mid), jnp.float32)
    g3 = 1.0 + 0.1 * jax.random.normal(keys[7], (1, cout), jnp.float32)
    b3 = jnp.zeros((1, cout), jnp.float32)
    return (w1, g1, b1, w2d, g2, b2, w3, g3, b3)


# ---------------------------------------------------------------------------
# Pure-JAX reference with the same precision policy (bf16 matmul operands,
# f32 accumulation/BN) for the correctness check.
# ---------------------------------------------------------------------------
def reference_forward(x_ncdhw, params):
    (w1, g1, b1, w2d, g2, b2, w3, g3, b3) = params
    n, cin, d, h, w = x_ncdhw.shape
    mid = w1.shape[1]
    cout = w3.shape[1]
    m = n * d * h * w

    def fold(y, gamma, beta):
        mean = jnp.mean(y, axis=0, keepdims=True)
        var = jnp.mean(y * y, axis=0, keepdims=True) - mean * mean
        inv = jax.lax.rsqrt(var + EPS)
        return gamma * inv, beta - mean * gamma * inv

    x_flat = jnp.transpose(x_ncdhw, (0, 2, 3, 4, 1)).astype(jnp.float32).reshape(m, cin)

    y1 = jnp.dot(x_flat.astype(jnp.bfloat16), w1, preferred_element_type=jnp.float32)
    sc1, sh1 = fold(y1, g1, b1)
    h1 = jnp.maximum(y1 * sc1 + sh1, 0.0)

    h1p = jnp.pad(h1.reshape(n, d, h, w, mid),
                  ((0, 0), (1, 1), (1, 1), (1, 1), (0, 0)))
    y2 = jnp.zeros((n, d, h, w, mid), jnp.float32)
    for kd in range(3):
        for kh in range(3):
            for kw in range(3):
                tap = 9 * kd + 3 * kh + kw
                win = h1p[:, kd:kd + d, kh:kh + h, kw:kw + w, :].astype(jnp.bfloat16)
                y2 = y2 + jax.lax.dot_general(
                    win, w2d[tap],
                    dimension_numbers=(((4,), (0,)), ((), ())),
                    preferred_element_type=jnp.float32)
    y2 = y2.reshape(m, mid)
    sc2, sh2 = fold(y2, g2, b2)
    h2 = jnp.maximum(y2 * sc2 + sh2, 0.0).astype(jnp.bfloat16)

    y3 = jnp.dot(h2, w3, preferred_element_type=jnp.float32)
    sc3, sh3 = fold(y3, g3, b3)
    out = jnp.maximum(y3 * sc3 + sh3 + x_flat, 0.0)
    return jnp.transpose(out.reshape(n, d, h, w, cout), (0, 4, 1, 2, 3))


if __name__ == "__main__":
    # Realistic ResNeXt widths (lane-dense channels) at small spatial size:
    # cardinality=32, planes=128 -> mid=128, out=256; inplanes = planes*2 = 256
    # so the identity residual is valid (stride=1, downsample=None).
    N, D, H, W = 2, 4, 8, 8
    inplanes, planes, cardinality = 256, 128, 32

    key = jax.random.PRNGKey(0)
    kx, kp = jax.random.split(key)
    x = jax.random.normal(kx, (N, inplanes, D, H, W), jnp.float32)
    params = make_params(kp, inplanes, planes, cardinality)

    fwd = jax.jit(resnext_bottleneck_forward)
    out = fwd(x, params)
    jax.block_until_ready(out)

    ref = reference_forward(x, params)
    assert out.shape == (N, planes * 2, D, H, W), out.shape
    max_err = float(jnp.max(jnp.abs(out - ref)))
    assert jnp.allclose(out, ref, atol=2e-3, rtol=2e-3), f"mismatch vs reference: {max_err}"

    print("KERNEL_OK")
</pallas_src>

<mosaic_0001>
module attributes {stable_mosaic.version = 11 : i64} {
  func.func @_conv1x1_stats_kernel(%arg0: i32, %arg1: memref<128x256xf32, #tpu.memory_space<vmem>>, %arg2: memref<256x128xbf16, #tpu.memory_space<vmem>>, %arg3: memref<128x128xf32, #tpu.memory_space<vmem>>, %arg4: memref<1x1x128xf32, #tpu.memory_space<vmem>>, %arg5: memref<1x1x128xf32, #tpu.memory_space<vmem>>) attributes {dimension_semantics = [#tpu.dimension_semantics<parallel>], iteration_bounds = array<i64: 4>, scalar_prefetch = 0 : i64, scratch_operands = 0 : i64, tpu.core_type = #tpu.core_type<tc>, window_params = [{transform_indices = @transform_0, window_bounds = array<i64: 128, 256>}, {pipeline_mode = #tpu.pipeline_mode<synchronous>, transform_indices = @transform_1, window_bounds = array<i64: 256, 128>}, {transform_indices = @transform_2, window_bounds = array<i64: 128, 128>}, {transform_indices = @transform_3, window_bounds = array<i64: 1, 1, 128>}, {transform_indices = @transform_4, window_bounds = array<i64: 1, 1, 128>}]} {
    %c0 = arith.constant 0 : index
    %c0_0 = arith.constant 0 : index
    %0 = vector.load %arg1[%c0, %c0_0] : memref<128x256xf32, #tpu.memory_space<vmem>>, vector<128x256xf32>
    %1 = arith.truncf %0 : vector<128x256xf32> to vector<128x256xbf16>
    %c0_1 = arith.constant 0 : index
    %c0_2 = arith.constant 0 : index
    %2 = vector.load %arg2[%c0_1, %c0_2] : memref<256x128xbf16, #tpu.memory_space<vmem>>, vector<256x128xbf16>
    %cst = arith.constant dense<0.000000e+00> : vector<128x128xf32>
    %3 = tpu.matmul %1, %2, %cst {dimension_numbers = #tpu.dot_dimension_numbers<[1], [0], [0], [1], [0, 0, 1, 1], [], []>} : vector<128x256xbf16>, vector<256x128xbf16>, vector<128x128xf32> -> vector<128x128xf32>
    %c0_3 = arith.constant 0 : index
    %c0_4 = arith.constant 0 : index
    %4 = vector.load %arg3[%c0_3, %c0_4] : memref<128x128xf32, #tpu.memory_space<vmem>>, vector<128x128xf32>
    tpu.vector_store %arg3[%c0_3, %c0_4], %3 {strides = array<i32>} : memref<128x128xf32, #tpu.memory_space<vmem>>, vector<128x128xf32>,
    %cst_5 = arith.constant dense<0.000000e+00> : vector<128xf32>
    %5 = vector.multi_reduction <add>, %3, %cst_5 [0] : vector<128x128xf32> to vector<128xf32>
    %6 = vector.shape_cast %5 : vector<128xf32> to vector<1x128xf32>
    %7 = vector.shape_cast %6 : vector<1x128xf32> to vector<1x1x128xf32>
    %c0_6 = arith.constant 0 : index
    %c0_7 = arith.constant 0 : index
    %c0_8 = arith.constant 0 : index
    %8 = vector.load %arg4[%c0_6, %c0_7, %c0_8] : memref<1x1x128xf32, #tpu.memory_space<vmem>>, vector<1x1x128xf32>
    tpu.vector_store %arg4[%c0_6, %c0_7, %c0_8], %7 {strides = array<i32>} : memref<1x1x128xf32, #tpu.memory_space<vmem>>, vector<1x1x128xf32>,
    %9 = arith.mulf %3, %3 : vector<128x128xf32>
    %cst_9 = arith.constant dense<0.000000e+00> : vector<128xf32>
    %10 = vector.multi_reduction <add>, %9, %cst_9 [0] : vector<128x128xf32> to vector<128xf32>
    %11 = vector.shape_cast %10 : vector<128xf32> to vector<1x128xf32>
    %12 = vector.shape_cast %11 : vector<1x128xf32> to vector<1x1x128xf32>
    %c0_10 = arith.constant 0 : index
    %c0_11 = arith.constant 0 : index
    %c0_12 = arith.constant 0 : index
    %13 = vector.load %arg5[%c0_10, %c0_11, %c0_12] : memref<1x1x128xf32, #tpu.memory_space<vmem>>, vector<1x1x128xf32>
    tpu.vector_store %arg5[%c0_10, %c0_11, %c0_12], %12 {strides = array<i32>} : memref<1x1x128xf32, #tpu.memory_space<vmem>>, vector<1x1x128xf32>,
    return
  }
  func.func @transform_0(%arg0: i32) -> (i32, i32) {
    %c0_i32 = arith.constant 0 : i32
    %c0_i32_0 = arith.constant 0 : i32
    return %arg0, %c0_i32 : i32, i32
  }
  func.func @transform_1(%arg0: i32) -> (i32, i32) {
    %c0_i32 = arith.constant 0 : i32
    %c0_i32_0 = arith.constant 0 : i32
    %c0_i32_1 = arith.constant 0 : i32
    return %c0_i32, %c0_i32_0 : i32, i32
  }
  func.func @transform_2(%arg0: i32) -> (i32, i32) {
    %c0_i32 = arith.constant 0 : i32
    %c0_i32_0 = arith.constant 0 : i32
    return %arg0, %c0_i32 : i32, i32
  }
  func.func @transform_3(%arg0: i32) -> (i32, i32, i32) {
    %c0_i32 = arith.constant 0 : i32
    %c0_i32_0 = arith.constant 0 : i32
    %c0_i32_1 = arith.constant 0 : i32
    return %arg0, %c0_i32, %c0_i32_0 : i32, i32, i32
  }
  func.func @transform_4(%arg0: i32) -> (i32, i32, i32) {
    %c0_i32 = arith.constant 0 : i32
    %c0_i32_0 = arith.constant 0 : i32
    %c0_i32_1 = arith.constant 0 : i32
    return %arg0, %c0_i32, %c0_i32_0 : i32, i32, i32
  }
}

module attributes {stable_mosaic.version = 11 : i64} {
  func.func @_conv2_fused_kernel(%arg0: i32, %arg1: memref<1x4x8x8x128xf32, #tpu.memory_space<vmem>>, %arg2: memref<1x128xf32, #tpu.memory_space<vmem>>, %arg3: memref<1x128xf32, #tpu.memory_space<vmem>>, %arg4: memref<3x1152x128xbf16, #tpu.memory_space<vmem>>, %arg5: memref<1x256x128xf32, #tpu.memory_space<vmem>>, %arg6: memref<1x1x128xf32, #tpu.memory_space<vmem>>, %arg7: memref<1x1x128xf32, #tpu.memory_space<vmem>>, %arg8: memref<6x10x10x128xf32, #tpu.memory_space<vmem>>) attributes {dimension_semantics = [#tpu.dimension_semantics<parallel>], iteration_bounds = array<i64: 2>, scalar_prefetch = 0 : i64, scratch_operands = 1 : i64, tpu.core_type = #tpu.core_type<tc>, window_params = [{transform_indices = @transform_0, window_bounds = array<i64: 1, 4, 8, 8, 128>}, {pipeline_mode = #tpu.pipeline_mode<synchronous>, transform_indices = @transform_1, window_bounds = array<i64: 1, 128>}, {pipeline_mode = #tpu.pipeline_mode<synchronous>, transform_indices = @transform_2, window_bounds = array<i64: 1, 128>}, {pipeline_mode = #tpu.pipeline_mode<synchronous>, transform_indices = @transform_3, window_bounds = array<i64: 3, 1152, 128>}, {transform_indices = @transform_4, window_bounds = array<i64: 1, 256, 128>}, {transform_indices = @transform_5, window_bounds = array<i64: 1, 1, 128>}, {transform_indices = @transform_6, window_bounds = array<i64: 1, 1, 128>}]} {
    %c0 = arith.constant 0 : index
    %c0_0 = arith.constant 0 : index
    %0 = vector.load %arg2[%c0, %c0_0] : memref<1x128xf32, #tpu.memory_space<vmem>>, vector<1x128xf32>
    %1 = vector.shape_cast %0 : vector<1x128xf32> to vector<1x1x1x128xf32>
    %c0_1 = arith.constant 0 : index
    %c0_2 = arith.constant 0 : index
    %2 = vector.load %arg3[%c0_1, %c0_2] : memref<1x128xf32, #tpu.memory_space<vmem>>, vector<1x128xf32>
    %3 = vector.shape_cast %2 : vector<1x128xf32> to vector<1x1x1x128xf32>
    %c0_3 = arith.constant 0 : index
    %c0_4 = arith.constant 0 : index
    %c0_5 = arith.constant 0 : index
    %c0_6 = arith.constant 0 : index
    %c0_7 = arith.constant 0 : index
    %4 = vector.load %arg1[%c0_3, %c0_4, %c0_5, %c0_6, %c0_7] : memref<1x4x8x8x128xf32, #tpu.memory_space<vmem>>, vector<1x4x8x8x128xf32>
    %5 = vector.shape_cast %4 : vector<1x4x8x8x128xf32> to vector<4x8x8x128xf32>
    %6 = vector.broadcast %1 : vector<1x1x1x128xf32> to vector<4x8x8x128xf32>
    %7 = arith.mulf %5, %6 : vector<4x8x8x128xf32>
    %8 = vector.broadcast %3 : vector<1x1x1x128xf32> to vector<4x8x8x128xf32>
    %9 = arith.addf %7, %8 : vector<4x8x8x128xf32>
    %cst = arith.constant 0.000000e+00 : f32
    %10 = vector.broadcast %cst : f32 to vector<4x8x8x128xf32>
    %11 = arith.maximumf %9, %10 : vector<4x8x8x128xf32>
    %cst_8 = arith.constant 0.000000e+00 : f32
    %12 = vector.broadcast %cst_8 : f32 to vector<6x10x10x128xf32>
    %c0_9 = arith.constant 0 : index
    %c0_10 = arith.constant 0 : index
    %c0_11 = arith.constant 0 : index
    %c0_12 = arith.constant 0 : index
    %13 = vector.load %arg8[%c0_9, %c0_10, %c0_11, %c0_12] : memref<6x10x10x128xf32, #tpu.memory_space<vmem>>, vector<6x10x10x128xf32>
    tpu.vector_store %arg8[%c0_9, %c0_10, %c0_11, %c0_12], %12 {strides = array<i32>} : memref<6x10x10x128xf32, #tpu.memory_space<vmem>>, vector<6x10x10x128xf32>,
    %c1 = arith.constant 1 : index
    %c1_13 = arith.constant 1 : index
    %c1_14 = arith.constant 1 : index
    %c0_15 = arith.constant 0 : index
    %14 = vector.load %arg8[%c1, %c1_13, %c1_14, %c0_15] : memref<6x10x10x128xf32, #tpu.memory_space<vmem>>, vector<4x8x8x128xf32>
    tpu.vector_store %arg8[%c1, %c1_13, %c1_14, %c0_15], %11 {strides = array<i32>} : memref<6x10x10x128xf32, #tpu.memory_space<vmem>>, vector<4x8x8x128xf32>,
    %c0_16 = arith.constant 0 : index
    %c0_17 = arith.constant 0 : index
    %c0_18 = arith.constant 0 : index
    %c0_19 = arith.constant 0 : index
    %15 = vector.load %arg8[%c0_16, %c0_17, %c0_18, %c0_19] : memref<6x10x10x128xf32, #tpu.memory_space<vmem>>, vector<4x8x8x128xf32>
    %16 = vector.shape_cast %15 : vector<4x8x8x128xf32> to vector<256x128xf32>
    %17 = arith.truncf %16 : vector<256x128xf32> to vector<256x128xbf16>
    %c0_20 = arith.constant 0 : index
    %c0_21 = arith.constant 0 : index
    %c1_22 = arith.constant 1 : index
    %c0_23 = arith.constant 0 : index
    %18 = vector.load %arg8[%c0_20, %c0_21, %c1_22, %c0_23] : memref<6x10x10x128xf32, #tpu.memory_space<vmem>>, vector<4x8x8x128xf32>
    %19 = vector.shape_cast %18 : vector<4x8x8x128xf32> to vector<256x128xf32>
    %20 = arith.truncf %19 : vector<256x128xf32> to vector<256x128xbf16>
    %c0_24 = arith.constant 0 : index
    %c0_25 = arith.constant 0 : index
    %c2 = arith.constant 2 : index
    %c0_26 = arith.constant 0 : index
    %21 = vector.load %arg8[%c0_24, %c0_25, %c2, %c0_26] : memref<6x10x10x128xf32, #tpu.memory_space<vmem>>, vector<4x8x8x128xf32>
    %22 = vector.shape_cast %21 : vector<4x8x8x128xf32> to vector<256x128xf32>
    %23 = arith.truncf %22 : vector<256x128xf32> to vector<256x128xbf16>
    %c0_27 = arith.constant 0 : index
    %c1_28 = arith.constant 1 : index
    %c0_29 = arith.constant 0 : index
    %c0_30 = arith.constant 0 : index
    %24 = vector.load %arg8[%c0_27, %c1_28, %c0_29, %c0_30] : memref<6x10x10x128xf32, #tpu.memory_space<vmem>>, vector<4x8x8x128xf32>
    %25 = vector.shape_cast %24 : vector<4x8x8x128xf32> to vector<256x128xf32>
    %26 = arith.truncf %25 : vector<256x128xf32> to vector<256x128xbf16>
    %c0_31 = arith.constant 0 : index
    %c1_32 = arith.constant 1 : index
    %c1_33 = arith.constant 1 : index
    %c0_34 = arith.constant 0 : index
    %27 = vector.load %arg8[%c0_31, %c1_32, %c1_33, %c0_34] : memref<6x10x10x128xf32, #tpu.memory_space<vmem>>, vector<4x8x8x128xf32>
    %28 = vector.shape_cast %27 : vector<4x8x8x128xf32> to vector<256x128xf32>
    %29 = arith.truncf %28 : vector<256x128xf32> to vector<256x128xbf16>
    %c0_35 = arith.constant 0 : index
    %c1_36 = arith.constant 1 : index
    %c2_37 = arith.constant 2 : index
    %c0_38 = arith.constant 0 : index
    %30 = vector.load %arg8[%c0_35, %c1_36, %c2_37, %c0_38] : memref<6x10x10x128xf32, #tpu.memory_space<vmem>>, vector<4x8x8x128xf32>
    %31 = vector.shape_cast %30 : vector<4x8x8x128xf32> to vector<256x128xf32>
    %32 = arith.truncf %31 : vector<256x128xf32> to vector<256x128xbf16>
    %c0_39 = arith.constant 0 : index
    %c2_40 = arith.constant 2 : index
    %c0_41 = arith.constant 0 : index
    %c0_42 = arith.constant 0 : index
    %33 = vector.load %arg8[%c0_39, %c2_40, %c0_41, %c0_42] : memref<6x10x10x128xf32, #tpu.memory_space<vmem>>, vector<4x8x8x128xf32>
    %34 = vector.shape_cast %33 : vector<4x8x8x128xf32> to vector<256x128xf32>
    %35 = arith.truncf %34 : vector<256x128xf32> to vector<256x128xbf16>
    %c0_43 = arith.constant 0 : index
    %c2_44 = arith.constant 2 : index
    %c1_45 = arith.constant 1 : index
    %c0_46 = arith.constant 0 : index
    %36 = vector.load %arg8[%c0_43, %c2_44, %c1_45, %c0_46] : memref<6x10x10x128xf32, #tpu.memory_space<vmem>>, vector<4x8x8x128xf32>
    %37 = vector.shape_cast %36 : vector<4x8x8x128xf32> to vector<256x128xf32>
    %38 = arith.truncf %37 : vector<256x128xf32> to vector<256x128xbf16>
    %c0_47 = arith.constant 0 : index
    %c2_48 = arith.constant 2 : index
    %c2_49 = arith.constant 2 : index
    %c0_50 = arith.constant 0 : index
    %39 = vector.load %arg8[%c0_47, %c2_48, %c2_49, %c0_50] : memref<6x10x10x128xf32, #tpu.memory_space<vmem>>, vector<4x8x8x128xf32>
    %40 = vector.shape_cast %39 : vector<4x8x8x128xf32> to vector<256x128xf32>
    %41 = arith.truncf %40 : vector<256x128xf32> to vector<256x128xbf16>
    %42 = tpu.concatenate %17, %20, %23, %26, %29, %32, %35, %38, %41 in 1 : vector<256x128xbf16>, vector<256x128xbf16>, vector<256x128xbf16>, vector<256x128xbf16>, vector<256x128xbf16>, vector<256x128xbf16>, vector<256x128xbf16>, vector<256x128xbf16>, vector<256x128xbf16> -> vector<256x1152xbf16>
    %c0_51 = arith.constant 0 : index
    %c0_52 = arith.constant 0 : index
    %c0_53 = arith.constant 0 : index
    %43 = vector.load %arg4[%c0_51, %c0_52, %c0_53] : memref<3x1152x128xbf16, #tpu.memory_space<vmem>>, vector<1x1152x128xbf16>
    %44 = vector.shape_cast %43 : vector<1x1152x128xbf16> to vector<1152x128xbf16>
    %cst_54 = arith.constant dense<0.000000e+00> : vector<256x128xf32>
    %45 = tpu.matmul %42, %44, %cst_54 {dimension_numbers = #tpu.dot_dimension_numbers<[1], [0], [0], [1], [0, 0, 1, 1], [], []>} : vector<256x1152xbf16>, vector<1152x128xbf16>, vector<256x128xf32> -> vector<256x128xf32>
    %c0_55 = arith.constant 0 : index
    %c0_56 = arith.constant 0 : index
    %c0_57 = arith.constant 0 : index
    %46 = vector.load %arg5[%c0_55, %c0_56, %c0_57] : memref<1x256x128xf32, #tpu.memory_space<vmem>>, vector<1x256x128xf32>
    %47 = vector.shape_cast %46 : vector<1x256x128xf32> to vector<256x128xf32>
    %48 = vector.shape_cast %45 : vector<256x128xf32> to vector<1x256x128xf32>
    tpu.vector_store %arg5[%c0_55, %c0_56, %c0_57], %48 {strides = array<i32>} : memref<1x256x128xf32, #tpu.memory_space<vmem>>, vector<1x256x128xf32>,
    %c1_58 = arith.constant 1 : index
    %c0_59 = arith.constant 0 : index
    %c0_60 = arith.constant 0 : index
    %c0_61 = arith.constant 0 : index
    %49 = vector.load %arg8[%c1_58, %c0_59, %c0_60, %c0_61] : memref<6x10x10x128xf32, #tpu.memory_space<vmem>>, vector<4x8x8x128xf32>
    %50 = vector.shape_cast %49 : vector<4x8x8x128xf32> to vector<256x128xf32>
    %51 = arith.truncf %50 : vector<256x128xf32> to vector<256x128xbf16>
    %c1_62 = arith.constant 1 : index
    %c0_63 = arith.constant 0 : index
    %c1_64 = arith.constant 1 : index
    %c0_65 = arith.constant 0 : index
    %52 = vector.load %arg8[%c1_62, %c0_63, %c1_64, %c0_65] : memref<6x10x10x128xf32, #tpu.memory_space<vmem>>, vector<4x8x8x128xf32>
    %53 = vector.shape_cast %52 : vector<4x8x8x128xf32> to vector<256x128xf32>
    %54 = arith.truncf %53 : vector<256x128xf32> to vector<256x128xbf16>
    %c1_66 = arith.constant 1 : index
    %c0_67 = arith.constant 0 : index
    %c2_68 = arith.constant 2 : index
    %c0_69 = arith.constant 0 : index
    %55 = vector.load %arg8[%c1_66, %c0_67, %c2_68, %c0_69] : memref<6x10x10x128xf32, #tpu.memory_space<vmem>>, vector<4x8x8x128xf32>
    %56 = vector.shape_cast %55 : vector<4x8x8x128xf32> to vector<256x128xf32>
    %57 = arith.truncf %56 : vector<256x128xf32> to vector<256x128xbf16>
    %c1_70 = arith.constant 1 : index
    %c1_71 = arith.constant 1 : index
    %c0_72 = arith.constant 0 : index
    %c0_73 = arith.constant 0 : index
    %58 = vector.load %arg8[%c1_70, %c1_71, %c0_72, %c0_73] : memref<6x10x10x128xf32, #tpu.memory_space<vmem>>, vector<4x8x8x128xf32>
    %59 = vector.shape_cast %58 : vector<4x8x8x128xf32> to vector<256x128xf32>
    %60 = arith.truncf %59 : vector<256x128xf32> to vector<256x128xbf16>
    %c1_74 = arith.constant 1 : index
    %c1_75 = arith.constant 1 : index
    %c1_76 = arith.constant 1 : index
    %c0_77 = arith.constant 0 : index
    %61 = vector.load %arg8[%c1_74, %c1_75, %c1_76, %c0_77] : memref<6x10x10x128xf32, #tpu.memory_space<vmem>>, vector<4x8x8x128xf32>
    %62 = vector.shape_cast %61 : vector<4x8x8x128xf32> to vector<256x128xf32>
    %63 = arith.truncf %62 : vector<256x128xf32> to vector<256x128xbf16>
    %c1_78 = arith.constant 1 : index
    %c1_79 = arith.constant 1 : index
    %c2_80 = arith.constant 2 : index
    %c0_81 = arith.constant 0 : index
    %64 = vector.load %arg8[%c1_78, %c1_79, %c2_80, %c0_81] : memref<6x10x10x128xf32, #tpu.memory_space<vmem>>, vector<4x8x8x128xf32>
    %65 = vector.shape_cast %64 : vector<4x8x8x128xf32> to vector<256x128xf32>
    %66 = arith.truncf %65 : vector<256x128xf32> to vector<256x128xbf16>
    %c1_82 = arith.constant 1 : index
    %c2_83 = arith.constant 2 : index
    %c0_84 = arith.constant 0 : index
    %c0_85 = arith.constant 0 : index
    %67 = vector.load %arg8[%c1_82, %c2_83, %c0_84, %c0_85] : memref<6x10x10x128xf32, #tpu.memory_space<vmem>>, vector<4x8x8x128xf32>
    %68 = vector.shape_cast %67 : vector<4x8x8x128xf32> to vector<256x128xf32>
    %69 = arith.truncf %68 : vector<256x128xf32> to vector<256x128xbf16>
    %c1_86 = arith.constant 1 : index
    %c2_87 = arith.constant 2 : index
    %c1_88 = arith.constant 1 : index
    %c0_89 = arith.constant 0 : index
    %70 = vector.load %arg8[%c1_86, %c2_87, %c1_88, %c0_89] : memref<6x10x10x128xf32, #tpu.memory_space<vmem>>, vector<4x8x8x128xf32>
    %71 = vector.shape_cast %70 : vector<4x8x8x128xf32> to vector<256x128xf32>
    %72 = arith.truncf %71 : vector<256x128xf32> to vector<256x128xbf16>
    %c1_90 = arith.constant 1 : index
    %c2_91 = arith.constant 2 : index
    %c2_92 = arith.constant 2 : index
    %c0_93 = arith.constant 0 : index
    %73 = vector.load %arg8[%c1_90, %c2_91, %c2_92, %c0_93] : memref<6x10x10x128xf32, #tpu.memory_space<vmem>>, vector<4x8x8x128xf32>
    %74 = vector.shape_cast %73 : vector<4x8x8x128xf32> to vector<256x128xf32>
    %75 = arith.truncf %74 : vector<256x128xf32> to vector<256x128xbf16>
    %76 = tpu.concatenate %51, %54, %57, %60, %63, %66, %69, %72, %75 in 1 : vector<256x128xbf16>, vector<256x128xbf16>, vector<256x128xbf16>, vector<256x128xbf16>, vector<256x128xbf16>, vector<256x128xbf16>, vector<256x128xbf16>, vector<256x128xbf16>, vector<256x128xbf16> -> vector<256x1152xbf16>
    %c1_94 = arith.constant 1 : index
    %c0_95 = arith.constant 0 : index
    %c0_96 = arith.constant 0 : index
    %77 = vector.load %arg4[%c1_94, %c0_95, %c0_96] : memref<3x1152x128xbf16, #tpu.memory_space<vmem>>, vector<1x1152x128xbf16>
    %78 = vector.shape_cast %77 : vector<1x1152x128xbf16> to vector<1152x128xbf16>
    %cst_97 = arith.constant dense<0.000000e+00> : vector<256x128xf32>
    %79 = tpu.matmul %76, %78, %cst_97 {dimension_numbers = #tpu.dot_dimension_numbers<[1], [0], [0], [1], [0, 0, 1, 1], [], []>} : vector<256x1152xbf16>, vector<1152x128xbf16>, vector<256x128xf32> -> vector<256x128xf32>
    %c0_98 = arith.constant 0 : index
    %c0_99 = arith.constant 0 : index
    %c0_100 = arith.constant 0 : index
    %80 = vector.load %arg5[%c0_98, %c0_99, %c0_100] : memref<1x256x128xf32, #tpu.memory_space<vmem>>, vector<1x256x128xf32>
    %81 = vector.shape_cast %80 : vector<1x256x128xf32> to vector<256x128xf32>
    %82 = arith.addf %81, %79 : vector<256x128xf32>
    %c0_101 = arith.constant 0 : index
    %c0_102 = arith.constant 0 : index
    %c0_103 = arith.constant 0 : index
    %83 = vector.load %arg5[%c0_101, %c0_102, %c0_103] : memref<1x256x128xf32, #tpu.memory_space<vmem>>, vector<1x256x128xf32>
    %84 = vector.shape_cast %83 : vector<1x256x128xf32> to vector<256x128xf32>
    %85 = vector.shape_cast %82 : vector<256x128xf32> to vector<1x256x128xf32>
    tpu.vector_store %arg5[%c0_101, %c0_102, %c0_103], %85 {strides = array<i32>} : memref<1x256x128xf32, #tpu.memory_space<vmem>>, vector<1x256x128xf32>,
    %c2_104 = arith.constant 2 : index
    %c0_105 = arith.constant 0 : index
    %c0_106 = arith.constant 0 : index
    %c0_107 = arith.constant 0 : index
    %86 = vector.load %arg8[%c2_104, %c0_105, %c0_106, %c0_107] : memref<6x10x10x128xf32, #tpu.memory_space<vmem>>, vector<4x8x8x128xf32>
    %87 = vector.shape_cast %86 : vector<4x8x8x128xf32> to vector<256x128xf32>
    %88 = arith.truncf %87 : vector<256x128xf32> to vector<256x128xbf16>
    %c2_108 = arith.constant 2 : index
    %c0_109 = arith.constant 0 : index
    %c1_110 = arith.constant 1 : index
    %c0_111 = arith.constant 0 : index
    %89 = vector.load %arg8[%c2_108, %c0_109, %c1_110, %c0_111] : memref<6x10x10x128xf32, #tpu.memory_space<vmem>>, vector<4x8x8x128xf32>
    %90 = vector.shape_cast %89 : vector<4x8x8x128xf32> to vector<256x128xf32>
    %91 = arith.truncf %90 : vector<256x128xf32> to vector<256x128xbf16>
    %c2_112 = arith.constant 2 : index
    %c0_113 = arith.constant 0 : index
    %c2_114 = arith.constant 2 : index
    %c0_115 = arith.constant 0 : index
    %92 = vector.load %arg8[%c2_112, %c0_113, %c2_114, %c0_115] : memref<6x10x10x128xf32, #tpu.memory_space<vmem>>, vector<4x8x8x128xf32>
    %93 = vector.shape_cast %92 : vector<4x8x8x128xf32> to vector<256x128xf32>
    %94 = arith.truncf %93 : vector<256x128xf32> to vector<256x128xbf16>
    %c2_116 = arith.constant 2 : index
    %c1_117 = arith.constant 1 : index
    %c0_118 = arith.constant 0 : index
    %c0_119 = arith.constant 0 : index
    %95 = vector.load %arg8[%c2_116, %c1_117, %c0_118, %c0_119] : memref<6x10x10x128xf32, #tpu.memory_space<vmem>>, vector<4x8x8x128xf32>
    %96 = vector.shape_cast %95 : vector<4x8x8x128xf32> to vector<256x128xf32>
    %97 = arith.truncf %96 : vector<256x128xf32> to vector<256x128xbf16>
    %c2_120 = arith.constant 2 : index
    %c1_121 = arith.constant 1 : index
    %c1_122 = arith.constant 1 : index
    %c0_123 = arith.constant 0 : index
    %98 = vector.load %arg8[%c2_120, %c1_121, %c1_122, %c0_123] : memref<6x10x10x128xf32, #tpu.memory_space<vmem>>, vector<4x8x8x128xf32>
    %99 = vector.shape_cast %98 : vector<4x8x8x128xf32> to vector<256x128xf32>
    %100 = arith.truncf %99 : vector<256x128xf32> to vector<256x128xbf16>
    %c2_124 = arith.constant 2 : index
    %c1_125 = arith.constant 1 : index
    %c2_126 = arith.constant 2 : index
    %c0_127 = arith.constant 0 : index
    %101 = vector.load %arg8[%c2_124, %c1_125, %c2_126, %c0_127] : memref<6x10x10x128xf32, #tpu.memory_space<vmem>>, vector<4x8x8x128xf32>
    %102 = vector.shape_cast %101 : vector<4x8x8x128xf32> to vector<256x128xf32>
    %103 = arith.truncf %102 : vector<256x128xf32> to vector<256x128xbf16>
    %c2_128 = arith.constant 2 : index
    %c2_129 = arith.constant 2 : index
    %c0_130 = arith.constant 0 : index
    %c0_131 = arith.constant 0 : index
    %104 = vector.load %arg8[%c2_128, %c2_129, %c0_130, %c0_131] : memref<6x10x10x128xf32, #tpu.memory_space<vmem>>, vector<4x8x8x128xf32>
    %105 = vector.shape_cast %104 : vector<4x8x8x128xf32> to vector<256x128xf32>
    %106 = arith.truncf %105 : vector<256x128xf32> to vector<256x128xbf16>
    %c2_132 = arith.constant 2 : index
    %c2_133 = arith.constant 2 : index
    %c1_134 = arith.constant 1 : index
    %c0_135 = arith.constant 0 : index
    %107 = vector.load %arg8[%c2_132, %c2_133, %c1_134, %c0_135] : memref<6x10x10x128xf32, #tpu.memory_space<vmem>>, vector<4x8x8x128xf32>
    %108 = vector.shape_cast %107 : vector<4x8x8x128xf32> to vector<256x128xf32>
    %109 = arith.truncf %108 : vector<256x128xf32> to vector<256x128xbf16>
    %c2_136 = arith.constant 2 : index
    %c2_137 = arith.constant 2 : index
    %c2_138 = arith.constant 2 : index
    %c0_139 = arith.constant 0 : index
    %110 = vector.load %arg8[%c2_136, %c2_137, %c2_138, %c0_139] : memref<6x10x10x128xf32, #tpu.memory_space<vmem>>, vector<4x8x8x128xf32>
    %111 = vector.shape_cast %110 : vector<4x8x8x128xf32> to vector<256x128xf32>
    %112 = arith.truncf %111 : vector<256x128xf32> to vector<256x128xbf16>
    %113 = tpu.concatenate %88, %91, %94, %97, %100, %103, %106, %109, %112 in 1 : vector<256x128xbf16>, vector<256x128xbf16>, vector<256x128xbf16>, vector<256x128xbf16>, vector<256x128xbf16>, vector<256x128xbf16>, vector<256x128xbf16>, vector<256x128xbf16>, vector<256x128xbf16> -> vector<256x1152xbf16>
    %c2_140 = arith.constant 2 : index
    %c0_141 = arith.constant 0 : index
    %c0_142 = arith.constant 0 : index
    %114 = vector.load %arg4[%c2_140, %c0_141, %c0_142] : memref<3x1152x128xbf16, #tpu.memory_space<vmem>>, vector<1x1152x128xbf16>
    %115 = vector.shape_cast %114 : vector<1x1152x128xbf16> to vector<1152x128xbf16>
    %cst_143 = arith.constant dense<0.000000e+00> : vector<256x128xf32>
    %116 = tpu.matmul %113, %115, %cst_143 {dimension_numbers = #tpu.dot_dimension_numbers<[1], [0], [0], [1], [0, 0, 1, 1], [], []>} : vector<256x1152xbf16>, vector<1152x128xbf16>, vector<256x128xf32> -> vector<256x128xf32>
    %c0_144 = arith.constant 0 : index
    %c0_145 = arith.constant 0 : index
    %c0_146 = arith.constant 0 : index
    %117 = vector.load %arg5[%c0_144, %c0_145, %c0_146] : memref<1x256x128xf32, #tpu.memory_space<vmem>>, vector<1x256x128xf32>
    %118 = vector.shape_cast %117 : vector<1x256x128xf32> to vector<256x128xf32>
    %119 = arith.addf %118, %116 : vector<256x128xf32>
    %c0_147 = arith.constant 0 : index
    %c0_148 = arith.constant 0 : index
    %c0_149 = arith.constant 0 : index
    %120 = vector.load %arg5[%c0_147, %c0_148, %c0_149] : memref<1x256x128xf32, #tpu.memory_space<vmem>>, vector<1x256x128xf32>
    %121 = vector.shape_cast %120 : vector<1x256x128xf32> to vector<256x128xf32>
    %122 = vector.shape_cast %119 : vector<256x128xf32> to vector<1x256x128xf32>
    tpu.vector_store %arg5[%c0_147, %c0_148, %c0_149], %122 {strides = array<i32>} : memref<1x256x128xf32, #tpu.memory_space<vmem>>, vector<1x256x128xf32>,
    %c0_150 = arith.constant 0 : index
    %c0_151 = arith.constant 0 : index
    %c0_152 = arith.constant 0 : index
    %123 = vector.load %arg5[%c0_150, %c0_151, %c0_152] : memref<1x256x128xf32, #tpu.memory_space<vmem>>, vector<1x256x128xf32>
    %124 = vector.shape_cast %123 : vector<1x256x128xf32> to vector<256x128xf32>
    %cst_153 = arith.constant dense<0.000000e+00> : vector<128xf32>
    %125 = vector.multi_reduction <add>, %124, %cst_153 [0] : vector<256x128xf32> to vector<128xf32>
    %126 = vector.shape_cast %125 : vector<128xf32> to vector<1x128xf32>
    %127 = vector.shape_cast %126 : vector<1x128xf32> to vector<1x1x128xf32>
    %c0_154 = arith.constant 0 : index
    %c0_155 = arith.constant 0 : index
    %c0_156 = arith.constant 0 : index
    %128 = vector.load %arg6[%c0_154, %c0_155, %c0_156] : memref<1x1x128xf32, #tpu.memory_space<vmem>>, vector<1x1x128xf32>
    tpu.vector_store %arg6[%c0_154, %c0_155, %c0_156], %127 {strides = array<i32>} : memref<1x1x128xf32, #tpu.memory_space<vmem>>, vector<1x1x128xf32>,
    %129 = arith.mulf %124, %124 : vector<256x128xf32>
    %cst_157 = arith.constant dense<0.000000e+00> : vector<128xf32>
    %130 = vector.multi_reduction <add>, %129, %cst_157 [0] : vector<256x128xf32> to vector<128xf32>
    %131 = vector.shape_cast %130 : vector<128xf32> to vector<1x128xf32>
    %132 = vector.shape_cast %131 : vector<1x128xf32> to vector<1x1x128xf32>
    %c0_158 = arith.constant 0 : index
    %c0_159 = arith.constant 0 : index
    %c0_160 = arith.constant 0 : index
    %133 = vector.load %arg7[%c0_158, %c0_159, %c0_160] : memref<1x1x128xf32, #tpu.memory_space<vmem>>, vector<1x1x128xf32>
    tpu.vector_store %arg7[%c0_158, %c0_159, %c0_160], %132 {strides = array<i32>} : memref<1x1x128xf32, #tpu.memory_space<vmem>>, vector<1x1x128xf32>,
    return
  }
  func.func @transform_0(%arg0: i32) -> (i32, i32, i32, i32, i32) {
    %c0_i32 = arith.constant 0 : i32
    %c0_i32_0 = arith.constant 0 : i32
    %c0_i32_1 = arith.constant 0 : i32
    %c0_i32_2 = arith.constant 0 : i32
    %c0_i32_3 = arith.constant 0 : i32
    return %arg0, %c0_i32, %c0_i32_0, %c0_i32_1, %c0_i32_2 : i32, i32, i32, i32, i32
  }
  func.func @transform_1(%arg0: i32) -> (i32, i32) {
    %c0_i32 = arith.constant 0 : i32
    %c0_i32_0 = arith.constant 0 : i32
    %c0_i32_1 = arith.constant 0 : i32
    return %c0_i32, %c0_i32_0 : i32, i32
  }
  func.func @transform_2(%arg0: i32) -> (i32, i32) {
    %c0_i32 = arith.constant 0 : i32
    %c0_i32_0 = arith.constant 0 : i32
    %c0_i32_1 = arith.constant 0 : i32
    return %c0_i32, %c0_i32_0 : i32, i32
  }
  func.func @transform_3(%arg0: i32) -> (i32, i32, i32) {
    %c0_i32 = arith.constant 0 : i32
    %c0_i32_0 = arith.constant 0 : i32
    %c0_i32_1 = arith.constant 0 : i32
    %c0_i32_2 = arith.constant 0 : i32
    return %c0_i32, %c0_i32_0, %c0_i32_1 : i32, i32, i32
  }
  func.func @transform_4(%arg0: i32) -> (i32, i32, i32) {
    %c0_i32 = arith.constant 0 : i32
    %c0_i32_0 = arith.constant 0 : i32
    %c0_i32_1 = arith.constant 0 : i32
    return %arg0, %c0_i32, %c0_i32_0 : i32, i32, i32
  }
  func.func @transform_5(%arg0: i32) -> (i32, i32, i32) {
    %c0_i32 = arith.constant 0 : i32
    %c0_i32_0 = arith.constant 0 : i32
    %c0_i32_1 = arith.constant 0 : i32
    return %arg0, %c0_i32, %c0_i32_0 : i32, i32, i32
  }
  func.func @transform_6(%arg0: i32) -> (i32, i32, i32) {
    %c0_i32 = arith.constant 0 : i32
    %c0_i32_0 = arith.constant 0 : i32
    %c0_i32_1 = arith.constant 0 : i32
    return %arg0, %c0_i32, %c0_i32_0 : i32, i32, i32
  }
}

module attributes {stable_mosaic.version = 11 : i64} {
  func.func @_bn_add_relu_kernel(%arg0: i32, %arg1: memref<128x256xf32, #tpu.memory_space<vmem>>, %arg2: memref<128x256xf32, #tpu.memory_space<vmem>>, %arg3: memref<1x256xf32, #tpu.memory_space<vmem>>, %arg4: memref<1x256xf32, #tpu.memory_space<vmem>>, %arg5: memref<128x256xf32, #tpu.memory_space<vmem>>) attributes {dimension_semantics = [#tpu.dimension_semantics<parallel>], iteration_bounds = array<i64: 4>, scalar_prefetch = 0 : i64, scratch_operands = 0 : i64, tpu.core_type = #tpu.core_type<tc>, window_params = [{transform_indices = @transform_0, window_bounds = array<i64: 128, 256>}, {transform_indices = @transform_1, window_bounds = array<i64: 128, 256>}, {pipeline_mode = #tpu.pipeline_mode<synchronous>, transform_indices = @transform_2, window_bounds = array<i64: 1, 256>}, {pipeline_mode = #tpu.pipeline_mode<synchronous>, transform_indices = @transform_3, window_bounds = array<i64: 1, 256>}, {transform_indices = @transform_4, window_bounds = array<i64: 128, 256>}]} {
    %c0 = arith.constant 0 : index
    %c0_0 = arith.constant 0 : index
    %0 = vector.load %arg1[%c0, %c0_0] : memref<128x256xf32, #tpu.memory_space<vmem>>, vector<128x256xf32>
    %c0_1 = arith.constant 0 : index
    %c0_2 = arith.constant 0 : index
    %1 = vector.load %arg3[%c0_1, %c0_2] : memref<1x256xf32, #tpu.memory_space<vmem>>, vector<1x256xf32>
    %2 = vector.broadcast %1 : vector<1x256xf32> to vector<128x256xf32>
    %3 = arith.mulf %0, %2 : vector<128x256xf32>
    %c0_3 = arith.constant 0 : index
    %c0_4 = arith.constant 0 : index
    %4 = vector.load %arg4[%c0_3, %c0_4] : memref<1x256xf32, #tpu.memory_space<vmem>>, vector<1x256xf32>
    %5 = vector.broadcast %4 : vector<1x256xf32> to vector<128x256xf32>
    %6 = arith.addf %3, %5 : vector<128x256xf32>
    %c0_5 = arith.constant 0 : index
    %c0_6 = arith.constant 0 : index
    %7 = vector.load %arg2[%c0_5, %c0_6] : memref<128x256xf32, #tpu.memory_space<vmem>>, vector<128x256xf32>
    %8 = arith.addf %6, %7 : vector<128x256xf32>
    %cst = arith.constant 0.000000e+00 : f32
    %9 = vector.broadcast %cst : f32 to vector<128x256xf32>
    %10 = arith.maximumf %8, %9 : vector<128x256xf32>
    %c0_7 = arith.constant 0 : index
    %c0_8 = arith.constant 0 : index
    %11 = vector.load %arg5[%c0_7, %c0_8] : memref<128x256xf32, #tpu.memory_space<vmem>>, vector<128x256xf32>
    tpu.vector_store %arg5[%c0_7, %c0_8], %10 {strides = array<i32>} : memref<128x256xf32, #tpu.memory_space<vmem>>, vector<128x256xf32>,
    return
  }
  func.func @transform_0(%arg0: i32) -> (i32, i32) {
    %c0_i32 = arith.constant 0 : i32
    %c0_i32_0 = arith.constant 0 : i32
    return %arg0, %c0_i32 : i32, i32
  }
  func.func @transform_1(%arg0: i32) -> (i32, i32) {
    %c0_i32 = arith.constant 0 : i32
    %c0_i32_0 = arith.constant 0 : i32
    return %arg0, %c0_i32 : i32, i32
  }
  func.func @transform_2(%arg0: i32) -> (i32, i32) {
    %c0_i32 = arith.constant 0 : i32
    %c0_i32_0 = arith.constant 0 : i32
    %c0_i32_1 = arith.constant 0 : i32
    return %c0_i32, %c0_i32_0 : i32, i32
  }
  func.func @transform_3(%arg0: i32) -> (i32, i32) {
    %c0_i32 = arith.constant 0 : i32
    %c0_i32_0 = arith.constant 0 : i32
    %c0_i32_1 = arith.constant 0 : i32
    return %c0_i32, %c0_i32_0 : i32, i32
  }
  func.func @transform_4(%arg0: i32) -> (i32, i32) {
    %c0_i32 = arith.constant 0 : i32
    %c0_i32_0 = arith.constant 0 : i32
    return %arg0, %c0_i32 : i32, i32
  }
}

module attributes {stable_mosaic.version = 11 : i64} {
  func.func @_bn_relu_matmul_stats_kernel(%arg0: i32, %arg1: memref<128x128xf32, #tpu.memory_space<vmem>>, %arg2: memref<1x128xf32, #tpu.memory_space<vmem>>, %arg3: memref<1x128xf32, #tpu.memory_space<vmem>>, %arg4: memref<128x256xbf16, #tpu.memory_space<vmem>>, %arg5: memref<128x256xf32, #tpu.memory_space<vmem>>, %arg6: memref<1x1x256xf32, #tpu.memory_space<vmem>>, %arg7: memref<1x1x256xf32, #tpu.memory_space<vmem>>) attributes {dimension_semantics = [#tpu.dimension_semantics<parallel>], iteration_bounds = array<i64: 4>, scalar_prefetch = 0 : i64, scratch_operands = 0 : i64, tpu.core_type = #tpu.core_type<tc>, window_params = [{transform_indices = @transform_0, window_bounds = array<i64: 128, 128>}, {pipeline_mode = #tpu.pipeline_mode<synchronous>, transform_indices = @transform_1, window_bounds = array<i64: 1, 128>}, {pipeline_mode = #tpu.pipeline_mode<synchronous>, transform_indices = @transform_2, window_bounds = array<i64: 1, 128>}, {pipeline_mode = #tpu.pipeline_mode<synchronous>, transform_indices = @transform_3, window_bounds = array<i64: 128, 256>}, {transform_indices = @transform_4, window_bounds = array<i64: 128, 256>}, {transform_indices = @transform_5, window_bounds = array<i64: 1, 1, 256>}, {transform_indices = @transform_6, window_bounds = array<i64: 1, 1, 256>}]} {
    %c0 = arith.constant 0 : index
    %c0_0 = arith.constant 0 : index
    %0 = vector.load %arg1[%c0, %c0_0] : memref<128x128xf32, #tpu.memory_space<vmem>>, vector<128x128xf32>
    %c0_1 = arith.constant 0 : index
    %c0_2 = arith.constant 0 : index
    %1 = vector.load %arg2[%c0_1, %c0_2] : memref<1x128xf32, #tpu.memory_space<vmem>>, vector<1x128xf32>
    %2 = vector.broadcast %1 : vector<1x128xf32> to vector<128x128xf32>
    %3 = arith.mulf %0, %2 : vector<128x128xf32>
    %c0_3 = arith.constant 0 : index
    %c0_4 = arith.constant 0 : index
    %4 = vector.load %arg3[%c0_3, %c0_4] : memref<1x128xf32, #tpu.memory_space<vmem>>, vector<1x128xf32>
    %5 = vector.broadcast %4 : vector<1x128xf32> to vector<128x128xf32>
    %6 = arith.addf %3, %5 : vector<128x128xf32>
    %cst = arith.constant 0.000000e+00 : f32
    %7 = vector.broadcast %cst : f32 to vector<128x128xf32>
    %8 = arith.maximumf %6, %7 : vector<128x128xf32>
    %9 = arith.truncf %8 : vector<128x128xf32> to vector<128x128xbf16>
    %c0_5 = arith.constant 0 : index
    %c0_6 = arith.constant 0 : index
    %10 = vector.load %arg4[%c0_5, %c0_6] : memref<128x256xbf16, #tpu.memory_space<vmem>>, vector<128x256xbf16>
    %cst_7 = arith.constant dense<0.000000e+00> : vector<128x256xf32>
    %11 = tpu.matmul %9, %10, %cst_7 {dimension_numbers = #tpu.dot_dimension_numbers<[1], [0], [0], [1], [0, 0, 1, 1], [], []>} : vector<128x128xbf16>, vector<128x256xbf16>, vector<128x256xf32> -> vector<128x256xf32>
    %c0_8 = arith.constant 0 : index
    %c0_9 = arith.constant 0 : index
    %12 = vector.load %arg5[%c0_8, %c0_9] : memref<128x256xf32, #tpu.memory_space<vmem>>, vector<128x256xf32>
    tpu.vector_store %arg5[%c0_8, %c0_9], %11 {strides = array<i32>} : memref<128x256xf32, #tpu.memory_space<vmem>>, vector<128x256xf32>,
    %cst_10 = arith.constant dense<0.000000e+00> : vector<256xf32>
    %13 = vector.multi_reduction <add>, %11, %cst_10 [0] : vector<128x256xf32> to vector<256xf32>
    %14 = vector.shape_cast %13 : vector<256xf32> to vector<1x256xf32>
    %15 = vector.shape_cast %14 : vector<1x256xf32> to vector<1x1x256xf32>
    %c0_11 = arith.constant 0 : index
    %c0_12 = arith.constant 0 : index
    %c0_13 = arith.constant 0 : index
    %16 = vector.load %arg6[%c0_11, %c0_12, %c0_13] : memref<1x1x256xf32, #tpu.memory_space<vmem>>, vector<1x1x256xf32>
    tpu.vector_store %arg6[%c0_11, %c0_12, %c0_13], %15 {strides = array<i32>} : memref<1x1x256xf32, #tpu.memory_space<vmem>>, vector<1x1x256xf32>,
    %17 = arith.mulf %11, %11 : vector<128x256xf32>
    %cst_14 = arith.constant dense<0.000000e+00> : vector<256xf32>
    %18 = vector.multi_reduction <add>, %17, %cst_14 [0] : vector<128x256xf32> to vector<256xf32>
    %19 = vector.shape_cast %18 : vector<256xf32> to vector<1x256xf32>
    %20 = vector.shape_cast %19 : vector<1x256xf32> to vector<1x1x256xf32>
    %c0_15 = arith.constant 0 : index
    %c0_16 = arith.constant 0 : index
    %c0_17 = arith.constant 0 : index
    %21 = vector.load %arg7[%c0_15, %c0_16, %c0_17] : memref<1x1x256xf32, #tpu.memory_space<vmem>>, vector<1x1x256xf32>
    tpu.vector_store %arg7[%c0_15, %c0_16, %c0_17], %20 {strides = array<i32>} : memref<1x1x256xf32, #tpu.memory_space<vmem>>, vector<1x1x256xf32>,
    return
  }
  func.func @transform_0(%arg0: i32) -> (i32, i32) {
    %c0_i32 = arith.constant 0 : i32
    %c0_i32_0 = arith.constant 0 : i32
    return %arg0, %c0_i32 : i32, i32
  }
  func.func @transform_1(%arg0: i32) -> (i32, i32) {
    %c0_i32 = arith.constant 0 : i32
    %c0_i32_0 = arith.constant 0 : i32
    %c0_i32_1 = arith.constant 0 : i32
    return %c0_i32, %c0_i32_0 : i32, i32
  }
  func.func @transform_2(%arg0: i32) -> (i32, i32) {
    %c0_i32 = arith.constant 0 : i32
    %c0_i32_0 = arith.constant 0 : i32
    %c0_i32_1 = arith.constant 0 : i32
    return %c0_i32, %c0_i32_0 : i32, i32
  }
  func.func @transform_3(%arg0: i32) -> (i32, i32) {
    %c0_i32 = arith.constant 0 : i32
    %c0_i32_0 = arith.constant 0 : i32
    %c0_i32_1 = arith.constant 0 : i32
    return %c0_i32, %c0_i32_0 : i32, i32
  }
  func.func @transform_4(%arg0: i32) -> (i32, i32) {
    %c0_i32 = arith.constant 0 : i32
    %c0_i32_0 = arith.constant 0 : i32
    return %arg0, %c0_i32 : i32, i32
  }
  func.func @transform_5(%arg0: i32) -> (i32, i32, i32) {
    %c0_i32 = arith.constant 0 : i32
    %c0_i32_0 = arith.constant 0 : i32
    %c0_i32_1 = arith.constant 0 : i32
    return %arg0, %c0_i32, %c0_i32_0 : i32, i32, i32
  }
  func.func @transform_6(%arg0: i32) -> (i32, i32, i32) {
    %c0_i32 = arith.constant 0 : i32
    %c0_i32_0 = arith.constant 0 : i32
    %c0_i32_1 = arith.constant 0 : i32
    return %arg0, %c0_i32, %c0_i32_0 : i32, i32, i32
  }
}

</mosaic_0001>

<llo_original>
// kernel: resnext_bottleneck_forward.7
$region0: #{resnext_bottleneck_forward.7}
  #allocation0 [shape = 'u32[]', space=smem, size = 0x4, offset = 0x4, fixed_abs, tag = 'smem constant byte address 0x4 - core index']
  #allocation1 [shape = 'u32[144,128]{1,0:T(1,128)}', space=vmem, size = 0x12000, scoped, tag = 'internal scratch']
  %s0 = inlined_call_operand.vmem [shape: f32[512,256], index: 0, kind: input, shape index: {}]
  %s1 = inlined_call_operand.vmem [shape: f32[512,256], index: 1, kind: input, shape index: {}]
  %s2 = inlined_call_operand.vmem [shape: f32[1,256], index: 2, kind: input, shape index: {}]
  %s3 = inlined_call_operand.vmem [shape: f32[1,256], index: 3, kind: input, shape index: {}]
  %s4 = inlined_call_operand.hbm [shape: f32[512,256], index: 4, kind: output, shape index: {}]
  %s5 = sld [smem:[#allocation0]]
  $region49: #{resnext_bottleneck_forward.7} parent=0
    _
  %s7 = ssub.s32 1, %s5
  %s8 = scalar_select 0, %s7, %s5
  $region1: #{resnext_bottleneck_forward.7} parent=0
    #allocation2 [shape = 'u8[262144]{0}', space=vmem, size = 0x40000, scoped, tag = 'output window, operand 0']
    #allocation3 [shape = 's32[2]{0}', space=sflag, size = 0x8, scoped, tag = 'scoped memory for resnext_bottleneck_forward.7']
    %9 = vsyncpa [#allocation3], 0
    %s10 = scalar_lea.sflag [#allocation3], 1
    %11 = vsyncpa %s10, 0
    loop: start=0, step=1, limit=6
    $region2: #{resnext_bottleneck_forward.7} parent=1 // loop_pre_header
      _
    $region3: #{resnext_bottleneck_forward.7} parent=1 // loop_header
      %s13 = sphi 0, %s17
      %p14 = scmp.ge.s32.totalorder %s13, 6
      %s23 = sphi 0, %s25
      %s26 = sphi 0, %s23
      %s27 = sphi 0, %s26
      %s43 = sphi 0, %s27
      %s49 = sphi 0, %s51
      %s52 = sphi 0, %s49
      %s53 = sphi 0, %s52
      %s69 = sphi 0, %s53
      %s73 = sphi 0, %s73
      %s75 = sphi 0, %s73
      %s76 = sphi 0, %s75
      %s90 = sphi 0, %s76
      %s94 = sphi 0, %s94
      %s96 = sphi 0, %s94
      %s97 = sphi 0, %s96
      %s111 = sphi 0, %s97
      %s117 = sphi 0, %s119
      %s120 = sphi 0, %s117
      %s121 = sphi 0, %s120
      %s137 = sphi 0, %s121
    $region4: #{resnext_bottleneck_forward.7} parent=1 // loop_header_branch
      %16 = sbr.rel (%p14) target = $region8
    $region5: #{resnext_bottleneck_forward.7} parent=1 // loop_body
      %s18 = ssub.s32 %s13, 1
      %s19 = ssub.s32 %s13, 2
      %s20 = sadd.s32 %s13, 1
      %s21 = ssub.s32 %s13, %s20
      %p22 = scmp.eq.s32.totalorder %s21, 0
      %s24 = sadd.s32 %s23, 1
      %s25 = scalar_select %p22, %s23, %s24
      %p28 = pneg %p22
      %p29 = scmp.eq.s32.totalorder %s13, 3
      %p30 = por %p28, %p29
      %p31 = scmp.ne.s32.totalorder %s23, %s26
      %p32 = scmp.eq.s32.totalorder %s13, 0
      %p33 = por %p31, %p32
      %p34 = scmp.ne.s32.totalorder %s23, %s26
      %p35 = scmp.eq.s32.totalorder %s18, 3
      %p36 = por %p34, %p35
      %p37 = scmp.ne.s32.totalorder %s26, %s27
      %p38 = scmp.eq.s32.totalorder %s18, 0
      %p39 = por %p37, %p38
      %p40 = scmp.ne.s32.totalorder %s26, %s27
      %p41 = scmp.eq.s32.totalorder %s19, 3
      %p42 = por %p40, %p41
      %p44 = scmp.ne.s32.totalorder %s27, %s43
      %p45 = scmp.eq.s32.totalorder %s19, 0
      %p46 = por %p44, %p45
      %s47 = ssub.s32 %s13, %s20
      %p48 = scmp.eq.s32.totalorder %s47, 0
      %s50 = sadd.s32 %s49, 1
      %s51 = scalar_select %p48, %s49, %s50
      %p54 = pneg %p48
      %p55 = scmp.eq.s32.totalorder %s13, 3
      %p56 = por %p54, %p55
      %p57 = scmp.ne.s32.totalorder %s49, %s52
      %p58 = scmp.eq.s32.totalorder %s13, 0
      %p59 = por %p57, %p58
      %p60 = scmp.ne.s32.totalorder %s49, %s52
      %p61 = scmp.eq.s32.totalorder %s18, 3
      %p62 = por %p60, %p61
      %p63 = scmp.ne.s32.totalorder %s52, %s53
      %p64 = scmp.eq.s32.totalorder %s18, 0
      %p65 = por %p63, %p64
      %p66 = scmp.ne.s32.totalorder %s52, %s53
      %p67 = scmp.eq.s32.totalorder %s19, 3
      %p68 = por %p66, %p67
      %p70 = scmp.ne.s32.totalorder %s53, %s69
      %p71 = scmp.eq.s32.totalorder %s19, 0
      %p72 = por %p70, %p71
      %s74 = sadd.s32 %s73, 1
      %p77 = scmp.eq.s32.totalorder %s13, 3
      %p78 = scmp.ne.s32.totalorder %s73, %s75
      %p79 = scmp.eq.s32.totalorder %s13, 0
      %p80 = por %p78, %p79
      %p81 = scmp.ne.s32.totalorder %s73, %s75
      %p82 = scmp.eq.s32.totalorder %s18, 3
      %p83 = por %p81, %p82
      %p84 = scmp.ne.s32.totalorder %s75, %s76
      %p85 = scmp.eq.s32.totalorder %s18, 0
      %p86 = por %p84, %p85
      %p87 = scmp.ne.s32.totalorder %s75, %s76
      %p88 = scmp.eq.s32.totalorder %s19, 3
      %p89 = por %p87, %p88
      %p91 = scmp.ne.s32.totalorder %s76, %s90
      %p92 = scmp.eq.s32.totalorder %s19, 0
      %p93 = por %p91, %p92
      %s95 = sadd.s32 %s94, 1
      %p98 = scmp.eq.s32.totalorder %s13, 3
      %p99 = scmp.ne.s32.totalorder %s94, %s96
      %p100 = scmp.eq.s32.totalorder %s13, 0
      %p101 = por %p99, %p100
      %p102 = scmp.ne.s32.totalorder %s94, %s96
      %p103 = scmp.eq.s32.totalorder %s18, 3
      %p104 = por %p102, %p103
      %p105 = scmp.ne.s32.totalorder %s96, %s97
      %p106 = scmp.eq.s32.totalorder %s18, 0
      %p107 = por %p105, %p106
      %p108 = scmp.ne.s32.totalorder %s96, %s97
      %p109 = scmp.eq.s32.totalorder %s19, 3
      %p110 = por %p108, %p109
      %p112 = scmp.ne.s32.totalorder %s97, %s111
      %p113 = scmp.eq.s32.totalorder %s19, 0
      %p114 = por %p112, %p113
      %s115 = ssub.s32 %s13, %s20
      %p116 = scmp.eq.s32.totalorder %s115, 0
      %s118 = sadd.s32 %s117, 1
      %s119 = scalar_select %p116, %s117, %s118
      %p122 = pneg %p116
      %p123 = scmp.eq.s32.totalorder %s13, 3
      %p124 = por %p122, %p123
      %p125 = scmp.ne.s32.totalorder %s117, %s120
      %p126 = scmp.eq.s32.totalorder %s13, 0
      %p127 = por %p125, %p126
      %p128 = scmp.ne.s32.totalorder %s117, %s120
      %p129 = scmp.eq.s32.totalorder %s18, 3
      %p130 = por %p128, %p129
      %p131 = scmp.ne.s32.totalorder %s120, %s121
      %p132 = scmp.eq.s32.totalorder %s18, 0
      %p133 = por %p131, %p132
      %p134 = scmp.ne.s32.totalorder %s120, %s121
      %p135 = scmp.eq.s32.totalorder %s19, 3
      %p136 = por %p134, %p135
      %p138 = scmp.ne.s32.totalorder %s121, %s137
      %p139 = scmp.eq.s32.totalorder %s19, 0
      %p140 = por %p138, %p139
      %p141 = scmp.le.s32.totalorder 1, %s13
      %p142 = scmp.lt.s32.totalorder %s13, 5
      %p143 = pnand %p141, %p142
      %p144 = pneg %p143
      // Predicated region
      $region9: #{resnext_bottleneck_forward.7} parent=5 // pred_check
        _
      $region10: #{resnext_bottleneck_forward.7} parent=5 // pred_check_branch
        %146 = sbr.rel (%p143) target = $region12
      $region11: #{resnext_bottleneck_forward.7} parent=5 // pred_region
        %s147 = ssub.s32 %s13, 1
        // Predicated region
        $region13: #{resnext_bottleneck_forward.7} parent=11 // pred_check
          %p148 = pneg %p86
        $region14: #{resnext_bottleneck_forward.7} parent=11 // pred_check_branch
          %150 = sbr.rel (%p148) target = $region16
        $region15: #{resnext_bottleneck_forward.7} parent=11 // pred_region
          _
        $region16: #{resnext_bottleneck_forward.7} parent=11 // pred_fallthru
          _
        // Predicated region
        $region17: #{resnext_bottleneck_forward.7} parent=11 // pred_check
          %p151 = pneg %p107
        $region18: #{resnext_bottleneck_forward.7} parent=11 // pred_check_branch
          %153 = sbr.rel (%p151) target = $region20
        $region19: #{resnext_bottleneck_forward.7} parent=11 // pred_region
          _
        $region20: #{resnext_bottleneck_forward.7} parent=11 // pred_fallthru
          _
      $region12: #{resnext_bottleneck_forward.7} parent=5 // pred_fallthru
        _
      %p154 = scmp.lt.s32.totalorder %s13, 4
      // Predicated region
      $region21: #{resnext_bottleneck_forward.7} parent=5 // pred_check
        %p155 = pneg %p154
      $region22: #{resnext_bottleneck_forward.7} parent=5 // pred_check_branch
        %157 = sbr.rel (%p155) target = $region24
      $region23: #{resnext_bottleneck_forward.7} parent=5 // pred_region
        // Predicated region
        $region25: #{resnext_bottleneck_forward.7} parent=23 // pred_check
          %p158 = pneg %p33
        $region26: #{resnext_bottleneck_forward.7} parent=23 // pred_check_branch
          %160 = sbr.rel (%p158) target = $region28
        $region27: #{resnext_bottleneck_forward.7} parent=23 // pred_region
          %s161 = smul.u32 16, %s13
          %p162 = scmp.lt.s32.totalorder %s161, 63
          %s163 = scalar_select %p162, %s161, 63
          %s164 = smul.addr %s163, 2
          %s165 = smul.addr %s164, 8
          %s166 = scalar_lea.vmem %s0, %s165
          %s167 = smul.u32 16, %s13
        $region28: #{resnext_bottleneck_forward.7} parent=23 // pred_fallthru
          _
        // Predicated region
        $region29: #{resnext_bottleneck_forward.7} parent=23 // pred_check
          %p168 = pneg %p59
        $region30: #{resnext_bottleneck_forward.7} parent=23 // pred_check_branch
          %170 = sbr.rel (%p168) target = $region32
        $region31: #{resnext_bottleneck_forward.7} parent=23 // pred_region
          %s171 = smul.u32 16, %s13
          %p172 = scmp.lt.s32.totalorder %s171, 63
          %s173 = scalar_select %p172, %s171, 63
          %s174 = smul.addr %s173, 2
          %s175 = smul.addr %s174, 8
          %s176 = scalar_lea.vmem %s1, %s175
          %s177 = smul.u32 16, %s13
        $region32: #{resnext_bottleneck_forward.7} parent=23 // pred_fallthru
          _
      $region24: #{resnext_bottleneck_forward.7} parent=5 // pred_fallthru
        _
      %p178 = scmp.le.s32.totalorder 1, %s13
      %p179 = scmp.lt.s32.totalorder %s13, 5
      %p180 = pnand %p178, %p179
      %p181 = pneg %p180
      // Predicated region
      $region33: #{resnext_bottleneck_forward.7} parent=5 // pred_check
        _
      $region34: #{resnext_bottleneck_forward.7} parent=5 // pred_check_branch
        %183 = sbr.rel (%p180) target = $region36
      $region35: #{resnext_bottleneck_forward.7} parent=5 // pred_region
        %s184 = ssub.s32 %s13, 1
        %s185 = smul.u32 16, %s18
        %p186 = scmp.lt.s32.totalorder %s185, 63
        %s187 = scalar_select %p186, %s185, 63
        %s188 = smul.addr %s187, 2
        %s189 = smul.addr %s188, 8
        %s190 = scalar_lea.vmem %s0, %s189
        %p191 = pneg %p39
        %p192 = pneg %p36
        %s193 = smul.u32 16, %s18
        %p194 = scmp.lt.s32.totalorder %s193, 63
        %s195 = scalar_select %p194, %s193, 63
        %s196 = smul.addr %s195, 2
        %s197 = smul.addr %s196, 8
        %s198 = scalar_lea.vmem %s1, %s197
        %p199 = pneg %p65
        %p200 = pneg %p62
        %p201 = pneg %p86
        %p202 = pneg %p83
        %p203 = pneg %p107
        %p204 = pneg %p104
        %p205 = pneg %p133
        %p206 = pneg %p130
        %s207 = sand.u32 %s120, 1
        %s208 = scalar_lea.sflag [#allocation3], %s207
        %s209 = sand.u32 %s120, 1
        %s210 = smul.addr %s209, 256
        %s211 = scalar_lea.vmem [#allocation2], %s210
        %s212 = smul.u32 16, %s18
        %p213 = scmp.lt.s32.totalorder %s212, 63
        %s214 = scalar_select %p213, %s212, 63
        %s215 = smul.addr %s214, 2
        %s216 = smul.addr %s215, 8
        %s217 = scalar_lea.vmem %s0, %s216
        %s218 = smul.u32 16, %s18
        %s219 = smul.u32 16, %s18
        %p220 = scmp.lt.s32.totalorder %s219, 63
        %s221 = scalar_select %p220, %s219, 63
        %s222 = smul.addr %s221, 2
        %s223 = smul.addr %s222, 8
        %s224 = scalar_lea.vmem %s1, %s223
        %s225 = smul.u32 16, %s18
        %s226 = smul.u32 16, %s18
        %v227 = vld [vmem:[%s217] sm:$0xff]
        %v228 = vld [vmem:[%s217 + $0x8] sm:$0xff]
        %v229 = vld [vmem:[%s217 + $0x10] sm:$0xff]
        %v230 = vld [vmem:[%s217 + $0x18] sm:$0xff]
        %v231 = vld [vmem:[%s217 + $0x20] sm:$0xff]
        %v232 = vld [vmem:[%s217 + $0x28] sm:$0xff]
        %v233 = vld [vmem:[%s217 + $0x30] sm:$0xff]
        %v234 = vld [vmem:[%s217 + $0x38] sm:$0xff]
        %v235 = vld [vmem:[%s217 + $0x40] sm:$0xff]
        %v236 = vld [vmem:[%s217 + $0x48] sm:$0xff]
        %v237 = vld [vmem:[%s217 + $0x50] sm:$0xff]
        %v238 = vld [vmem:[%s217 + $0x58] sm:$0xff]
        %v239 = vld [vmem:[%s217 + $0x60] sm:$0xff]
        %v240 = vld [vmem:[%s217 + $0x68] sm:$0xff]
        %v241 = vld [vmem:[%s217 + $0x70] sm:$0xff]
        %v242 = vld [vmem:[%s217 + $0x78] sm:$0xff]
        %v243 = vld [vmem:[%s217 + $0x80] sm:$0xff]
        %v244 = vld [vmem:[%s217 + $0x88] sm:$0xff]
        %v245 = vld [vmem:[%s217 + $0x90] sm:$0xff]
        %v246 = vld [vmem:[%s217 + $0x98] sm:$0xff]
        %v247 = vld [vmem:[%s217 + $0xa0] sm:$0xff]
        %v248 = vld [vmem:[%s217 + $0xa8] sm:$0xff]
        %v249 = vld [vmem:[%s217 + $0xb0] sm:$0xff]
        %v250 = vld [vmem:[%s217 + $0xb8] sm:$0xff]
        %v251 = vld [vmem:[%s217 + $0xc0] sm:$0xff]
        %v252 = vld [vmem:[%s217 + $0xc8] sm:$0xff]
        %v253 = vld [vmem:[%s217 + $0xd0] sm:$0xff]
        %v254 = vld [vmem:[%s217 + $0xd8] sm:$0xff]
        %v255 = vld [vmem:[%s217 + $0xe0] sm:$0xff]
        %v256 = vld [vmem:[%s217 + $0xe8] sm:$0xff]
        %v257 = vld [vmem:[%s217 + $0xf0] sm:$0xff]
        %v258 = vld [vmem:[%s217 + $0xf8] sm:$0xff]
        %v259 = vld [vmem:[%s2] sm:$0x3]
        %v261 = vlaneseq
        %v262 = vshrl.u32 %v261, 7
        %v263 = vsub.s32 0, %v262
        %v264 = vrot.slane %v259, %v263
        %v265 = vlaneseq
        %v266 = vshrl.u32 %v265, 7
        %v267 = vsub.s32 1, %v266
        %v268 = vrot.slane %v259, %v267
        %v271 = vmul.f32 %v227, %v264
        %v272 = vmul.f32 %v228, %v268
        %v273 = vmul.f32 %v229, %v264
        %v274 = vmul.f32 %v230, %v268
        %v275 = vmul.f32 %v231, %v264
        %v276 = vmul.f32 %v232, %v268
        %v277 = vmul.f32 %v233, %v264
        %v278 = vmul.f32 %v234, %v268
        %v279 = vmul.f32 %v235, %v264
        %v280 = vmul.f32 %v236, %v268
        %v281 = vmul.f32 %v237, %v264
        %v282 = vmul.f32 %v238, %v268
        %v283 = vmul.f32 %v239, %v264
        %v284 = vmul.f32 %v240, %v268
        %v285 = vmul.f32 %v241, %v264
        %v286 = vmul.f32 %v242, %v268
        %v287 = vmul.f32 %v243, %v264
        %v288 = vmul.f32 %v244, %v268
        %v289 = vmul.f32 %v245, %v264
        %v290 = vmul.f32 %v246, %v268
        %v291 = vmul.f32 %v247, %v264
        %v292 = vmul.f32 %v248, %v268
        %v293 = vmul.f32 %v249, %v264
        %v294 = vmul.f32 %v250, %v268
        %v295 = vmul.f32 %v251, %v264
        %v296 = vmul.f32 %v252, %v268
        %v297 = vmul.f32 %v253, %v264
        %v298 = vmul.f32 %v254, %v268
        %v299 = vmul.f32 %v255, %v264
        %v300 = vmul.f32 %v256, %v268
        %v301 = vmul.f32 %v257, %v264
        %v302 = vmul.f32 %v258, %v268
        %v303 = vld [vmem:[%s3] sm:$0x3]
        %v305 = vlaneseq
        %v306 = vshrl.u32 %v305, 7
        %v307 = vsub.s32 0, %v306
        %v308 = vrot.slane %v303, %v307
        %v309 = vlaneseq
        %v310 = vshrl.u32 %v309, 7
        %v311 = vsub.s32 1, %v310
        %v312 = vrot.slane %v303, %v311
        %v315 = vadd.f32 %v271, %v308
        %v316 = vadd.f32 %v272, %v312
        %v317 = vadd.f32 %v273, %v308
        %v318 = vadd.f32 %v274, %v312
        %v319 = vadd.f32 %v275, %v308
        %v320 = vadd.f32 %v276, %v312
        %v321 = vadd.f32 %v277, %v308
        %v322 = vadd.f32 %v278, %v312
        %v323 = vadd.f32 %v279, %v308
        %v324 = vadd.f32 %v280, %v312
        %v325 = vadd.f32 %v281, %v308
        %v326 = vadd.f32 %v282, %v312
        %v327 = vadd.f32 %v283, %v308
        %v328 = vadd.f32 %v284, %v312
        %v329 = vadd.f32 %v285, %v308
        %v330 = vadd.f32 %v286, %v312
        %v331 = vadd.f32 %v287, %v308
        %v332 = vadd.f32 %v288, %v312
        %v333 = vadd.f32 %v289, %v308
        %v334 = vadd.f32 %v290, %v312
        %v335 = vadd.f32 %v291, %v308
        %v336 = vadd.f32 %v292, %v312
        %v337 = vadd.f32 %v293, %v308
        %v338 = vadd.f32 %v294, %v312
        %v339 = vadd.f32 %v295, %v308
        %v340 = vadd.f32 %v296, %v312
        %v341 = vadd.f32 %v297, %v308
        %v342 = vadd.f32 %v298, %v312
        %v343 = vadd.f32 %v299, %v308
        %v344 = vadd.f32 %v300, %v312
        %v345 = vadd.f32 %v301, %v308
        %v346 = vadd.f32 %v302, %v312
        %v347 = vld [vmem:[%s224] sm:$0xff]
        %v348 = vld [vmem:[%s224 + $0x8] sm:$0xff]
        %v349 = vld [vmem:[%s224 + $0x10] sm:$0xff]
        %v350 = vld [vmem:[%s224 + $0x18] sm:$0xff]
        %v351 = vld [vmem:[%s224 + $0x20] sm:$0xff]
        %v352 = vld [vmem:[%s224 + $0x28] sm:$0xff]
        %v353 = vld [vmem:[%s224 + $0x30] sm:$0xff]
        %v354 = vld [vmem:[%s224 + $0x38] sm:$0xff]
        %v355 = vld [vmem:[%s224 + $0x40] sm:$0xff]
        %v356 = vld [vmem:[%s224 + $0x48] sm:$0xff]
        %v357 = vld [vmem:[%s224 + $0x50] sm:$0xff]
        %v358 = vld [vmem:[%s224 + $0x58] sm:$0xff]
        %v359 = vld [vmem:[%s224 + $0x60] sm:$0xff]
        %v360 = vld [vmem:[%s224 + $0x68] sm:$0xff]
        %v361 = vld [vmem:[%s224 + $0x70] sm:$0xff]
        %v362 = vld [vmem:[%s224 + $0x78] sm:$0xff]
        %v363 = vld [vmem:[%s224 + $0x80] sm:$0xff]
        %v364 = vld [vmem:[%s224 + $0x88] sm:$0xff]
        %v365 = vld [vmem:[%s224 + $0x90] sm:$0xff]
        %v366 = vld [vmem:[%s224 + $0x98] sm:$0xff]
        %v367 = vld [vmem:[%s224 + $0xa0] sm:$0xff]
        %v368 = vld [vmem:[%s224 + $0xa8] sm:$0xff]
        %v369 = vld [vmem:[%s224 + $0xb0] sm:$0xff]
        %v370 = vld [vmem:[%s224 + $0xb8] sm:$0xff]
        %v371 = vld [vmem:[%s224 + $0xc0] sm:$0xff]
        %v372 = vld [vmem:[%s224 + $0xc8] sm:$0xff]
        %v373 = vld [vmem:[%s224 + $0xd0] sm:$0xff]
        %v374 = vld [vmem:[%s224 + $0xd8] sm:$0xff]
        %v375 = vld [vmem:[%s224 + $0xe0] sm:$0xff]
        %v376 = vld [vmem:[%s224 + $0xe8] sm:$0xff]
        %v377 = vld [vmem:[%s224 + $0xf0] sm:$0xff]
        %v378 = vld [vmem:[%s224 + $0xf8] sm:$0xff]
        %v379 = vadd.f32 %v315, %v347
        %v380 = vadd.f32 %v316, %v348
        %v381 = vadd.f32 %v317, %v349
        %v382 = vadd.f32 %v318, %v350
        %v383 = vadd.f32 %v319, %v351
        %v384 = vadd.f32 %v320, %v352
        %v385 = vadd.f32 %v321, %v353
        %v386 = vadd.f32 %v322, %v354
        %v387 = vadd.f32 %v323, %v355
        %v388 = vadd.f32 %v324, %v356
        %v389 = vadd.f32 %v325, %v357
        %v390 = vadd.f32 %v326, %v358
        %v391 = vadd.f32 %v327, %v359
        %v392 = vadd.f32 %v328, %v360
        %v393 = vadd.f32 %v329, %v361
        %v394 = vadd.f32 %v330, %v362
        %v395 = vadd.f32 %v331, %v363
        %v396 = vadd.f32 %v332, %v364
        %v397 = vadd.f32 %v333, %v365
        %v398 = vadd.f32 %v334, %v366
        %v399 = vadd.f32 %v335, %v367
        %v400 = vadd.f32 %v336, %v368
        %v401 = vadd.f32 %v337, %v369
        %v402 = vadd.f32 %v338, %v370
        %v403 = vadd.f32 %v339, %v371
        %v404 = vadd.f32 %v340, %v372
        %v405 = vadd.f32 %v341, %v373
        %v406 = vadd.f32 %v342, %v374
        %v407 = vadd.f32 %v343, %v375
        %v408 = vadd.f32 %v344, %v376
        %v409 = vadd.f32 %v345, %v377
        %v410 = vadd.f32 %v346, %v378
        %v411 = vmax.f32 %v379, 0.0
        %v412 = vmax.f32 %v380, 0.0
        %v413 = vmax.f32 %v381, 0.0
        %v414 = vmax.f32 %v382, 0.0
        %v415 = vmax.f32 %v383, 0.0
        %v416 = vmax.f32 %v384, 0.0
        %v417 = vmax.f32 %v385, 0.0
        %v418 = vmax.f32 %v386, 0.0
        %v419 = vmax.f32 %v387, 0.0
        %v420 = vmax.f32 %v388, 0.0
        %v421 = vmax.f32 %v389, 0.0
        %v422 = vmax.f32 %v390, 0.0
        %v423 = vmax.f32 %v391, 0.0
        %v424 = vmax.f32 %v392, 0.0
        %v425 = vmax.f32 %v393, 0.0
        %v426 = vmax.f32 %v394, 0.0
        %v427 = vmax.f32 %v395, 0.0
        %v428 = vmax.f32 %v396, 0.0
        %v429 = vmax.f32 %v397, 0.0
        %v430 = vmax.f32 %v398, 0.0
        %v431 = vmax.f32 %v399, 0.0
        %v432 = vmax.f32 %v400, 0.0
        %v433 = vmax.f32 %v401, 0.0
        %v434 = vmax.f32 %v402, 0.0
        %v435 = vmax.f32 %v403, 0.0
        %v436 = vmax.f32 %v404, 0.0
        %v437 = vmax.f32 %v405, 0.0
        %v438 = vmax.f32 %v406, 0.0
        %v439 = vmax.f32 %v407, 0.0
        %v440 = vmax.f32 %v408, 0.0
        %v441 = vmax.f32 %v409, 0.0
        %v442 = vmax.f32 %v410, 0.0
        %443 = vst [vmem:[%s211] sm:$0xff] %v411
        %444 = vst [vmem:[%s211 + $0x8] sm:$0xff] %v412
        %445 = vst [vmem:[%s211 + $0x10] sm:$0xff] %v413
        %446 = vst [vmem:[%s211 + $0x18] sm:$0xff] %v414
        %447 = vst [vmem:[%s211 + $0x20] sm:$0xff] %v415
        %448 = vst [vmem:[%s211 + $0x28] sm:$0xff] %v416
        %449 = vst [vmem:[%s211 + $0x30] sm:$0xff] %v417
        %450 = vst [vmem:[%s211 + $0x38] sm:$0xff] %v418
        %451 = vst [vmem:[%s211 + $0x40] sm:$0xff] %v419
        %452 = vst [vmem:[%s211 + $0x48] sm:$0xff] %v420
        %453 = vst [vmem:[%s211 + $0x50] sm:$0xff] %v421
        %454 = vst [vmem:[%s211 + $0x58] sm:$0xff] %v422
        %455 = vst [vmem:[%s211 + $0x60] sm:$0xff] %v423
        %456 = vst [vmem:[%s211 + $0x68] sm:$0xff] %v424
        %457 = vst [vmem:[%s211 + $0x70] sm:$0xff] %v425
        %458 = vst [vmem:[%s211 + $0x78] sm:$0xff] %v426
        %459 = vst [vmem:[%s211 + $0x80] sm:$0xff] %v427
        %460 = vst [vmem:[%s211 + $0x88] sm:$0xff] %v428
        %461 = vst [vmem:[%s211 + $0x90] sm:$0xff] %v429
        %462 = vst [vmem:[%s211 + $0x98] sm:$0xff] %v430
        %463 = vst [vmem:[%s211 + $0xa0] sm:$0xff] %v431
        %464 = vst [vmem:[%s211 + $0xa8] sm:$0xff] %v432
        %465 = vst [vmem:[%s211 + $0xb0] sm:$0xff] %v433
        %466 = vst [vmem:[%s211 + $0xb8] sm:$0xff] %v434
        %467 = vst [vmem:[%s211 + $0xc0] sm:$0xff] %v435
        %468 = vst [vmem:[%s211 + $0xc8] sm:$0xff] %v436
        %469 = vst [vmem:[%s211 + $0xd0] sm:$0xff] %v437
        %470 = vst [vmem:[%s211 + $0xd8] sm:$0xff] %v438
        %471 = vst [vmem:[%s211 + $0xe0] sm:$0xff] %v439
        %472 = vst [vmem:[%s211 + $0xe8] sm:$0xff] %v440
        %473 = vst [vmem:[%s211 + $0xf0] sm:$0xff] %v441
        %474 = vst [vmem:[%s211 + $0xf8] sm:$0xff] %v442
        %s475 = sand.u32 %s120, 1
        %s476 = scalar_lea.sflag [#allocation3], %s475
        %s477 = sand.u32 %s120, 1
        %s478 = smul.addr %s477, 256
        %s479 = scalar_lea.vmem [#allocation2], %s478
        // Predicated region
        $region37: #{resnext_bottleneck_forward.7} parent=35 // pred_check
          %p480 = pneg %p130
        $region38: #{resnext_bottleneck_forward.7} parent=35 // pred_check_branch
          %482 = sbr.rel (%p480) target = $region40
        $region39: #{resnext_bottleneck_forward.7} parent=35 // pred_region
          %s483 = smul.u32 16, %s18
          %s485 = ssub.s32 4096, 4096
          %486 = vsyncadd %s476, %s485
          %s487 = smul.addr %s483, 2
          %s488 = smul.addr %s487, 128
          %s489 = scalar_lea.hbm %s4, %s488
          %s490 = sshll.u32 %s479, 4
          %s491 = int_to_ptr.vmem [resolvable:$true] %s490
          %496 = dma.vmem_to_hbm [thread:$0]  %s491, 4096, %s489, %s476, 256, 256, 16
        $region40: #{resnext_bottleneck_forward.7} parent=35 // pred_fallthru
          _
      $region36: #{resnext_bottleneck_forward.7} parent=5 // pred_fallthru
        _
      %p497 = scmp.le.s32.totalorder 2, %s13
      // Predicated region
      $region41: #{resnext_bottleneck_forward.7} parent=5 // pred_check
        %p498 = pneg %p497
      $region42: #{resnext_bottleneck_forward.7} parent=5 // pred_check_branch
        %500 = sbr.rel (%p498) target = $region44
      $region43: #{resnext_bottleneck_forward.7} parent=5 // pred_region
        %s501 = ssub.s32 %s13, 2
        // Predicated region
        $region45: #{resnext_bottleneck_forward.7} parent=43 // pred_check
          %p502 = pneg %p136
        $region46: #{resnext_bottleneck_forward.7} parent=43 // pred_check_branch
          %504 = sbr.rel (%p502) target = $region48
        $region47: #{resnext_bottleneck_forward.7} parent=43 // pred_region
          %s505 = sand.u32 %s121, 1
          %s506 = scalar_lea.sflag [#allocation3], %s505
          %s507 = sand.u32 %s121, 1
          %s508 = smul.addr %s507, 256
          %s509 = scalar_lea.vmem [#allocation2], %s508
          %510 = dma.done %s506, 4096
        $region48: #{resnext_bottleneck_forward.7} parent=43 // pred_fallthru
          _
      $region44: #{resnext_bottleneck_forward.7} parent=5 // pred_fallthru
        _
    $region6: #{resnext_bottleneck_forward.7} parent=1 // loop_footer
      %s17 = sadd.s32 1, %s13
    $region7: #{resnext_bottleneck_forward.7} parent=1 // loop_footer_branch
      %12 = sbr.rel target = $region3
    $region8: #{resnext_bottleneck_forward.7} parent=1 // loop_exit
      _
    %511 = vsyncpa [#allocation3], 1
    %s512 = scalar_lea.sflag [#allocation3], 1
    %513 = vsyncpa %s512, 1

// kernel: resnext_bottleneck_forward.4
$region0: #{resnext_bottleneck_forward.4}
  #allocation0 [shape = 'u32[]', space=smem, size = 0x4, offset = 0x4, fixed_abs, tag = 'smem constant byte address 0x4 - core index']
  #allocation1 [shape = 'u32[144,128]{1,0:T(1,128)}', space=vmem, size = 0x12000, scoped, tag = 'internal scratch']
  %s0 = inlined_call_operand.hbm [shape: f32[512,256], index: 0, kind: input, shape index: {}]
  %s1 = inlined_call_operand.hbm [shape: bf16[256,128], index: 1, kind: input, shape index: {}]
  %s2 = inlined_call_operand.vmem [shape: f32[512,128], index: 2, kind: output, shape index: {0}]
  %s3 = inlined_call_operand.vmem [shape: f32[4,1,128], index: 3, kind: output, shape index: {1}]
  %s4 = inlined_call_operand.vmem [shape: f32[4,1,128], index: 4, kind: output, shape index: {2}]
  %5 = xla_tuple %s2, %s3, %s4
  %s6 = sld [smem:[#allocation0]]
  $region65: #{resnext_bottleneck_forward.4} parent=0
    _
  %s8 = ssub.s32 1, %s6
  %s9 = scalar_select 0, %s8, %s6
  $region1: #{resnext_bottleneck_forward.4} parent=0
    #allocation2 [shape = 'u8[262144]{0}', space=vmem, size = 0x40000, scoped, tag = 'input window, operand 0']
    #allocation3 [shape = 's32[2]{0}', space=sflag, size = 0x8, scoped, tag = 'scoped memory for resnext_bottleneck_forward.4']
    #allocation4 [shape = 'u8[65536]{0}', space=vmem, size = 0x10000, scoped, tag = 'input window, operand 1, single buffered']
    #allocation5 [shape = 's32[1]{0}', space=sflag, size = 0x4, scoped, tag = 'scoped memory for resnext_bottleneck_forward.4']
    %10 = vsyncpa [#allocation3], 0
    %s11 = scalar_lea.sflag [#allocation3], 1
    %12 = vsyncpa %s11, 0
    %13 = vsyncpa [#allocation5], 0
    loop: start=0, step=1, limit=6
    $region2: #{resnext_bottleneck_forward.4} parent=1 // loop_pre_header
      _
    $region3: #{resnext_bottleneck_forward.4} parent=1 // loop_header
      %s15 = sphi 0, %s19
      %p16 = scmp.ge.s32.totalorder %s15, 6
      %s25 = sphi 0, %s27
      %s28 = sphi 0, %s25
      %s29 = sphi 0, %s28
      %s45 = sphi 0, %s29
      %s49 = sphi 0, %s49
      %s51 = sphi 0, %s49
      %s52 = sphi 0, %s51
      %s66 = sphi 0, %s52
      %s72 = sphi 0, %s74
      %s75 = sphi 0, %s72
      %s76 = sphi 0, %s75
      %s92 = sphi 0, %s76
      %s98 = sphi 0, %s100
      %s101 = sphi 0, %s98
      %s102 = sphi 0, %s101
      %s118 = sphi 0, %s102
      %s124 = sphi 0, %s126
      %s127 = sphi 0, %s124
      %s128 = sphi 0, %s127
      %s144 = sphi 0, %s128
    $region4: #{resnext_bottleneck_forward.4} parent=1 // loop_header_branch
      %18 = sbr.rel (%p16) target = $region8
    $region5: #{resnext_bottleneck_forward.4} parent=1 // loop_body
      %s20 = ssub.s32 %s15, 1
      %s21 = ssub.s32 %s15, 2
      %s22 = sadd.s32 %s15, 1
      %s23 = ssub.s32 %s15, %s22
      %p24 = scmp.eq.s32.totalorder %s23, 0
      %s26 = sadd.s32 %s25, 1
      %s27 = scalar_select %p24, %s25, %s26
      %p30 = pneg %p24
      %p31 = scmp.eq.s32.totalorder %s15, 3
      %p32 = por %p30, %p31
      %p33 = scmp.ne.s32.totalorder %s25, %s28
      %p34 = scmp.eq.s32.totalorder %s15, 0
      %p35 = por %p33, %p34
      %p36 = scmp.ne.s32.totalorder %s25, %s28
      %p37 = scmp.eq.s32.totalorder %s20, 3
      %p38 = por %p36, %p37
      %p39 = scmp.ne.s32.totalorder %s28, %s29
      %p40 = scmp.eq.s32.totalorder %s20, 0
      %p41 = por %p39, %p40
      %p42 = scmp.ne.s32.totalorder %s28, %s29
      %p43 = scmp.eq.s32.totalorder %s21, 3
      %p44 = por %p42, %p43
      %p46 = scmp.ne.s32.totalorder %s29, %s45
      %p47 = scmp.eq.s32.totalorder %s21, 0
      %p48 = por %p46, %p47
      %s50 = sadd.s32 %s49, 1
      %p53 = scmp.eq.s32.totalorder %s15, 3
      %p54 = scmp.ne.s32.totalorder %s49, %s51
      %p55 = scmp.eq.s32.totalorder %s15, 0
      %p56 = por %p54, %p55
      %p57 = scmp.ne.s32.totalorder %s49, %s51
      %p58 = scmp.eq.s32.totalorder %s20, 3
      %p59 = por %p57, %p58
      %p60 = scmp.ne.s32.totalorder %s51, %s52
      %p61 = scmp.eq.s32.totalorder %s20, 0
      %p62 = por %p60, %p61
      %p63 = scmp.ne.s32.totalorder %s51, %s52
      %p64 = scmp.eq.s32.totalorder %s21, 3
      %p65 = por %p63, %p64
      %p67 = scmp.ne.s32.totalorder %s52, %s66
      %p68 = scmp.eq.s32.totalorder %s21, 0
      %p69 = por %p67, %p68
      %s70 = ssub.s32 %s15, %s22
      %p71 = scmp.eq.s32.totalorder %s70, 0
      %s73 = sadd.s32 %s72, 1
      %s74 = scalar_select %p71, %s72, %s73
      %p77 = pneg %p71
      %p78 = scmp.eq.s32.totalorder %s15, 3
      %p79 = por %p77, %p78
      %p80 = scmp.ne.s32.totalorder %s72, %s75
      %p81 = scmp.eq.s32.totalorder %s15, 0
      %p82 = por %p80, %p81
      %p83 = scmp.ne.s32.totalorder %s72, %s75
      %p84 = scmp.eq.s32.totalorder %s20, 3
      %p85 = por %p83, %p84
      %p86 = scmp.ne.s32.totalorder %s75, %s76
      %p87 = scmp.eq.s32.totalorder %s20, 0
      %p88 = por %p86, %p87
      %p89 = scmp.ne.s32.totalorder %s75, %s76
      %p90 = scmp.eq.s32.totalorder %s21, 3
      %p91 = por %p89, %p90
      %p93 = scmp.ne.s32.totalorder %s76, %s92
      %p94 = scmp.eq.s32.totalorder %s21, 0
      %p95 = por %p93, %p94
      %s96 = ssub.s32 %s15, %s22
      %p97 = scmp.eq.s32.totalorder %s96, 0
      %s99 = sadd.s32 %s98, 1
      %s100 = scalar_select %p97, %s98, %s99
      %p103 = pneg %p97
      %p104 = scmp.eq.s32.totalorder %s15, 3
      %p105 = por %p103, %p104
      %p106 = scmp.ne.s32.totalorder %s98, %s101
      %p107 = scmp.eq.s32.totalorder %s15, 0
      %p108 = por %p106, %p107
      %p109 = scmp.ne.s32.totalorder %s98, %s101
      %p110 = scmp.eq.s32.totalorder %s20, 3
      %p111 = por %p109, %p110
      %p112 = scmp.ne.s32.totalorder %s101, %s102
      %p113 = scmp.eq.s32.totalorder %s20, 0
      %p114 = por %p112, %p113
      %p115 = scmp.ne.s32.totalorder %s101, %s102
      %p116 = scmp.eq.s32.totalorder %s21, 3
      %p117 = por %p115, %p116
      %p119 = scmp.ne.s32.totalorder %s102, %s118
      %p120 = scmp.eq.s32.totalorder %s21, 0
      %p121 = por %p119, %p120
      %s122 = ssub.s32 %s15, %s22
      %p123 = scmp.eq.s32.totalorder %s122, 0
      %s125 = sadd.s32 %s124, 1
      %s126 = scalar_select %p123, %s124, %s125
      %p129 = pneg %p123
      %p130 = scmp.eq.s32.totalorder %s15, 3
      %p131 = por %p129, %p130
      %p132 = scmp.ne.s32.totalorder %s124, %s127
      %p133 = scmp.eq.s32.totalorder %s15, 0
      %p134 = por %p132, %p133
      %p135 = scmp.ne.s32.totalorder %s124, %s127
      %p136 = scmp.eq.s32.totalorder %s20, 3
      %p137 = por %p135, %p136
      %p138 = scmp.ne.s32.totalorder %s127, %s128
      %p139 = scmp.eq.s32.totalorder %s20, 0
      %p140 = por %p138, %p139
      %p141 = scmp.ne.s32.totalorder %s127, %s128
      %p142 = scmp.eq.s32.totalorder %s21, 3
      %p143 = por %p141, %p142
      %p145 = scmp.ne.s32.totalorder %s128, %s144
      %p146 = scmp.eq.s32.totalorder %s21, 0
      %p147 = por %p145, %p146
      %p148 = scmp.le.s32.totalorder 1, %s15
      %p149 = scmp.lt.s32.totalorder %s15, 5
      %p150 = pnand %p148, %p149
      %p151 = pneg %p150
      // Predicated region
      $region9: #{resnext_bottleneck_forward.4} parent=5 // pred_check
        _
      $region10: #{resnext_bottleneck_forward.4} parent=5 // pred_check_branch
        %153 = sbr.rel (%p150) target = $region12
      $region11: #{resnext_bottleneck_forward.4} parent=5 // pred_region
        %s154 = ssub.s32 %s15, 1
        // Predicated region
        $region13: #{resnext_bottleneck_forward.4} parent=11 // pred_check
          %p155 = pneg %p62
        $region14: #{resnext_bottleneck_forward.4} parent=11 // pred_check_branch
          %157 = sbr.rel (%p155) target = $region16
        $region15: #{resnext_bottleneck_forward.4} parent=11 // pred_region
          %s159 = ssub.s32 2048, 2048
          %160 = vsyncadd [#allocation5], %s159
          %s161 = sshll.u32 [#allocation4], 4
          %s162 = int_to_ptr.vmem [resolvable:$true] %s161
          %167 = dma.hbm_to_vmem [thread:$0]  %s1, 2048, %s162, [#allocation5], 64, 64, 4
        $region16: #{resnext_bottleneck_forward.4} parent=11 // pred_fallthru
          _
      $region12: #{resnext_bottleneck_forward.4} parent=5 // pred_fallthru
        _
      %p168 = scmp.lt.s32.totalorder %s15, 4
      // Predicated region
      $region17: #{resnext_bottleneck_forward.4} parent=5 // pred_check
        %p169 = pneg %p168
      $region18: #{resnext_bottleneck_forward.4} parent=5 // pred_check_branch
        %171 = sbr.rel (%p169) target = $region20
      $region19: #{resnext_bottleneck_forward.4} parent=5 // pred_region
        // Predicated region
        $region21: #{resnext_bottleneck_forward.4} parent=19 // pred_check
          %p172 = pneg %p35
        $region22: #{resnext_bottleneck_forward.4} parent=19 // pred_check_branch
          %174 = sbr.rel (%p172) target = $region24
        $region23: #{resnext_bottleneck_forward.4} parent=19 // pred_region
          %s175 = sand.u32 %s25, 1
          %s176 = scalar_lea.sflag [#allocation3], %s175
          %s177 = sand.u32 %s25, 1
          %s178 = smul.addr %s177, 256
          %s179 = scalar_lea.vmem [#allocation2], %s178
          %s180 = smul.u32 16, %s15
          %s182 = ssub.s32 4096, 4096
          %183 = vsyncadd %s176, %s182
          %s184 = smul.addr %s180, 2
          %s185 = smul.addr %s184, 128
          %s186 = scalar_lea.hbm %s0, %s185
          %s187 = sshll.u32 %s179, 4
          %s188 = int_to_ptr.vmem [resolvable:$true] %s187
          %193 = dma.hbm_to_vmem [thread:$0]  %s186, 4096, %s188, %s176, 256, 256, 16
        $region24: #{resnext_bottleneck_forward.4} parent=19 // pred_fallthru
          _
      $region20: #{resnext_bottleneck_forward.4} parent=5 // pred_fallthru
        _
      %p194 = scmp.le.s32.totalorder 1, %s15
      %p195 = scmp.lt.s32.totalorder %s15, 5
      %p196 = pnand %p194, %p195
      %p197 = pneg %p196
      // Predicated region
      $region25: #{resnext_bottleneck_forward.4} parent=5 // pred_check
        _
      $region26: #{resnext_bottleneck_forward.4} parent=5 // pred_check_branch
        %199 = sbr.rel (%p196) target = $region28
      $region27: #{resnext_bottleneck_forward.4} parent=5 // pred_region
        %s200 = ssub.s32 %s15, 1
        %s201 = sand.u32 %s28, 1
        %s202 = scalar_lea.sflag [#allocation3], %s201
        %s203 = sand.u32 %s28, 1
        %s204 = smul.addr %s203, 256
        %s205 = scalar_lea.vmem [#allocation2], %s204
        // Predicated region
        $region29: #{resnext_bottleneck_forward.4} parent=27 // pred_check
          %p206 = pneg %p41
        $region30: #{resnext_bottleneck_forward.4} parent=27 // pred_check_branch
          %208 = sbr.rel (%p206) target = $region32
        $region31: #{resnext_bottleneck_forward.4} parent=27 // pred_region
          %209 = dma.done %s202, 4096
        $region32: #{resnext_bottleneck_forward.4} parent=27 // pred_fallthru
          _
        // Predicated region
        $region33: #{resnext_bottleneck_forward.4} parent=27 // pred_check
          %p210 = pneg %p62
        $region34: #{resnext_bottleneck_forward.4} parent=27 // pred_check_branch
          %212 = sbr.rel (%p210) target = $region36
        $region35: #{resnext_bottleneck_forward.4} parent=27 // pred_region
          %213 = dma.done [#allocation5], 2048
        $region36: #{resnext_bottleneck_forward.4} parent=27 // pred_fallthru
          _
        %s214 = sand.u32 %s28, 1
        %s215 = scalar_lea.sflag [#allocation3], %s214
        %s216 = sand.u32 %s28, 1
        %s217 = smul.addr %s216, 256
        %s218 = scalar_lea.vmem [#allocation2], %s217
        %p219 = pneg %p41
        %p220 = pneg %p38
        %p221 = pneg %p62
        %p222 = pneg %p59
        %p223 = pneg %p88
        %p224 = pneg %p85
        %s225 = smul.u32 16, %s20
        %p226 = scmp.lt.s32.totalorder %s225, 63
        %s227 = scalar_select %p226, %s225, 63
        %s228 = smul.addr %s227, 8
        %s229 = scalar_lea.vmem %s2, %s228
        %p230 = pneg %p114
        %p231 = pneg %p111
        %p232 = scmp.lt.s32.totalorder %s20, 3
        %s233 = scalar_select %p232, %s20, 3
        %s234 = scalar_lea.vmem %s3, %s233
        %p235 = pneg %p140
        %p236 = pneg %p137
        %p237 = scmp.lt.s32.totalorder %s20, 3
        %s238 = scalar_select %p237, %s20, 3
        %s239 = scalar_lea.vmem %s4, %s238
        %s240 = smul.u32 16, %s20
        %s241 = smul.u32 16, %s20
        %p242 = scmp.lt.s32.totalorder %s241, 63
        %s243 = scalar_select %p242, %s241, 63
        %s244 = smul.addr %s243, 8
        %s245 = scalar_lea.vmem %s2, %s244
        %s246 = smul.u32 16, %s20
        %p247 = scmp.lt.s32.totalorder %s20, 3
        %s248 = scalar_select %p247, %s20, 3
        %s249 = scalar_lea.vmem %s3, %s248
        %p250 = scmp.lt.s32.totalorder %s20, 3
        %s251 = scalar_select %p250, %s20, 3
        %s252 = scalar_lea.vmem %s4, %s251
        %v254 = vld [vmem:[%s205] sm:$0xff]
        %v255 = vld [vmem:[%s205 + $0x8] sm:$0xff]
        %v256 = vld [vmem:[%s205 + $0x10] sm:$0xff]
        %v257 = vld [vmem:[%s205 + $0x18] sm:$0xff]
        %v258 = vld [vmem:[%s205 + $0x20] sm:$0xff]
        %v259 = vld [vmem:[%s205 + $0x28] sm:$0xff]
        %v260 = vld [vmem:[%s205 + $0x30] sm:$0xff]
        %v261 = vld [vmem:[%s205 + $0x38] sm:$0xff]
        %v262 = vld [vmem:[%s205 + $0x40] sm:$0xff]
        %v263 = vld [vmem:[%s205 + $0x48] sm:$0xff]
        %v264 = vld [vmem:[%s205 + $0x50] sm:$0xff]
        %v265 = vld [vmem:[%s205 + $0x58] sm:$0xff]
        %v266 = vld [vmem:[%s205 + $0x60] sm:$0xff]
        %v267 = vld [vmem:[%s205 + $0x68] sm:$0xff]
        %v268 = vld [vmem:[%s205 + $0x70] sm:$0xff]
        %v269 = vld [vmem:[%s205 + $0x78] sm:$0xff]
        %v270 = vld [vmem:[%s205 + $0x80] sm:$0xff]
        %v271 = vld [vmem:[%s205 + $0x88] sm:$0xff]
        %v272 = vld [vmem:[%s205 + $0x90] sm:$0xff]
        %v273 = vld [vmem:[%s205 + $0x98] sm:$0xff]
        %v274 = vld [vmem:[%s205 + $0xa0] sm:$0xff]
        %v275 = vld [vmem:[%s205 + $0xa8] sm:$0xff]
        %v276 = vld [vmem:[%s205 + $0xb0] sm:$0xff]
        %v277 = vld [vmem:[%s205 + $0xb8] sm:$0xff]
        %v278 = vld [vmem:[%s205 + $0xc0] sm:$0xff]
        %v279 = vld [vmem:[%s205 + $0xc8] sm:$0xff]
        %v280 = vld [vmem:[%s205 + $0xd0] sm:$0xff]
        %v281 = vld [vmem:[%s205 + $0xd8] sm:$0xff]
        %v282 = vld [vmem:[%s205 + $0xe0] sm:$0xff]
        %v283 = vld [vmem:[%s205 + $0xe8] sm:$0xff]
        %v284 = vld [vmem:[%s205 + $0xf0] sm:$0xff]
        %v285 = vld [vmem:[%s205 + $0xf8] sm:$0xff]
        %v286 = vpack.c.bf16 %v256, %v254
        %v287 = vpack.c.bf16 %v257, %v255
        %v288 = vpack.c.bf16 %v260, %v258
        %v289 = vpack.c.bf16 %v261, %v259
        %v290 = vpack.c.bf16 %v264, %v262
        %v291 = vpack.c.bf16 %v265, %v263
        %v292 = vpack.c.bf16 %v268, %v266
        %v293 = vpack.c.bf16 %v269, %v267
        %v294 = vpack.c.bf16 %v272, %v270
        %v295 = vpack.c.bf16 %v273, %v271
        %v296 = vpack.c.bf16 %v276, %v274
        %v297 = vpack.c.bf16 %v277, %v275
        %v298 = vpack.c.bf16 %v280, %v278
        %v299 = vpack.c.bf16 %v281, %v279
        %v300 = vpack.c.bf16 %v284, %v282
        %v301 = vpack.c.bf16 %v285, %v283
        %v302 = vld [vmem:[#allocation4] sm:$0xf]
        %v303 = vld [vmem:[#allocation4 + $0x4] sm:$0xf]
        %v304 = vld [vmem:[#allocation4 + $0x8] sm:$0xf]
        %v305 = vld [vmem:[#allocation4 + $0xc] sm:$0xf]
        %v306 = vld [vmem:[#allocation4 + $0x10] sm:$0xf]
        %v307 = vld [vmem:[#allocation4 + $0x14] sm:$0xf]
        %v308 = vld [vmem:[#allocation4 + $0x18] sm:$0xf]
        %v309 = vld [vmem:[#allocation4 + $0x1c] sm:$0xf]
        %v310 = vld [vmem:[#allocation4 + $0x20] sm:$0xf]
        %v311 = vld [vmem:[#allocation4 + $0x24] sm:$0xf]
        %v312 = vld [vmem:[#allocation4 + $0x28] sm:$0xf]
        %v313 = vld [vmem:[#allocation4 + $0x2c] sm:$0xf]
        %v314 = vld [vmem:[#allocation4 + $0x30] sm:$0xf]
        %v315 = vld [vmem:[#allocation4 + $0x34] sm:$0xf]
        %v316 = vld [vmem:[#allocation4 + $0x38] sm:$0xf]
        %v317 = vld [vmem:[#allocation4 + $0x3c] sm:$0xf]
        %v318 = vld [vmem:[#allocation4 + $0x40] sm:$0xf]
        %v319 = vld [vmem:[#allocation4 + $0x44] sm:$0xf]
        %v320 = vld [vmem:[#allocation4 + $0x48] sm:$0xf]
        %v321 = vld [vmem:[#allocation4 + $0x4c] sm:$0xf]
        %v322 = vld [vmem:[#allocation4 + $0x50] sm:$0xf]
        %v323 = vld [vmem:[#allocation4 + $0x54] sm:$0xf]
        %v324 = vld [vmem:[#allocation4 + $0x58] sm:$0xf]
        %v325 = vld [vmem:[#allocation4 + $0x5c] sm:$0xf]
        %v326 = vld [vmem:[#allocation4 + $0x60] sm:$0xf]
        %v327 = vld [vmem:[#allocation4 + $0x64] sm:$0xf]
        %v328 = vld [vmem:[#allocation4 + $0x68] sm:$0xf]
        %v329 = vld [vmem:[#allocation4 + $0x6c] sm:$0xf]
        %v330 = vld [vmem:[#allocation4 + $0x70] sm:$0xf]
        %v331 = vld [vmem:[#allocation4 + $0x74] sm:$0xf]
        %v332 = vld [vmem:[#allocation4 + $0x78] sm:$0xf]
        %v333 = vld [vmem:[#allocation4 + $0x7c] sm:$0xf]
        %v366 = vunpack.c.l.b16 %v302
        %v367 = vunpack.c.l.b16 %v303
        %v368 = vunpack.c.l.b16 %v304
        %v369 = vunpack.c.l.b16 %v305
        %v370 = vunpack.c.l.b16 %v306
        %v371 = vunpack.c.l.b16 %v307
        %v372 = vunpack.c.l.b16 %v308
        %v373 = vunpack.c.l.b16 %v309
        %v374 = vunpack.c.l.b16 %v310
        %v375 = vunpack.c.l.b16 %v311
        %v376 = vunpack.c.l.b16 %v312
        %v377 = vunpack.c.l.b16 %v313
        %v378 = vunpack.c.l.b16 %v314
        %v379 = vunpack.c.l.b16 %v315
        %v380 = vunpack.c.l.b16 %v316
        %v381 = vunpack.c.l.b16 %v317
        %v382 = vunpack.c.l.b16 %v318
        %v383 = vunpack.c.l.b16 %v319
        %v384 = vunpack.c.l.b16 %v320
        %v385 = vunpack.c.l.b16 %v321
        %v386 = vunpack.c.l.b16 %v322
        %v387 = vunpack.c.l.b16 %v323
        %v388 = vunpack.c.l.b16 %v324
        %v389 = vunpack.c.l.b16 %v325
        %v390 = vunpack.c.l.b16 %v326
        %v391 = vunpack.c.l.b16 %v327
        %v392 = vunpack.c.l.b16 %v328
        %v393 = vunpack.c.l.b16 %v329
        %v394 = vunpack.c.l.b16 %v330
        %v395 = vunpack.c.l.b16 %v331
        %v396 = vunpack.c.l.b16 %v332
        %v397 = vunpack.c.l.b16 %v333
        %v398 = vpack.c.b16 %v367, %v366
        %v399 = vpack.c.b16 %v369, %v368
        %v400 = vpack.c.b16 %v371, %v370
        %v401 = vpack.c.b16 %v373, %v372
        %v402 = vpack.c.b16 %v375, %v374
        %v403 = vpack.c.b16 %v377, %v376
        %v404 = vpack.c.b16 %v379, %v378
        %v405 = vpack.c.b16 %v381, %v380
        %v406 = vpack.c.b16 %v383, %v382
        %v407 = vpack.c.b16 %v385, %v384
        %v408 = vpack.c.b16 %v387, %v386
        %v409 = vpack.c.b16 %v389, %v388
        %v410 = vpack.c.b16 %v391, %v390
        %v411 = vpack.c.b16 %v393, %v392
        %v412 = vpack.c.b16 %v395, %v394
        %v413 = vpack.c.b16 %v397, %v396
        %430 = vmatprep.subr.bf16.mxu0 0
        %431 = vmatpush1.bf16.msra.mxu0 %v405
        %432 = vmatprep.subr.bf16.mxu0 0
        %433 = vmatpush1.bf16.msra.mxu0 %v404
        %434 = vmatprep.subr.bf16.mxu0 0
        %435 = vmatpush1.bf16.msra.mxu0 %v403
        %436 = vmatprep.subr.bf16.mxu0 0
        %437 = vmatpush1.bf16.msra.mxu0 %v402
        %438 = vmatprep.subr.bf16.mxu0 0
        %439 = vmatpush1.bf16.msra.mxu0 %v401
        %440 = vmatprep.subr.bf16.mxu0 0
        %441 = vmatpush1.bf16.msra.mxu0 %v400
        %442 = vmatprep.subr.bf16.mxu0 0
        %443 = vmatpush1.bf16.msra.mxu0 %v399
        %444 = vmatprep.subr.bf16.mxu0 0
        %445 = vmatpush1.bf16.msra.mxu0 %v398
        %446 = vmatprep.subr.bf16.mxu0 0
        %447 = vmatpush2.bf16.msra.mxu0 %v413
        %448 = vmatprep.subr.bf16.mxu0 0
        %449 = vmatpush2.bf16.msra.mxu0 %v412
        %450 = vmatprep.subr.bf16.mxu0 0
        %451 = vmatpush2.bf16.msra.mxu0 %v411
        %452 = vmatprep.subr.bf16.mxu0 0
        %453 = vmatpush2.bf16.msra.mxu0 %v410
        %454 = vmatprep.subr.bf16.mxu0 0
        %455 = vmatpush2.bf16.msra.mxu0 %v409
        %456 = vmatprep.subr.bf16.mxu0 0
        %457 = vmatpush2.bf16.msra.mxu0 %v408
        %458 = vmatprep.subr.bf16.mxu0 0
        %459 = vmatpush2.bf16.msra.mxu0 %v407
        %460 = vmatprep.subr.bf16.mxu0 0
        %461 = vmatpush2.bf16.msra.mxu0 %v406
        %462 = vmatprep.mubr.bf16.mxu0 %v287
        %463 = vmatmul.mubr.bf16.gmra.mxu0 %v286
        %v464 = vpop.f32.mrf.mxu0
        %v465 = vadd.f32 0.0, %v464
        %v466 = vpop.f32.mrf.mxu0
        %v467 = vpop.f32.mrf.mxu0
        %v468 = vadd.f32 0.0, %v467
        %v469 = vpop.f32.mrf.mxu0
        %470 = vmatprep.mubr.bf16.mxu0 %v289
        %471 = vmatmul.mubr.bf16.gmra.mxu0 %v288
        %v472 = vpop.f32.mrf.mxu0
        %v473 = vadd.f32 0.0, %v472
        %v474 = vpop.f32.mrf.mxu0
        %v475 = vpop.f32.mrf.mxu0
        %v476 = vadd.f32 0.0, %v475
        %v477 = vpop.f32.mrf.mxu0
        %478 = vmatprep.mubr.bf16.mxu0 %v291
        %479 = vmatmul.mubr.bf16.gmra.mxu0 %v290
        %v480 = vpop.f32.mrf.mxu0
        %v481 = vadd.f32 0.0, %v480
        %v482 = vpop.f32.mrf.mxu0
        %v483 = vpop.f32.mrf.mxu0
        %v484 = vadd.f32 0.0, %v483
        %v485 = vpop.f32.mrf.mxu0
        %486 = vmatprep.mubr.bf16.mxu0 %v293
        %487 = vmatmul.mubr.bf16.gmra.mxu0 %v292
        %v488 = vpop.f32.mrf.mxu0
        %v489 = vadd.f32 0.0, %v488
        %v490 = vpop.f32.mrf.mxu0
        %v491 = vpop.f32.mrf.mxu0
        %v492 = vadd.f32 0.0, %v491
        %v493 = vpop.f32.mrf.mxu0
        %494 = vmatprep.mubr.bf16.mxu0 %v295
        %495 = vmatmul.mubr.bf16.gmra.mxu0 %v294
        %v496 = vpop.f32.mrf.mxu0
        %v497 = vadd.f32 0.0, %v496
        %v498 = vpop.f32.mrf.mxu0
        %v499 = vpop.f32.mrf.mxu0
        %v500 = vadd.f32 0.0, %v499
        %v501 = vpop.f32.mrf.mxu0
        %502 = vmatprep.mubr.bf16.mxu0 %v297
        %503 = vmatmul.mubr.bf16.gmra.mxu0 %v296
        %v504 = vpop.f32.mrf.mxu0
        %v505 = vadd.f32 0.0, %v504
        %v506 = vpop.f32.mrf.mxu0
        %v507 = vpop.f32.mrf.mxu0
        %v508 = vadd.f32 0.0, %v507
        %v509 = vpop.f32.mrf.mxu0
        %510 = vmatprep.mubr.bf16.mxu0 %v299
        %511 = vmatmul.mubr.bf16.gmra.mxu0 %v298
        %v512 = vpop.f32.mrf.mxu0
        %v513 = vadd.f32 0.0, %v512
        %v514 = vpop.f32.mrf.mxu0
        %v515 = vpop.f32.mrf.mxu0
        %v516 = vadd.f32 0.0, %v515
        %v517 = vpop.f32.mrf.mxu0
        %518 = vmatprep.mubr.bf16.mxu0 %v301
        %519 = vmatmul.mubr.bf16.gmra.mxu0 %v300
        %v520 = vpop.f32.mrf.mxu0
        %v521 = vadd.f32 0.0, %v520
        %v522 = vpop.f32.mrf.mxu0
        %v523 = vpop.f32.mrf.mxu0
        %v524 = vadd.f32 0.0, %v523
        %v525 = vpop.f32.mrf.mxu0
        %526 = vdwg.mxu0
        %527 = vst [vmem:[%s245] sm:$0xff] %v465
        %528 = vst [vmem:[%s245 + $0x8] sm:$0xff] %v468
        %529 = vst [vmem:[%s245 + $0x10] sm:$0xff] %v473
        %530 = vst [vmem:[%s245 + $0x18] sm:$0xff] %v476
        %531 = vst [vmem:[%s245 + $0x20] sm:$0xff] %v481
        %532 = vst [vmem:[%s245 + $0x28] sm:$0xff] %v484
        %533 = vst [vmem:[%s245 + $0x30] sm:$0xff] %v489
        %534 = vst [vmem:[%s245 + $0x38] sm:$0xff] %v492
        %535 = vst [vmem:[%s245 + $0x40] sm:$0xff] %v497
        %536 = vst [vmem:[%s245 + $0x48] sm:$0xff] %v500
        %537 = vst [vmem:[%s245 + $0x50] sm:$0xff] %v505
        %538 = vst [vmem:[%s245 + $0x58] sm:$0xff] %v508
        %539 = vst [vmem:[%s245 + $0x60] sm:$0xff] %v513
        %540 = vst [vmem:[%s245 + $0x68] sm:$0xff] %v516
        %541 = vst [vmem:[%s245 + $0x70] sm:$0xff] %v521
        %542 = vst [vmem:[%s245 + $0x78] sm:$0xff] %v524
        %v543 = vadd.f32 %v465, %v468
        %v544 = vadd.f32 %v543, %v473
        %v545 = vadd.f32 %v544, %v476
        %v546 = vadd.f32 %v545, %v481
        %v547 = vadd.f32 %v546, %v484
        %v548 = vadd.f32 %v547, %v489
        %v549 = vadd.f32 %v548, %v492
        %v550 = vadd.f32 %v549, %v497
        %v551 = vadd.f32 %v550, %v500
        %v552 = vadd.f32 %v551, %v505
        %v553 = vadd.f32 %v552, %v508
        %v554 = vadd.f32 %v553, %v513
        %v555 = vadd.f32 %v554, %v516
        %v556 = vadd.f32 %v555, %v521
        %v557 = vadd.f32 %v556, %v524
        %v558 = vrot.slane %v557, 4
        %v559 = vadd.f32 %v557, %v558
        %v560 = vrot.slane %v559, 2
        %v561 = vadd.f32 %v559, %v560
        %v562 = vrot.slane %v561, 1
        %v563 = vadd.f32 %v561, %v562
        %564 = vst [vmem:[%s249] sm:$0x1] %v563
        %v565 = vmul.f32 %v465, %v465
        %v566 = vmul.f32 %v468, %v468
        %v567 = vmul.f32 %v473, %v473
        %v568 = vmul.f32 %v476, %v476
        %v569 = vmul.f32 %v481, %v481
        %v570 = vmul.f32 %v484, %v484
        %v571 = vmul.f32 %v489, %v489
        %v572 = vmul.f32 %v492, %v492
        %v573 = vmul.f32 %v497, %v497
        %v574 = vmul.f32 %v500, %v500
        %v575 = vmul.f32 %v505, %v505
        %v576 = vmul.f32 %v508, %v508
        %v577 = vmul.f32 %v513, %v513
        %v578 = vmul.f32 %v516, %v516
        %v579 = vmul.f32 %v521, %v521
        %v580 = vmul.f32 %v524, %v524
        %v581 = vadd.f32 %v565, %v566
        %v582 = vadd.f32 %v581, %v567
        %v583 = vadd.f32 %v582, %v568
        %v584 = vadd.f32 %v583, %v569
        %v585 = vadd.f32 %v584, %v570
        %v586 = vadd.f32 %v585, %v571
        %v587 = vadd.f32 %v586, %v572
        %v588 = vadd.f32 %v587, %v573
        %v589 = vadd.f32 %v588, %v574
        %v590 = vadd.f32 %v589, %v575
        %v591 = vadd.f32 %v590, %v576
        %v592 = vadd.f32 %v591, %v577
        %v593 = vadd.f32 %v592, %v578
        %v594 = vadd.f32 %v593, %v579
        %v595 = vadd.f32 %v594, %v580
        %v596 = vrot.slane %v595, 4
        %v597 = vadd.f32 %v595, %v596
        %v598 = vrot.slane %v597, 2
        %v599 = vadd.f32 %v597, %v598
        %v600 = vrot.slane %v599, 1
        %v601 = vadd.f32 %v599, %v600
        %602 = vst [vmem:[%s252] sm:$0x1] %v601
        %s603 = smul.u32 16, %s20
        %p604 = scmp.lt.s32.totalorder %s603, 63
        %s605 = scalar_select %p604, %s603, 63
        %s606 = smul.addr %s605, 8
        %s607 = scalar_lea.vmem %s2, %s606
        %p608 = scmp.lt.s32.totalorder %s20, 3
        %s609 = scalar_select %p608, %s20, 3
        %s610 = scalar_lea.vmem %s3, %s609
        %p611 = scmp.lt.s32.totalorder %s20, 3
        %s612 = scalar_select %p611, %s20, 3
        %s613 = scalar_lea.vmem %s4, %s612
        // Predicated region
        $region37: #{resnext_bottleneck_forward.4} parent=27 // pred_check
          %p614 = pneg %p85
        $region38: #{resnext_bottleneck_forward.4} parent=27 // pred_check_branch
          %616 = sbr.rel (%p614) target = $region40
        $region39: #{resnext_bottleneck_forward.4} parent=27 // pred_region
          %s617 = smul.u32 16, %s20
        $region40: #{resnext_bottleneck_forward.4} parent=27 // pred_fallthru
          _
        // Predicated region
        $region41: #{resnext_bottleneck_forward.4} parent=27 // pred_check
          %p618 = pneg %p111
        $region42: #{resnext_bottleneck_forward.4} parent=27 // pred_check_branch
          %620 = sbr.rel (%p618) target = $region44
        $region43: #{resnext_bottleneck_forward.4} parent=27 // pred_region
          _
        $region44: #{resnext_bottleneck_forward.4} parent=27 // pred_fallthru
          _
        // Predicated region
        $region45: #{resnext_bottleneck_forward.4} parent=27 // pred_check
          %p621 = pneg %p137
        $region46: #{resnext_bottleneck_forward.4} parent=27 // pred_check_branch
          %623 = sbr.rel (%p621) target = $region48
        $region47: #{resnext_bottleneck_forward.4} parent=27 // pred_region
          _
        $region48: #{resnext_bottleneck_forward.4} parent=27 // pred_fallthru
          _
      $region28: #{resnext_bottleneck_forward.4} parent=5 // pred_fallthru
        _
      %p624 = scmp.le.s32.totalorder 2, %s15
      // Predicated region
      $region49: #{resnext_bottleneck_forward.4} parent=5 // pred_check
        %p625 = pneg %p624
      $region50: #{resnext_bottleneck_forward.4} parent=5 // pred_check_branch
        %627 = sbr.rel (%p625) target = $region52
      $region51: #{resnext_bottleneck_forward.4} parent=5 // pred_region
        %s628 = ssub.s32 %s15, 2
        // Predicated region
        $region53: #{resnext_bottleneck_forward.4} parent=51 // pred_check
          %p629 = pneg %p91
        $region54: #{resnext_bottleneck_forward.4} parent=51 // pred_check_branch
          %631 = sbr.rel (%p629) target = $region56
        $region55: #{resnext_bottleneck_forward.4} parent=51 // pred_region
          %s632 = smul.u32 16, %s21
          %p633 = scmp.lt.s32.totalorder %s632, 63
          %s634 = scalar_select %p633, %s632, 63
          %s635 = smul.addr %s634, 8
          %s636 = scalar_lea.vmem %s2, %s635
        $region56: #{resnext_bottleneck_forward.4} parent=51 // pred_fallthru
          _
        // Predicated region
        $region57: #{resnext_bottleneck_forward.4} parent=51 // pred_check
          %p637 = pneg %p117
        $region58: #{resnext_bottleneck_forward.4} parent=51 // pred_check_branch
          %639 = sbr.rel (%p637) target = $region60
        $region59: #{resnext_bottleneck_forward.4} parent=51 // pred_region
          %p640 = scmp.lt.s32.totalorder %s21, 3
          %s641 = scalar_select %p640, %s21, 3
          %s642 = scalar_lea.vmem %s3, %s641
        $region60: #{resnext_bottleneck_forward.4} parent=51 // pred_fallthru
          _
        // Predicated region
        $region61: #{resnext_bottleneck_forward.4} parent=51 // pred_check
          %p643 = pneg %p143
        $region62: #{resnext_bottleneck_forward.4} parent=51 // pred_check_branch
          %645 = sbr.rel (%p643) target = $region64
        $region63: #{resnext_bottleneck_forward.4} parent=51 // pred_region
          %p646 = scmp.lt.s32.totalorder %s21, 3
          %s647 = scalar_select %p646, %s21, 3
          %s648 = scalar_lea.vmem %s4, %s647
        $region64: #{resnext_bottleneck_forward.4} parent=51 // pred_fallthru
          _
      $region52: #{resnext_bottleneck_forward.4} parent=5 // pred_fallthru
        _
    $region6: #{resnext_bottleneck_forward.4} parent=1 // loop_footer
      %s19 = sadd.s32 1, %s15
    $region7: #{resnext_bottleneck_forward.4} parent=1 // loop_footer_branch
      %14 = sbr.rel target = $region3
    $region8: #{resnext_bottleneck_forward.4} parent=1 // loop_exit
      _
    %649 = vsyncpa [#allocation3], 1
    %s650 = scalar_lea.sflag [#allocation3], 1
    %651 = vsyncpa %s650, 1
    %652 = vsyncpa [#allocation5], 1

// kernel: resnext_bottleneck_forward.6
$region0: #{resnext_bottleneck_forward.6}
  #allocation0 [shape = 'u32[]', space=smem, size = 0x4, offset = 0x4, fixed_abs, tag = 'smem constant byte address 0x4 - core index']
  #allocation1 [shape = 'u32[144,128]{1,0:T(1,128)}', space=vmem, size = 0x12000, scoped, tag = 'internal scratch']
  %s0 = inlined_call_operand.vmem [shape: f32[512,128], index: 0, kind: input, shape index: {}]
  %s1 = inlined_call_operand.vmem [shape: f32[1,128], index: 1, kind: input, shape index: {}]
  %s2 = inlined_call_operand.vmem [shape: f32[1,128], index: 2, kind: input, shape index: {}]
  %s3 = inlined_call_operand.vmem [shape: bf16[128,256], index: 3, kind: input, shape index: {}]
  %s4 = inlined_call_operand.vmem [shape: f32[512,256], index: 4, kind: output, shape index: {0}]
  %s5 = inlined_call_operand.vmem [shape: f32[4,1,256], index: 5, kind: output, shape index: {1}]
  %s6 = inlined_call_operand.vmem [shape: f32[4,1,256], index: 6, kind: output, shape index: {2}]
  %7 = xla_tuple %s4, %s5, %s6
  %s8 = sld [smem:[#allocation0]]
  $region65: #{resnext_bottleneck_forward.6} parent=0
    _
  %s10 = ssub.s32 1, %s8
  %s11 = scalar_select 0, %s10, %s8
  loop: start=0, step=1, limit=6
  $region2: #{resnext_bottleneck_forward.6} parent=0 // loop_pre_header
    _
  $region3: #{resnext_bottleneck_forward.6} parent=0 // loop_header
    %s13 = sphi 0, %s17
    %p14 = scmp.ge.s32.totalorder %s13, 6
    %s23 = sphi 0, %s25
    %s26 = sphi 0, %s23
    %s27 = sphi 0, %s26
    %s43 = sphi 0, %s27
    %s47 = sphi 0, %s47
    %s49 = sphi 0, %s47
    %s50 = sphi 0, %s49
    %s64 = sphi 0, %s50
    %s68 = sphi 0, %s68
    %s70 = sphi 0, %s68
    %s71 = sphi 0, %s70
    %s85 = sphi 0, %s71
    %s89 = sphi 0, %s89
    %s91 = sphi 0, %s89
    %s92 = sphi 0, %s91
    %s106 = sphi 0, %s92
    %s112 = sphi 0, %s114
    %s115 = sphi 0, %s112
    %s116 = sphi 0, %s115
    %s132 = sphi 0, %s116
    %s138 = sphi 0, %s140
    %s141 = sphi 0, %s138
    %s142 = sphi 0, %s141
    %s158 = sphi 0, %s142
    %s164 = sphi 0, %s166
    %s167 = sphi 0, %s164
    %s168 = sphi 0, %s167
    %s184 = sphi 0, %s168
  $region4: #{resnext_bottleneck_forward.6} parent=0 // loop_header_branch
    %16 = sbr.rel (%p14) target = $region8
  $region5: #{resnext_bottleneck_forward.6} parent=0 // loop_body
    %s18 = ssub.s32 %s13, 1
    %s19 = ssub.s32 %s13, 2
    %s20 = sadd.s32 %s13, 1
    %s21 = ssub.s32 %s13, %s20
    %p22 = scmp.eq.s32.totalorder %s21, 0
    %s24 = sadd.s32 %s23, 1
    %s25 = scalar_select %p22, %s23, %s24
    %p28 = pneg %p22
    %p29 = scmp.eq.s32.totalorder %s13, 3
    %p30 = por %p28, %p29
    %p31 = scmp.ne.s32.totalorder %s23, %s26
    %p32 = scmp.eq.s32.totalorder %s13, 0
    %p33 = por %p31, %p32
    %p34 = scmp.ne.s32.totalorder %s23, %s26
    %p35 = scmp.eq.s32.totalorder %s18, 3
    %p36 = por %p34, %p35
    %p37 = scmp.ne.s32.totalorder %s26, %s27
    %p38 = scmp.eq.s32.totalorder %s18, 0
    %p39 = por %p37, %p38
    %p40 = scmp.ne.s32.totalorder %s26, %s27
    %p41 = scmp.eq.s32.totalorder %s19, 3
    %p42 = por %p40, %p41
    %p44 = scmp.ne.s32.totalorder %s27, %s43
    %p45 = scmp.eq.s32.totalorder %s19, 0
    %p46 = por %p44, %p45
    %s48 = sadd.s32 %s47, 1
    %p51 = scmp.eq.s32.totalorder %s13, 3
    %p52 = scmp.ne.s32.totalorder %s47, %s49
    %p53 = scmp.eq.s32.totalorder %s13, 0
    %p54 = por %p52, %p53
    %p55 = scmp.ne.s32.totalorder %s47, %s49
    %p56 = scmp.eq.s32.totalorder %s18, 3
    %p57 = por %p55, %p56
    %p58 = scmp.ne.s32.totalorder %s49, %s50
    %p59 = scmp.eq.s32.totalorder %s18, 0
    %p60 = por %p58, %p59
    %p61 = scmp.ne.s32.totalorder %s49, %s50
    %p62 = scmp.eq.s32.totalorder %s19, 3
    %p63 = por %p61, %p62
    %p65 = scmp.ne.s32.totalorder %s50, %s64
    %p66 = scmp.eq.s32.totalorder %s19, 0
    %p67 = por %p65, %p66
    %s69 = sadd.s32 %s68, 1
    %p72 = scmp.eq.s32.totalorder %s13, 3
    %p73 = scmp.ne.s32.totalorder %s68, %s70
    %p74 = scmp.eq.s32.totalorder %s13, 0
    %p75 = por %p73, %p74
    %p76 = scmp.ne.s32.totalorder %s68, %s70
    %p77 = scmp.eq.s32.totalorder %s18, 3
    %p78 = por %p76, %p77
    %p79 = scmp.ne.s32.totalorder %s70, %s71
    %p80 = scmp.eq.s32.totalorder %s18, 0
    %p81 = por %p79, %p80
    %p82 = scmp.ne.s32.totalorder %s70, %s71
    %p83 = scmp.eq.s32.totalorder %s19, 3
    %p84 = por %p82, %p83
    %p86 = scmp.ne.s32.totalorder %s71, %s85
    %p87 = scmp.eq.s32.totalorder %s19, 0
    %p88 = por %p86, %p87
    %s90 = sadd.s32 %s89, 1
    %p93 = scmp.eq.s32.totalorder %s13, 3
    %p94 = scmp.ne.s32.totalorder %s89, %s91
    %p95 = scmp.eq.s32.totalorder %s13, 0
    %p96 = por %p94, %p95
    %p97 = scmp.ne.s32.totalorder %s89, %s91
    %p98 = scmp.eq.s32.totalorder %s18, 3
    %p99 = por %p97, %p98
    %p100 = scmp.ne.s32.totalorder %s91, %s92
    %p101 = scmp.eq.s32.totalorder %s18, 0
    %p102 = por %p100, %p101
    %p103 = scmp.ne.s32.totalorder %s91, %s92
    %p104 = scmp.eq.s32.totalorder %s19, 3
    %p105 = por %p103, %p104
    %p107 = scmp.ne.s32.totalorder %s92, %s106
    %p108 = scmp.eq.s32.totalorder %s19, 0
    %p109 = por %p107, %p108
    %s110 = ssub.s32 %s13, %s20
    %p111 = scmp.eq.s32.totalorder %s110, 0
    %s113 = sadd.s32 %s112, 1
    %s114 = scalar_select %p111, %s112, %s113
    %p117 = pneg %p111
    %p118 = scmp.eq.s32.totalorder %s13, 3
    %p119 = por %p117, %p118
    %p120 = scmp.ne.s32.totalorder %s112, %s115
    %p121 = scmp.eq.s32.totalorder %s13, 0
    %p122 = por %p120, %p121
    %p123 = scmp.ne.s32.totalorder %s112, %s115
    %p124 = scmp.eq.s32.totalorder %s18, 3
    %p125 = por %p123, %p124
    %p126 = scmp.ne.s32.totalorder %s115, %s116
    %p127 = scmp.eq.s32.totalorder %s18, 0
    %p128 = por %p126, %p127
    %p129 = scmp.ne.s32.totalorder %s115, %s116
    %p130 = scmp.eq.s32.totalorder %s19, 3
    %p131 = por %p129, %p130
    %p133 = scmp.ne.s32.totalorder %s116, %s132
    %p134 = scmp.eq.s32.totalorder %s19, 0
    %p135 = por %p133, %p134
    %s136 = ssub.s32 %s13, %s20
    %p137 = scmp.eq.s32.totalorder %s136, 0
    %s139 = sadd.s32 %s138, 1
    %s140 = scalar_select %p137, %s138, %s139
    %p143 = pneg %p137
    %p144 = scmp.eq.s32.totalorder %s13, 3
    %p145 = por %p143, %p144
    %p146 = scmp.ne.s32.totalorder %s138, %s141
    %p147 = scmp.eq.s32.totalorder %s13, 0
    %p148 = por %p146, %p147
    %p149 = scmp.ne.s32.totalorder %s138, %s141
    %p150 = scmp.eq.s32.totalorder %s18, 3
    %p151 = por %p149, %p150
    %p152 = scmp.ne.s32.totalorder %s141, %s142
    %p153 = scmp.eq.s32.totalorder %s18, 0
    %p154 = por %p152, %p153
    %p155 = scmp.ne.s32.totalorder %s141, %s142
    %p156 = scmp.eq.s32.totalorder %s19, 3
    %p157 = por %p155, %p156
    %p159 = scmp.ne.s32.totalorder %s142, %s158
    %p160 = scmp.eq.s32.totalorder %s19, 0
    %p161 = por %p159, %p160
    %s162 = ssub.s32 %s13, %s20
    %p163 = scmp.eq.s32.totalorder %s162, 0
    %s165 = sadd.s32 %s164, 1
    %s166 = scalar_select %p163, %s164, %s165
    %p169 = pneg %p163
    %p170 = scmp.eq.s32.totalorder %s13, 3
    %p171 = por %p169, %p170
    %p172 = scmp.ne.s32.totalorder %s164, %s167
    %p173 = scmp.eq.s32.totalorder %s13, 0
    %p174 = por %p172, %p173
    %p175 = scmp.ne.s32.totalorder %s164, %s167
    %p176 = scmp.eq.s32.totalorder %s18, 3
    %p177 = por %p175, %p176
    %p178 = scmp.ne.s32.totalorder %s167, %s168
    %p179 = scmp.eq.s32.totalorder %s18, 0
    %p180 = por %p178, %p179
    %p181 = scmp.ne.s32.totalorder %s167, %s168
    %p182 = scmp.eq.s32.totalorder %s19, 3
    %p183 = por %p181, %p182
    %p185 = scmp.ne.s32.totalorder %s168, %s184
    %p186 = scmp.eq.s32.totalorder %s19, 0
    %p187 = por %p185, %p186
    %p188 = scmp.le.s32.totalorder 1, %s13
    %p189 = scmp.lt.s32.totalorder %s13, 5
    %p190 = pnand %p188, %p189
    %p191 = pneg %p190
    // Predicated region
    $region9: #{resnext_bottleneck_forward.6} parent=5 // pred_check
      _
    $region10: #{resnext_bottleneck_forward.6} parent=5 // pred_check_branch
      %193 = sbr.rel (%p190) target = $region12
    $region11: #{resnext_bottleneck_forward.6} parent=5 // pred_region
      %s194 = ssub.s32 %s13, 1
      // Predicated region
      $region13: #{resnext_bottleneck_forward.6} parent=11 // pred_check
        %p195 = pneg %p60
      $region14: #{resnext_bottleneck_forward.6} parent=11 // pred_check_branch
        %197 = sbr.rel (%p195) target = $region16
      $region15: #{resnext_bottleneck_forward.6} parent=11 // pred_region
        _
      $region16: #{resnext_bottleneck_forward.6} parent=11 // pred_fallthru
        _
      // Predicated region
      $region17: #{resnext_bottleneck_forward.6} parent=11 // pred_check
        %p198 = pneg %p81
      $region18: #{resnext_bottleneck_forward.6} parent=11 // pred_check_branch
        %200 = sbr.rel (%p198) target = $region20
      $region19: #{resnext_bottleneck_forward.6} parent=11 // pred_region
        _
      $region20: #{resnext_bottleneck_forward.6} parent=11 // pred_fallthru
        _
      // Predicated region
      $region21: #{resnext_bottleneck_forward.6} parent=11 // pred_check
        %p201 = pneg %p102
      $region22: #{resnext_bottleneck_forward.6} parent=11 // pred_check_branch
        %203 = sbr.rel (%p201) target = $region24
      $region23: #{resnext_bottleneck_forward.6} parent=11 // pred_region
        _
      $region24: #{resnext_bottleneck_forward.6} parent=11 // pred_fallthru
        _
    $region12: #{resnext_bottleneck_forward.6} parent=5 // pred_fallthru
      _
    %p204 = scmp.lt.s32.totalorder %s13, 4
    // Predicated region
    $region25: #{resnext_bottleneck_forward.6} parent=5 // pred_check
      %p205 = pneg %p204
    $region26: #{resnext_bottleneck_forward.6} parent=5 // pred_check_branch
      %207 = sbr.rel (%p205) target = $region28
    $region27: #{resnext_bottleneck_forward.6} parent=5 // pred_region
      // Predicated region
      $region29: #{resnext_bottleneck_forward.6} parent=27 // pred_check
        %p208 = pneg %p33
      $region30: #{resnext_bottleneck_forward.6} parent=27 // pred_check_branch
        %210 = sbr.rel (%p208) target = $region32
      $region31: #{resnext_bottleneck_forward.6} parent=27 // pred_region
        %s211 = smul.u32 16, %s13
        %p212 = scmp.lt.s32.totalorder %s211, 63
        %s213 = scalar_select %p212, %s211, 63
        %s214 = smul.addr %s213, 8
        %s215 = scalar_lea.vmem %s0, %s214
        %s216 = smul.u32 16, %s13
      $region32: #{resnext_bottleneck_forward.6} parent=27 // pred_fallthru
        _
    $region28: #{resnext_bottleneck_forward.6} parent=5 // pred_fallthru
      _
    %p217 = scmp.le.s32.totalorder 1, %s13
    %p218 = scmp.lt.s32.totalorder %s13, 5
    %p219 = pnand %p217, %p218
    %p220 = pneg %p219
    // Predicated region
    $region33: #{resnext_bottleneck_forward.6} parent=5 // pred_check
      _
    $region34: #{resnext_bottleneck_forward.6} parent=5 // pred_check_branch
      %222 = sbr.rel (%p219) target = $region36
    $region35: #{resnext_bottleneck_forward.6} parent=5 // pred_region
      %s223 = ssub.s32 %s13, 1
      %s224 = smul.u32 16, %s18
      %p225 = scmp.lt.s32.totalorder %s224, 63
      %s226 = scalar_select %p225, %s224, 63
      %s227 = smul.addr %s226, 8
      %s228 = scalar_lea.vmem %s0, %s227
      %p229 = pneg %p39
      %p230 = pneg %p36
      %p231 = pneg %p60
      %p232 = pneg %p57
      %p233 = pneg %p81
      %p234 = pneg %p78
      %p235 = pneg %p102
      %p236 = pneg %p99
      %p237 = pneg %p128
      %p238 = pneg %p125
      %s239 = smul.u32 16, %s18
      %p240 = scmp.lt.s32.totalorder %s239, 63
      %s241 = scalar_select %p240, %s239, 63
      %s242 = smul.addr %s241, 2
      %s243 = smul.addr %s242, 8
      %s244 = scalar_lea.vmem %s4, %s243
      %p245 = pneg %p154
      %p246 = pneg %p151
      %p247 = scmp.lt.s32.totalorder %s18, 3
      %s248 = scalar_select %p247, %s18, 3
      %s249 = smul.addr %s248, 2
      %s250 = scalar_lea.vmem %s5, %s249
      %p251 = pneg %p180
      %p252 = pneg %p177
      %p253 = scmp.lt.s32.totalorder %s18, 3
      %s254 = scalar_select %p253, %s18, 3
      %s255 = smul.addr %s254, 2
      %s256 = scalar_lea.vmem %s6, %s255
      %s257 = smul.u32 16, %s18
      %p258 = scmp.lt.s32.totalorder %s257, 63
      %s259 = scalar_select %p258, %s257, 63
      %s260 = smul.addr %s259, 8
      %s261 = scalar_lea.vmem %s0, %s260
      %s262 = smul.u32 16, %s18
      %s263 = smul.u32 16, %s18
      %p264 = scmp.lt.s32.totalorder %s263, 63
      %s265 = scalar_select %p264, %s263, 63
      %s266 = smul.addr %s265, 2
      %s267 = smul.addr %s266, 8
      %s268 = scalar_lea.vmem %s4, %s267
      %s269 = smul.u32 16, %s18
      %p270 = scmp.lt.s32.totalorder %s18, 3
      %s271 = scalar_select %p270, %s18, 3
      %s272 = smul.addr %s271, 2
      %s273 = scalar_lea.vmem %s5, %s272
      %p274 = scmp.lt.s32.totalorder %s18, 3
      %s275 = scalar_select %p274, %s18, 3
      %s276 = smul.addr %s275, 2
      %s277 = scalar_lea.vmem %s6, %s276
      %v279 = vld [vmem:[%s261] sm:$0xff]
      %v280 = vld [vmem:[%s261 + $0x8] sm:$0xff]
      %v281 = vld [vmem:[%s261 + $0x10] sm:$0xff]
      %v282 = vld [vmem:[%s261 + $0x18] sm:$0xff]
      %v283 = vld [vmem:[%s261 + $0x20] sm:$0xff]
      %v284 = vld [vmem:[%s261 + $0x28] sm:$0xff]
      %v285 = vld [vmem:[%s261 + $0x30] sm:$0xff]
      %v286 = vld [vmem:[%s261 + $0x38] sm:$0xff]
      %v287 = vld [vmem:[%s261 + $0x40] sm:$0xff]
      %v288 = vld [vmem:[%s261 + $0x48] sm:$0xff]
      %v289 = vld [vmem:[%s261 + $0x50] sm:$0xff]
      %v290 = vld [vmem:[%s261 + $0x58] sm:$0xff]
      %v291 = vld [vmem:[%s261 + $0x60] sm:$0xff]
      %v292 = vld [vmem:[%s261 + $0x68] sm:$0xff]
      %v293 = vld [vmem:[%s261 + $0x70] sm:$0xff]
      %v294 = vld [vmem:[%s261 + $0x78] sm:$0xff]
      %v295 = vld [vmem:[%s1] sm:$0x1]
      %v297 = vlaneseq
      %v298 = vshrl.u32 %v297, 7
      %v299 = vsub.s32 0, %v298
      %v300 = vrot.slane %v295, %v299
      %v302 = vmul.f32 %v279, %v300
      %v303 = vmul.f32 %v280, %v300
      %v304 = vmul.f32 %v281, %v300
      %v305 = vmul.f32 %v282, %v300
      %v306 = vmul.f32 %v283, %v300
      %v307 = vmul.f32 %v284, %v300
      %v308 = vmul.f32 %v285, %v300
      %v309 = vmul.f32 %v286, %v300
      %v310 = vmul.f32 %v287, %v300
      %v311 = vmul.f32 %v288, %v300
      %v312 = vmul.f32 %v289, %v300
      %v313 = vmul.f32 %v290, %v300
      %v314 = vmul.f32 %v291, %v300
      %v315 = vmul.f32 %v292, %v300
      %v316 = vmul.f32 %v293, %v300
      %v317 = vmul.f32 %v294, %v300
      %v318 = vld [vmem:[%s2] sm:$0x1]
      %v320 = vlaneseq
      %v321 = vshrl.u32 %v320, 7
      %v322 = vsub.s32 0, %v321
      %v323 = vrot.slane %v318, %v322
      %v325 = vadd.f32 %v302, %v323
      %v326 = vadd.f32 %v303, %v323
      %v327 = vadd.f32 %v304, %v323
      %v328 = vadd.f32 %v305, %v323
      %v329 = vadd.f32 %v306, %v323
      %v330 = vadd.f32 %v307, %v323
      %v331 = vadd.f32 %v308, %v323
      %v332 = vadd.f32 %v309, %v323
      %v333 = vadd.f32 %v310, %v323
      %v334 = vadd.f32 %v311, %v323
      %v335 = vadd.f32 %v312, %v323
      %v336 = vadd.f32 %v313, %v323
      %v337 = vadd.f32 %v314, %v323
      %v338 = vadd.f32 %v315, %v323
      %v339 = vadd.f32 %v316, %v323
      %v340 = vadd.f32 %v317, %v323
      %v341 = vmax.f32 %v325, 0.0
      %v342 = vmax.f32 %v326, 0.0
      %v343 = vmax.f32 %v327, 0.0
      %v344 = vmax.f32 %v328, 0.0
      %v345 = vmax.f32 %v329, 0.0
      %v346 = vmax.f32 %v330, 0.0
      %v347 = vmax.f32 %v331, 0.0
      %v348 = vmax.f32 %v332, 0.0
      %v349 = vmax.f32 %v333, 0.0
      %v350 = vmax.f32 %v334, 0.0
      %v351 = vmax.f32 %v335, 0.0
      %v352 = vmax.f32 %v336, 0.0
      %v353 = vmax.f32 %v337, 0.0
      %v354 = vmax.f32 %v338, 0.0
      %v355 = vmax.f32 %v339, 0.0
      %v356 = vmax.f32 %v340, 0.0
      %v357 = vpack.c.bf16 %v342, %v341
      %v358 = vpack.c.bf16 %v344, %v343
      %v359 = vpack.c.bf16 %v346, %v345
      %v360 = vpack.c.bf16 %v348, %v347
      %v361 = vpack.c.bf16 %v350, %v349
      %v362 = vpack.c.bf16 %v352, %v351
      %v363 = vpack.c.bf16 %v354, %v353
      %v364 = vpack.c.bf16 %v356, %v355
      %v365 = vld [vmem:[%s3] sm:$0xff]
      %v366 = vld [vmem:[%s3 + $0x8] sm:$0xff]
      %v367 = vld [vmem:[%s3 + $0x10] sm:$0xff]
      %v368 = vld [vmem:[%s3 + $0x18] sm:$0xff]
      %v369 = vld [vmem:[%s3 + $0x20] sm:$0xff]
      %v370 = vld [vmem:[%s3 + $0x28] sm:$0xff]
      %v371 = vld [vmem:[%s3 + $0x30] sm:$0xff]
      %v372 = vld [vmem:[%s3 + $0x38] sm:$0xff]
      %v373 = vld [vmem:[%s3 + $0x40] sm:$0xff]
      %v374 = vld [vmem:[%s3 + $0x48] sm:$0xff]
      %v375 = vld [vmem:[%s3 + $0x50] sm:$0xff]
      %v376 = vld [vmem:[%s3 + $0x58] sm:$0xff]
      %v377 = vld [vmem:[%s3 + $0x60] sm:$0xff]
      %v378 = vld [vmem:[%s3 + $0x68] sm:$0xff]
      %v379 = vld [vmem:[%s3 + $0x70] sm:$0xff]
      %v380 = vld [vmem:[%s3 + $0x78] sm:$0xff]
      %v397 = vunpack.c.l.b16 %v365
      %v398 = vunpack.c.h.b16 %v365
      %v399 = vunpack.c.l.b16 %v366
      %v400 = vunpack.c.h.b16 %v366
      %v401 = vunpack.c.l.b16 %v367
      %v402 = vunpack.c.h.b16 %v367
      %v403 = vunpack.c.l.b16 %v368
      %v404 = vunpack.c.h.b16 %v368
      %v405 = vunpack.c.l.b16 %v369
      %v406 = vunpack.c.h.b16 %v369
      %v407 = vunpack.c.l.b16 %v370
      %v408 = vunpack.c.h.b16 %v370
      %v409 = vunpack.c.l.b16 %v371
      %v410 = vunpack.c.h.b16 %v371
      %v411 = vunpack.c.l.b16 %v372
      %v412 = vunpack.c.h.b16 %v372
      %v413 = vunpack.c.l.b16 %v373
      %v414 = vunpack.c.h.b16 %v373
      %v415 = vunpack.c.l.b16 %v374
      %v416 = vunpack.c.h.b16 %v374
      %v417 = vunpack.c.l.b16 %v375
      %v418 = vunpack.c.h.b16 %v375
      %v419 = vunpack.c.l.b16 %v376
      %v420 = vunpack.c.h.b16 %v376
      %v421 = vunpack.c.l.b16 %v377
      %v422 = vunpack.c.h.b16 %v377
      %v423 = vunpack.c.l.b16 %v378
      %v424 = vunpack.c.h.b16 %v378
      %v425 = vunpack.c.l.b16 %v379
      %v426 = vunpack.c.h.b16 %v379
      %v427 = vunpack.c.l.b16 %v380
      %v428 = vunpack.c.h.b16 %v380
      %v429 = vpack.c.b16 %v399, %v397
      %v430 = vpack.c.b16 %v400, %v398
      %v431 = vpack.c.b16 %v403, %v401
      %v432 = vpack.c.b16 %v404, %v402
      %v433 = vpack.c.b16 %v407, %v405
      %v434 = vpack.c.b16 %v408, %v406
      %v435 = vpack.c.b16 %v411, %v409
      %v436 = vpack.c.b16 %v412, %v410
      %v437 = vpack.c.b16 %v415, %v413
      %v438 = vpack.c.b16 %v416, %v414
      %v439 = vpack.c.b16 %v419, %v417
      %v440 = vpack.c.b16 %v420, %v418
      %v441 = vpack.c.b16 %v423, %v421
      %v442 = vpack.c.b16 %v424, %v422
      %v443 = vpack.c.b16 %v427, %v425
      %v444 = vpack.c.b16 %v428, %v426
      %461 = vmatprep.subr.bf16.mxu0 %v444
      %462 = vmatpush1.bf16.msra.mxu0 %v443
      %463 = vmatprep.subr.bf16.mxu0 %v442
      %464 = vmatpush1.bf16.msra.mxu0 %v441
      %465 = vmatprep.subr.bf16.mxu0 %v440
      %466 = vmatpush1.bf16.msra.mxu0 %v439
      %467 = vmatprep.subr.bf16.mxu0 %v438
      %468 = vmatpush1.bf16.msra.mxu0 %v437
      %469 = vmatprep.subr.bf16.mxu0 %v436
      %470 = vmatpush1.bf16.msra.mxu0 %v435
      %471 = vmatprep.subr.bf16.mxu0 %v434
      %472 = vmatpush1.bf16.msra.mxu0 %v433
      %473 = vmatprep.subr.bf16.mxu0 %v432
      %474 = vmatpush1.bf16.msra.mxu0 %v431
      %475 = vmatprep.subr.bf16.mxu0 %v430
      %476 = vmatpush1.bf16.msra.mxu0 %v429
      %477 = vmatprep.subr.bf16.mxu0 0
      %478 = vmatpush2.bf16.msra.mxu0 0
      %479 = vmatprep.subr.bf16.mxu0 0
      %480 = vmatpush2.bf16.msra.mxu0 0
      %481 = vmatprep.subr.bf16.mxu0 0
      %482 = vmatpush2.bf16.msra.mxu0 0
      %483 = vmatprep.subr.bf16.mxu0 0
      %484 = vmatpush2.bf16.msra.mxu0 0
      %485 = vmatprep.subr.bf16.mxu0 0
      %486 = vmatpush2.bf16.msra.mxu0 0
      %487 = vmatprep.subr.bf16.mxu0 0
      %488 = vmatpush2.bf16.msra.mxu0 0
      %489 = vmatprep.subr.bf16.mxu0 0
      %490 = vmatpush2.bf16.msra.mxu0 0
      %491 = vmatprep.subr.bf16.mxu0 0
      %492 = vmatpush2.bf16.msra.mxu0 0
      %493 = vmatprep.mubr.bf16.mxu0 0
      %494 = vmatmul.mubr.bf16.gmra.mxu0 %v357
      %v495 = vpop.f32.mrf.mxu0
      %v496 = vadd.f32 0.0, %v495
      %v497 = vpop.f32.mrf.mxu0
      %v498 = vadd.f32 0.0, %v497
      %v499 = vpop.f32.mrf.mxu0
      %v500 = vadd.f32 0.0, %v499
      %v501 = vpop.f32.mrf.mxu0
      %v502 = vadd.f32 0.0, %v501
      %503 = vmatprep.mubr.bf16.mxu0 0
      %504 = vmatmul.mubr.bf16.gmra.mxu0 %v358
      %v505 = vpop.f32.mrf.mxu0
      %v506 = vadd.f32 0.0, %v505
      %v507 = vpop.f32.mrf.mxu0
      %v508 = vadd.f32 0.0, %v507
      %v509 = vpop.f32.mrf.mxu0
      %v510 = vadd.f32 0.0, %v509
      %v511 = vpop.f32.mrf.mxu0
      %v512 = vadd.f32 0.0, %v511
      %513 = vmatprep.mubr.bf16.mxu0 0
      %514 = vmatmul.mubr.bf16.gmra.mxu0 %v359
      %v515 = vpop.f32.mrf.mxu0
      %v516 = vadd.f32 0.0, %v515
      %v517 = vpop.f32.mrf.mxu0
      %v518 = vadd.f32 0.0, %v517
      %v519 = vpop.f32.mrf.mxu0
      %v520 = vadd.f32 0.0, %v519
      %v521 = vpop.f32.mrf.mxu0
      %v522 = vadd.f32 0.0, %v521
      %523 = vmatprep.mubr.bf16.mxu0 0
      %524 = vmatmul.mubr.bf16.gmra.mxu0 %v360
      %v525 = vpop.f32.mrf.mxu0
      %v526 = vadd.f32 0.0, %v525
      %v527 = vpop.f32.mrf.mxu0
      %v528 = vadd.f32 0.0, %v527
      %v529 = vpop.f32.mrf.mxu0
      %v530 = vadd.f32 0.0, %v529
      %v531 = vpop.f32.mrf.mxu0
      %v532 = vadd.f32 0.0, %v531
      %533 = vmatprep.mubr.bf16.mxu0 0
      %534 = vmatmul.mubr.bf16.gmra.mxu0 %v361
      %v535 = vpop.f32.mrf.mxu0
      %v536 = vadd.f32 0.0, %v535
      %v537 = vpop.f32.mrf.mxu0
      %v538 = vadd.f32 0.0, %v537
      %v539 = vpop.f32.mrf.mxu0
      %v540 = vadd.f32 0.0, %v539
      %v541 = vpop.f32.mrf.mxu0
      %v542 = vadd.f32 0.0, %v541
      %543 = vmatprep.mubr.bf16.mxu0 0
      %544 = vmatmul.mubr.bf16.gmra.mxu0 %v362
      %v545 = vpop.f32.mrf.mxu0
      %v546 = vadd.f32 0.0, %v545
      %v547 = vpop.f32.mrf.mxu0
      %v548 = vadd.f32 0.0, %v547
      %v549 = vpop.f32.mrf.mxu0
      %v550 = vadd.f32 0.0, %v549
      %v551 = vpop.f32.mrf.mxu0
      %v552 = vadd.f32 0.0, %v551
      %553 = vmatprep.mubr.bf16.mxu0 0
      %554 = vmatmul.mubr.bf16.gmra.mxu0 %v363
      %v555 = vpop.f32.mrf.mxu0
      %v556 = vadd.f32 0.0, %v555
      %v557 = vpop.f32.mrf.mxu0
      %v558 = vadd.f32 0.0, %v557
      %v559 = vpop.f32.mrf.mxu0
      %v560 = vadd.f32 0.0, %v559
      %v561 = vpop.f32.mrf.mxu0
      %v562 = vadd.f32 0.0, %v561
      %563 = vmatprep.mubr.bf16.mxu0 0
      %564 = vmatmul.mubr.bf16.gmra.mxu0 %v364
      %v565 = vpop.f32.mrf.mxu0
      %v566 = vadd.f32 0.0, %v565
      %v567 = vpop.f32.mrf.mxu0
      %v568 = vadd.f32 0.0, %v567
      %v569 = vpop.f32.mrf.mxu0
      %v570 = vadd.f32 0.0, %v569
      %v571 = vpop.f32.mrf.mxu0
      %v572 = vadd.f32 0.0, %v571
      %573 = vdwg.mxu0
      %574 = vst [vmem:[%s268] sm:$0xff] %v496
      %575 = vst [vmem:[%s268 + $0x8] sm:$0xff] %v498
      %576 = vst [vmem:[%s268 + $0x10] sm:$0xff] %v500
      %577 = vst [vmem:[%s268 + $0x18] sm:$0xff] %v502
      %578 = vst [vmem:[%s268 + $0x20] sm:$0xff] %v506
      %579 = vst [vmem:[%s268 + $0x28] sm:$0xff] %v508
      %580 = vst [vmem:[%s268 + $0x30] sm:$0xff] %v510
      %581 = vst [vmem:[%s268 + $0x38] sm:$0xff] %v512
      %582 = vst [vmem:[%s268 + $0x40] sm:$0xff] %v516
      %583 = vst [vmem:[%s268 + $0x48] sm:$0xff] %v518
      %584 = vst [vmem:[%s268 + $0x50] sm:$0xff] %v520
      %585 = vst [vmem:[%s268 + $0x58] sm:$0xff] %v522
      %586 = vst [vmem:[%s268 + $0x60] sm:$0xff] %v526
      %587 = vst [vmem:[%s268 + $0x68] sm:$0xff] %v528
      %588 = vst [vmem:[%s268 + $0x70] sm:$0xff] %v530
      %589 = vst [vmem:[%s268 + $0x78] sm:$0xff] %v532
      %590 = vst [vmem:[%s268 + $0x80] sm:$0xff] %v536
      %591 = vst [vmem:[%s268 + $0x88] sm:$0xff] %v538
      %592 = vst [vmem:[%s268 + $0x90] sm:$0xff] %v540
      %593 = vst [vmem:[%s268 + $0x98] sm:$0xff] %v542
      %594 = vst [vmem:[%s268 + $0xa0] sm:$0xff] %v546
      %595 = vst [vmem:[%s268 + $0xa8] sm:$0xff] %v548
      %596 = vst [vmem:[%s268 + $0xb0] sm:$0xff] %v550
      %597 = vst [vmem:[%s268 + $0xb8] sm:$0xff] %v552
      %598 = vst [vmem:[%s268 + $0xc0] sm:$0xff] %v556
      %599 = vst [vmem:[%s268 + $0xc8] sm:$0xff] %v558
      %600 = vst [vmem:[%s268 + $0xd0] sm:$0xff] %v560
      %601 = vst [vmem:[%s268 + $0xd8] sm:$0xff] %v562
      %602 = vst [vmem:[%s268 + $0xe0] sm:$0xff] %v566
      %603 = vst [vmem:[%s268 + $0xe8] sm:$0xff] %v568
      %604 = vst [vmem:[%s268 + $0xf0] sm:$0xff] %v570
      %605 = vst [vmem:[%s268 + $0xf8] sm:$0xff] %v572
      %v606 = vadd.f32 %v496, %v500
      %v607 = vadd.f32 %v606, %v506
      %v608 = vadd.f32 %v607, %v510
      %v609 = vadd.f32 %v608, %v516
      %v610 = vadd.f32 %v609, %v520
      %v611 = vadd.f32 %v610, %v526
      %v612 = vadd.f32 %v611, %v530
      %v613 = vadd.f32 %v612, %v536
      %v614 = vadd.f32 %v613, %v540
      %v615 = vadd.f32 %v614, %v546
      %v616 = vadd.f32 %v615, %v550
      %v617 = vadd.f32 %v616, %v556
      %v618 = vadd.f32 %v617, %v560
      %v619 = vadd.f32 %v618, %v566
      %v620 = vadd.f32 %v619, %v570
      %v621 = vrot.slane %v620, 4
      %v622 = vadd.f32 %v620, %v621
      %v623 = vrot.slane %v622, 2
      %v624 = vadd.f32 %v622, %v623
      %v625 = vrot.slane %v624, 1
      %v626 = vadd.f32 %v624, %v625
      %v627 = vadd.f32 %v498, %v502
      %v628 = vadd.f32 %v627, %v508
      %v629 = vadd.f32 %v628, %v512
      %v630 = vadd.f32 %v629, %v518
      %v631 = vadd.f32 %v630, %v522
      %v632 = vadd.f32 %v631, %v528
      %v633 = vadd.f32 %v632, %v532
      %v634 = vadd.f32 %v633, %v538
      %v635 = vadd.f32 %v634, %v542
      %v636 = vadd.f32 %v635, %v548
      %v637 = vadd.f32 %v636, %v552
      %v638 = vadd.f32 %v637, %v558
      %v639 = vadd.f32 %v638, %v562
      %v640 = vadd.f32 %v639, %v568
      %v641 = vadd.f32 %v640, %v572
      %v642 = vrot.slane %v641, 4
      %v643 = vadd.f32 %v641, %v642
      %v644 = vrot.slane %v643, 2
      %v645 = vadd.f32 %v643, %v644
      %v646 = vrot.slane %v645, 1
      %v647 = vadd.f32 %v645, %v646
      %v650 = vcombine.low %v626, %v647
      %v652 = vunpack.c.l.s4 1966171168
      %v653 = vunpack.c.0.s8 %v652
      %v654 = vlaneseq
      %v655 = vshrl.u32 %v654, 7
      %v656 = vsub.s32 %v653, %v655
      %v657 = vrot.slane %v650, %v656
      %v659 = vunpack.c.l.s4 1966171168
      %v660 = vunpack.c.0.s8 %v659
      %v661 = vlaneseq
      %v662 = vshrl.u32 %v661, 7
      %v663 = vsub.s32 %v660, %v662
      %v664 = vrot.slane %v657, %v663
      %v666 = vlaneseq
      %vm667 = vcmp.ge.s32.totalorder %v666, 0
      %vm668 = vcmp.lt.s32.totalorder %v666, 256
      %vm669 = vmand %vm667, %vm668
      %670 = vst.msk [vmem:[%s273] sm:$0x3] %vm669, %v664
      %v671 = vmul.f32 %v496, %v496
      %v672 = vmul.f32 %v498, %v498
      %v673 = vmul.f32 %v500, %v500
      %v674 = vmul.f32 %v502, %v502
      %v675 = vmul.f32 %v506, %v506
      %v676 = vmul.f32 %v508, %v508
      %v677 = vmul.f32 %v510, %v510
      %v678 = vmul.f32 %v512, %v512
      %v679 = vmul.f32 %v516, %v516
      %v680 = vmul.f32 %v518, %v518
      %v681 = vmul.f32 %v520, %v520
      %v682 = vmul.f32 %v522, %v522
      %v683 = vmul.f32 %v526, %v526
      %v684 = vmul.f32 %v528, %v528
      %v685 = vmul.f32 %v530, %v530
      %v686 = vmul.f32 %v532, %v532
      %v687 = vmul.f32 %v536, %v536
      %v688 = vmul.f32 %v538, %v538
      %v689 = vmul.f32 %v540, %v540
      %v690 = vmul.f32 %v542, %v542
      %v691 = vmul.f32 %v546, %v546
      %v692 = vmul.f32 %v548, %v548
      %v693 = vmul.f32 %v550, %v550
      %v694 = vmul.f32 %v552, %v552
      %v695 = vmul.f32 %v556, %v556
      %v696 = vmul.f32 %v558, %v558
      %v697 = vmul.f32 %v560, %v560
      %v698 = vmul.f32 %v562, %v562
      %v699 = vmul.f32 %v566, %v566
      %v700 = vmul.f32 %v568, %v568
      %v701 = vmul.f32 %v570, %v570
      %v702 = vmul.f32 %v572, %v572
      %v703 = vadd.f32 %v671, %v673
      %v704 = vadd.f32 %v703, %v675
      %v705 = vadd.f32 %v704, %v677
      %v706 = vadd.f32 %v705, %v679
      %v707 = vadd.f32 %v706, %v681
      %v708 = vadd.f32 %v707, %v683
      %v709 = vadd.f32 %v708, %v685
      %v710 = vadd.f32 %v709, %v687
      %v711 = vadd.f32 %v710, %v689
      %v712 = vadd.f32 %v711, %v691
      %v713 = vadd.f32 %v712, %v693
      %v714 = vadd.f32 %v713, %v695
      %v715 = vadd.f32 %v714, %v697
      %v716 = vadd.f32 %v715, %v699
      %v717 = vadd.f32 %v716, %v701
      %v718 = vrot.slane %v717, 4
      %v719 = vadd.f32 %v717, %v718
      %v720 = vrot.slane %v719, 2
      %v721 = vadd.f32 %v719, %v720
      %v722 = vrot.slane %v721, 1
      %v723 = vadd.f32 %v721, %v722
      %v724 = vadd.f32 %v672, %v674
      %v725 = vadd.f32 %v724, %v676
      %v726 = vadd.f32 %v725, %v678
      %v727 = vadd.f32 %v726, %v680
      %v728 = vadd.f32 %v727, %v682
      %v729 = vadd.f32 %v728, %v684
      %v730 = vadd.f32 %v729, %v686
      %v731 = vadd.f32 %v730, %v688
      %v732 = vadd.f32 %v731, %v690
      %v733 = vadd.f32 %v732, %v692
      %v734 = vadd.f32 %v733, %v694
      %v735 = vadd.f32 %v734, %v696
      %v736 = vadd.f32 %v735, %v698
      %v737 = vadd.f32 %v736, %v700
      %v738 = vadd.f32 %v737, %v702
      %v739 = vrot.slane %v738, 4
      %v740 = vadd.f32 %v738, %v739
      %v741 = vrot.slane %v740, 2
      %v742 = vadd.f32 %v740, %v741
      %v743 = vrot.slane %v742, 1
      %v744 = vadd.f32 %v742, %v743
      %v747 = vcombine.low %v723, %v744
      %v749 = vunpack.c.l.s4 1966171168
      %v750 = vunpack.c.0.s8 %v749
      %v751 = vlaneseq
      %v752 = vshrl.u32 %v751, 7
      %v753 = vsub.s32 %v750, %v752
      %v754 = vrot.slane %v747, %v753
      %v756 = vunpack.c.l.s4 1966171168
      %v757 = vunpack.c.0.s8 %v756
      %v758 = vlaneseq
      %v759 = vshrl.u32 %v758, 7
      %v760 = vsub.s32 %v757, %v759
      %v761 = vrot.slane %v754, %v760
      %763 = vst.msk [vmem:[%s277] sm:$0x3] %vm669, %v761
      %s764 = smul.u32 16, %s18
      %p765 = scmp.lt.s32.totalorder %s764, 63
      %s766 = scalar_select %p765, %s764, 63
      %s767 = smul.addr %s766, 2
      %s768 = smul.addr %s767, 8
      %s769 = scalar_lea.vmem %s4, %s768
      %p770 = scmp.lt.s32.totalorder %s18, 3
      %s771 = scalar_select %p770, %s18, 3
      %s772 = smul.addr %s771, 2
      %s773 = scalar_lea.vmem %s5, %s772
      %p774 = scmp.lt.s32.totalorder %s18, 3
      %s775 = scalar_select %p774, %s18, 3
      %s776 = smul.addr %s775, 2
      %s777 = scalar_lea.vmem %s6, %s776
      // Predicated region
      $region37: #{resnext_bottleneck_forward.6} parent=35 // pred_check
        %p778 = pneg %p125
      $region38: #{resnext_bottleneck_forward.6} parent=35 // pred_check_branch
        %780 = sbr.rel (%p778) target = $region40
      $region39: #{resnext_bottleneck_forward.6} parent=35 // pred_region
        %s781 = smul.u32 16, %s18
      $region40: #{resnext_bottleneck_forward.6} parent=35 // pred_fallthru
        _
      // Predicated region
      $region41: #{resnext_bottleneck_forward.6} parent=35 // pred_check
        %p782 = pneg %p151
      $region42: #{resnext_bottleneck_forward.6} parent=35 // pred_check_branch
        %784 = sbr.rel (%p782) target = $region44
      $region43: #{resnext_bottleneck_forward.6} parent=35 // pred_region
        _
      $region44: #{resnext_bottleneck_forward.6} parent=35 // pred_fallthru
        _
      // Predicated region
      $region45: #{resnext_bottleneck_forward.6} parent=35 // pred_check
        %p785 = pneg %p177
      $region46: #{resnext_bottleneck_forward.6} parent=35 // pred_check_branch
        %787 = sbr.rel (%p785) target = $region48
      $region47: #{resnext_bottleneck_forward.6} parent=35 // pred_region
        _
      $region48: #{resnext_bottleneck_forward.6} parent=35 // pred_fallthru
        _
    $region36: #{resnext_bottleneck_forward.6} parent=5 // pred_fallthru
      _
    %p788 = scmp.le.s32.totalorder 2, %s13
    // Predicated region
    $region49: #{resnext_bottleneck_forward.6} parent=5 // pred_check
      %p789 = pneg %p788
    $region50: #{resnext_bottleneck_forward.6} parent=5 // pred_check_branch
      %791 = sbr.rel (%p789) target = $region52
    $region51: #{resnext_bottleneck_forward.6} parent=5 // pred_region
      %s792 = ssub.s32 %s13, 2
      // Predicated region
      $region53: #{resnext_bottleneck_forward.6} parent=51 // pred_check
        %p793 = pneg %p131
      $region54: #{resnext_bottleneck_forward.6} parent=51 // pred_check_branch
        %795 = sbr.rel (%p793) target = $region56
      $region55: #{resnext_bottleneck_forward.6} parent=51 // pred_region
        %s796 = smul.u32 16, %s19
        %p797 = scmp.lt.s32.totalorder %s796, 63
        %s798 = scalar_select %p797, %s796, 63
        %s799 = smul.addr %s798, 2
        %s800 = smul.addr %s799, 8
        %s801 = scalar_lea.vmem %s4, %s800
      $region56: #{resnext_bottleneck_forward.6} parent=51 // pred_fallthru
        _
      // Predicated region
      $region57: #{resnext_bottleneck_forward.6} parent=51 // pred_check
        %p802 = pneg %p157
      $region58: #{resnext_bottleneck_forward.6} parent=51 // pred_check_branch
        %804 = sbr.rel (%p802) target = $region60
      $region59: #{resnext_bottleneck_forward.6} parent=51 // pred_region
        %p805 = scmp.lt.s32.totalorder %s19, 3
        %s806 = scalar_select %p805, %s19, 3
        %s807 = smul.addr %s806, 2
        %s808 = scalar_lea.vmem %s5, %s807
      $region60: #{resnext_bottleneck_forward.6} parent=51 // pred_fallthru
        _
      // Predicated region
      $region61: #{resnext_bottleneck_forward.6} parent=51 // pred_check
        %p809 = pneg %p183
      $region62: #{resnext_bottleneck_forward.6} parent=51 // pred_check_branch
        %811 = sbr.rel (%p809) target = $region64
      $region63: #{resnext_bottleneck_forward.6} parent=51 // pred_region
        %p812 = scmp.lt.s32.totalorder %s19, 3
        %s813 = scalar_select %p812, %s19, 3
        %s814 = smul.addr %s813, 2
        %s815 = scalar_lea.vmem %s6, %s814
      $region64: #{resnext_bottleneck_forward.6} parent=51 // pred_fallthru
        _
    $region52: #{resnext_bottleneck_forward.6} parent=5 // pred_fallthru
      _
  $region6: #{resnext_bottleneck_forward.6} parent=0 // loop_footer
    %s17 = sadd.s32 1, %s13
  $region7: #{resnext_bottleneck_forward.6} parent=0 // loop_footer_branch
    %12 = sbr.rel target = $region3
  $region8: #{resnext_bottleneck_forward.6} parent=0 // loop_exit
    _

// kernel: resnext_bottleneck_forward.5
$region0: #{resnext_bottleneck_forward.5}
  #allocation0 [shape = 'u32[]', space=smem, size = 0x4, offset = 0x4, fixed_abs, tag = 'smem constant byte address 0x4 - core index']
  #allocation1 [shape = 'u32[144,128]{1,0:T(1,128)}', space=vmem, size = 0x12000, scoped, tag = 'internal scratch']
  #allocation2 [shape = 'f32[6,10,10,128]{3,2,1,0:T(8,128)}', space=vmem, size = 0x78000, scoped, tag = 'scratch operand']
  %s0 = inlined_call_operand.vmem [shape: f32[2,4,8,8,128], index: 0, kind: input, shape index: {}]
  %s1 = inlined_call_operand.vmem [shape: f32[1,128], index: 1, kind: input, shape index: {}]
  %s2 = inlined_call_operand.vmem [shape: f32[1,128], index: 2, kind: input, shape index: {}]
  %s3 = inlined_call_operand.hbm [shape: bf16[3,1152,128], index: 3, kind: input, shape index: {}]
  %s4 = inlined_call_operand.vmem [shape: f32[2,256,128], index: 4, kind: output, shape index: {0}]
  %s5 = inlined_call_operand.vmem [shape: f32[2,1,128], index: 5, kind: output, shape index: {1}]
  %s6 = inlined_call_operand.vmem [shape: f32[2,1,128], index: 6, kind: output, shape index: {2}]
  %7 = xla_tuple %s4, %s5, %s6
  %s8 = sld [smem:[#allocation0]]
  $region69: #{resnext_bottleneck_forward.5} parent=0
    _
  %s10 = ssub.s32 1, %s8
  %s11 = scalar_select 0, %s10, %s8
  $region1: #{resnext_bottleneck_forward.5} parent=0
    #allocation3 [shape = 'u8[884736]{0}', space=vmem, size = 0xd8000, scoped, tag = 'input window, operand 3, single buffered']
    #allocation4 [shape = 's32[2]{0}', space=sflag, size = 0x8, scoped, tag = 'scoped memory for resnext_bottleneck_forward.5']
    %12 = vsyncpa [#allocation4], 0
    loop: start=0, step=1, limit=4
    $region2: #{resnext_bottleneck_forward.5} parent=1 // loop_pre_header
      _
    $region3: #{resnext_bottleneck_forward.5} parent=1 // loop_header
      %s14 = sphi 0, %s18
      %p15 = scmp.ge.s32.totalorder %s14, 4
      %s24 = sphi 0, %s26
      %s27 = sphi 0, %s24
      %s28 = sphi 0, %s27
      %s44 = sphi 0, %s28
      %s48 = sphi 0, %s48
      %s50 = sphi 0, %s48
      %s51 = sphi 0, %s50
      %s65 = sphi 0, %s51
      %s69 = sphi 0, %s69
      %s71 = sphi 0, %s69
      %s72 = sphi 0, %s71
      %s86 = sphi 0, %s72
      %s90 = sphi 0, %s90
      %s92 = sphi 0, %s90
      %s93 = sphi 0, %s92
      %s107 = sphi 0, %s93
      %s113 = sphi 0, %s115
      %s116 = sphi 0, %s113
      %s117 = sphi 0, %s116
      %s133 = sphi 0, %s117
      %s139 = sphi 0, %s141
      %s142 = sphi 0, %s139
      %s143 = sphi 0, %s142
      %s159 = sphi 0, %s143
      %s165 = sphi 0, %s167
      %s168 = sphi 0, %s165
      %s169 = sphi 0, %s168
      %s185 = sphi 0, %s169
    $region4: #{resnext_bottleneck_forward.5} parent=1 // loop_header_branch
      %17 = sbr.rel (%p15) target = $region8
    $region5: #{resnext_bottleneck_forward.5} parent=1 // loop_body
      %s19 = ssub.s32 %s14, 1
      %s20 = ssub.s32 %s14, 2
      %s21 = sadd.s32 %s14, 1
      %s22 = ssub.s32 %s14, %s21
      %p23 = scmp.eq.s32.totalorder %s22, 0
      %s25 = sadd.s32 %s24, 1
      %s26 = scalar_select %p23, %s24, %s25
      %p29 = pneg %p23
      %p30 = scmp.eq.s32.totalorder %s14, 1
      %p31 = por %p29, %p30
      %p32 = scmp.ne.s32.totalorder %s24, %s27
      %p33 = scmp.eq.s32.totalorder %s14, 0
      %p34 = por %p32, %p33
      %p35 = scmp.ne.s32.totalorder %s24, %s27
      %p36 = scmp.eq.s32.totalorder %s19, 1
      %p37 = por %p35, %p36
      %p38 = scmp.ne.s32.totalorder %s27, %s28
      %p39 = scmp.eq.s32.totalorder %s19, 0
      %p40 = por %p38, %p39
      %p41 = scmp.ne.s32.totalorder %s27, %s28
      %p42 = scmp.eq.s32.totalorder %s20, 1
      %p43 = por %p41, %p42
      %p45 = scmp.ne.s32.totalorder %s28, %s44
      %p46 = scmp.eq.s32.totalorder %s20, 0
      %p47 = por %p45, %p46
      %s49 = sadd.s32 %s48, 1
      %p52 = scmp.eq.s32.totalorder %s14, 1
      %p53 = scmp.ne.s32.totalorder %s48, %s50
      %p54 = scmp.eq.s32.totalorder %s14, 0
      %p55 = por %p53, %p54
      %p56 = scmp.ne.s32.totalorder %s48, %s50
      %p57 = scmp.eq.s32.totalorder %s19, 1
      %p58 = por %p56, %p57
      %p59 = scmp.ne.s32.totalorder %s50, %s51
      %p60 = scmp.eq.s32.totalorder %s19, 0
      %p61 = por %p59, %p60
      %p62 = scmp.ne.s32.totalorder %s50, %s51
      %p63 = scmp.eq.s32.totalorder %s20, 1
      %p64 = por %p62, %p63
      %p66 = scmp.ne.s32.totalorder %s51, %s65
      %p67 = scmp.eq.s32.totalorder %s20, 0
      %p68 = por %p66, %p67
      %s70 = sadd.s32 %s69, 1
      %p73 = scmp.eq.s32.totalorder %s14, 1
      %p74 = scmp.ne.s32.totalorder %s69, %s71
      %p75 = scmp.eq.s32.totalorder %s14, 0
      %p76 = por %p74, %p75
      %p77 = scmp.ne.s32.totalorder %s69, %s71
      %p78 = scmp.eq.s32.totalorder %s19, 1
      %p79 = por %p77, %p78
      %p80 = scmp.ne.s32.totalorder %s71, %s72
      %p81 = scmp.eq.s32.totalorder %s19, 0
      %p82 = por %p80, %p81
      %p83 = scmp.ne.s32.totalorder %s71, %s72
      %p84 = scmp.eq.s32.totalorder %s20, 1
      %p85 = por %p83, %p84
      %p87 = scmp.ne.s32.totalorder %s72, %s86
      %p88 = scmp.eq.s32.totalorder %s20, 0
      %p89 = por %p87, %p88
      %s91 = sadd.s32 %s90, 1
      %p94 = scmp.eq.s32.totalorder %s14, 1
      %p95 = scmp.ne.s32.totalorder %s90, %s92
      %p96 = scmp.eq.s32.totalorder %s14, 0
      %p97 = por %p95, %p96
      %p98 = scmp.ne.s32.totalorder %s90, %s92
      %p99 = scmp.eq.s32.totalorder %s19, 1
      %p100 = por %p98, %p99
      %p101 = scmp.ne.s32.totalorder %s92, %s93
      %p102 = scmp.eq.s32.totalorder %s19, 0
      %p103 = por %p101, %p102
      %p104 = scmp.ne.s32.totalorder %s92, %s93
      %p105 = scmp.eq.s32.totalorder %s20, 1
      %p106 = por %p104, %p105
      %p108 = scmp.ne.s32.totalorder %s93, %s107
      %p109 = scmp.eq.s32.totalorder %s20, 0
      %p110 = por %p108, %p109
      %s111 = ssub.s32 %s14, %s21
      %p112 = scmp.eq.s32.totalorder %s111, 0
      %s114 = sadd.s32 %s113, 1
      %s115 = scalar_select %p112, %s113, %s114
      %p118 = pneg %p112
      %p119 = scmp.eq.s32.totalorder %s14, 1
      %p120 = por %p118, %p119
      %p121 = scmp.ne.s32.totalorder %s113, %s116
      %p122 = scmp.eq.s32.totalorder %s14, 0
      %p123 = por %p121, %p122
      %p124 = scmp.ne.s32.totalorder %s113, %s116
      %p125 = scmp.eq.s32.totalorder %s19, 1
      %p126 = por %p124, %p125
      %p127 = scmp.ne.s32.totalorder %s116, %s117
      %p128 = scmp.eq.s32.totalorder %s19, 0
      %p129 = por %p127, %p128
      %p130 = scmp.ne.s32.totalorder %s116, %s117
      %p131 = scmp.eq.s32.totalorder %s20, 1
      %p132 = por %p130, %p131
      %p134 = scmp.ne.s32.totalorder %s117, %s133
      %p135 = scmp.eq.s32.totalorder %s20, 0
      %p136 = por %p134, %p135
      %s137 = ssub.s32 %s14, %s21
      %p138 = scmp.eq.s32.totalorder %s137, 0
      %s140 = sadd.s32 %s139, 1
      %s141 = scalar_select %p138, %s139, %s140
      %p144 = pneg %p138
      %p145 = scmp.eq.s32.totalorder %s14, 1
      %p146 = por %p144, %p145
      %p147 = scmp.ne.s32.totalorder %s139, %s142
      %p148 = scmp.eq.s32.totalorder %s14, 0
      %p149 = por %p147, %p148
      %p150 = scmp.ne.s32.totalorder %s139, %s142
      %p151 = scmp.eq.s32.totalorder %s19, 1
      %p152 = por %p150, %p151
      %p153 = scmp.ne.s32.totalorder %s142, %s143
      %p154 = scmp.eq.s32.totalorder %s19, 0
      %p155 = por %p153, %p154
      %p156 = scmp.ne.s32.totalorder %s142, %s143
      %p157 = scmp.eq.s32.totalorder %s20, 1
      %p158 = por %p156, %p157
      %p160 = scmp.ne.s32.totalorder %s143, %s159
      %p161 = scmp.eq.s32.totalorder %s20, 0
      %p162 = por %p160, %p161
      %s163 = ssub.s32 %s14, %s21
      %p164 = scmp.eq.s32.totalorder %s163, 0
      %s166 = sadd.s32 %s165, 1
      %s167 = scalar_select %p164, %s165, %s166
      %p170 = pneg %p164
      %p171 = scmp.eq.s32.totalorder %s14, 1
      %p172 = por %p170, %p171
      %p173 = scmp.ne.s32.totalorder %s165, %s168
      %p174 = scmp.eq.s32.totalorder %s14, 0
      %p175 = por %p173, %p174
      %p176 = scmp.ne.s32.totalorder %s165, %s168
      %p177 = scmp.eq.s32.totalorder %s19, 1
      %p178 = por %p176, %p177
      %p179 = scmp.ne.s32.totalorder %s168, %s169
      %p180 = scmp.eq.s32.totalorder %s19, 0
      %p181 = por %p179, %p180
      %p182 = scmp.ne.s32.totalorder %s168, %s169
      %p183 = scmp.eq.s32.totalorder %s20, 1
      %p184 = por %p182, %p183
      %p186 = scmp.ne.s32.totalorder %s169, %s185
      %p187 = scmp.eq.s32.totalorder %s20, 0
      %p188 = por %p186, %p187
      %p189 = scmp.le.s32.totalorder 1, %s14
      %p190 = scmp.lt.s32.totalorder %s14, 3
      %p191 = pnand %p189, %p190
      %p192 = pneg %p191
      // Predicated region
      $region9: #{resnext_bottleneck_forward.5} parent=5 // pred_check
        _
      $region10: #{resnext_bottleneck_forward.5} parent=5 // pred_check_branch
        %194 = sbr.rel (%p191) target = $region12
      $region11: #{resnext_bottleneck_forward.5} parent=5 // pred_region
        %s195 = ssub.s32 %s14, 1
        // Predicated region
        $region13: #{resnext_bottleneck_forward.5} parent=11 // pred_check
          %p196 = pneg %p61
        $region14: #{resnext_bottleneck_forward.5} parent=11 // pred_check_branch
          %198 = sbr.rel (%p196) target = $region16
        $region15: #{resnext_bottleneck_forward.5} parent=11 // pred_region
          _
        $region16: #{resnext_bottleneck_forward.5} parent=11 // pred_fallthru
          _
        // Predicated region
        $region17: #{resnext_bottleneck_forward.5} parent=11 // pred_check
          %p199 = pneg %p82
        $region18: #{resnext_bottleneck_forward.5} parent=11 // pred_check_branch
          %201 = sbr.rel (%p199) target = $region20
        $region19: #{resnext_bottleneck_forward.5} parent=11 // pred_region
          _
        $region20: #{resnext_bottleneck_forward.5} parent=11 // pred_fallthru
          _
        // Predicated region
        $region21: #{resnext_bottleneck_forward.5} parent=11 // pred_check
          %p202 = pneg %p103
        $region22: #{resnext_bottleneck_forward.5} parent=11 // pred_check_branch
          %204 = sbr.rel (%p202) target = $region24
        $region23: #{resnext_bottleneck_forward.5} parent=11 // pred_region
          %s206 = ssub.s32 27648, 27648
          %207 = vsyncadd [#allocation4], %s206
          %s208 = sshll.u32 [#allocation3], 4
          %s209 = int_to_ptr.vmem [resolvable:$true] %s208
          %214 = dma.hbm_to_vmem [thread:$0]  %s3, 27648, %s209, [#allocation4], 64, 64, 4
        $region24: #{resnext_bottleneck_forward.5} parent=11 // pred_fallthru
          _
      $region12: #{resnext_bottleneck_forward.5} parent=5 // pred_fallthru
        _
      %p215 = scmp.lt.s32.totalorder %s14, 2
      // Predicated region
      $region25: #{resnext_bottleneck_forward.5} parent=5 // pred_check
        %p216 = pneg %p215
      $region26: #{resnext_bottleneck_forward.5} parent=5 // pred_check_branch
        %218 = sbr.rel (%p216) target = $region28
      $region27: #{resnext_bottleneck_forward.5} parent=5 // pred_region
        // Predicated region
        $region29: #{resnext_bottleneck_forward.5} parent=27 // pred_check
          %p219 = pneg %p34
        $region30: #{resnext_bottleneck_forward.5} parent=27 // pred_check_branch
          %221 = sbr.rel (%p219) target = $region32
        $region31: #{resnext_bottleneck_forward.5} parent=27 // pred_region
          %p222 = scmp.lt.s32.totalorder %s14, 1
          %s223 = scalar_select %p222, %s14, 1
          %s224 = smul.addr %s223, 32
          %s225 = smul.addr %s224, 8
          %s226 = scalar_lea.vmem %s0, %s225
        $region32: #{resnext_bottleneck_forward.5} parent=27 // pred_fallthru
          _
      $region28: #{resnext_bottleneck_forward.5} parent=5 // pred_fallthru
        _
      %p227 = scmp.le.s32.totalorder 1, %s14
      %p228 = scmp.lt.s32.totalorder %s14, 3
      %p229 = pnand %p227, %p228
      %p230 = pneg %p229
      // Predicated region
      $region33: #{resnext_bottleneck_forward.5} parent=5 // pred_check
        _
      $region34: #{resnext_bottleneck_forward.5} parent=5 // pred_check_branch
        %232 = sbr.rel (%p229) target = $region36
      $region35: #{resnext_bottleneck_forward.5} parent=5 // pred_region
        %s233 = ssub.s32 %s14, 1
        // Predicated region
        $region37: #{resnext_bottleneck_forward.5} parent=35 // pred_check
          %p234 = pneg %p103
        $region38: #{resnext_bottleneck_forward.5} parent=35 // pred_check_branch
          %236 = sbr.rel (%p234) target = $region40
        $region39: #{resnext_bottleneck_forward.5} parent=35 // pred_region
          %237 = dma.done [#allocation4], 27648
        $region40: #{resnext_bottleneck_forward.5} parent=35 // pred_fallthru
          _
        %p238 = scmp.lt.s32.totalorder %s19, 1
        %s239 = scalar_select %p238, %s19, 1
        %s240 = smul.addr %s239, 32
        %s241 = smul.addr %s240, 8
        %s242 = scalar_lea.vmem %s0, %s241
        %p243 = pneg %p40
        %p244 = pneg %p37
        %p245 = pneg %p61
        %p246 = pneg %p58
        %p247 = pneg %p82
        %p248 = pneg %p79
        %p249 = pneg %p103
        %p250 = pneg %p100
        %p251 = pneg %p129
        %p252 = pneg %p126
        %p253 = scmp.lt.s32.totalorder %s19, 1
        %s254 = scalar_select %p253, %s19, 1
        %s255 = smul.addr %s254, 32
        %s256 = smul.addr %s255, 8
        %s257 = scalar_lea.vmem %s4, %s256
        %p258 = pneg %p155
        %p259 = pneg %p152
        %p260 = scmp.lt.s32.totalorder %s19, 1
        %s261 = scalar_select %p260, %s19, 1
        %s262 = scalar_lea.vmem %s5, %s261
        %p263 = pneg %p181
        %p264 = pneg %p178
        %p265 = scmp.lt.s32.totalorder %s19, 1
        %s266 = scalar_select %p265, %s19, 1
        %s267 = scalar_lea.vmem %s6, %s266
        %p268 = scmp.lt.s32.totalorder %s19, 1
        %s269 = scalar_select %p268, %s19, 1
        %s270 = smul.addr %s269, 32
        %s271 = smul.addr %s270, 8
        %s272 = scalar_lea.vmem %s0, %s271
        %p273 = scmp.lt.s32.totalorder %s19, 1
        %s274 = scalar_select %p273, %s19, 1
        %s275 = smul.addr %s274, 32
        %s276 = smul.addr %s275, 8
        %s277 = scalar_lea.vmem %s4, %s276
        %p278 = scmp.lt.s32.totalorder %s19, 1
        %s279 = scalar_select %p278, %s19, 1
        %s280 = scalar_lea.vmem %s5, %s279
        %p281 = scmp.lt.s32.totalorder %s19, 1
        %s282 = scalar_select %p281, %s19, 1
        %s283 = scalar_lea.vmem %s6, %s282
        %v285 = vld [vmem:[%s1] sm:$0x1]
        %v286 = vld [vmem:[%s2] sm:$0x1]
        %v287 = vld [vmem:[%s272] sm:$0xff]
        %v288 = vld [vmem:[%s272 + $0x8] sm:$0xff]
        %v289 = vld [vmem:[%s272 + $0x10] sm:$0xff]
        %v290 = vld [vmem:[%s272 + $0x18] sm:$0xff]
        %v291 = vld [vmem:[%s272 + $0x20] sm:$0xff]
        %v292 = vld [vmem:[%s272 + $0x28] sm:$0xff]
        %v293 = vld [vmem:[%s272 + $0x30] sm:$0xff]
        %v294 = vld [vmem:[%s272 + $0x38] sm:$0xff]
        %v295 = vld [vmem:[%s272 + $0x40] sm:$0xff]
        %v296 = vld [vmem:[%s272 + $0x48] sm:$0xff]
        %v297 = vld [vmem:[%s272 + $0x50] sm:$0xff]
        %v298 = vld [vmem:[%s272 + $0x58] sm:$0xff]
        %v299 = vld [vmem:[%s272 + $0x60] sm:$0xff]
        %v300 = vld [vmem:[%s272 + $0x68] sm:$0xff]
        %v301 = vld [vmem:[%s272 + $0x70] sm:$0xff]
        %v302 = vld [vmem:[%s272 + $0x78] sm:$0xff]
        %v303 = vld [vmem:[%s272 + $0x80] sm:$0xff]
        %v304 = vld [vmem:[%s272 + $0x88] sm:$0xff]
        %v305 = vld [vmem:[%s272 + $0x90] sm:$0xff]
        %v306 = vld [vmem:[%s272 + $0x98] sm:$0xff]
        %v307 = vld [vmem:[%s272 + $0xa0] sm:$0xff]
        %v308 = vld [vmem:[%s272 + $0xa8] sm:$0xff]
        %v309 = vld [vmem:[%s272 + $0xb0] sm:$0xff]
        %v310 = vld [vmem:[%s272 + $0xb8] sm:$0xff]
        %v311 = vld [vmem:[%s272 + $0xc0] sm:$0xff]
        %v312 = vld [vmem:[%s272 + $0xc8] sm:$0xff]
        %v313 = vld [vmem:[%s272 + $0xd0] sm:$0xff]
        %v314 = vld [vmem:[%s272 + $0xd8] sm:$0xff]
        %v315 = vld [vmem:[%s272 + $0xe0] sm:$0xff]
        %v316 = vld [vmem:[%s272 + $0xe8] sm:$0xff]
        %v317 = vld [vmem:[%s272 + $0xf0] sm:$0xff]
        %v318 = vld [vmem:[%s272 + $0xf8] sm:$0xff]
        %v320 = vlaneseq
        %v321 = vshrl.u32 %v320, 7
        %v322 = vsub.s32 0, %v321
        %v323 = vrot.slane %v285, %v322
        %v325 = vmul.f32 %v287, %v323
        %v326 = vmul.f32 %v288, %v323
        %v327 = vmul.f32 %v289, %v323
        %v328 = vmul.f32 %v290, %v323
        %v329 = vmul.f32 %v291, %v323
        %v330 = vmul.f32 %v292, %v323
        %v331 = vmul.f32 %v293, %v323
        %v332 = vmul.f32 %v294, %v323
        %v333 = vmul.f32 %v295, %v323
        %v334 = vmul.f32 %v296, %v323
        %v335 = vmul.f32 %v297, %v323
        %v336 = vmul.f32 %v298, %v323
        %v337 = vmul.f32 %v299, %v323
        %v338 = vmul.f32 %v300, %v323
        %v339 = vmul.f32 %v301, %v323
        %v340 = vmul.f32 %v302, %v323
        %v341 = vmul.f32 %v303, %v323
        %v342 = vmul.f32 %v304, %v323
        %v343 = vmul.f32 %v305, %v323
        %v344 = vmul.f32 %v306, %v323
        %v345 = vmul.f32 %v307, %v323
        %v346 = vmul.f32 %v308, %v323
        %v347 = vmul.f32 %v309, %v323
        %v348 = vmul.f32 %v310, %v323
        %v349 = vmul.f32 %v311, %v323
        %v350 = vmul.f32 %v312, %v323
        %v351 = vmul.f32 %v313, %v323
        %v352 = vmul.f32 %v314, %v323
        %v353 = vmul.f32 %v315, %v323
        %v354 = vmul.f32 %v316, %v323
        %v355 = vmul.f32 %v317, %v323
        %v356 = vmul.f32 %v318, %v323
        %v358 = vlaneseq
        %v359 = vshrl.u32 %v358, 7
        %v360 = vsub.s32 0, %v359
        %v361 = vrot.slane %v286, %v360
        %v363 = vadd.f32 %v325, %v361
        %v364 = vadd.f32 %v326, %v361
        %v365 = vadd.f32 %v327, %v361
        %v366 = vadd.f32 %v328, %v361
        %v367 = vadd.f32 %v329, %v361
        %v368 = vadd.f32 %v330, %v361
        %v369 = vadd.f32 %v331, %v361
        %v370 = vadd.f32 %v332, %v361
        %v371 = vadd.f32 %v333, %v361
        %v372 = vadd.f32 %v334, %v361
        %v373 = vadd.f32 %v335, %v361
        %v374 = vadd.f32 %v336, %v361
        %v375 = vadd.f32 %v337, %v361
        %v376 = vadd.f32 %v338, %v361
        %v377 = vadd.f32 %v339, %v361
        %v378 = vadd.f32 %v340, %v361
        %v379 = vadd.f32 %v341, %v361
        %v380 = vadd.f32 %v342, %v361
        %v381 = vadd.f32 %v343, %v361
        %v382 = vadd.f32 %v344, %v361
        %v383 = vadd.f32 %v345, %v361
        %v384 = vadd.f32 %v346, %v361
        %v385 = vadd.f32 %v347, %v361
        %v386 = vadd.f32 %v348, %v361
        %v387 = vadd.f32 %v349, %v361
        %v388 = vadd.f32 %v350, %v361
        %v389 = vadd.f32 %v351, %v361
        %v390 = vadd.f32 %v352, %v361
        %v391 = vadd.f32 %v353, %v361
        %v392 = vadd.f32 %v354, %v361
        %v393 = vadd.f32 %v355, %v361
        %v394 = vadd.f32 %v356, %v361
        %v395 = vmax.f32 %v363, 0.0
        %v396 = vmax.f32 %v364, 0.0
        %v397 = vmax.f32 %v365, 0.0
        %v398 = vmax.f32 %v366, 0.0
        %v399 = vmax.f32 %v367, 0.0
        %v400 = vmax.f32 %v368, 0.0
        %v401 = vmax.f32 %v369, 0.0
        %v402 = vmax.f32 %v370, 0.0
        %v403 = vmax.f32 %v371, 0.0
        %v404 = vmax.f32 %v372, 0.0
        %v405 = vmax.f32 %v373, 0.0
        %v406 = vmax.f32 %v374, 0.0
        %v407 = vmax.f32 %v375, 0.0
        %v408 = vmax.f32 %v376, 0.0
        %v409 = vmax.f32 %v377, 0.0
        %v410 = vmax.f32 %v378, 0.0
        %v411 = vmax.f32 %v379, 0.0
        %v412 = vmax.f32 %v380, 0.0
        %v413 = vmax.f32 %v381, 0.0
        %v414 = vmax.f32 %v382, 0.0
        %v415 = vmax.f32 %v383, 0.0
        %v416 = vmax.f32 %v384, 0.0
        %v417 = vmax.f32 %v385, 0.0
        %v418 = vmax.f32 %v386, 0.0
        %v419 = vmax.f32 %v387, 0.0
        %v420 = vmax.f32 %v388, 0.0
        %v421 = vmax.f32 %v389, 0.0
        %v422 = vmax.f32 %v390, 0.0
        %v423 = vmax.f32 %v391, 0.0
        %v424 = vmax.f32 %v392, 0.0
        %v425 = vmax.f32 %v393, 0.0
        %v426 = vmax.f32 %v394, 0.0
        %427 = vst [vmem:[#allocation2] sm:$0xff] 0.0
        %428 = vst [vmem:[#allocation2 + $0x8] sm:$0x3] 0.0
        %429 = vst [vmem:[#allocation2 + $0x10] sm:$0xff] 0.0
        %430 = vst [vmem:[#allocation2 + $0x18] sm:$0x3] 0.0
        %431 = vst [vmem:[#allocation2 + $0x20] sm:$0xff] 0.0
        %432 = vst [vmem:[#allocation2 + $0x28] sm:$0x3] 0.0
        %433 = vst [vmem:[#allocation2 + $0x30] sm:$0xff] 0.0
        %434 = vst [vmem:[#allocation2 + $0x38] sm:$0x3] 0.0
        %435 = vst [vmem:[#allocation2 + $0x40] sm:$0xff] 0.0
        %436 = vst [vmem:[#allocation2 + $0x48] sm:$0x3] 0.0
        %437 = vst [vmem:[#allocation2 + $0x50] sm:$0xff] 0.0
        %438 = vst [vmem:[#allocation2 + $0x58] sm:$0x3] 0.0
        %439 = vst [vmem:[#allocation2 + $0x60] sm:$0xff] 0.0
        %440 = vst [vmem:[#allocation2 + $0x68] sm:$0x3] 0.0
        %441 = vst [vmem:[#allocation2 + $0x70] sm:$0xff] 0.0
        %442 = vst [vmem:[#allocation2 + $0x78] sm:$0x3] 0.0
        %443 = vst [vmem:[#allocation2 + $0x80] sm:$0xff] 0.0
        %444 = vst [vmem:[#allocation2 + $0x88] sm:$0x3] 0.0
        %445 = vst [vmem:[#allocation2 + $0x90] sm:$0xff] 0.0
        %446 = vst [vmem:[#allocation2 + $0x98] sm:$0x3] 0.0
        %447 = vst [vmem:[#allocation2 + $0xa0] sm:$0xff] 0.0
        %448 = vst [vmem:[#allocation2 + $0xa8] sm:$0x3] 0.0
        %449 = vst [vmem:[#allocation2 + $0xb0] sm:$0xff] 0.0
        %450 = vst [vmem:[#allocation2 + $0xb8] sm:$0x3] 0.0
        %451 = vst [vmem:[#allocation2 + $0xc0] sm:$0xff] 0.0
        %452 = vst [vmem:[#allocation2 + $0xc8] sm:$0x3] 0.0
        %453 = vst [vmem:[#allocation2 + $0xd0] sm:$0xff] 0.0
        %454 = vst [vmem:[#allocation2 + $0xd8] sm:$0x3] 0.0
        %455 = vst [vmem:[#allocation2 + $0xe0] sm:$0xff] 0.0
        %456 = vst [vmem:[#allocation2 + $0xe8] sm:$0x3] 0.0
        %457 = vst [vmem:[#allocation2 + $0xf0] sm:$0xff] 0.0
        %458 = vst [vmem:[#allocation2 + $0xf8] sm:$0x3] 0.0
        %459 = vst [vmem:[#allocation2 + $0x100] sm:$0xff] 0.0
        %460 = vst [vmem:[#allocation2 + $0x108] sm:$0x3] 0.0
        %461 = vst [vmem:[#allocation2 + $0x110] sm:$0xff] 0.0
        %462 = vst [vmem:[#allocation2 + $0x118] sm:$0x3] 0.0
        %463 = vst [vmem:[#allocation2 + $0x120] sm:$0xff] 0.0
        %464 = vst [vmem:[#allocation2 + $0x128] sm:$0x3] 0.0
        %465 = vst [vmem:[#allocation2 + $0x130] sm:$0xff] 0.0
        %466 = vst [vmem:[#allocation2 + $0x138] sm:$0x3] 0.0
        %467 = vst [vmem:[#allocation2 + $0x140] sm:$0xff] 0.0
        %468 = vst [vmem:[#allocation2 + $0x148] sm:$0x3] 0.0
        %469 = vst [vmem:[#allocation2 + $0x150] sm:$0xff] 0.0
        %470 = vst [vmem:[#allocation2 + $0x158] sm:$0x3] 0.0
        %471 = vst [vmem:[#allocation2 + $0x160] sm:$0xff] 0.0
        %472 = vst [vmem:[#allocation2 + $0x168] sm:$0x3] 0.0
        %473 = vst [vmem:[#allocation2 + $0x170] sm:$0xff] 0.0
        %474 = vst [vmem:[#allocation2 + $0x178] sm:$0x3] 0.0
        %475 = vst [vmem:[#allocation2 + $0x180] sm:$0xff] 0.0
        %476 = vst [vmem:[#allocation2 + $0x188] sm:$0x3] 0.0
        %477 = vst [vmem:[#allocation2 + $0x190] sm:$0xff] 0.0
        %478 = vst [vmem:[#allocation2 + $0x198] sm:$0x3] 0.0
        %479 = vst [vmem:[#allocation2 + $0x1a0] sm:$0xff] 0.0
        %480 = vst [vmem:[#allocation2 + $0x1a8] sm:$0x3] 0.0
        %481 = vst [vmem:[#allocation2 + $0x1b0] sm:$0xff] 0.0
        %482 = vst [vmem:[#allocation2 + $0x1b8] sm:$0x3] 0.0
        %483 = vst [vmem:[#allocation2 + $0x1c0] sm:$0xff] 0.0
        %484 = vst [vmem:[#allocation2 + $0x1c8] sm:$0x3] 0.0
        %485 = vst [vmem:[#allocation2 + $0x1d0] sm:$0xff] 0.0
        %486 = vst [vmem:[#allocation2 + $0x1d8] sm:$0x3] 0.0
        %487 = vst [vmem:[#allocation2 + $0x1e0] sm:$0xff] 0.0
        %488 = vst [vmem:[#allocation2 + $0x1e8] sm:$0x3] 0.0
        %489 = vst [vmem:[#allocation2 + $0x1f0] sm:$0xff] 0.0
        %490 = vst [vmem:[#allocation2 + $0x1f8] sm:$0x3] 0.0
        %491 = vst [vmem:[#allocation2 + $0x200] sm:$0xff] 0.0
        %492 = vst [vmem:[#allocation2 + $0x208] sm:$0x3] 0.0
        %493 = vst [vmem:[#allocation2 + $0x210] sm:$0xff] 0.0
        %494 = vst [vmem:[#allocation2 + $0x218] sm:$0x3] 0.0
        %495 = vst [vmem:[#allocation2 + $0x220] sm:$0xff] 0.0
        %496 = vst [vmem:[#allocation2 + $0x228] sm:$0x3] 0.0
        %497 = vst [vmem:[#allocation2 + $0x230] sm:$0xff] 0.0
        %498 = vst [vmem:[#allocation2 + $0x238] sm:$0x3] 0.0
        %499 = vst [vmem:[#allocation2 + $0x240] sm:$0xff] 0.0
        %500 = vst [vmem:[#allocation2 + $0x248] sm:$0x3] 0.0
        %501 = vst [vmem:[#allocation2 + $0x250] sm:$0xff] 0.0
        %502 = vst [vmem:[#allocation2 + $0x258] sm:$0x3] 0.0
        %503 = vst [vmem:[#allocation2 + $0x260] sm:$0xff] 0.0
        %504 = vst [vmem:[#allocation2 + $0x268] sm:$0x3] 0.0
        %505 = vst [vmem:[#allocation2 + $0x270] sm:$0xff] 0.0
        %506 = vst [vmem:[#allocation2 + $0x278] sm:$0x3] 0.0
        %507 = vst [vmem:[#allocation2 + $0x280] sm:$0xff] 0.0
        %508 = vst [vmem:[#allocation2 + $0x288] sm:$0x3] 0.0
        %509 = vst [vmem:[#allocation2 + $0x290] sm:$0xff] 0.0
        %510 = vst [vmem:[#allocation2 + $0x298] sm:$0x3] 0.0
        %511 = vst [vmem:[#allocation2 + $0x2a0] sm:$0xff] 0.0
        %512 = vst [vmem:[#allocation2 + $0x2a8] sm:$0x3] 0.0
        %513 = vst [vmem:[#allocation2 + $0x2b0] sm:$0xff] 0.0
        %514 = vst [vmem:[#allocation2 + $0x2b8] sm:$0x3] 0.0
        %515 = vst [vmem:[#allocation2 + $0x2c0] sm:$0xff] 0.0
        %516 = vst [vmem:[#allocation2 + $0x2c8] sm:$0x3] 0.0
        %517 = vst [vmem:[#allocation2 + $0x2d0] sm:$0xff] 0.0
        %518 = vst [vmem:[#allocation2 + $0x2d8] sm:$0x3] 0.0
        %519 = vst [vmem:[#allocation2 + $0x2e0] sm:$0xff] 0.0
        %520 = vst [vmem:[#allocation2 + $0x2e8] sm:$0x3] 0.0
        %521 = vst [vmem:[#allocation2 + $0x2f0] sm:$0xff] 0.0
        %522 = vst [vmem:[#allocation2 + $0x2f8] sm:$0x3] 0.0
        %523 = vst [vmem:[#allocation2 + $0x300] sm:$0xff] 0.0
        %524 = vst [vmem:[#allocation2 + $0x308] sm:$0x3] 0.0
        %525 = vst [vmem:[#allocation2 + $0x310] sm:$0xff] 0.0
        %526 = vst [vmem:[#allocation2 + $0x318] sm:$0x3] 0.0
        %527 = vst [vmem:[#allocation2 + $0x320] sm:$0xff] 0.0
        %528 = vst [vmem:[#allocation2 + $0x328] sm:$0x3] 0.0
        %529 = vst [vmem:[#allocation2 + $0x330] sm:$0xff] 0.0
        %530 = vst [vmem:[#allocation2 + $0x338] sm:$0x3] 0.0
        %531 = vst [vmem:[#allocation2 + $0x340] sm:$0xff] 0.0
        %532 = vst [vmem:[#allocation2 + $0x348] sm:$0x3] 0.0
        %533 = vst [vmem:[#allocation2 + $0x350] sm:$0xff] 0.0
        %534 = vst [vmem:[#allocation2 + $0x358] sm:$0x3] 0.0
        %535 = vst [vmem:[#allocation2 + $0x360] sm:$0xff] 0.0
        %536 = vst [vmem:[#allocation2 + $0x368] sm:$0x3] 0.0
        %537 = vst [vmem:[#allocation2 + $0x370] sm:$0xff] 0.0
        %538 = vst [vmem:[#allocation2 + $0x378] sm:$0x3] 0.0
        %539 = vst [vmem:[#allocation2 + $0x380] sm:$0xff] 0.0
        %540 = vst [vmem:[#allocation2 + $0x388] sm:$0x3] 0.0
        %541 = vst [vmem:[#allocation2 + $0x390] sm:$0xff] 0.0
        %542 = vst [vmem:[#allocation2 + $0x398] sm:$0x3] 0.0
        %543 = vst [vmem:[#allocation2 + $0x3a0] sm:$0xff] 0.0
        %544 = vst [vmem:[#allocation2 + $0x3a8] sm:$0x3] 0.0
        %545 = vst [vmem:[#allocation2 + $0x3b0] sm:$0xff] 0.0
        %546 = vst [vmem:[#allocation2 + $0x3b8] sm:$0x3] 0.0
        %s547 = scalar_lea.vmem [#allocation2], 176
        %548 = vst [vmem:[%s547 + $0x1] sm:$0xff] %v395
        %549 = vst [vmem:[%s547 + $0x11] sm:$0xff] %v396
        %550 = vst [vmem:[%s547 + $0x21] sm:$0xff] %v397
        %551 = vst [vmem:[%s547 + $0x31] sm:$0xff] %v398
        %552 = vst [vmem:[%s547 + $0x41] sm:$0xff] %v399
        %553 = vst [vmem:[%s547 + $0x51] sm:$0xff] %v400
        %554 = vst [vmem:[%s547 + $0x61] sm:$0xff] %v401
        %555 = vst [vmem:[%s547 + $0x71] sm:$0xff] %v402
        %556 = vst [vmem:[%s547 + $0xa1] sm:$0xff] %v403
        %557 = vst [vmem:[%s547 + $0xb1] sm:$0xff] %v404
        %558 = vst [vmem:[%s547 + $0xc1] sm:$0xff] %v405
        %559 = vst [vmem:[%s547 + $0xd1] sm:$0xff] %v406
        %560 = vst [vmem:[%s547 + $0xe1] sm:$0xff] %v407
        %561 = vst [vmem:[%s547 + $0xf1] sm:$0xff] %v408
        %562 = vst [vmem:[%s547 + $0x101] sm:$0xff] %v409
        %563 = vst [vmem:[%s547 + $0x111] sm:$0xff] %v410
        %564 = vst [vmem:[%s547 + $0x141] sm:$0xff] %v411
        %565 = vst [vmem:[%s547 + $0x151] sm:$0xff] %v412
        %566 = vst [vmem:[%s547 + $0x161] sm:$0xff] %v413
        %567 = vst [vmem:[%s547 + $0x171] sm:$0xff] %v414
        %568 = vst [vmem:[%s547 + $0x181] sm:$0xff] %v415
        %569 = vst [vmem:[%s547 + $0x191] sm:$0xff] %v416
        %570 = vst [vmem:[%s547 + $0x1a1] sm:$0xff] %v417
        %571 = vst [vmem:[%s547 + $0x1b1] sm:$0xff] %v418
        %572 = vst [vmem:[%s547 + $0x1e1] sm:$0xff] %v419
        %573 = vst [vmem:[%s547 + $0x1f1] sm:$0xff] %v420
        %574 = vst [vmem:[%s547 + $0x201] sm:$0xff] %v421
        %575 = vst [vmem:[%s547 + $0x211] sm:$0xff] %v422
        %576 = vst [vmem:[%s547 + $0x221] sm:$0xff] %v423
        %577 = vst [vmem:[%s547 + $0x231] sm:$0xff] %v424
        %578 = vst [vmem:[%s547 + $0x241] sm:$0xff] %v425
        %579 = vst [vmem:[%s547 + $0x251] sm:$0xff] %v426
        %v580 = vld [vmem:[#allocation2] sm:$0xff]
        %v581 = vld [vmem:[#allocation2 + $0x10] sm:$0xff]
        %v582 = vld [vmem:[#allocation2 + $0x20] sm:$0xff]
        %v583 = vld [vmem:[#allocation2 + $0x30] sm:$0xff]
        %v584 = vld [vmem:[#allocation2 + $0x40] sm:$0xff]
        %v585 = vld [vmem:[#allocation2 + $0x50] sm:$0xff]
        %v586 = vld [vmem:[#allocation2 + $0x60] sm:$0xff]
        %v587 = vld [vmem:[#allocation2 + $0x70] sm:$0xff]
        %v588 = vld [vmem:[#allocation2 + $0xa0] sm:$0xff]
        %v589 = vld [vmem:[#allocation2 + $0xb0] sm:$0xff]
        %v590 = vld [vmem:[#allocation2 + $0xc0] sm:$0xff]
        %v591 = vld [vmem:[#allocation2 + $0xd0] sm:$0xff]
        %v592 = vld [vmem:[#allocation2 + $0xe0] sm:$0xff]
        %v593 = vld [vmem:[#allocation2 + $0xf0] sm:$0xff]
        %v594 = vld [vmem:[#allocation2 + $0x100] sm:$0xff]
        %v595 = vld [vmem:[#allocation2 + $0x110] sm:$0xff]
        %v596 = vld [vmem:[#allocation2 + $0x140] sm:$0xff]
        %v597 = vld [vmem:[#allocation2 + $0x150] sm:$0xff]
        %v598 = vld [vmem:[#allocation2 + $0x160] sm:$0xff]
        %v599 = vld [vmem:[#allocation2 + $0x170] sm:$0xff]
        %v600 = vld [vmem:[#allocation2 + $0x180] sm:$0xff]
        %v601 = vld [vmem:[#allocation2 + $0x190] sm:$0xff]
        %v602 = vld [vmem:[#allocation2 + $0x1a0] sm:$0xff]
        %v603 = vld [vmem:[#allocation2 + $0x1b0] sm:$0xff]
        %v604 = vld [vmem:[#allocation2 + $0x1e0] sm:$0xff]
        %v605 = vld [vmem:[#allocation2 + $0x1f0] sm:$0xff]
        %v606 = vld [vmem:[#allocation2 + $0x200] sm:$0xff]
        %v607 = vld [vmem:[#allocation2 + $0x210] sm:$0xff]
        %v608 = vld [vmem:[#allocation2 + $0x220] sm:$0xff]
        %v609 = vld [vmem:[#allocation2 + $0x230] sm:$0xff]
        %v610 = vld [vmem:[#allocation2 + $0x240] sm:$0xff]
        %v611 = vld [vmem:[#allocation2 + $0x250] sm:$0xff]
        %v612 = vpack.c.bf16 %v581, %v580
        %v613 = vpack.c.bf16 %v583, %v582
        %v614 = vpack.c.bf16 %v585, %v584
        %v615 = vpack.c.bf16 %v587, %v586
        %v616 = vpack.c.bf16 %v589, %v588
        %v617 = vpack.c.bf16 %v591, %v590
        %v618 = vpack.c.bf16 %v593, %v592
        %v619 = vpack.c.bf16 %v595, %v594
        %v620 = vpack.c.bf16 %v597, %v596
        %v621 = vpack.c.bf16 %v599, %v598
        %v622 = vpack.c.bf16 %v601, %v600
        %v623 = vpack.c.bf16 %v603, %v602
        %v624 = vpack.c.bf16 %v605, %v604
        %v625 = vpack.c.bf16 %v607, %v606
        %v626 = vpack.c.bf16 %v609, %v608
        %v627 = vpack.c.bf16 %v611, %v610
        %v628 = vld [vmem:[#allocation2 + $0x1] sm:$0xff]
        %v629 = vld [vmem:[#allocation2 + $0x11] sm:$0xff]
        %v630 = vld [vmem:[#allocation2 + $0x21] sm:$0xff]
        %v631 = vld [vmem:[#allocation2 + $0x31] sm:$0xff]
        %v632 = vld [vmem:[#allocation2 + $0x41] sm:$0xff]
        %v633 = vld [vmem:[#allocation2 + $0x51] sm:$0xff]
        %v634 = vld [vmem:[#allocation2 + $0x61] sm:$0xff]
        %v635 = vld [vmem:[#allocation2 + $0x71] sm:$0xff]
        %v636 = vld [vmem:[#allocation2 + $0xa1] sm:$0xff]
        %v637 = vld [vmem:[#allocation2 + $0xb1] sm:$0xff]
        %v638 = vld [vmem:[#allocation2 + $0xc1] sm:$0xff]
        %v639 = vld [vmem:[#allocation2 + $0xd1] sm:$0xff]
        %v640 = vld [vmem:[#allocation2 + $0xe1] sm:$0xff]
        %v641 = vld [vmem:[#allocation2 + $0xf1] sm:$0xff]
        %v642 = vld [vmem:[#allocation2 + $0x101] sm:$0xff]
        %v643 = vld [vmem:[#allocation2 + $0x111] sm:$0xff]
        %v644 = vld [vmem:[#allocation2 + $0x141] sm:$0xff]
        %v645 = vld [vmem:[#allocation2 + $0x151] sm:$0xff]
        %v646 = vld [vmem:[#allocation2 + $0x161] sm:$0xff]
        %v647 = vld [vmem:[#allocation2 + $0x171] sm:$0xff]
        %v648 = vld [vmem:[#allocation2 + $0x181] sm:$0xff]
        %v649 = vld [vmem:[#allocation2 + $0x191] sm:$0xff]
        %v650 = vld [vmem:[#allocation2 + $0x1a1] sm:$0xff]
        %v651 = vld [vmem:[#allocation2 + $0x1b1] sm:$0xff]
        %v652 = vld [vmem:[#allocation2 + $0x1e1] sm:$0xff]
        %v653 = vld [vmem:[#allocation2 + $0x1f1] sm:$0xff]
        %v654 = vld [vmem:[#allocation2 + $0x201] sm:$0xff]
        %v655 = vld [vmem:[#allocation2 + $0x211] sm:$0xff]
        %v656 = vld [vmem:[#allocation2 + $0x221] sm:$0xff]
        %v657 = vld [vmem:[#allocation2 + $0x231] sm:$0xff]
        %v658 = vld [vmem:[#allocation2 + $0x241] sm:$0xff]
        %v659 = vld [vmem:[#allocation2 + $0x251] sm:$0xff]
        %v660 = vpack.c.bf16 %v629, %v628
        %v661 = vpack.c.bf16 %v631, %v630
        %v662 = vpack.c.bf16 %v633, %v632
        %v663 = vpack.c.bf16 %v635, %v634
        %v664 = vpack.c.bf16 %v637, %v636
        %v665 = vpack.c.bf16 %v639, %v638
        %v666 = vpack.c.bf16 %v641, %v640
        %v667 = vpack.c.bf16 %v643, %v642
        %v668 = vpack.c.bf16 %v645, %v644
        %v669 = vpack.c.bf16 %v647, %v646
        %v670 = vpack.c.bf16 %v649, %v648
        %v671 = vpack.c.bf16 %v651, %v650
        %v672 = vpack.c.bf16 %v653, %v652
        %v673 = vpack.c.bf16 %v655, %v654
        %v674 = vpack.c.bf16 %v657, %v656
        %v675 = vpack.c.bf16 %v659, %v658
        %v676 = vld [vmem:[#allocation2 + $0x2] sm:$0xff]
        %v677 = vld [vmem:[#allocation2 + $0x12] sm:$0xff]
        %v678 = vld [vmem:[#allocation2 + $0x22] sm:$0xff]
        %v679 = vld [vmem:[#allocation2 + $0x32] sm:$0xff]
        %v680 = vld [vmem:[#allocation2 + $0x42] sm:$0xff]
        %v681 = vld [vmem:[#allocation2 + $0x52] sm:$0xff]
        %v682 = vld [vmem:[#allocation2 + $0x62] sm:$0xff]
        %v683 = vld [vmem:[#allocation2 + $0x72] sm:$0xff]
        %v684 = vld [vmem:[#allocation2 + $0xa2] sm:$0xff]
        %v685 = vld [vmem:[#allocation2 + $0xb2] sm:$0xff]
        %v686 = vld [vmem:[#allocation2 + $0xc2] sm:$0xff]
        %v687 = vld [vmem:[#allocation2 + $0xd2] sm:$0xff]
        %v688 = vld [vmem:[#allocation2 + $0xe2] sm:$0xff]
        %v689 = vld [vmem:[#allocation2 + $0xf2] sm:$0xff]
        %v690 = vld [vmem:[#allocation2 + $0x102] sm:$0xff]
        %v691 = vld [vmem:[#allocation2 + $0x112] sm:$0xff]
        %v692 = vld [vmem:[#allocation2 + $0x142] sm:$0xff]
        %v693 = vld [vmem:[#allocation2 + $0x152] sm:$0xff]
        %v694 = vld [vmem:[#allocation2 + $0x162] sm:$0xff]
        %v695 = vld [vmem:[#allocation2 + $0x172] sm:$0xff]
        %v696 = vld [vmem:[#allocation2 + $0x182] sm:$0xff]
        %v697 = vld [vmem:[#allocation2 + $0x192] sm:$0xff]
        %v698 = vld [vmem:[#allocation2 + $0x1a2] sm:$0xff]
        %v699 = vld [vmem:[#allocation2 + $0x1b2] sm:$0xff]
        %v700 = vld [vmem:[#allocation2 + $0x1e2] sm:$0xff]
        %v701 = vld [vmem:[#allocation2 + $0x1f2] sm:$0xff]
        %v702 = vld [vmem:[#allocation2 + $0x202] sm:$0xff]
        %v703 = vld [vmem:[#allocation2 + $0x212] sm:$0xff]
        %v704 = vld [vmem:[#allocation2 + $0x222] sm:$0xff]
        %v705 = vld [vmem:[#allocation2 + $0x232] sm:$0xff]
        %v706 = vld [vmem:[#allocation2 + $0x242] sm:$0xff]
        %v707 = vld [vmem:[#allocation2 + $0x252] sm:$0xff]
        %v708 = vpack.c.bf16 %v677, %v676
        %v709 = vpack.c.bf16 %v679, %v678
        %v710 = vpack.c.bf16 %v681, %v680
        %v711 = vpack.c.bf16 %v683, %v682
        %v712 = vpack.c.bf16 %v685, %v684
        %v713 = vpack.c.bf16 %v687, %v686
        %v714 = vpack.c.bf16 %v689, %v688
        %v715 = vpack.c.bf16 %v691, %v690
        %v716 = vpack.c.bf16 %v693, %v692
        %v717 = vpack.c.bf16 %v695, %v694
        %v718 = vpack.c.bf16 %v697, %v696
        %v719 = vpack.c.bf16 %v699, %v698
        %v720 = vpack.c.bf16 %v701, %v700
        %v721 = vpack.c.bf16 %v703, %v702
        %v722 = vpack.c.bf16 %v705, %v704
        %v723 = vpack.c.bf16 %v707, %v706
        %s724 = scalar_lea.vmem [#allocation2], 16
        %v725 = vld [vmem:[%s724] sm:$0xff]
        %v726 = vld [vmem:[%s724 + $0x10] sm:$0xff]
        %v727 = vld [vmem:[%s724 + $0x20] sm:$0xff]
        %v728 = vld [vmem:[%s724 + $0x30] sm:$0xff]
        %v729 = vld [vmem:[%s724 + $0x40] sm:$0xff]
        %v730 = vld [vmem:[%s724 + $0x50] sm:$0xff]
        %v731 = vld [vmem:[%s724 + $0x60] sm:$0xff]
        %v732 = vld [vmem:[%s724 + $0x70] sm:$0xff]
        %v733 = vld [vmem:[%s724 + $0xa0] sm:$0xff]
        %v734 = vld [vmem:[%s724 + $0xb0] sm:$0xff]
        %v735 = vld [vmem:[%s724 + $0xc0] sm:$0xff]
        %v736 = vld [vmem:[%s724 + $0xd0] sm:$0xff]
        %v737 = vld [vmem:[%s724 + $0xe0] sm:$0xff]
        %v738 = vld [vmem:[%s724 + $0xf0] sm:$0xff]
        %v739 = vld [vmem:[%s724 + $0x100] sm:$0xff]
        %v740 = vld [vmem:[%s724 + $0x110] sm:$0xff]
        %v741 = vld [vmem:[%s724 + $0x140] sm:$0xff]
        %v742 = vld [vmem:[%s724 + $0x150] sm:$0xff]
        %v743 = vld [vmem:[%s724 + $0x160] sm:$0xff]
        %v744 = vld [vmem:[%s724 + $0x170] sm:$0xff]
        %v745 = vld [vmem:[%s724 + $0x180] sm:$0xff]
        %v746 = vld [vmem:[%s724 + $0x190] sm:$0xff]
        %v747 = vld [vmem:[%s724 + $0x1a0] sm:$0xff]
        %v748 = vld [vmem:[%s724 + $0x1b0] sm:$0xff]
        %v749 = vld [vmem:[%s724 + $0x1e0] sm:$0xff]
        %v750 = vld [vmem:[%s724 + $0x1f0] sm:$0xff]
        %v751 = vld [vmem:[%s724 + $0x200] sm:$0xff]
        %v752 = vld [vmem:[%s724 + $0x210] sm:$0xff]
        %v753 = vld [vmem:[%s724 + $0x220] sm:$0xff]
        %v754 = vld [vmem:[%s724 + $0x230] sm:$0xff]
        %v755 = vld [vmem:[%s724 + $0x240] sm:$0xff]
        %v756 = vld [vmem:[%s724 + $0x250] sm:$0xff]
        %v757 = vpack.c.bf16 %v726, %v725
        %v758 = vpack.c.bf16 %v728, %v727
        %v759 = vpack.c.bf16 %v730, %v729
        %v760 = vpack.c.bf16 %v732, %v731
        %v761 = vpack.c.bf16 %v734, %v733
        %v762 = vpack.c.bf16 %v736, %v735
        %v763 = vpack.c.bf16 %v738, %v737
        %v764 = vpack.c.bf16 %v740, %v739
        %v765 = vpack.c.bf16 %v742, %v741
        %v766 = vpack.c.bf16 %v744, %v743
        %v767 = vpack.c.bf16 %v746, %v745
        %v768 = vpack.c.bf16 %v748, %v747
        %v769 = vpack.c.bf16 %v750, %v749
        %v770 = vpack.c.bf16 %v752, %v751
        %v771 = vpack.c.bf16 %v754, %v753
        %v772 = vpack.c.bf16 %v756, %v755
        %v773 = vld [vmem:[%s724 + $0x1] sm:$0xff]
        %v774 = vld [vmem:[%s724 + $0x11] sm:$0xff]
        %v775 = vld [vmem:[%s724 + $0x21] sm:$0xff]
        %v776 = vld [vmem:[%s724 + $0x31] sm:$0xff]
        %v777 = vld [vmem:[%s724 + $0x41] sm:$0xff]
        %v778 = vld [vmem:[%s724 + $0x51] sm:$0xff]
        %v779 = vld [vmem:[%s724 + $0x61] sm:$0xff]
        %v780 = vld [vmem:[%s724 + $0x71] sm:$0xff]
        %v781 = vld [vmem:[%s724 + $0xa1] sm:$0xff]
        %v782 = vld [vmem:[%s724 + $0xb1] sm:$0xff]
        %v783 = vld [vmem:[%s724 + $0xc1] sm:$0xff]
        %v784 = vld [vmem:[%s724 + $0xd1] sm:$0xff]
        %v785 = vld [vmem:[%s724 + $0xe1] sm:$0xff]
        %v786 = vld [vmem:[%s724 + $0xf1] sm:$0xff]
        %v787 = vld [vmem:[%s724 + $0x101] sm:$0xff]
        %v788 = vld [vmem:[%s724 + $0x111] sm:$0xff]
        %v789 = vld [vmem:[%s724 + $0x141] sm:$0xff]
        %v790 = vld [vmem:[%s724 + $0x151] sm:$0xff]
        %v791 = vld [vmem:[%s724 + $0x161] sm:$0xff]
        %v792 = vld [vmem:[%s724 + $0x171] sm:$0xff]
        %v793 = vld [vmem:[%s724 + $0x181] sm:$0xff]
        %v794 = vld [vmem:[%s724 + $0x191] sm:$0xff]
        %v795 = vld [vmem:[%s724 + $0x1a1] sm:$0xff]
        %v796 = vld [vmem:[%s724 + $0x1b1] sm:$0xff]
        %v797 = vld [vmem:[%s724 + $0x1e1] sm:$0xff]
        %v798 = vld [vmem:[%s724 + $0x1f1] sm:$0xff]
        %v799 = vld [vmem:[%s724 + $0x201] sm:$0xff]
        %v800 = vld [vmem:[%s724 + $0x211] sm:$0xff]
        %v801 = vld [vmem:[%s724 + $0x221] sm:$0xff]
        %v802 = vld [vmem:[%s724 + $0x231] sm:$0xff]
        %v803 = vld [vmem:[%s724 + $0x241] sm:$0xff]
        %v804 = vld [vmem:[%s724 + $0x251] sm:$0xff]
        %v805 = vpack.c.bf16 %v774, %v773
        %v806 = vpack.c.bf16 %v776, %v775
        %v807 = vpack.c.bf16 %v778, %v777
        %v808 = vpack.c.bf16 %v780, %v779
        %v809 = vpack.c.bf16 %v782, %v781
        %v810 = vpack.c.bf16 %v784, %v783
        %v811 = vpack.c.bf16 %v786, %v785
        %v812 = vpack.c.bf16 %v788, %v787
        %v813 = vpack.c.bf16 %v790, %v789
        %v814 = vpack.c.bf16 %v792, %v791
        %v815 = vpack.c.bf16 %v794, %v793
        %v816 = vpack.c.bf16 %v796, %v795
        %v817 = vpack.c.bf16 %v798, %v797
        %v818 = vpack.c.bf16 %v800, %v799
        %v819 = vpack.c.bf16 %v802, %v801
        %v820 = vpack.c.bf16 %v804, %v803
        %v821 = vld [vmem:[%s724 + $0x2] sm:$0xff]
        %v822 = vld [vmem:[%s724 + $0x12] sm:$0xff]
        %v823 = vld [vmem:[%s724 + $0x22] sm:$0xff]
        %v824 = vld [vmem:[%s724 + $0x32] sm:$0xff]
        %v825 = vld [vmem:[%s724 + $0x42] sm:$0xff]
        %v826 = vld [vmem:[%s724 + $0x52] sm:$0xff]
        %v827 = vld [vmem:[%s724 + $0x62] sm:$0xff]
        %v828 = vld [vmem:[%s724 + $0x72] sm:$0xff]
        %v829 = vld [vmem:[%s724 + $0xa2] sm:$0xff]
        %v830 = vld [vmem:[%s724 + $0xb2] sm:$0xff]
        %v831 = vld [vmem:[%s724 + $0xc2] sm:$0xff]
        %v832 = vld [vmem:[%s724 + $0xd2] sm:$0xff]
        %v833 = vld [vmem:[%s724 + $0xe2] sm:$0xff]
        %v834 = vld [vmem:[%s724 + $0xf2] sm:$0xff]
        %v835 = vld [vmem:[%s724 + $0x102] sm:$0xff]
        %v836 = vld [vmem:[%s724 + $0x112] sm:$0xff]
        %v837 = vld [vmem:[%s724 + $0x142] sm:$0xff]
        %v838 = vld [vmem:[%s724 + $0x152] sm:$0xff]
        %v839 = vld [vmem:[%s724 + $0x162] sm:$0xff]
        %v840 = vld [vmem:[%s724 + $0x172] sm:$0xff]
        %v841 = vld [vmem:[%s724 + $0x182] sm:$0xff]
        %v842 = vld [vmem:[%s724 + $0x192] sm:$0xff]
        %v843 = vld [vmem:[%s724 + $0x1a2] sm:$0xff]
        %v844 = vld [vmem:[%s724 + $0x1b2] sm:$0xff]
        %v845 = vld [vmem:[%s724 + $0x1e2] sm:$0xff]
        %v846 = vld [vmem:[%s724 + $0x1f2] sm:$0xff]
        %v847 = vld [vmem:[%s724 + $0x202] sm:$0xff]
        %v848 = vld [vmem:[%s724 + $0x212] sm:$0xff]
        %v849 = vld [vmem:[%s724 + $0x222] sm:$0xff]
        %v850 = vld [vmem:[%s724 + $0x232] sm:$0xff]
        %v851 = vld [vmem:[%s724 + $0x242] sm:$0xff]
        %v852 = vld [vmem:[%s724 + $0x252] sm:$0xff]
        %v853 = vpack.c.bf16 %v822, %v821
        %v854 = vpack.c.bf16 %v824, %v823
        %v855 = vpack.c.bf16 %v826, %v825
        %v856 = vpack.c.bf16 %v828, %v827
        %v857 = vpack.c.bf16 %v830, %v829
        %v858 = vpack.c.bf16 %v832, %v831
        %v859 = vpack.c.bf16 %v834, %v833
        %v860 = vpack.c.bf16 %v836, %v835
        %v861 = vpack.c.bf16 %v838, %v837
        %v862 = vpack.c.bf16 %v840, %v839
        %v863 = vpack.c.bf16 %v842, %v841
        %v864 = vpack.c.bf16 %v844, %v843
        %v865 = vpack.c.bf16 %v846, %v845
        %v866 = vpack.c.bf16 %v848, %v847
        %v867 = vpack.c.bf16 %v850, %v849
        %v868 = vpack.c.bf16 %v852, %v851
        %s869 = scalar_lea.vmem [#allocation2], 32
        %v870 = vld [vmem:[%s869] sm:$0xff]
        %v871 = vld [vmem:[%s869 + $0x10] sm:$0xff]
        %v872 = vld [vmem:[%s869 + $0x20] sm:$0xff]
        %v873 = vld [vmem:[%s869 + $0x30] sm:$0xff]
        %v874 = vld [vmem:[%s869 + $0x40] sm:$0xff]
        %v875 = vld [vmem:[%s869 + $0x50] sm:$0xff]
        %v876 = vld [vmem:[%s869 + $0x60] sm:$0xff]
        %v877 = vld [vmem:[%s869 + $0x70] sm:$0xff]
        %v878 = vld [vmem:[%s869 + $0xa0] sm:$0xff]
        %v879 = vld [vmem:[%s869 + $0xb0] sm:$0xff]
        %v880 = vld [vmem:[%s869 + $0xc0] sm:$0xff]
        %v881 = vld [vmem:[%s869 + $0xd0] sm:$0xff]
        %v882 = vld [vmem:[%s869 + $0xe0] sm:$0xff]
        %v883 = vld [vmem:[%s869 + $0xf0] sm:$0xff]
        %v884 = vld [vmem:[%s869 + $0x100] sm:$0xff]
        %v885 = vld [vmem:[%s869 + $0x110] sm:$0xff]
        %v886 = vld [vmem:[%s869 + $0x140] sm:$0xff]
        %v887 = vld [vmem:[%s869 + $0x150] sm:$0xff]
        %v888 = vld [vmem:[%s869 + $0x160] sm:$0xff]
        %v889 = vld [vmem:[%s869 + $0x170] sm:$0xff]
        %v890 = vld [vmem:[%s869 + $0x180] sm:$0xff]
        %v891 = vld [vmem:[%s869 + $0x190] sm:$0xff]
        %v892 = vld [vmem:[%s869 + $0x1a0] sm:$0xff]
        %v893 = vld [vmem:[%s869 + $0x1b0] sm:$0xff]
        %v894 = vld [vmem:[%s869 + $0x1e0] sm:$0xff]
        %v895 = vld [vmem:[%s869 + $0x1f0] sm:$0xff]
        %v896 = vld [vmem:[%s869 + $0x200] sm:$0xff]
        %v897 = vld [vmem:[%s869 + $0x210] sm:$0xff]
        %v898 = vld [vmem:[%s869 + $0x220] sm:$0xff]
        %v899 = vld [vmem:[%s869 + $0x230] sm:$0xff]
        %v900 = vld [vmem:[%s869 + $0x240] sm:$0xff]
        %v901 = vld [vmem:[%s869 + $0x250] sm:$0xff]
        %v902 = vpack.c.bf16 %v871, %v870
        %v903 = vpack.c.bf16 %v873, %v872
        %v904 = vpack.c.bf16 %v875, %v874
        %v905 = vpack.c.bf16 %v877, %v876
        %v906 = vpack.c.bf16 %v879, %v878
        %v907 = vpack.c.bf16 %v881, %v880
        %v908 = vpack.c.bf16 %v883, %v882
        %v909 = vpack.c.bf16 %v885, %v884
        %v910 = vpack.c.bf16 %v887, %v886
        %v911 = vpack.c.bf16 %v889, %v888
        %v912 = vpack.c.bf16 %v891, %v890
        %v913 = vpack.c.bf16 %v893, %v892
        %v914 = vpack.c.bf16 %v895, %v894
        %v915 = vpack.c.bf16 %v897, %v896
        %v916 = vpack.c.bf16 %v899, %v898
        %v917 = vpack.c.bf16 %v901, %v900
        %v918 = vld [vmem:[%s869 + $0x1] sm:$0xff]
        %v919 = vld [vmem:[%s869 + $0x11] sm:$0xff]
        %v920 = vld [vmem:[%s869 + $0x21] sm:$0xff]
        %v921 = vld [vmem:[%s869 + $0x31] sm:$0xff]
        %v922 = vld [vmem:[%s869 + $0x41] sm:$0xff]
        %v923 = vld [vmem:[%s869 + $0x51] sm:$0xff]
        %v924 = vld [vmem:[%s869 + $0x61] sm:$0xff]
        %v925 = vld [vmem:[%s869 + $0x71] sm:$0xff]
        %v926 = vld [vmem:[%s869 + $0xa1] sm:$0xff]
        %v927 = vld [vmem:[%s869 + $0xb1] sm:$0xff]
        %v928 = vld [vmem:[%s869 + $0xc1] sm:$0xff]
        %v929 = vld [vmem:[%s869 + $0xd1] sm:$0xff]
        %v930 = vld [vmem:[%s869 + $0xe1] sm:$0xff]
        %v931 = vld [vmem:[%s869 + $0xf1] sm:$0xff]
        %v932 = vld [vmem:[%s869 + $0x101] sm:$0xff]
        %v933 = vld [vmem:[%s869 + $0x111] sm:$0xff]
        %v934 = vld [vmem:[%s869 + $0x141] sm:$0xff]
        %v935 = vld [vmem:[%s869 + $0x151] sm:$0xff]
        %v936 = vld [vmem:[%s869 + $0x161] sm:$0xff]
        %v937 = vld [vmem:[%s869 + $0x171] sm:$0xff]
        %v938 = vld [vmem:[%s869 + $0x181] sm:$0xff]
        %v939 = vld [vmem:[%s869 + $0x191] sm:$0xff]
        %v940 = vld [vmem:[%s869 + $0x1a1] sm:$0xff]
        %v941 = vld [vmem:[%s869 + $0x1b1] sm:$0xff]
        %v942 = vld [vmem:[%s869 + $0x1e1] sm:$0xff]
        %v943 = vld [vmem:[%s869 + $0x1f1] sm:$0xff]
        %v944 = vld [vmem:[%s869 + $0x201] sm:$0xff]
        %v945 = vld [vmem:[%s869 + $0x211] sm:$0xff]
        %v946 = vld [vmem:[%s869 + $0x221] sm:$0xff]
        %v947 = vld [vmem:[%s869 + $0x231] sm:$0xff]
        %v948 = vld [vmem:[%s869 + $0x241] sm:$0xff]
        %v949 = vld [vmem:[%s869 + $0x251] sm:$0xff]
        %v950 = vpack.c.bf16 %v919, %v918
        %v951 = vpack.c.bf16 %v921, %v920
        %v952 = vpack.c.bf16 %v923, %v922
        %v953 = vpack.c.bf16 %v925, %v924
        %v954 = vpack.c.bf16 %v927, %v926
        %v955 = vpack.c.bf16 %v929, %v928
        %v956 = vpack.c.bf16 %v931, %v930
        %v957 = vpack.c.bf16 %v933, %v932
        %v958 = vpack.c.bf16 %v935, %v934
        %v959 = vpack.c.bf16 %v937, %v936
        %v960 = vpack.c.bf16 %v939, %v938
        %v961 = vpack.c.bf16 %v941, %v940
        %v962 = vpack.c.bf16 %v943, %v942
        %v963 = vpack.c.bf16 %v945, %v944
        %v964 = vpack.c.bf16 %v947, %v946
        %v965 = vpack.c.bf16 %v949, %v948
        %v966 = vld [vmem:[%s869 + $0x2] sm:$0xff]
        %v967 = vld [vmem:[%s869 + $0x12] sm:$0xff]
        %v968 = vld [vmem:[%s869 + $0x22] sm:$0xff]
        %v969 = vld [vmem:[%s869 + $0x32] sm:$0xff]
        %v970 = vld [vmem:[%s869 + $0x42] sm:$0xff]
        %v971 = vld [vmem:[%s869 + $0x52] sm:$0xff]
        %v972 = vld [vmem:[%s869 + $0x62] sm:$0xff]
        %v973 = vld [vmem:[%s869 + $0x72] sm:$0xff]
        %v974 = vld [vmem:[%s869 + $0xa2] sm:$0xff]
        %v975 = vld [vmem:[%s869 + $0xb2] sm:$0xff]
        %v976 = vld [vmem:[%s869 + $0xc2] sm:$0xff]
        %v977 = vld [vmem:[%s869 + $0xd2] sm:$0xff]
        %v978 = vld [vmem:[%s869 + $0xe2] sm:$0xff]
        %v979 = vld [vmem:[%s869 + $0xf2] sm:$0xff]
        %v980 = vld [vmem:[%s869 + $0x102] sm:$0xff]
        %v981 = vld [vmem:[%s869 + $0x112] sm:$0xff]
        %v982 = vld [vmem:[%s869 + $0x142] sm:$0xff]
        %v983 = vld [vmem:[%s869 + $0x152] sm:$0xff]
        %v984 = vld [vmem:[%s869 + $0x162] sm:$0xff]
        %v985 = vld [vmem:[%s869 + $0x172] sm:$0xff]
        %v986 = vld [vmem:[%s869 + $0x182] sm:$0xff]
        %v987 = vld [vmem:[%s869 + $0x192] sm:$0xff]
        %v988 = vld [vmem:[%s869 + $0x1a2] sm:$0xff]
        %v989 = vld [vmem:[%s869 + $0x1b2] sm:$0xff]
        %v990 = vld [vmem:[%s869 + $0x1e2] sm:$0xff]
        %v991 = vld [vmem:[%s869 + $0x1f2] sm:$0xff]
        %v992 = vld [vmem:[%s869 + $0x202] sm:$0xff]
        %v993 = vld [vmem:[%s869 + $0x212] sm:$0xff]
        %v994 = vld [vmem:[%s869 + $0x222] sm:$0xff]
        %v995 = vld [vmem:[%s869 + $0x232] sm:$0xff]
        %v996 = vld [vmem:[%s869 + $0x242] sm:$0xff]
        %v997 = vld [vmem:[%s869 + $0x252] sm:$0xff]
        %v998 = vpack.c.bf16 %v967, %v966
        %v999 = vpack.c.bf16 %v969, %v968
        %v1000 = vpack.c.bf16 %v971, %v970
        %v1001 = vpack.c.bf16 %v973, %v972
        %v1002 = vpack.c.bf16 %v975, %v974
        %v1003 = vpack.c.bf16 %v977, %v976
        %v1004 = vpack.c.bf16 %v979, %v978
        %v1005 = vpack.c.bf16 %v981, %v980
        %v1006 = vpack.c.bf16 %v983, %v982
        %v1007 = vpack.c.bf16 %v985, %v984
        %v1008 = vpack.c.bf16 %v987, %v986
        %v1009 = vpack.c.bf16 %v989, %v988
        %v1010 = vpack.c.bf16 %v991, %v990
        %v1011 = vpack.c.bf16 %v993, %v992
        %v1012 = vpack.c.bf16 %v995, %v994
        %v1013 = vpack.c.bf16 %v997, %v996
        %v1014 = vld [vmem:[#allocation3] sm:$0xf]
        %v1015 = vld [vmem:[#allocation3 + $0x4] sm:$0xf]
        %v1016 = vld [vmem:[#allocation3 + $0x8] sm:$0xf]
        %v1017 = vld [vmem:[#allocation3 + $0xc] sm:$0xf]
        %v1018 = vld [vmem:[#allocation3 + $0x10] sm:$0xf]
        %v1019 = vld [vmem:[#allocation3 + $0x14] sm:$0xf]
        %v1020 = vld [vmem:[#allocation3 + $0x18] sm:$0xf]
        %v1021 = vld [vmem:[#allocation3 + $0x1c] sm:$0xf]
        %v1022 = vld [vmem:[#allocation3 + $0x20] sm:$0xf]
        %v1023 = vld [vmem:[#allocation3 + $0x24] sm:$0xf]
        %v1024 = vld [vmem:[#allocation3 + $0x28] sm:$0xf]
        %v1025 = vld [vmem:[#allocation3 + $0x2c] sm:$0xf]
        %v1026 = vld [vmem:[#allocation3 + $0x30] sm:$0xf]
        %v1027 = vld [vmem:[#allocation3 + $0x34] sm:$0xf]
        %v1028 = vld [vmem:[#allocation3 + $0x38] sm:$0xf]
        %v1029 = vld [vmem:[#allocation3 + $0x3c] sm:$0xf]
        %v1030 = vld [vmem:[#allocation3 + $0x40] sm:$0xf]
        %v1031 = vld [vmem:[#allocation3 + $0x44] sm:$0xf]
        %v1032 = vld [vmem:[#allocation3 + $0x48] sm:$0xf]
        %v1033 = vld [vmem:[#allocation3 + $0x4c] sm:$0xf]
        %v1034 = vld [vmem:[#allocation3 + $0x50] sm:$0xf]
        %v1035 = vld [vmem:[#allocation3 + $0x54] sm:$0xf]
        %v1036 = vld [vmem:[#allocation3 + $0x58] sm:$0xf]
        %v1037 = vld [vmem:[#allocation3 + $0x5c] sm:$0xf]
        %v1038 = vld [vmem:[#allocation3 + $0x60] sm:$0xf]
        %v1039 = vld [vmem:[#allocation3 + $0x64] sm:$0xf]
        %v1040 = vld [vmem:[#allocation3 + $0x68] sm:$0xf]
        %v1041 = vld [vmem:[#allocation3 + $0x6c] sm:$0xf]
        %v1042 = vld [vmem:[#allocation3 + $0x70] sm:$0xf]
        %v1043 = vld [vmem:[#allocation3 + $0x74] sm:$0xf]
        %v1044 = vld [vmem:[#allocation3 + $0x78] sm:$0xf]
        %v1045 = vld [vmem:[#allocation3 + $0x7c] sm:$0xf]
        %v1046 = vld [vmem:[#allocation3 + $0x80] sm:$0xf]
        %v1047 = vld [vmem:[#allocation3 + $0x84] sm:$0xf]
        %v1048 = vld [vmem:[#allocation3 + $0x88] sm:$0xf]
        %v1049 = vld [vmem:[#allocation3 + $0x8c] sm:$0xf]
        %v1050 = vld [vmem:[#allocation3 + $0x90] sm:$0xf]
        %v1051 = vld [vmem:[#allocation3 + $0x94] sm:$0xf]
        %v1052 = vld [vmem:[#allocation3 + $0x98] sm:$0xf]
        %v1053 = vld [vmem:[#allocation3 + $0x9c] sm:$0xf]
        %v1054 = vld [vmem:[#allocation3 + $0xa0] sm:$0xf]
        %v1055 = vld [vmem:[#allocation3 + $0xa4] sm:$0xf]
        %v1056 = vld [vmem:[#allocation3 + $0xa8] sm:$0xf]
        %v1057 = vld [vmem:[#allocation3 + $0xac] sm:$0xf]
        %v1058 = vld [vmem:[#allocation3 + $0xb0] sm:$0xf]
        %v1059 = vld [vmem:[#allocation3 + $0xb4] sm:$0xf]
        %v1060 = vld [vmem:[#allocation3 + $0xb8] sm:$0xf]
        %v1061 = vld [vmem:[#allocation3 + $0xbc] sm:$0xf]
        %v1062 = vld [vmem:[#allocation3 + $0xc0] sm:$0xf]
        %v1063 = vld [vmem:[#allocation3 + $0xc4] sm:$0xf]
        %v1064 = vld [vmem:[#allocation3 + $0xc8] sm:$0xf]
        %v1065 = vld [vmem:[#allocation3 + $0xcc] sm:$0xf]
        %v1066 = vld [vmem:[#allocation3 + $0xd0] sm:$0xf]
        %v1067 = vld [vmem:[#allocation3 + $0xd4] sm:$0xf]
        %v1068 = vld [vmem:[#allocation3 + $0xd8] sm:$0xf]
        %v1069 = vld [vmem:[#allocation3 + $0xdc] sm:$0xf]
        %v1070 = vld [vmem:[#allocation3 + $0xe0] sm:$0xf]
        %v1071 = vld [vmem:[#allocation3 + $0xe4] sm:$0xf]
        %v1072 = vld [vmem:[#allocation3 + $0xe8] sm:$0xf]
        %v1073 = vld [vmem:[#allocation3 + $0xec] sm:$0xf]
        %v1074 = vld [vmem:[#allocation3 + $0xf0] sm:$0xf]
        %v1075 = vld [vmem:[#allocation3 + $0xf4] sm:$0xf]
        %v1076 = vld [vmem:[#allocation3 + $0xf8] sm:$0xf]
        %v1077 = vld [vmem:[#allocation3 + $0xfc] sm:$0xf]
        %v1078 = vld [vmem:[#allocation3 + $0x100] sm:$0xf]
        %v1079 = vld [vmem:[#allocation3 + $0x104] sm:$0xf]
        %v1080 = vld [vmem:[#allocation3 + $0x108] sm:$0xf]
        %v1081 = vld [vmem:[#allocation3 + $0x10c] sm:$0xf]
        %v1082 = vld [vmem:[#allocation3 + $0x110] sm:$0xf]
        %v1083 = vld [vmem:[#allocation3 + $0x114] sm:$0xf]
        %v1084 = vld [vmem:[#allocation3 + $0x118] sm:$0xf]
        %v1085 = vld [vmem:[#allocation3 + $0x11c] sm:$0xf]
        %v1086 = vld [vmem:[#allocation3 + $0x120] sm:$0xf]
        %v1087 = vld [vmem:[#allocation3 + $0x124] sm:$0xf]
        %v1088 = vld [vmem:[#allocation3 + $0x128] sm:$0xf]
        %v1089 = vld [vmem:[#allocation3 + $0x12c] sm:$0xf]
        %v1090 = vld [vmem:[#allocation3 + $0x130] sm:$0xf]
        %v1091 = vld [vmem:[#allocation3 + $0x134] sm:$0xf]
        %v1092 = vld [vmem:[#allocation3 + $0x138] sm:$0xf]
        %v1093 = vld [vmem:[#allocation3 + $0x13c] sm:$0xf]
        %v1094 = vld [vmem:[#allocation3 + $0x140] sm:$0xf]
        %v1095 = vld [vmem:[#allocation3 + $0x144] sm:$0xf]
        %v1096 = vld [vmem:[#allocation3 + $0x148] sm:$0xf]
        %v1097 = vld [vmem:[#allocation3 + $0x14c] sm:$0xf]
        %v1098 = vld [vmem:[#allocation3 + $0x150] sm:$0xf]
        %v1099 = vld [vmem:[#allocation3 + $0x154] sm:$0xf]
        %v1100 = vld [vmem:[#allocation3 + $0x158] sm:$0xf]
        %v1101 = vld [vmem:[#allocation3 + $0x15c] sm:$0xf]
        %v1102 = vld [vmem:[#allocation3 + $0x160] sm:$0xf]
        %v1103 = vld [vmem:[#allocation3 + $0x164] sm:$0xf]
        %v1104 = vld [vmem:[#allocation3 + $0x168] sm:$0xf]
        %v1105 = vld [vmem:[#allocation3 + $0x16c] sm:$0xf]
        %v1106 = vld [vmem:[#allocation3 + $0x170] sm:$0xf]
        %v1107 = vld [vmem:[#allocation3 + $0x174] sm:$0xf]
        %v1108 = vld [vmem:[#allocation3 + $0x178] sm:$0xf]
        %v1109 = vld [vmem:[#allocation3 + $0x17c] sm:$0xf]
        %v1110 = vld [vmem:[#allocation3 + $0x180] sm:$0xf]
        %v1111 = vld [vmem:[#allocation3 + $0x184] sm:$0xf]
        %v1112 = vld [vmem:[#allocation3 + $0x188] sm:$0xf]
        %v1113 = vld [vmem:[#allocation3 + $0x18c] sm:$0xf]
        %v1114 = vld [vmem:[#allocation3 + $0x190] sm:$0xf]
        %v1115 = vld [vmem:[#allocation3 + $0x194] sm:$0xf]
        %v1116 = vld [vmem:[#allocation3 + $0x198] sm:$0xf]
        %v1117 = vld [vmem:[#allocation3 + $0x19c] sm:$0xf]
        %v1118 = vld [vmem:[#allocation3 + $0x1a0] sm:$0xf]
        %v1119 = vld [vmem:[#allocation3 + $0x1a4] sm:$0xf]
        %v1120 = vld [vmem:[#allocation3 + $0x1a8] sm:$0xf]
        %v1121 = vld [vmem:[#allocation3 + $0x1ac] sm:$0xf]
        %v1122 = vld [vmem:[#allocation3 + $0x1b0] sm:$0xf]
        %v1123 = vld [vmem:[#allocation3 + $0x1b4] sm:$0xf]
        %v1124 = vld [vmem:[#allocation3 + $0x1b8] sm:$0xf]
        %v1125 = vld [vmem:[#allocation3 + $0x1bc] sm:$0xf]
        %v1126 = vld [vmem:[#allocation3 + $0x1c0] sm:$0xf]
        %v1127 = vld [vmem:[#allocation3 + $0x1c4] sm:$0xf]
        %v1128 = vld [vmem:[#allocation3 + $0x1c8] sm:$0xf]
        %v1129 = vld [vmem:[#allocation3 + $0x1cc] sm:$0xf]
        %v1130 = vld [vmem:[#allocation3 + $0x1d0] sm:$0xf]
        %v1131 = vld [vmem:[#allocation3 + $0x1d4] sm:$0xf]
        %v1132 = vld [vmem:[#allocation3 + $0x1d8] sm:$0xf]
        %v1133 = vld [vmem:[#allocation3 + $0x1dc] sm:$0xf]
        %v1134 = vld [vmem:[#allocation3 + $0x1e0] sm:$0xf]
        %v1135 = vld [vmem:[#allocation3 + $0x1e4] sm:$0xf]
        %v1136 = vld [vmem:[#allocation3 + $0x1e8] sm:$0xf]
        %v1137 = vld [vmem:[#allocation3 + $0x1ec] sm:$0xf]
        %v1138 = vld [vmem:[#allocation3 + $0x1f0] sm:$0xf]
        %v1139 = vld [vmem:[#allocation3 + $0x1f4] sm:$0xf]
        %v1140 = vld [vmem:[#allocation3 + $0x1f8] sm:$0xf]
        %v1141 = vld [vmem:[#allocation3 + $0x1fc] sm:$0xf]
        %v1142 = vld [vmem:[#allocation3 + $0x200] sm:$0xf]
        %v1143 = vld [vmem:[#allocation3 + $0x204] sm:$0xf]
        %v1144 = vld [vmem:[#allocation3 + $0x208] sm:$0xf]
        %v1145 = vld [vmem:[#allocation3 + $0x20c] sm:$0xf]
        %v1146 = vld [vmem:[#allocation3 + $0x210] sm:$0xf]
        %v1147 = vld [vmem:[#allocation3 + $0x214] sm:$0xf]
        %v1148 = vld [vmem:[#allocation3 + $0x218] sm:$0xf]
        %v1149 = vld [vmem:[#allocation3 + $0x21c] sm:$0xf]
        %v1150 = vld [vmem:[#allocation3 + $0x220] sm:$0xf]
        %v1151 = vld [vmem:[#allocation3 + $0x224] sm:$0xf]
        %v1152 = vld [vmem:[#allocation3 + $0x228] sm:$0xf]
        %v1153 = vld [vmem:[#allocation3 + $0x22c] sm:$0xf]
        %v1154 = vld [vmem:[#allocation3 + $0x230] sm:$0xf]
        %v1155 = vld [vmem:[#allocation3 + $0x234] sm:$0xf]
        %v1156 = vld [vmem:[#allocation3 + $0x238] sm:$0xf]
        %v1157 = vld [vmem:[#allocation3 + $0x23c] sm:$0xf]
        %v1302 = vunpack.c.l.b16 %v1014
        %v1303 = vunpack.c.l.b16 %v1015
        %v1304 = vunpack.c.l.b16 %v1016
        %v1305 = vunpack.c.l.b16 %v1017
        %v1306 = vunpack.c.l.b16 %v1018
        %v1307 = vunpack.c.l.b16 %v1019
        %v1308 = vunpack.c.l.b16 %v1020
        %v1309 = vunpack.c.l.b16 %v1021
        %v1310 = vunpack.c.l.b16 %v1022
        %v1311 = vunpack.c.l.b16 %v1023
        %v1312 = vunpack.c.l.b16 %v1024
        %v1313 = vunpack.c.l.b16 %v1025
        %v1314 = vunpack.c.l.b16 %v1026
        %v1315 = vunpack.c.l.b16 %v1027
        %v1316 = vunpack.c.l.b16 %v1028
        %v1317 = vunpack.c.l.b16 %v1029
        %v1318 = vunpack.c.l.b16 %v1030
        %v1319 = vunpack.c.l.b16 %v1031
        %v1320 = vunpack.c.l.b16 %v1032
        %v1321 = vunpack.c.l.b16 %v1033
        %v1322 = vunpack.c.l.b16 %v1034
        %v1323 = vunpack.c.l.b16 %v1035
        %v1324 = vunpack.c.l.b16 %v1036
        %v1325 = vunpack.c.l.b16 %v1037
        %v1326 = vunpack.c.l.b16 %v1038
        %v1327 = vunpack.c.l.b16 %v1039
        %v1328 = vunpack.c.l.b16 %v1040
        %v1329 = vunpack.c.l.b16 %v1041
        %v1330 = vunpack.c.l.b16 %v1042
        %v1331 = vunpack.c.l.b16 %v1043
        %v1332 = vunpack.c.l.b16 %v1044
        %v1333 = vunpack.c.l.b16 %v1045
        %v1334 = vunpack.c.l.b16 %v1046
        %v1335 = vunpack.c.l.b16 %v1047
        %v1336 = vunpack.c.l.b16 %v1048
        %v1337 = vunpack.c.l.b16 %v1049
        %v1338 = vunpack.c.l.b16 %v1050
        %v1339 = vunpack.c.l.b16 %v1051
        %v1340 = vunpack.c.l.b16 %v1052
        %v1341 = vunpack.c.l.b16 %v1053
        %v1342 = vunpack.c.l.b16 %v1054
        %v1343 = vunpack.c.l.b16 %v1055
        %v1344 = vunpack.c.l.b16 %v1056
        %v1345 = vunpack.c.l.b16 %v1057
        %v1346 = vunpack.c.l.b16 %v1058
        %v1347 = vunpack.c.l.b16 %v1059
        %v1348 = vunpack.c.l.b16 %v1060
        %v1349 = vunpack.c.l.b16 %v1061
        %v1350 = vunpack.c.l.b16 %v1062
        %v1351 = vunpack.c.l.b16 %v1063
        %v1352 = vunpack.c.l.b16 %v1064
        %v1353 = vunpack.c.l.b16 %v1065
        %v1354 = vunpack.c.l.b16 %v1066
        %v1355 = vunpack.c.l.b16 %v1067
        %v1356 = vunpack.c.l.b16 %v1068
        %v1357 = vunpack.c.l.b16 %v1069
        %v1358 = vunpack.c.l.b16 %v1070
        %v1359 = vunpack.c.l.b16 %v1071
        %v1360 = vunpack.c.l.b16 %v1072
        %v1361 = vunpack.c.l.b16 %v1073
        %v1362 = vunpack.c.l.b16 %v1074
        %v1363 = vunpack.c.l.b16 %v1075
        %v1364 = vunpack.c.l.b16 %v1076
        %v1365 = vunpack.c.l.b16 %v1077
        %v1366 = vunpack.c.l.b16 %v1078
        %v1367 = vunpack.c.l.b16 %v1079
        %v1368 = vunpack.c.l.b16 %v1080
        %v1369 = vunpack.c.l.b16 %v1081
        %v1370 = vunpack.c.l.b16 %v1082
        %v1371 = vunpack.c.l.b16 %v1083
        %v1372 = vunpack.c.l.b16 %v1084
        %v1373 = vunpack.c.l.b16 %v1085
        %v1374 = vunpack.c.l.b16 %v1086
        %v1375 = vunpack.c.l.b16 %v1087
        %v1376 = vunpack.c.l.b16 %v1088
        %v1377 = vunpack.c.l.b16 %v1089
        %v1378 = vunpack.c.l.b16 %v1090
        %v1379 = vunpack.c.l.b16 %v1091
        %v1380 = vunpack.c.l.b16 %v1092
        %v1381 = vunpack.c.l.b16 %v1093
        %v1382 = vunpack.c.l.b16 %v1094
        %v1383 = vunpack.c.l.b16 %v1095
        %v1384 = vunpack.c.l.b16 %v1096
        %v1385 = vunpack.c.l.b16 %v1097
        %v1386 = vunpack.c.l.b16 %v1098
        %v1387 = vunpack.c.l.b16 %v1099
        %v1388 = vunpack.c.l.b16 %v1100
        %v1389 = vunpack.c.l.b16 %v1101
        %v1390 = vunpack.c.l.b16 %v1102
        %v1391 = vunpack.c.l.b16 %v1103
        %v1392 = vunpack.c.l.b16 %v1104
        %v1393 = vunpack.c.l.b16 %v1105
        %v1394 = vunpack.c.l.b16 %v1106
        %v1395 = vunpack.c.l.b16 %v1107
        %v1396 = vunpack.c.l.b16 %v1108
        %v1397 = vunpack.c.l.b16 %v1109
        %v1398 = vunpack.c.l.b16 %v1110
        %v1399 = vunpack.c.l.b16 %v1111
        %v1400 = vunpack.c.l.b16 %v1112
        %v1401 = vunpack.c.l.b16 %v1113
        %v1402 = vunpack.c.l.b16 %v1114
        %v1403 = vunpack.c.l.b16 %v1115
        %v1404 = vunpack.c.l.b16 %v1116
        %v1405 = vunpack.c.l.b16 %v1117
        %v1406 = vunpack.c.l.b16 %v1118
        %v1407 = vunpack.c.l.b16 %v1119
        %v1408 = vunpack.c.l.b16 %v1120
        %v1409 = vunpack.c.l.b16 %v1121
        %v1410 = vunpack.c.l.b16 %v1122
        %v1411 = vunpack.c.l.b16 %v1123
        %v1412 = vunpack.c.l.b16 %v1124
        %v1413 = vunpack.c.l.b16 %v1125
        %v1414 = vunpack.c.l.b16 %v1126
        %v1415 = vunpack.c.l.b16 %v1127
        %v1416 = vunpack.c.l.b16 %v1128
        %v1417 = vunpack.c.l.b16 %v1129
        %v1418 = vunpack.c.l.b16 %v1130
        %v1419 = vunpack.c.l.b16 %v1131
        %v1420 = vunpack.c.l.b16 %v1132
        %v1421 = vunpack.c.l.b16 %v1133
        %v1422 = vunpack.c.l.b16 %v1134
        %v1423 = vunpack.c.l.b16 %v1135
        %v1424 = vunpack.c.l.b16 %v1136
        %v1425 = vunpack.c.l.b16 %v1137
        %v1426 = vunpack.c.l.b16 %v1138
        %v1427 = vunpack.c.l.b16 %v1139
        %v1428 = vunpack.c.l.b16 %v1140
        %v1429 = vunpack.c.l.b16 %v1141
        %v1430 = vunpack.c.l.b16 %v1142
        %v1431 = vunpack.c.l.b16 %v1143
        %v1432 = vunpack.c.l.b16 %v1144
        %v1433 = vunpack.c.l.b16 %v1145
        %v1434 = vunpack.c.l.b16 %v1146
        %v1435 = vunpack.c.l.b16 %v1147
        %v1436 = vunpack.c.l.b16 %v1148
        %v1437 = vunpack.c.l.b16 %v1149
        %v1438 = vunpack.c.l.b16 %v1150
        %v1439 = vunpack.c.l.b16 %v1151
        %v1440 = vunpack.c.l.b16 %v1152
        %v1441 = vunpack.c.l.b16 %v1153
        %v1442 = vunpack.c.l.b16 %v1154
        %v1443 = vunpack.c.l.b16 %v1155
        %v1444 = vunpack.c.l.b16 %v1156
        %v1445 = vunpack.c.l.b16 %v1157
        %v1446 = vpack.c.b16 %v1303, %v1302
        %v1447 = vpack.c.b16 %v1305, %v1304
        %v1448 = vpack.c.b16 %v1307, %v1306
        %v1449 = vpack.c.b16 %v1309, %v1308
        %v1450 = vpack.c.b16 %v1311, %v1310
        %v1451 = vpack.c.b16 %v1313, %v1312
        %v1452 = vpack.c.b16 %v1315, %v1314
        %v1453 = vpack.c.b16 %v1317, %v1316
        %v1454 = vpack.c.b16 %v1319, %v1318
        %v1455 = vpack.c.b16 %v1321, %v1320
        %v1456 = vpack.c.b16 %v1323, %v1322
        %v1457 = vpack.c.b16 %v1325, %v1324
        %v1458 = vpack.c.b16 %v1327, %v1326
        %v1459 = vpack.c.b16 %v1329, %v1328
        %v1460 = vpack.c.b16 %v1331, %v1330
        %v1461 = vpack.c.b16 %v1333, %v1332
        %v1462 = vpack.c.b16 %v1335, %v1334
        %v1463 = vpack.c.b16 %v1337, %v1336
        %v1464 = vpack.c.b16 %v1339, %v1338
        %v1465 = vpack.c.b16 %v1341, %v1340
        %v1466 = vpack.c.b16 %v1343, %v1342
        %v1467 = vpack.c.b16 %v1345, %v1344
        %v1468 = vpack.c.b16 %v1347, %v1346
        %v1469 = vpack.c.b16 %v1349, %v1348
        %v1470 = vpack.c.b16 %v1351, %v1350
        %v1471 = vpack.c.b16 %v1353, %v1352
        %v1472 = vpack.c.b16 %v1355, %v1354
        %v1473 = vpack.c.b16 %v1357, %v1356
        %v1474 = vpack.c.b16 %v1359, %v1358
        %v1475 = vpack.c.b16 %v1361, %v1360
        %v1476 = vpack.c.b16 %v1363, %v1362
        %v1477 = vpack.c.b16 %v1365, %v1364
        %v1478 = vpack.c.b16 %v1367, %v1366
        %v1479 = vpack.c.b16 %v1369, %v1368
        %v1480 = vpack.c.b16 %v1371, %v1370
        %v1481 = vpack.c.b16 %v1373, %v1372
        %v1482 = vpack.c.b16 %v1375, %v1374
        %v1483 = vpack.c.b16 %v1377, %v1376
        %v1484 = vpack.c.b16 %v1379, %v1378
        %v1485 = vpack.c.b16 %v1381, %v1380
        %v1486 = vpack.c.b16 %v1383, %v1382
        %v1487 = vpack.c.b16 %v1385, %v1384
        %v1488 = vpack.c.b16 %v1387, %v1386
        %v1489 = vpack.c.b16 %v1389, %v1388
        %v1490 = vpack.c.b16 %v1391, %v1390
        %v1491 = vpack.c.b16 %v1393, %v1392
        %v1492 = vpack.c.b16 %v1395, %v1394
        %v1493 = vpack.c.b16 %v1397, %v1396
        %v1494 = vpack.c.b16 %v1399, %v1398
        %v1495 = vpack.c.b16 %v1401, %v1400
        %v1496 = vpack.c.b16 %v1403, %v1402
        %v1497 = vpack.c.b16 %v1405, %v1404
        %v1498 = vpack.c.b16 %v1407, %v1406
        %v1499 = vpack.c.b16 %v1409, %v1408
        %v1500 = vpack.c.b16 %v1411, %v1410
        %v1501 = vpack.c.b16 %v1413, %v1412
        %v1502 = vpack.c.b16 %v1415, %v1414
        %v1503 = vpack.c.b16 %v1417, %v1416
        %v1504 = vpack.c.b16 %v1419, %v1418
        %v1505 = vpack.c.b16 %v1421, %v1420
        %v1506 = vpack.c.b16 %v1423, %v1422
        %v1507 = vpack.c.b16 %v1425, %v1424
        %v1508 = vpack.c.b16 %v1427, %v1426
        %v1509 = vpack.c.b16 %v1429, %v1428
        %v1510 = vpack.c.b16 %v1431, %v1430
        %v1511 = vpack.c.b16 %v1433, %v1432
        %v1512 = vpack.c.b16 %v1435, %v1434
        %v1513 = vpack.c.b16 %v1437, %v1436
        %v1514 = vpack.c.b16 %v1439, %v1438
        %v1515 = vpack.c.b16 %v1441, %v1440
        %v1516 = vpack.c.b16 %v1443, %v1442
        %v1517 = vpack.c.b16 %v1445, %v1444
        %1590 = vmatprep.subr.bf16.mxu0 0
        %1591 = vmatpush1.bf16.msra.mxu0 %v1453
        %1592 = vmatprep.subr.bf16.mxu0 0
        %1593 = vmatpush1.bf16.msra.mxu0 %v1452
        %1594 = vmatprep.subr.bf16.mxu0 0
        %1595 = vmatpush1.bf16.msra.mxu0 %v1451
        %1596 = vmatprep.subr.bf16.mxu0 0
        %1597 = vmatpush1.bf16.msra.mxu0 %v1450
        %1598 = vmatprep.subr.bf16.mxu0 0
        %1599 = vmatpush1.bf16.msra.mxu0 %v1449
        %1600 = vmatprep.subr.bf16.mxu0 0
        %1601 = vmatpush1.bf16.msra.mxu0 %v1448
        %1602 = vmatprep.subr.bf16.mxu0 0
        %1603 = vmatpush1.bf16.msra.mxu0 %v1447
        %1604 = vmatprep.subr.bf16.mxu0 0
        %1605 = vmatpush1.bf16.msra.mxu0 %v1446
        %1606 = vmatprep.subr.bf16.mxu0 0
        %1607 = vmatpush2.bf16.msra.mxu0 %v1461
        %1608 = vmatprep.subr.bf16.mxu0 0
        %1609 = vmatpush2.bf16.msra.mxu0 %v1460
        %1610 = vmatprep.subr.bf16.mxu0 0
        %1611 = vmatpush2.bf16.msra.mxu0 %v1459
        %1612 = vmatprep.subr.bf16.mxu0 0
        %1613 = vmatpush2.bf16.msra.mxu0 %v1458
        %1614 = vmatprep.subr.bf16.mxu0 0
        %1615 = vmatpush2.bf16.msra.mxu0 %v1457
        %1616 = vmatprep.subr.bf16.mxu0 0
        %1617 = vmatpush2.bf16.msra.mxu0 %v1456
        %1618 = vmatprep.subr.bf16.mxu0 0
        %1619 = vmatpush2.bf16.msra.mxu0 %v1455
        %1620 = vmatprep.subr.bf16.mxu0 0
        %1621 = vmatpush2.bf16.msra.mxu0 %v1454
        %1622 = vmatprep.mubr.bf16.mxu0 %v660
        %1623 = vmatmul.mubr.bf16.gmra.mxu0 %v612
        %v1624 = vpop.f32.mrf.mxu0
        %v1625 = vadd.f32 0.0, %v1624
        %v1626 = vpop.f32.mrf.mxu0
        %v1627 = vpop.f32.mrf.mxu0
        %v1628 = vadd.f32 0.0, %v1627
        %v1629 = vpop.f32.mrf.mxu0
        %1630 = vmatprep.mubr.bf16.mxu0 %v661
        %1631 = vmatmul.mubr.bf16.gmra.mxu0 %v613
        %v1632 = vpop.f32.mrf.mxu0
        %v1633 = vadd.f32 0.0, %v1632
        %v1634 = vpop.f32.mrf.mxu0
        %v1635 = vpop.f32.mrf.mxu0
        %v1636 = vadd.f32 0.0, %v1635
        %v1637 = vpop.f32.mrf.mxu0
        %1638 = vmatprep.mubr.bf16.mxu0 %v662
        %1639 = vmatmul.mubr.bf16.gmra.mxu0 %v614
        %v1640 = vpop.f32.mrf.mxu0
        %v1641 = vadd.f32 0.0, %v1640
        %v1642 = vpop.f32.mrf.mxu0
        %v1643 = vpop.f32.mrf.mxu0
        %v1644 = vadd.f32 0.0, %v1643
        %v1645 = vpop.f32.mrf.mxu0
        %1646 = vmatprep.mubr.bf16.mxu0 %v663
        %1647 = vmatmul.mubr.bf16.gmra.mxu0 %v615
        %v1648 = vpop.f32.mrf.mxu0
        %v1649 = vadd.f32 0.0, %v1648
        %v1650 = vpop.f32.mrf.mxu0
        %v1651 = vpop.f32.mrf.mxu0
        %v1652 = vadd.f32 0.0, %v1651
        %v1653 = vpop.f32.mrf.mxu0
        %1654 = vmatprep.mubr.bf16.mxu0 %v664
        %1655 = vmatmul.mubr.bf16.gmra.mxu0 %v616
        %v1656 = vpop.f32.mrf.mxu0
        %v1657 = vadd.f32 0.0, %v1656
        %v1658 = vpop.f32.mrf.mxu0
        %v1659 = vpop.f32.mrf.mxu0
        %v1660 = vadd.f32 0.0, %v1659
        %v1661 = vpop.f32.mrf.mxu0
        %1662 = vmatprep.mubr.bf16.mxu0 %v665
        %1663 = vmatmul.mubr.bf16.gmra.mxu0 %v617
        %v1664 = vpop.f32.mrf.mxu0
        %v1665 = vadd.f32 0.0, %v1664
        %v1666 = vpop.f32.mrf.mxu0
        %v1667 = vpop.f32.mrf.mxu0
        %v1668 = vadd.f32 0.0, %v1667
        %v1669 = vpop.f32.mrf.mxu0
        %1670 = vmatprep.mubr.bf16.mxu0 %v666
        %1671 = vmatmul.mubr.bf16.gmra.mxu0 %v618
        %v1672 = vpop.f32.mrf.mxu0
        %v1673 = vadd.f32 0.0, %v1672
        %v1674 = vpop.f32.mrf.mxu0
        %v1675 = vpop.f32.mrf.mxu0
        %v1676 = vadd.f32 0.0, %v1675
        %v1677 = vpop.f32.mrf.mxu0
        %1678 = vmatprep.mubr.bf16.mxu0 %v667
        %1679 = vmatmul.mubr.bf16.gmra.mxu0 %v619
        %v1680 = vpop.f32.mrf.mxu0
        %v1681 = vadd.f32 0.0, %v1680
        %v1682 = vpop.f32.mrf.mxu0
        %v1683 = vpop.f32.mrf.mxu0
        %v1684 = vadd.f32 0.0, %v1683
        %v1685 = vpop.f32.mrf.mxu0
        %1686 = vmatprep.mubr.bf16.mxu0 %v668
        %1687 = vmatmul.mubr.bf16.gmra.mxu0 %v620
        %v1688 = vpop.f32.mrf.mxu0
        %v1689 = vadd.f32 0.0, %v1688
        %v1690 = vpop.f32.mrf.mxu0
        %v1691 = vpop.f32.mrf.mxu0
        %v1692 = vadd.f32 0.0, %v1691
        %v1693 = vpop.f32.mrf.mxu0
        %1694 = vmatprep.mubr.bf16.mxu0 %v669
        %1695 = vmatmul.mubr.bf16.gmra.mxu0 %v621
        %v1696 = vpop.f32.mrf.mxu0
        %v1697 = vadd.f32 0.0, %v1696
        %v1698 = vpop.f32.mrf.mxu0
        %v1699 = vpop.f32.mrf.mxu0
        %v1700 = vadd.f32 0.0, %v1699
        %v1701 = vpop.f32.mrf.mxu0
        %1702 = vmatprep.mubr.bf16.mxu0 %v670
        %1703 = vmatmul.mubr.bf16.gmra.mxu0 %v622
        %v1704 = vpop.f32.mrf.mxu0
        %v1705 = vadd.f32 0.0, %v1704
        %v1706 = vpop.f32.mrf.mxu0
        %v1707 = vpop.f32.mrf.mxu0
        %v1708 = vadd.f32 0.0, %v1707
        %v1709 = vpop.f32.mrf.mxu0
        %1710 = vmatprep.mubr.bf16.mxu0 %v671
        %1711 = vmatmul.mubr.bf16.gmra.mxu0 %v623
        %v1712 = vpop.f32.mrf.mxu0
        %v1713 = vadd.f32 0.0, %v1712
        %v1714 = vpop.f32.mrf.mxu0
        %v1715 = vpop.f32.mrf.mxu0
        %v1716 = vadd.f32 0.0, %v1715
        %v1717 = vpop.f32.mrf.mxu0
        %1718 = vmatprep.mubr.bf16.mxu0 %v672
        %1719 = vmatmul.mubr.bf16.gmra.mxu0 %v624
        %v1720 = vpop.f32.mrf.mxu0
        %v1721 = vadd.f32 0.0, %v1720
        %v1722 = vpop.f32.mrf.mxu0
        %v1723 = vpop.f32.mrf.mxu0
        %v1724 = vadd.f32 0.0, %v1723
        %v1725 = vpop.f32.mrf.mxu0
        %1726 = vmatprep.mubr.bf16.mxu0 %v673
        %1727 = vmatmul.mubr.bf16.gmra.mxu0 %v625
        %v1728 = vpop.f32.mrf.mxu0
        %v1729 = vadd.f32 0.0, %v1728
        %v1730 = vpop.f32.mrf.mxu0
        %v1731 = vpop.f32.mrf.mxu0
        %v1732 = vadd.f32 0.0, %v1731
        %v1733 = vpop.f32.mrf.mxu0
        %1734 = vmatprep.mubr.bf16.mxu0 %v674
        %1735 = vmatmul.mubr.bf16.gmra.mxu0 %v626
        %v1736 = vpop.f32.mrf.mxu0
        %v1737 = vadd.f32 0.0, %v1736
        %v1738 = vpop.f32.mrf.mxu0
        %v1739 = vpop.f32.mrf.mxu0
        %v1740 = vadd.f32 0.0, %v1739
        %v1741 = vpop.f32.mrf.mxu0
        %1742 = vmatprep.mubr.bf16.mxu0 %v675
        %1743 = vmatmul.mubr.bf16.gmra.mxu0 %v627
        %v1744 = vpop.f32.mrf.mxu0
        %v1745 = vadd.f32 0.0, %v1744
        %v1746 = vpop.f32.mrf.mxu0
        %v1747 = vpop.f32.mrf.mxu0
        %v1748 = vadd.f32 0.0, %v1747
        %v1749 = vpop.f32.mrf.mxu0
        %1750 = vdwg.mxu0
        %1751 = vmatprep.subr.bf16.mxu0 0
        %1752 = vmatpush1.bf16.msra.mxu0 %v1469
        %1753 = vmatprep.subr.bf16.mxu0 0
        %1754 = vmatpush1.bf16.msra.mxu0 %v1468
        %1755 = vmatprep.subr.bf16.mxu0 0
        %1756 = vmatpush1.bf16.msra.mxu0 %v1467
        %1757 = vmatprep.subr.bf16.mxu0 0
        %1758 = vmatpush1.bf16.msra.mxu0 %v1466
        %1759 = vmatprep.subr.bf16.mxu0 0
        %1760 = vmatpush1.bf16.msra.mxu0 %v1465
        %1761 = vmatprep.subr.bf16.mxu0 0
        %1762 = vmatpush1.bf16.msra.mxu0 %v1464
        %1763 = vmatprep.subr.bf16.mxu0 0
        %1764 = vmatpush1.bf16.msra.mxu0 %v1463
        %1765 = vmatprep.subr.bf16.mxu0 0
        %1766 = vmatpush1.bf16.msra.mxu0 %v1462
        %1767 = vmatprep.subr.bf16.mxu0 0
        %1768 = vmatpush2.bf16.msra.mxu0 %v1477
        %1769 = vmatprep.subr.bf16.mxu0 0
        %1770 = vmatpush2.bf16.msra.mxu0 %v1476
        %1771 = vmatprep.subr.bf16.mxu0 0
        %1772 = vmatpush2.bf16.msra.mxu0 %v1475
        %1773 = vmatprep.subr.bf16.mxu0 0
        %1774 = vmatpush2.bf16.msra.mxu0 %v1474
        %1775 = vmatprep.subr.bf16.mxu0 0
        %1776 = vmatpush2.bf16.msra.mxu0 %v1473
        %1777 = vmatprep.subr.bf16.mxu0 0
        %1778 = vmatpush2.bf16.msra.mxu0 %v1472
        %1779 = vmatprep.subr.bf16.mxu0 0
        %1780 = vmatpush2.bf16.msra.mxu0 %v1471
        %1781 = vmatprep.subr.bf16.mxu0 0
        %1782 = vmatpush2.bf16.msra.mxu0 %v1470
        %1783 = vmatprep.mubr.bf16.mxu0 %v757
        %1784 = vmatmul.mubr.bf16.gmra.mxu0 %v708
        %v1785 = vpop.f32.mrf.mxu0
        %v1786 = vadd.f32 %v1625, %v1785
        %v1787 = vpop.f32.mrf.mxu0
        %v1788 = vpop.f32.mrf.mxu0
        %v1789 = vadd.f32 %v1628, %v1788
        %v1790 = vpop.f32.mrf.mxu0
        %1791 = vmatprep.mubr.bf16.mxu0 %v758
        %1792 = vmatmul.mubr.bf16.gmra.mxu0 %v709
        %v1793 = vpop.f32.mrf.mxu0
        %v1794 = vadd.f32 %v1633, %v1793
        %v1795 = vpop.f32.mrf.mxu0
        %v1796 = vpop.f32.mrf.mxu0
        %v1797 = vadd.f32 %v1636, %v1796
        %v1798 = vpop.f32.mrf.mxu0
        %1799 = vmatprep.mubr.bf16.mxu0 %v759
        %1800 = vmatmul.mubr.bf16.gmra.mxu0 %v710
        %v1801 = vpop.f32.mrf.mxu0
        %v1802 = vadd.f32 %v1641, %v1801
        %v1803 = vpop.f32.mrf.mxu0
        %v1804 = vpop.f32.mrf.mxu0
        %v1805 = vadd.f32 %v1644, %v1804
        %v1806 = vpop.f32.mrf.mxu0
        %1807 = vmatprep.mubr.bf16.mxu0 %v760
        %1808 = vmatmul.mubr.bf16.gmra.mxu0 %v711
        %v1809 = vpop.f32.mrf.mxu0
        %v1810 = vadd.f32 %v1649, %v1809
        %v1811 = vpop.f32.mrf.mxu0
        %v1812 = vpop.f32.mrf.mxu0
        %v1813 = vadd.f32 %v1652, %v1812
        %v1814 = vpop.f32.mrf.mxu0
        %1815 = vmatprep.mubr.bf16.mxu0 %v761
        %1816 = vmatmul.mubr.bf16.gmra.mxu0 %v712
        %v1817 = vpop.f32.mrf.mxu0
        %v1818 = vadd.f32 %v1657, %v1817
        %v1819 = vpop.f32.mrf.mxu0
        %v1820 = vpop.f32.mrf.mxu0
        %v1821 = vadd.f32 %v1660, %v1820
        %v1822 = vpop.f32.mrf.mxu0
        %1823 = vmatprep.mubr.bf16.mxu0 %v762
        %1824 = vmatmul.mubr.bf16.gmra.mxu0 %v713
        %v1825 = vpop.f32.mrf.mxu0
        %v1826 = vadd.f32 %v1665, %v1825
        %v1827 = vpop.f32.mrf.mxu0
        %v1828 = vpop.f32.mrf.mxu0
        %v1829 = vadd.f32 %v1668, %v1828
        %v1830 = vpop.f32.mrf.mxu0
        %1831 = vmatprep.mubr.bf16.mxu0 %v763
        %1832 = vmatmul.mubr.bf16.gmra.mxu0 %v714
        %v1833 = vpop.f32.mrf.mxu0
        %v1834 = vadd.f32 %v1673, %v1833
        %v1835 = vpop.f32.mrf.mxu0
        %v1836 = vpop.f32.mrf.mxu0
        %v1837 = vadd.f32 %v1676, %v1836
        %v1838 = vpop.f32.mrf.mxu0
        %1839 = vmatprep.mubr.bf16.mxu0 %v764
        %1840 = vmatmul.mubr.bf16.gmra.mxu0 %v715
        %v1841 = vpop.f32.mrf.mxu0
        %v1842 = vadd.f32 %v1681, %v1841
        %v1843 = vpop.f32.mrf.mxu0
        %v1844 = vpop.f32.mrf.mxu0
        %v1845 = vadd.f32 %v1684, %v1844
        %v1846 = vpop.f32.mrf.mxu0
        %1847 = vmatprep.mubr.bf16.mxu0 %v765
        %1848 = vmatmul.mubr.bf16.gmra.mxu0 %v716
        %v1849 = vpop.f32.mrf.mxu0
        %v1850 = vadd.f32 %v1689, %v1849
        %v1851 = vpop.f32.mrf.mxu0
        %v1852 = vpop.f32.mrf.mxu0
        %v1853 = vadd.f32 %v1692, %v1852
        %v1854 = vpop.f32.mrf.mxu0
        %1855 = vmatprep.mubr.bf16.mxu0 %v766
        %1856 = vmatmul.mubr.bf16.gmra.mxu0 %v717
        %v1857 = vpop.f32.mrf.mxu0
        %v1858 = vadd.f32 %v1697, %v1857
        %v1859 = vpop.f32.mrf.mxu0
        %v1860 = vpop.f32.mrf.mxu0
        %v1861 = vadd.f32 %v1700, %v1860
        %v1862 = vpop.f32.mrf.mxu0
        %1863 = vmatprep.mubr.bf16.mxu0 %v767
        %1864 = vmatmul.mubr.bf16.gmra.mxu0 %v718
        %v1865 = vpop.f32.mrf.mxu0
        %v1866 = vadd.f32 %v1705, %v1865
        %v1867 = vpop.f32.mrf.mxu0
        %v1868 = vpop.f32.mrf.mxu0
        %v1869 = vadd.f32 %v1708, %v1868
        %v1870 = vpop.f32.mrf.mxu0
        %1871 = vmatprep.mubr.bf16.mxu0 %v768
        %1872 = vmatmul.mubr.bf16.gmra.mxu0 %v719
        %v1873 = vpop.f32.mrf.mxu0
        %v1874 = vadd.f32 %v1713, %v1873
        %v1875 = vpop.f32.mrf.mxu0
        %v1876 = vpop.f32.mrf.mxu0
        %v1877 = vadd.f32 %v1716, %v1876
        %v1878 = vpop.f32.mrf.mxu0
        %1879 = vmatprep.mubr.bf16.mxu0 %v769
        %1880 = vmatmul.mubr.bf16.gmra.mxu0 %v720
        %v1881 = vpop.f32.mrf.mxu0
        %v1882 = vadd.f32 %v1721, %v1881
        %v1883 = vpop.f32.mrf.mxu0
        %v1884 = vpop.f32.mrf.mxu0
        %v1885 = vadd.f32 %v1724, %v1884
        %v1886 = vpop.f32.mrf.mxu0
        %1887 = vmatprep.mubr.bf16.mxu0 %v770
        %1888 = vmatmul.mubr.bf16.gmra.mxu0 %v721
        %v1889 = vpop.f32.mrf.mxu0
        %v1890 = vadd.f32 %v1729, %v1889
        %v1891 = vpop.f32.mrf.mxu0
        %v1892 = vpop.f32.mrf.mxu0
        %v1893 = vadd.f32 %v1732, %v1892
        %v1894 = vpop.f32.mrf.mxu0
        %1895 = vmatprep.mubr.bf16.mxu0 %v771
        %1896 = vmatmul.mubr.bf16.gmra.mxu0 %v722
        %v1897 = vpop.f32.mrf.mxu0
        %v1898 = vadd.f32 %v1737, %v1897
        %v1899 = vpop.f32.mrf.mxu0
        %v1900 = vpop.f32.mrf.mxu0
        %v1901 = vadd.f32 %v1740, %v1900
        %v1902 = vpop.f32.mrf.mxu0
        %1903 = vmatprep.mubr.bf16.mxu0 %v772
        %1904 = vmatmul.mubr.bf16.gmra.mxu0 %v723
        %v1905 = vpop.f32.mrf.mxu0
        %v1906 = vadd.f32 %v1745, %v1905
        %v1907 = vpop.f32.mrf.mxu0
        %v1908 = vpop.f32.mrf.mxu0
        %v1909 = vadd.f32 %v1748, %v1908
        %v1910 = vpop.f32.mrf.mxu0
        %1911 = vdwg.mxu0
        %1912 = vmatprep.subr.bf16.mxu0 0
        %1913 = vmatpush1.bf16.msra.mxu0 %v1485
        %1914 = vmatprep.subr.bf16.mxu0 0
        %1915 = vmatpush1.bf16.msra.mxu0 %v1484
        %1916 = vmatprep.subr.bf16.mxu0 0
        %1917 = vmatpush1.bf16.msra.mxu0 %v1483
        %1918 = vmatprep.subr.bf16.mxu0 0
        %1919 = vmatpush1.bf16.msra.mxu0 %v1482
        %1920 = vmatprep.subr.bf16.mxu0 0
        %1921 = vmatpush1.bf16.msra.mxu0 %v1481
        %1922 = vmatprep.subr.bf16.mxu0 0
        %1923 = vmatpush1.bf16.msra.mxu0 %v1480
        %1924 = vmatprep.subr.bf16.mxu0 0
        %1925 = vmatpush1.bf16.msra.mxu0 %v1479
        %1926 = vmatprep.subr.bf16.mxu0 0
        %1927 = vmatpush1.bf16.msra.mxu0 %v1478
        %1928 = vmatprep.subr.bf16.mxu0 0
        %1929 = vmatpush2.bf16.msra.mxu0 %v1493
        %1930 = vmatprep.subr.bf16.mxu0 0
        %1931 = vmatpush2.bf16.msra.mxu0 %v1492
        %1932 = vmatprep.subr.bf16.mxu0 0
        %1933 = vmatpush2.bf16.msra.mxu0 %v1491
        %1934 = vmatprep.subr.bf16.mxu0 0
        %1935 = vmatpush2.bf16.msra.mxu0 %v1490
        %1936 = vmatprep.subr.bf16.mxu0 0
        %1937 = vmatpush2.bf16.msra.mxu0 %v1489
        %1938 = vmatprep.subr.bf16.mxu0 0
        %1939 = vmatpush2.bf16.msra.mxu0 %v1488
        %1940 = vmatprep.subr.bf16.mxu0 0
        %1941 = vmatpush2.bf16.msra.mxu0 %v1487
        %1942 = vmatprep.subr.bf16.mxu0 0
        %1943 = vmatpush2.bf16.msra.mxu0 %v1486
        %1944 = vmatprep.mubr.bf16.mxu0 %v853
        %1945 = vmatmul.mubr.bf16.gmra.mxu0 %v805
        %v1946 = vpop.f32.mrf.mxu0
        %v1947 = vadd.f32 %v1786, %v1946
        %v1948 = vpop.f32.mrf.mxu0
        %v1949 = vpop.f32.mrf.mxu0
        %v1950 = vadd.f32 %v1789, %v1949
        %v1951 = vpop.f32.mrf.mxu0
        %1952 = vmatprep.mubr.bf16.mxu0 %v854
        %1953 = vmatmul.mubr.bf16.gmra.mxu0 %v806
        %v1954 = vpop.f32.mrf.mxu0
        %v1955 = vadd.f32 %v1794, %v1954
        %v1956 = vpop.f32.mrf.mxu0
        %v1957 = vpop.f32.mrf.mxu0
        %v1958 = vadd.f32 %v1797, %v1957
        %v1959 = vpop.f32.mrf.mxu0
        %1960 = vmatprep.mubr.bf16.mxu0 %v855
        %1961 = vmatmul.mubr.bf16.gmra.mxu0 %v807
        %v1962 = vpop.f32.mrf.mxu0
        %v1963 = vadd.f32 %v1802, %v1962
        %v1964 = vpop.f32.mrf.mxu0
        %v1965 = vpop.f32.mrf.mxu0
        %v1966 = vadd.f32 %v1805, %v1965
        %v1967 = vpop.f32.mrf.mxu0
        %1968 = vmatprep.mubr.bf16.mxu0 %v856
        %1969 = vmatmul.mubr.bf16.gmra.mxu0 %v808
        %v1970 = vpop.f32.mrf.mxu0
        %v1971 = vadd.f32 %v1810, %v1970
        %v1972 = vpop.f32.mrf.mxu0
        %v1973 = vpop.f32.mrf.mxu0
        %v1974 = vadd.f32 %v1813, %v1973
        %v1975 = vpop.f32.mrf.mxu0
        %1976 = vmatprep.mubr.bf16.mxu0 %v857
        %1977 = vmatmul.mubr.bf16.gmra.mxu0 %v809
        %v1978 = vpop.f32.mrf.mxu0
        %v1979 = vadd.f32 %v1818, %v1978
        %v1980 = vpop.f32.mrf.mxu0
        %v1981 = vpop.f32.mrf.mxu0
        %v1982 = vadd.f32 %v1821, %v1981
        %v1983 = vpop.f32.mrf.mxu0
        %1984 = vmatprep.mubr.bf16.mxu0 %v858
        %1985 = vmatmul.mubr.bf16.gmra.mxu0 %v810
        %v1986 = vpop.f32.mrf.mxu0
        %v1987 = vadd.f32 %v1826, %v1986
        %v1988 = vpop.f32.mrf.mxu0
        %v1989 = vpop.f32.mrf.mxu0
        %v1990 = vadd.f32 %v1829, %v1989
        %v1991 = vpop.f32.mrf.mxu0
        %1992 = vmatprep.mubr.bf16.mxu0 %v859
        %1993 = vmatmul.mubr.bf16.gmra.mxu0 %v811
        %v1994 = vpop.f32.mrf.mxu0
        %v1995 = vadd.f32 %v1834, %v1994
        %v1996 = vpop.f32.mrf.mxu0
        %v1997 = vpop.f32.mrf.mxu0
        %v1998 = vadd.f32 %v1837, %v1997
        %v1999 = vpop.f32.mrf.mxu0
        %2000 = vmatprep.mubr.bf16.mxu0 %v860
        %2001 = vmatmul.mubr.bf16.gmra.mxu0 %v812
        %v2002 = vpop.f32.mrf.mxu0
        %v2003 = vadd.f32 %v1842, %v2002
        %v2004 = vpop.f32.mrf.mxu0
        %v2005 = vpop.f32.mrf.mxu0
        %v2006 = vadd.f32 %v1845, %v2005
        %v2007 = vpop.f32.mrf.mxu0
        %2008 = vmatprep.mubr.bf16.mxu0 %v861
        %2009 = vmatmul.mubr.bf16.gmra.mxu0 %v813
        %v2010 = vpop.f32.mrf.mxu0
        %v2011 = vadd.f32 %v1850, %v2010
        %v2012 = vpop.f32.mrf.mxu0
        %v2013 = vpop.f32.mrf.mxu0
        %v2014 = vadd.f32 %v1853, %v2013
        %v2015 = vpop.f32.mrf.mxu0
        %2016 = vmatprep.mubr.bf16.mxu0 %v862
        %2017 = vmatmul.mubr.bf16.gmra.mxu0 %v814
        %v2018 = vpop.f32.mrf.mxu0
        %v2019 = vadd.f32 %v1858, %v2018
        %v2020 = vpop.f32.mrf.mxu0
        %v2021 = vpop.f32.mrf.mxu0
        %v2022 = vadd.f32 %v1861, %v2021
        %v2023 = vpop.f32.mrf.mxu0
        %2024 = vmatprep.mubr.bf16.mxu0 %v863
        %2025 = vmatmul.mubr.bf16.gmra.mxu0 %v815
        %v2026 = vpop.f32.mrf.mxu0
        %v2027 = vadd.f32 %v1866, %v2026
        %v2028 = vpop.f32.mrf.mxu0
        %v2029 = vpop.f32.mrf.mxu0
        %v2030 = vadd.f32 %v1869, %v2029
        %v2031 = vpop.f32.mrf.mxu0
        %2032 = vmatprep.mubr.bf16.mxu0 %v864
        %2033 = vmatmul.mubr.bf16.gmra.mxu0 %v816
        %v2034 = vpop.f32.mrf.mxu0
        %v2035 = vadd.f32 %v1874, %v2034
        %v2036 = vpop.f32.mrf.mxu0
        %v2037 = vpop.f32.mrf.mxu0
        %v2038 = vadd.f32 %v1877, %v2037
        %v2039 = vpop.f32.mrf.mxu0
        %2040 = vmatprep.mubr.bf16.mxu0 %v865
        %2041 = vmatmul.mubr.bf16.gmra.mxu0 %v817
        %v2042 = vpop.f32.mrf.mxu0
        %v2043 = vadd.f32 %v1882, %v2042
        %v2044 = vpop.f32.mrf.mxu0
        %v2045 = vpop.f32.mrf.mxu0
        %v2046 = vadd.f32 %v1885, %v2045
        %v2047 = vpop.f32.mrf.mxu0
        %2048 = vmatprep.mubr.bf16.mxu0 %v866
        %2049 = vmatmul.mubr.bf16.gmra.mxu0 %v818
        %v2050 = vpop.f32.mrf.mxu0
        %v2051 = vadd.f32 %v1890, %v2050
        %v2052 = vpop.f32.mrf.mxu0
        %v2053 = vpop.f32.mrf.mxu0
        %v2054 = vadd.f32 %v1893, %v2053
        %v2055 = vpop.f32.mrf.mxu0
        %2056 = vmatprep.mubr.bf16.mxu0 %v867
        %2057 = vmatmul.mubr.bf16.gmra.mxu0 %v819
        %v2058 = vpop.f32.mrf.mxu0
        %v2059 = vadd.f32 %v1898, %v2058
        %v2060 = vpop.f32.mrf.mxu0
        %v2061 = vpop.f32.mrf.mxu0
        %v2062 = vadd.f32 %v1901, %v2061
        %v2063 = vpop.f32.mrf.mxu0
        %2064 = vmatprep.mubr.bf16.mxu0 %v868
        %2065 = vmatmul.mubr.bf16.gmra.mxu0 %v820
        %v2066 = vpop.f32.mrf.mxu0
        %v2067 = vadd.f32 %v1906, %v2066
        %v2068 = vpop.f32.mrf.mxu0
        %v2069 = vpop.f32.mrf.mxu0
        %v2070 = vadd.f32 %v1909, %v2069
        %v2071 = vpop.f32.mrf.mxu0
        %2072 = vdwg.mxu0
        %2073 = vmatprep.subr.bf16.mxu0 0
        %2074 = vmatpush1.bf16.msra.mxu0 %v1501
        %2075 = vmatprep.subr.bf16.mxu0 0
        %2076 = vmatpush1.bf16.msra.mxu0 %v1500
        %2077 = vmatprep.subr.bf16.mxu0 0
        %2078 = vmatpush1.bf16.msra.mxu0 %v1499
        %2079 = vmatprep.subr.bf16.mxu0 0
        %2080 = vmatpush1.bf16.msra.mxu0 %v1498
        %2081 = vmatprep.subr.bf16.mxu0 0
        %2082 = vmatpush1.bf16.msra.mxu0 %v1497
        %2083 = vmatprep.subr.bf16.mxu0 0
        %2084 = vmatpush1.bf16.msra.mxu0 %v1496
        %2085 = vmatprep.subr.bf16.mxu0 0
        %2086 = vmatpush1.bf16.msra.mxu0 %v1495
        %2087 = vmatprep.subr.bf16.mxu0 0
        %2088 = vmatpush1.bf16.msra.mxu0 %v1494
        %2089 = vmatprep.subr.bf16.mxu0 0
        %2090 = vmatpush2.bf16.msra.mxu0 %v1509
        %2091 = vmatprep.subr.bf16.mxu0 0
        %2092 = vmatpush2.bf16.msra.mxu0 %v1508
        %2093 = vmatprep.subr.bf16.mxu0 0
        %2094 = vmatpush2.bf16.msra.mxu0 %v1507
        %2095 = vmatprep.subr.bf16.mxu0 0
        %2096 = vmatpush2.bf16.msra.mxu0 %v1506
        %2097 = vmatprep.subr.bf16.mxu0 0
        %2098 = vmatpush2.bf16.msra.mxu0 %v1505
        %2099 = vmatprep.subr.bf16.mxu0 0
        %2100 = vmatpush2.bf16.msra.mxu0 %v1504
        %2101 = vmatprep.subr.bf16.mxu0 0
        %2102 = vmatpush2.bf16.msra.mxu0 %v1503
        %2103 = vmatprep.subr.bf16.mxu0 0
        %2104 = vmatpush2.bf16.msra.mxu0 %v1502
        %2105 = vmatprep.mubr.bf16.mxu0 %v950
        %2106 = vmatmul.mubr.bf16.gmra.mxu0 %v902
        %v2107 = vpop.f32.mrf.mxu0
        %v2108 = vadd.f32 %v1947, %v2107
        %v2109 = vpop.f32.mrf.mxu0
        %v2110 = vpop.f32.mrf.mxu0
        %v2111 = vadd.f32 %v1950, %v2110
        %v2112 = vpop.f32.mrf.mxu0
        %2113 = vmatprep.mubr.bf16.mxu0 %v951
        %2114 = vmatmul.mubr.bf16.gmra.mxu0 %v903
        %v2115 = vpop.f32.mrf.mxu0
        %v2116 = vadd.f32 %v1955, %v2115
        %v2117 = vpop.f32.mrf.mxu0
        %v2118 = vpop.f32.mrf.mxu0
        %v2119 = vadd.f32 %v1958, %v2118
        %v2120 = vpop.f32.mrf.mxu0
        %2121 = vmatprep.mubr.bf16.mxu0 %v952
        %2122 = vmatmul.mubr.bf16.gmra.mxu0 %v904
        %v2123 = vpop.f32.mrf.mxu0
        %v2124 = vadd.f32 %v1963, %v2123
        %v2125 = vpop.f32.mrf.mxu0
        %v2126 = vpop.f32.mrf.mxu0
        %v2127 = vadd.f32 %v1966, %v2126
        %v2128 = vpop.f32.mrf.mxu0
        %2129 = vmatprep.mubr.bf16.mxu0 %v953
        %2130 = vmatmul.mubr.bf16.gmra.mxu0 %v905
        %v2131 = vpop.f32.mrf.mxu0
        %v2132 = vadd.f32 %v1971, %v2131
        %v2133 = vpop.f32.mrf.mxu0
        %v2134 = vpop.f32.mrf.mxu0
        %v2135 = vadd.f32 %v1974, %v2134
        %v2136 = vpop.f32.mrf.mxu0
        %2137 = vmatprep.mubr.bf16.mxu0 %v954
        %2138 = vmatmul.mubr.bf16.gmra.mxu0 %v906
        %v2139 = vpop.f32.mrf.mxu0
        %v2140 = vadd.f32 %v1979, %v2139
        %v2141 = vpop.f32.mrf.mxu0
        %v2142 = vpop.f32.mrf.mxu0
        %v2143 = vadd.f32 %v1982, %v2142
        %v2144 = vpop.f32.mrf.mxu0
        %2145 = vmatprep.mubr.bf16.mxu0 %v955
        %2146 = vmatmul.mubr.bf16.gmra.mxu0 %v907
        %v2147 = vpop.f32.mrf.mxu0
        %v2148 = vadd.f32 %v1987, %v2147
        %v2149 = vpop.f32.mrf.mxu0
        %v2150 = vpop.f32.mrf.mxu0
        %v2151 = vadd.f32 %v1990, %v2150
        %v2152 = vpop.f32.mrf.mxu0
        %2153 = vmatprep.mubr.bf16.mxu0 %v956
        %2154 = vmatmul.mubr.bf16.gmra.mxu0 %v908
        %v2155 = vpop.f32.mrf.mxu0
        %v2156 = vadd.f32 %v1995, %v2155
        %v2157 = vpop.f32.mrf.mxu0
        %v2158 = vpop.f32.mrf.mxu0
        %v2159 = vadd.f32 %v1998, %v2158
        %v2160 = vpop.f32.mrf.mxu0
        %2161 = vmatprep.mubr.bf16.mxu0 %v957
        %2162 = vmatmul.mubr.bf16.gmra.mxu0 %v909
        %v2163 = vpop.f32.mrf.mxu0
        %v2164 = vadd.f32 %v2003, %v2163
        %v2165 = vpop.f32.mrf.mxu0
        %v2166 = vpop.f32.mrf.mxu0
        %v2167 = vadd.f32 %v2006, %v2166
        %v2168 = vpop.f32.mrf.mxu0
        %2169 = vmatprep.mubr.bf16.mxu0 %v958
        %2170 = vmatmul.mubr.bf16.gmra.mxu0 %v910
        %v2171 = vpop.f32.mrf.mxu0
        %v2172 = vadd.f32 %v2011, %v2171
        %v2173 = vpop.f32.mrf.mxu0
        %v2174 = vpop.f32.mrf.mxu0
        %v2175 = vadd.f32 %v2014, %v2174
        %v2176 = vpop.f32.mrf.mxu0
        %2177 = vmatprep.mubr.bf16.mxu0 %v959
        %2178 = vmatmul.mubr.bf16.gmra.mxu0 %v911
        %v2179 = vpop.f32.mrf.mxu0
        %v2180 = vadd.f32 %v2019, %v2179
        %v2181 = vpop.f32.mrf.mxu0
        %v2182 = vpop.f32.mrf.mxu0
        %v2183 = vadd.f32 %v2022, %v2182
        %v2184 = vpop.f32.mrf.mxu0
        %2185 = vmatprep.mubr.bf16.mxu0 %v960
        %2186 = vmatmul.mubr.bf16.gmra.mxu0 %v912
        %v2187 = vpop.f32.mrf.mxu0
        %v2188 = vadd.f32 %v2027, %v2187
        %v2189 = vpop.f32.mrf.mxu0
        %v2190 = vpop.f32.mrf.mxu0
        %v2191 = vadd.f32 %v2030, %v2190
        %v2192 = vpop.f32.mrf.mxu0
        %2193 = vmatprep.mubr.bf16.mxu0 %v961
        %2194 = vmatmul.mubr.bf16.gmra.mxu0 %v913
        %v2195 = vpop.f32.mrf.mxu0
        %v2196 = vadd.f32 %v2035, %v2195
        %v2197 = vpop.f32.mrf.mxu0
        %v2198 = vpop.f32.mrf.mxu0
        %v2199 = vadd.f32 %v2038, %v2198
        %v2200 = vpop.f32.mrf.mxu0
        %2201 = vmatprep.mubr.bf16.mxu0 %v962
        %2202 = vmatmul.mubr.bf16.gmra.mxu0 %v914
        %v2203 = vpop.f32.mrf.mxu0
        %v2204 = vadd.f32 %v2043, %v2203
        %v2205 = vpop.f32.mrf.mxu0
        %v2206 = vpop.f32.mrf.mxu0
        %v2207 = vadd.f32 %v2046, %v2206
        %v2208 = vpop.f32.mrf.mxu0
        %2209 = vmatprep.mubr.bf16.mxu0 %v963
        %2210 = vmatmul.mubr.bf16.gmra.mxu0 %v915
        %v2211 = vpop.f32.mrf.mxu0
        %v2212 = vadd.f32 %v2051, %v2211
        %v2213 = vpop.f32.mrf.mxu0
        %v2214 = vpop.f32.mrf.mxu0
        %v2215 = vadd.f32 %v2054, %v2214
        %v2216 = vpop.f32.mrf.mxu0
        %2217 = vmatprep.mubr.bf16.mxu0 %v964
        %2218 = vmatmul.mubr.bf16.gmra.mxu0 %v916
        %v2219 = vpop.f32.mrf.mxu0
        %v2220 = vadd.f32 %v2059, %v2219
        %v2221 = vpop.f32.mrf.mxu0
        %v2222 = vpop.f32.mrf.mxu0
        %v2223 = vadd.f32 %v2062, %v2222
        %v2224 = vpop.f32.mrf.mxu0
        %2225 = vmatprep.mubr.bf16.mxu0 %v965
        %2226 = vmatmul.mubr.bf16.gmra.mxu0 %v917
        %v2227 = vpop.f32.mrf.mxu0
        %v2228 = vadd.f32 %v2067, %v2227
        %v2229 = vpop.f32.mrf.mxu0
        %v2230 = vpop.f32.mrf.mxu0
        %v2231 = vadd.f32 %v2070, %v2230
        %v2232 = vpop.f32.mrf.mxu0
        %2233 = vdwg.mxu0
        %2234 = vmatprep.subr.bf16.mxu0 0
        %2235 = vmatpush1.bf16.msra.mxu0 %v1517
        %2236 = vmatprep.subr.bf16.mxu0 0
        %2237 = vmatpush1.bf16.msra.mxu0 %v1516
        %2238 = vmatprep.subr.bf16.mxu0 0
        %2239 = vmatpush1.bf16.msra.mxu0 %v1515
        %2240 = vmatprep.subr.bf16.mxu0 0
        %2241 = vmatpush1.bf16.msra.mxu0 %v1514
        %2242 = vmatprep.subr.bf16.mxu0 0
        %2243 = vmatpush1.bf16.msra.mxu0 %v1513
        %2244 = vmatprep.subr.bf16.mxu0 0
        %2245 = vmatpush1.bf16.msra.mxu0 %v1512
        %2246 = vmatprep.subr.bf16.mxu0 0
        %2247 = vmatpush1.bf16.msra.mxu0 %v1511
        %2248 = vmatprep.subr.bf16.mxu0 0
        %2249 = vmatpush1.bf16.msra.mxu0 %v1510
        %2250 = vmatprep.subr.bf16.mxu0 0
        %2251 = vmatpush2.bf16.msra.mxu0 0
        %2252 = vmatprep.subr.bf16.mxu0 0
        %2253 = vmatpush2.bf16.msra.mxu0 0
        %2254 = vmatprep.subr.bf16.mxu0 0
        %2255 = vmatpush2.bf16.msra.mxu0 0
        %2256 = vmatprep.subr.bf16.mxu0 0
        %2257 = vmatpush2.bf16.msra.mxu0 0
        %2258 = vmatprep.subr.bf16.mxu0 0
        %2259 = vmatpush2.bf16.msra.mxu0 0
        %2260 = vmatprep.subr.bf16.mxu0 0
        %2261 = vmatpush2.bf16.msra.mxu0 0
        %2262 = vmatprep.subr.bf16.mxu0 0
        %2263 = vmatpush2.bf16.msra.mxu0 0
        %2264 = vmatprep.subr.bf16.mxu0 0
        %2265 = vmatpush2.bf16.msra.mxu0 0
        %2266 = vmatprep.mubr.bf16.mxu0 0
        %2267 = vmatmul.mubr.bf16.gmra.mxu0 %v998
        %v2268 = vpop.f32.mrf.mxu0
        %v2269 = vadd.f32 %v2108, %v2268
        %v2270 = vpop.f32.mrf.mxu0
        %v2271 = vpop.f32.mrf.mxu0
        %v2272 = vadd.f32 %v2111, %v2271
        %v2273 = vpop.f32.mrf.mxu0
        %2274 = vmatprep.mubr.bf16.mxu0 0
        %2275 = vmatmul.mubr.bf16.gmra.mxu0 %v999
        %v2276 = vpop.f32.mrf.mxu0
        %v2277 = vadd.f32 %v2116, %v2276
        %v2278 = vpop.f32.mrf.mxu0
        %v2279 = vpop.f32.mrf.mxu0
        %v2280 = vadd.f32 %v2119, %v2279
        %v2281 = vpop.f32.mrf.mxu0
        %2282 = vmatprep.mubr.bf16.mxu0 0
        %2283 = vmatmul.mubr.bf16.gmra.mxu0 %v1000
        %v2284 = vpop.f32.mrf.mxu0
        %v2285 = vadd.f32 %v2124, %v2284
        %v2286 = vpop.f32.mrf.mxu0
        %v2287 = vpop.f32.mrf.mxu0
        %v2288 = vadd.f32 %v2127, %v2287
        %v2289 = vpop.f32.mrf.mxu0
        %2290 = vmatprep.mubr.bf16.mxu0 0
        %2291 = vmatmul.mubr.bf16.gmra.mxu0 %v1001
        %v2292 = vpop.f32.mrf.mxu0
        %v2293 = vadd.f32 %v2132, %v2292
        %v2294 = vpop.f32.mrf.mxu0
        %v2295 = vpop.f32.mrf.mxu0
        %v2296 = vadd.f32 %v2135, %v2295
        %v2297 = vpop.f32.mrf.mxu0
        %2298 = vmatprep.mubr.bf16.mxu0 0
        %2299 = vmatmul.mubr.bf16.gmra.mxu0 %v1002
        %v2300 = vpop.f32.mrf.mxu0
        %v2301 = vadd.f32 %v2140, %v2300
        %v2302 = vpop.f32.mrf.mxu0
        %v2303 = vpop.f32.mrf.mxu0
        %v2304 = vadd.f32 %v2143, %v2303
        %v2305 = vpop.f32.mrf.mxu0
        %2306 = vmatprep.mubr.bf16.mxu0 0
        %2307 = vmatmul.mubr.bf16.gmra.mxu0 %v1003
        %v2308 = vpop.f32.mrf.mxu0
        %v2309 = vadd.f32 %v2148, %v2308
        %v2310 = vpop.f32.mrf.mxu0
        %v2311 = vpop.f32.mrf.mxu0
        %v2312 = vadd.f32 %v2151, %v2311
        %v2313 = vpop.f32.mrf.mxu0
        %2314 = vmatprep.mubr.bf16.mxu0 0
        %2315 = vmatmul.mubr.bf16.gmra.mxu0 %v1004
        %v2316 = vpop.f32.mrf.mxu0
        %v2317 = vadd.f32 %v2156, %v2316
        %v2318 = vpop.f32.mrf.mxu0
        %v2319 = vpop.f32.mrf.mxu0
        %v2320 = vadd.f32 %v2159, %v2319
        %v2321 = vpop.f32.mrf.mxu0
        %2322 = vmatprep.mubr.bf16.mxu0 0
        %2323 = vmatmul.mubr.bf16.gmra.mxu0 %v1005
        %v2324 = vpop.f32.mrf.mxu0
        %v2325 = vadd.f32 %v2164, %v2324
        %v2326 = vpop.f32.mrf.mxu0
        %v2327 = vpop.f32.mrf.mxu0
        %v2328 = vadd.f32 %v2167, %v2327
        %v2329 = vpop.f32.mrf.mxu0
        %2330 = vmatprep.mubr.bf16.mxu0 0
        %2331 = vmatmul.mubr.bf16.gmra.mxu0 %v1006
        %v2332 = vpop.f32.mrf.mxu0
        %v2333 = vadd.f32 %v2172, %v2332
        %v2334 = vpop.f32.mrf.mxu0
        %v2335 = vpop.f32.mrf.mxu0
        %v2336 = vadd.f32 %v2175, %v2335
        %v2337 = vpop.f32.mrf.mxu0
        %2338 = vmatprep.mubr.bf16.mxu0 0
        %2339 = vmatmul.mubr.bf16.gmra.mxu0 %v1007
        %v2340 = vpop.f32.mrf.mxu0
        %v2341 = vadd.f32 %v2180, %v2340
        %v2342 = vpop.f32.mrf.mxu0
        %v2343 = vpop.f32.mrf.mxu0
        %v2344 = vadd.f32 %v2183, %v2343
        %v2345 = vpop.f32.mrf.mxu0
        %2346 = vmatprep.mubr.bf16.mxu0 0
        %2347 = vmatmul.mubr.bf16.gmra.mxu0 %v1008
        %v2348 = vpop.f32.mrf.mxu0
        %v2349 = vadd.f32 %v2188, %v2348
        %v2350 = vpop.f32.mrf.mxu0
        %v2351 = vpop.f32.mrf.mxu0
        %v2352 = vadd.f32 %v2191, %v2351
        %v2353 = vpop.f32.mrf.mxu0
        %2354 = vmatprep.mubr.bf16.mxu0 0
        %2355 = vmatmul.mubr.bf16.gmra.mxu0 %v1009
        %v2356 = vpop.f32.mrf.mxu0
        %v2357 = vadd.f32 %v2196, %v2356
        %v2358 = vpop.f32.mrf.mxu0
        %v2359 = vpop.f32.mrf.mxu0
        %v2360 = vadd.f32 %v2199, %v2359
        %v2361 = vpop.f32.mrf.mxu0
        %2362 = vmatprep.mubr.bf16.mxu0 0
        %2363 = vmatmul.mubr.bf16.gmra.mxu0 %v1010
        %v2364 = vpop.f32.mrf.mxu0
        %v2365 = vadd.f32 %v2204, %v2364
        %v2366 = vpop.f32.mrf.mxu0
        %v2367 = vpop.f32.mrf.mxu0
        %v2368 = vadd.f32 %v2207, %v2367
        %v2369 = vpop.f32.mrf.mxu0
        %2370 = vmatprep.mubr.bf16.mxu0 0
        %2371 = vmatmul.mubr.bf16.gmra.mxu0 %v1011
        %v2372 = vpop.f32.mrf.mxu0
        %v2373 = vadd.f32 %v2212, %v2372
        %v2374 = vpop.f32.mrf.mxu0
        %v2375 = vpop.f32.mrf.mxu0
        %v2376 = vadd.f32 %v2215, %v2375
        %v2377 = vpop.f32.mrf.mxu0
        %2378 = vmatprep.mubr.bf16.mxu0 0
        %2379 = vmatmul.mubr.bf16.gmra.mxu0 %v1012
        %v2380 = vpop.f32.mrf.mxu0
        %v2381 = vadd.f32 %v2220, %v2380
        %v2382 = vpop.f32.mrf.mxu0
        %v2383 = vpop.f32.mrf.mxu0
        %v2384 = vadd.f32 %v2223, %v2383
        %v2385 = vpop.f32.mrf.mxu0
        %2386 = vmatprep.mubr.bf16.mxu0 0
        %2387 = vmatmul.mubr.bf16.gmra.mxu0 %v1013
        %v2388 = vpop.f32.mrf.mxu0
        %v2389 = vadd.f32 %v2228, %v2388
        %v2390 = vpop.f32.mrf.mxu0
        %v2391 = vpop.f32.mrf.mxu0
        %v2392 = vadd.f32 %v2231, %v2391
        %v2393 = vpop.f32.mrf.mxu0
        %2394 = vdwg.mxu0
        %2395 = vst [vmem:[%s277] sm:$0xff] %v2269
        %2396 = vst [vmem:[%s277 + $0x8] sm:$0xff] %v2272
        %2397 = vst [vmem:[%s277 + $0x10] sm:$0xff] %v2277
        %2398 = vst [vmem:[%s277 + $0x18] sm:$0xff] %v2280
        %2399 = vst [vmem:[%s277 + $0x20] sm:$0xff] %v2285
        %2400 = vst [vmem:[%s277 + $0x28] sm:$0xff] %v2288
        %2401 = vst [vmem:[%s277 + $0x30] sm:$0xff] %v2293
        %2402 = vst [vmem:[%s277 + $0x38] sm:$0xff] %v2296
        %2403 = vst [vmem:[%s277 + $0x40] sm:$0xff] %v2301
        %2404 = vst [vmem:[%s277 + $0x48] sm:$0xff] %v2304
        %2405 = vst [vmem:[%s277 + $0x50] sm:$0xff] %v2309
        %2406 = vst [vmem:[%s277 + $0x58] sm:$0xff] %v2312
        %2407 = vst [vmem:[%s277 + $0x60] sm:$0xff] %v2317
        %2408 = vst [vmem:[%s277 + $0x68] sm:$0xff] %v2320
        %2409 = vst [vmem:[%s277 + $0x70] sm:$0xff] %v2325
        %2410 = vst [vmem:[%s277 + $0x78] sm:$0xff] %v2328
        %2411 = vst [vmem:[%s277 + $0x80] sm:$0xff] %v2333
        %2412 = vst [vmem:[%s277 + $0x88] sm:$0xff] %v2336
        %2413 = vst [vmem:[%s277 + $0x90] sm:$0xff] %v2341
        %2414 = vst [vmem:[%s277 + $0x98] sm:$0xff] %v2344
        %2415 = vst [vmem:[%s277 + $0xa0] sm:$0xff] %v2349
        %2416 = vst [vmem:[%s277 + $0xa8] sm:$0xff] %v2352
        %2417 = vst [vmem:[%s277 + $0xb0] sm:$0xff] %v2357
        %2418 = vst [vmem:[%s277 + $0xb8] sm:$0xff] %v2360
        %2419 = vst [vmem:[%s277 + $0xc0] sm:$0xff] %v2365
        %2420 = vst [vmem:[%s277 + $0xc8] sm:$0xff] %v2368
        %2421 = vst [vmem:[%s277 + $0xd0] sm:$0xff] %v2373
        %2422 = vst [vmem:[%s277 + $0xd8] sm:$0xff] %v2376
        %2423 = vst [vmem:[%s277 + $0xe0] sm:$0xff] %v2381
        %2424 = vst [vmem:[%s277 + $0xe8] sm:$0xff] %v2384
        %2425 = vst [vmem:[%s277 + $0xf0] sm:$0xff] %v2389
        %2426 = vst [vmem:[%s277 + $0xf8] sm:$0xff] %v2392
        %s2427 = scalar_lea.vmem [#allocation2], 160
        %v2428 = vld [vmem:[%s2427] sm:$0xff]
        %v2429 = vld [vmem:[%s2427 + $0x10] sm:$0xff]
        %v2430 = vld [vmem:[%s2427 + $0x20] sm:$0xff]
        %v2431 = vld [vmem:[%s2427 + $0x30] sm:$0xff]
        %v2432 = vld [vmem:[%s2427 + $0x40] sm:$0xff]
        %v2433 = vld [vmem:[%s2427 + $0x50] sm:$0xff]
        %v2434 = vld [vmem:[%s2427 + $0x60] sm:$0xff]
        %v2435 = vld [vmem:[%s2427 + $0x70] sm:$0xff]
        %v2436 = vld [vmem:[%s2427 + $0xa0] sm:$0xff]
        %v2437 = vld [vmem:[%s2427 + $0xb0] sm:$0xff]
        %v2438 = vld [vmem:[%s2427 + $0xc0] sm:$0xff]
        %v2439 = vld [vmem:[%s2427 + $0xd0] sm:$0xff]
        %v2440 = vld [vmem:[%s2427 + $0xe0] sm:$0xff]
        %v2441 = vld [vmem:[%s2427 + $0xf0] sm:$0xff]
        %v2442 = vld [vmem:[%s2427 + $0x100] sm:$0xff]
        %v2443 = vld [vmem:[%s2427 + $0x110] sm:$0xff]
        %v2444 = vld [vmem:[%s2427 + $0x140] sm:$0xff]
        %v2445 = vld [vmem:[%s2427 + $0x150] sm:$0xff]
        %v2446 = vld [vmem:[%s2427 + $0x160] sm:$0xff]
        %v2447 = vld [vmem:[%s2427 + $0x170] sm:$0xff]
        %v2448 = vld [vmem:[%s2427 + $0x180] sm:$0xff]
        %v2449 = vld [vmem:[%s2427 + $0x190] sm:$0xff]
        %v2450 = vld [vmem:[%s2427 + $0x1a0] sm:$0xff]
        %v2451 = vld [vmem:[%s2427 + $0x1b0] sm:$0xff]
        %v2452 = vld [vmem:[%s2427 + $0x1e0] sm:$0xff]
        %v2453 = vld [vmem:[%s2427 + $0x1f0] sm:$0xff]
        %v2454 = vld [vmem:[%s2427 + $0x200] sm:$0xff]
        %v2455 = vld [vmem:[%s2427 + $0x210] sm:$0xff]
        %v2456 = vld [vmem:[%s2427 + $0x220] sm:$0xff]
        %v2457 = vld [vmem:[%s2427 + $0x230] sm:$0xff]
        %v2458 = vld [vmem:[%s2427 + $0x240] sm:$0xff]
        %v2459 = vld [vmem:[%s2427 + $0x250] sm:$0xff]
        %v2460 = vpack.c.bf16 %v2429, %v2428
        %v2461 = vpack.c.bf16 %v2431, %v2430
        %v2462 = vpack.c.bf16 %v2433, %v2432
        %v2463 = vpack.c.bf16 %v2435, %v2434
        %v2464 = vpack.c.bf16 %v2437, %v2436
        %v2465 = vpack.c.bf16 %v2439, %v2438
        %v2466 = vpack.c.bf16 %v2441, %v2440
        %v2467 = vpack.c.bf16 %v2443, %v2442
        %v2468 = vpack.c.bf16 %v2445, %v2444
        %v2469 = vpack.c.bf16 %v2447, %v2446
        %v2470 = vpack.c.bf16 %v2449, %v2448
        %v2471 = vpack.c.bf16 %v2451, %v2450
        %v2472 = vpack.c.bf16 %v2453, %v2452
        %v2473 = vpack.c.bf16 %v2455, %v2454
        %v2474 = vpack.c.bf16 %v2457, %v2456
        %v2475 = vpack.c.bf16 %v2459, %v2458
        %v2476 = vld [vmem:[%s2427 + $0x1] sm:$0xff]
        %v2477 = vld [vmem:[%s2427 + $0x11] sm:$0xff]
        %v2478 = vld [vmem:[%s2427 + $0x21] sm:$0xff]
        %v2479 = vld [vmem:[%s2427 + $0x31] sm:$0xff]
        %v2480 = vld [vmem:[%s2427 + $0x41] sm:$0xff]
        %v2481 = vld [vmem:[%s2427 + $0x51] sm:$0xff]
        %v2482 = vld [vmem:[%s2427 + $0x61] sm:$0xff]
        %v2483 = vld [vmem:[%s2427 + $0x71] sm:$0xff]
        %v2484 = vld [vmem:[%s2427 + $0xa1] sm:$0xff]
        %v2485 = vld [vmem:[%s2427 + $0xb1] sm:$0xff]
        %v2486 = vld [vmem:[%s2427 + $0xc1] sm:$0xff]
        %v2487 = vld [vmem:[%s2427 + $0xd1] sm:$0xff]
        %v2488 = vld [vmem:[%s2427 + $0xe1] sm:$0xff]
        %v2489 = vld [vmem:[%s2427 + $0xf1] sm:$0xff]
        %v2490 = vld [vmem:[%s2427 + $0x101] sm:$0xff]
        %v2491 = vld [vmem:[%s2427 + $0x111] sm:$0xff]
        %v2492 = vld [vmem:[%s2427 + $0x141] sm:$0xff]
        %v2493 = vld [vmem:[%s2427 + $0x151] sm:$0xff]
        %v2494 = vld [vmem:[%s2427 + $0x161] sm:$0xff]
        %v2495 = vld [vmem:[%s2427 + $0x171] sm:$0xff]
        %v2496 = vld [vmem:[%s2427 + $0x181] sm:$0xff]
        %v2497 = vld [vmem:[%s2427 + $0x191] sm:$0xff]
        %v2498 = vld [vmem:[%s2427 + $0x1a1] sm:$0xff]
        %v2499 = vld [vmem:[%s2427 + $0x1b1] sm:$0xff]
        %v2500 = vld [vmem:[%s2427 + $0x1e1] sm:$0xff]
        %v2501 = vld [vmem:[%s2427 + $0x1f1] sm:$0xff]
        %v2502 = vld [vmem:[%s2427 + $0x201] sm:$0xff]
        %v2503 = vld [vmem:[%s2427 + $0x211] sm:$0xff]
        %v2504 = vld [vmem:[%s2427 + $0x221] sm:$0xff]
        %v2505 = vld [vmem:[%s2427 + $0x231] sm:$0xff]
        %v2506 = vld [vmem:[%s2427 + $0x241] sm:$0xff]
        %v2507 = vld [vmem:[%s2427 + $0x251] sm:$0xff]
        %v2508 = vpack.c.bf16 %v2477, %v2476
        %v2509 = vpack.c.bf16 %v2479, %v2478
        %v2510 = vpack.c.bf16 %v2481, %v2480
        %v2511 = vpack.c.bf16 %v2483, %v2482
        %v2512 = vpack.c.bf16 %v2485, %v2484
        %v2513 = vpack.c.bf16 %v2487, %v2486
        %v2514 = vpack.c.bf16 %v2489, %v2488
        %v2515 = vpack.c.bf16 %v2491, %v2490
        %v2516 = vpack.c.bf16 %v2493, %v2492
        %v2517 = vpack.c.bf16 %v2495, %v2494
        %v2518 = vpack.c.bf16 %v2497, %v2496
        %v2519 = vpack.c.bf16 %v2499, %v2498
        %v2520 = vpack.c.bf16 %v2501, %v2500
        %v2521 = vpack.c.bf16 %v2503, %v2502
        %v2522 = vpack.c.bf16 %v2505, %v2504
        %v2523 = vpack.c.bf16 %v2507, %v2506
        %v2524 = vld [vmem:[%s2427 + $0x2] sm:$0xff]
        %v2525 = vld [vmem:[%s2427 + $0x12] sm:$0xff]
        %v2526 = vld [vmem:[%s2427 + $0x22] sm:$0xff]
        %v2527 = vld [vmem:[%s2427 + $0x32] sm:$0xff]
        %v2528 = vld [vmem:[%s2427 + $0x42] sm:$0xff]
        %v2529 = vld [vmem:[%s2427 + $0x52] sm:$0xff]
        %v2530 = vld [vmem:[%s2427 + $0x62] sm:$0xff]
        %v2531 = vld [vmem:[%s2427 + $0x72] sm:$0xff]
        %v2532 = vld [vmem:[%s2427 + $0xa2] sm:$0xff]
        %v2533 = vld [vmem:[%s2427 + $0xb2] sm:$0xff]
        %v2534 = vld [vmem:[%s2427 + $0xc2] sm:$0xff]
        %v2535 = vld [vmem:[%s2427 + $0xd2] sm:$0xff]
        %v2536 = vld [vmem:[%s2427 + $0xe2] sm:$0xff]
        %v2537 = vld [vmem:[%s2427 + $0xf2] sm:$0xff]
        %v2538 = vld [vmem:[%s2427 + $0x102] sm:$0xff]
        %v2539 = vld [vmem:[%s2427 + $0x112] sm:$0xff]
        %v2540 = vld [vmem:[%s2427 + $0x142] sm:$0xff]
        %v2541 = vld [vmem:[%s2427 + $0x152] sm:$0xff]
        %v2542 = vld [vmem:[%s2427 + $0x162] sm:$0xff]
        %v2543 = vld [vmem:[%s2427 + $0x172] sm:$0xff]
        %v2544 = vld [vmem:[%s2427 + $0x182] sm:$0xff]
        %v2545 = vld [vmem:[%s2427 + $0x192] sm:$0xff]
        %v2546 = vld [vmem:[%s2427 + $0x1a2] sm:$0xff]
        %v2547 = vld [vmem:[%s2427 + $0x1b2] sm:$0xff]
        %v2548 = vld [vmem:[%s2427 + $0x1e2] sm:$0xff]
        %v2549 = vld [vmem:[%s2427 + $0x1f2] sm:$0xff]
        %v2550 = vld [vmem:[%s2427 + $0x202] sm:$0xff]
        %v2551 = vld [vmem:[%s2427 + $0x212] sm:$0xff]
        %v2552 = vld [vmem:[%s2427 + $0x222] sm:$0xff]
        %v2553 = vld [vmem:[%s2427 + $0x232] sm:$0xff]
        %v2554 = vld [vmem:[%s2427 + $0x242] sm:$0xff]
        %v2555 = vld [vmem:[%s2427 + $0x252] sm:$0xff]
        %v2556 = vpack.c.bf16 %v2525, %v2524
        %v2557 = vpack.c.bf16 %v2527, %v2526
        %v2558 = vpack.c.bf16 %v2529, %v2528
        %v2559 = vpack.c.bf16 %v2531, %v2530
        %v2560 = vpack.c.bf16 %v2533, %v2532
        %v2561 = vpack.c.bf16 %v2535, %v2534
        %v2562 = vpack.c.bf16 %v2537, %v2536
        %v2563 = vpack.c.bf16 %v2539, %v2538
        %v2564 = vpack.c.bf16 %v2541, %v2540
        %v2565 = vpack.c.bf16 %v2543, %v2542
        %v2566 = vpack.c.bf16 %v2545, %v2544
        %v2567 = vpack.c.bf16 %v2547, %v2546
        %v2568 = vpack.c.bf16 %v2549, %v2548
        %v2569 = vpack.c.bf16 %v2551, %v2550
        %v2570 = vpack.c.bf16 %v2553, %v2552
        %v2571 = vpack.c.bf16 %v2555, %v2554
        %v2572 = vld [vmem:[%s547] sm:$0xff]
        %v2573 = vld [vmem:[%s547 + $0x10] sm:$0xff]
        %v2574 = vld [vmem:[%s547 + $0x20] sm:$0xff]
        %v2575 = vld [vmem:[%s547 + $0x30] sm:$0xff]
        %v2576 = vld [vmem:[%s547 + $0x40] sm:$0xff]
        %v2577 = vld [vmem:[%s547 + $0x50] sm:$0xff]
        %v2578 = vld [vmem:[%s547 + $0x60] sm:$0xff]
        %v2579 = vld [vmem:[%s547 + $0x70] sm:$0xff]
        %v2580 = vld [vmem:[%s547 + $0xa0] sm:$0xff]
        %v2581 = vld [vmem:[%s547 + $0xb0] sm:$0xff]
        %v2582 = vld [vmem:[%s547 + $0xc0] sm:$0xff]
        %v2583 = vld [vmem:[%s547 + $0xd0] sm:$0xff]
        %v2584 = vld [vmem:[%s547 + $0xe0] sm:$0xff]
        %v2585 = vld [vmem:[%s547 + $0xf0] sm:$0xff]
        %v2586 = vld [vmem:[%s547 + $0x100] sm:$0xff]
        %v2587 = vld [vmem:[%s547 + $0x110] sm:$0xff]
        %v2588 = vld [vmem:[%s547 + $0x140] sm:$0xff]
        %v2589 = vld [vmem:[%s547 + $0x150] sm:$0xff]
        %v2590 = vld [vmem:[%s547 + $0x160] sm:$0xff]
        %v2591 = vld [vmem:[%s547 + $0x170] sm:$0xff]
        %v2592 = vld [vmem:[%s547 + $0x180] sm:$0xff]
        %v2593 = vld [vmem:[%s547 + $0x190] sm:$0xff]
        %v2594 = vld [vmem:[%s547 + $0x1a0] sm:$0xff]
        %v2595 = vld [vmem:[%s547 + $0x1b0] sm:$0xff]
        %v2596 = vld [vmem:[%s547 + $0x1e0] sm:$0xff]
        %v2597 = vld [vmem:[%s547 + $0x1f0] sm:$0xff]
        %v2598 = vld [vmem:[%s547 + $0x200] sm:$0xff]
        %v2599 = vld [vmem:[%s547 + $0x210] sm:$0xff]
        %v2600 = vld [vmem:[%s547 + $0x220] sm:$0xff]
        %v2601 = vld [vmem:[%s547 + $0x230] sm:$0xff]
        %v2602 = vld [vmem:[%s547 + $0x240] sm:$0xff]
        %v2603 = vld [vmem:[%s547 + $0x250] sm:$0xff]
        %v2604 = vpack.c.bf16 %v2573, %v2572
        %v2605 = vpack.c.bf16 %v2575, %v2574
        %v2606 = vpack.c.bf16 %v2577, %v2576
        %v2607 = vpack.c.bf16 %v2579, %v2578
        %v2608 = vpack.c.bf16 %v2581, %v2580
        %v2609 = vpack.c.bf16 %v2583, %v2582
        %v2610 = vpack.c.bf16 %v2585, %v2584
        %v2611 = vpack.c.bf16 %v2587, %v2586
        %v2612 = vpack.c.bf16 %v2589, %v2588
        %v2613 = vpack.c.bf16 %v2591, %v2590
        %v2614 = vpack.c.bf16 %v2593, %v2592
        %v2615 = vpack.c.bf16 %v2595, %v2594
        %v2616 = vpack.c.bf16 %v2597, %v2596
        %v2617 = vpack.c.bf16 %v2599, %v2598
        %v2618 = vpack.c.bf16 %v2601, %v2600
        %v2619 = vpack.c.bf16 %v2603, %v2602
        %v2620 = vld [vmem:[%s547 + $0x1] sm:$0xff]
        %v2621 = vld [vmem:[%s547 + $0x11] sm:$0xff]
        %v2622 = vld [vmem:[%s547 + $0x21] sm:$0xff]
        %v2623 = vld [vmem:[%s547 + $0x31] sm:$0xff]
        %v2624 = vld [vmem:[%s547 + $0x41] sm:$0xff]
        %v2625 = vld [vmem:[%s547 + $0x51] sm:$0xff]
        %v2626 = vld [vmem:[%s547 + $0x61] sm:$0xff]
        %v2627 = vld [vmem:[%s547 + $0x71] sm:$0xff]
        %v2628 = vld [vmem:[%s547 + $0xa1] sm:$0xff]
        %v2629 = vld [vmem:[%s547 + $0xb1] sm:$0xff]
        %v2630 = vld [vmem:[%s547 + $0xc1] sm:$0xff]
        %v2631 = vld [vmem:[%s547 + $0xd1] sm:$0xff]
        %v2632 = vld [vmem:[%s547 + $0xe1] sm:$0xff]
        %v2633 = vld [vmem:[%s547 + $0xf1] sm:$0xff]
        %v2634 = vld [vmem:[%s547 + $0x101] sm:$0xff]
        %v2635 = vld [vmem:[%s547 + $0x111] sm:$0xff]
        %v2636 = vld [vmem:[%s547 + $0x141] sm:$0xff]
        %v2637 = vld [vmem:[%s547 + $0x151] sm:$0xff]
        %v2638 = vld [vmem:[%s547 + $0x161] sm:$0xff]
        %v2639 = vld [vmem:[%s547 + $0x171] sm:$0xff]
        %v2640 = vld [vmem:[%s547 + $0x181] sm:$0xff]
        %v2641 = vld [vmem:[%s547 + $0x191] sm:$0xff]
        %v2642 = vld [vmem:[%s547 + $0x1a1] sm:$0xff]
        %v2643 = vld [vmem:[%s547 + $0x1b1] sm:$0xff]
        %v2644 = vld [vmem:[%s547 + $0x1e1] sm:$0xff]
        %v2645 = vld [vmem:[%s547 + $0x1f1] sm:$0xff]
        %v2646 = vld [vmem:[%s547 + $0x201] sm:$0xff]
        %v2647 = vld [vmem:[%s547 + $0x211] sm:$0xff]
        %v2648 = vld [vmem:[%s547 + $0x221] sm:$0xff]
        %v2649 = vld [vmem:[%s547 + $0x231] sm:$0xff]
        %v2650 = vld [vmem:[%s547 + $0x241] sm:$0xff]
        %v2651 = vld [vmem:[%s547 + $0x251] sm:$0xff]
        %v2652 = vpack.c.bf16 %v2621, %v2620
        %v2653 = vpack.c.bf16 %v2623, %v2622
        %v2654 = vpack.c.bf16 %v2625, %v2624
        %v2655 = vpack.c.bf16 %v2627, %v2626
        %v2656 = vpack.c.bf16 %v2629, %v2628
        %v2657 = vpack.c.bf16 %v2631, %v2630
        %v2658 = vpack.c.bf16 %v2633, %v2632
        %v2659 = vpack.c.bf16 %v2635, %v2634
        %v2660 = vpack.c.bf16 %v2637, %v2636
        %v2661 = vpack.c.bf16 %v2639, %v2638
        %v2662 = vpack.c.bf16 %v2641, %v2640
        %v2663 = vpack.c.bf16 %v2643, %v2642
        %v2664 = vpack.c.bf16 %v2645, %v2644
        %v2665 = vpack.c.bf16 %v2647, %v2646
        %v2666 = vpack.c.bf16 %v2649, %v2648
        %v2667 = vpack.c.bf16 %v2651, %v2650
        %v2668 = vld [vmem:[%s547 + $0x2] sm:$0xff]
        %v2669 = vld [vmem:[%s547 + $0x12] sm:$0xff]
        %v2670 = vld [vmem:[%s547 + $0x22] sm:$0xff]
        %v2671 = vld [vmem:[%s547 + $0x32] sm:$0xff]
        %v2672 = vld [vmem:[%s547 + $0x42] sm:$0xff]
        %v2673 = vld [vmem:[%s547 + $0x52] sm:$0xff]
        %v2674 = vld [vmem:[%s547 + $0x62] sm:$0xff]
        %v2675 = vld [vmem:[%s547 + $0x72] sm:$0xff]
        %v2676 = vld [vmem:[%s547 + $0xa2] sm:$0xff]
        %v2677 = vld [vmem:[%s547 + $0xb2] sm:$0xff]
        %v2678 = vld [vmem:[%s547 + $0xc2] sm:$0xff]
        %v2679 = vld [vmem:[%s547 + $0xd2] sm:$0xff]
        %v2680 = vld [vmem:[%s547 + $0xe2] sm:$0xff]
        %v2681 = vld [vmem:[%s547 + $0xf2] sm:$0xff]
        %v2682 = vld [vmem:[%s547 + $0x102] sm:$0xff]
        %v2683 = vld [vmem:[%s547 + $0x112] sm:$0xff]
        %v2684 = vld [vmem:[%s547 + $0x142] sm:$0xff]
        %v2685 = vld [vmem:[%s547 + $0x152] sm:$0xff]
        %v2686 = vld [vmem:[%s547 + $0x162] sm:$0xff]
        %v2687 = vld [vmem:[%s547 + $0x172] sm:$0xff]
        %v2688 = vld [vmem:[%s547 + $0x182] sm:$0xff]
        %v2689 = vld [vmem:[%s547 + $0x192] sm:$0xff]
        %v2690 = vld [vmem:[%s547 + $0x1a2] sm:$0xff]
        %v2691 = vld [vmem:[%s547 + $0x1b2] sm:$0xff]
        %v2692 = vld [vmem:[%s547 + $0x1e2] sm:$0xff]
        %v2693 = vld [vmem:[%s547 + $0x1f2] sm:$0xff]
        %v2694 = vld [vmem:[%s547 + $0x202] sm:$0xff]
        %v2695 = vld [vmem:[%s547 + $0x212] sm:$0xff]
        %v2696 = vld [vmem:[%s547 + $0x222] sm:$0xff]
        %v2697 = vld [vmem:[%s547 + $0x232] sm:$0xff]
        %v2698 = vld [vmem:[%s547 + $0x242] sm:$0xff]
        %v2699 = vld [vmem:[%s547 + $0x252] sm:$0xff]
        %v2700 = vpack.c.bf16 %v2669, %v2668
        %v2701 = vpack.c.bf16 %v2671, %v2670
        %v2702 = vpack.c.bf16 %v2673, %v2672
        %v2703 = vpack.c.bf16 %v2675, %v2674
        %v2704 = vpack.c.bf16 %v2677, %v2676
        %v2705 = vpack.c.bf16 %v2679, %v2678
        %v2706 = vpack.c.bf16 %v2681, %v2680
        %v2707 = vpack.c.bf16 %v2683, %v2682
        %v2708 = vpack.c.bf16 %v2685, %v2684
        %v2709 = vpack.c.bf16 %v2687, %v2686
        %v2710 = vpack.c.bf16 %v2689, %v2688
        %v2711 = vpack.c.bf16 %v2691, %v2690
        %v2712 = vpack.c.bf16 %v2693, %v2692
        %v2713 = vpack.c.bf16 %v2695, %v2694
        %v2714 = vpack.c.bf16 %v2697, %v2696
        %v2715 = vpack.c.bf16 %v2699, %v2698
        %s2716 = scalar_lea.vmem [#allocation2], 192
        %v2717 = vld [vmem:[%s2716] sm:$0xff]
        %v2718 = vld [vmem:[%s2716 + $0x10] sm:$0xff]
        %v2719 = vld [vmem:[%s2716 + $0x20] sm:$0xff]
        %v2720 = vld [vmem:[%s2716 + $0x30] sm:$0xff]
        %v2721 = vld [vmem:[%s2716 + $0x40] sm:$0xff]
        %v2722 = vld [vmem:[%s2716 + $0x50] sm:$0xff]
        %v2723 = vld [vmem:[%s2716 + $0x60] sm:$0xff]
        %v2724 = vld [vmem:[%s2716 + $0x70] sm:$0xff]
        %v2725 = vld [vmem:[%s2716 + $0xa0] sm:$0xff]
        %v2726 = vld [vmem:[%s2716 + $0xb0] sm:$0xff]
        %v2727 = vld [vmem:[%s2716 + $0xc0] sm:$0xff]
        %v2728 = vld [vmem:[%s2716 + $0xd0] sm:$0xff]
        %v2729 = vld [vmem:[%s2716 + $0xe0] sm:$0xff]
        %v2730 = vld [vmem:[%s2716 + $0xf0] sm:$0xff]
        %v2731 = vld [vmem:[%s2716 + $0x100] sm:$0xff]
        %v2732 = vld [vmem:[%s2716 + $0x110] sm:$0xff]
        %v2733 = vld [vmem:[%s2716 + $0x140] sm:$0xff]
        %v2734 = vld [vmem:[%s2716 + $0x150] sm:$0xff]
        %v2735 = vld [vmem:[%s2716 + $0x160] sm:$0xff]
        %v2736 = vld [vmem:[%s2716 + $0x170] sm:$0xff]
        %v2737 = vld [vmem:[%s2716 + $0x180] sm:$0xff]
        %v2738 = vld [vmem:[%s2716 + $0x190] sm:$0xff]
        %v2739 = vld [vmem:[%s2716 + $0x1a0] sm:$0xff]
        %v2740 = vld [vmem:[%s2716 + $0x1b0] sm:$0xff]
        %v2741 = vld [vmem:[%s2716 + $0x1e0] sm:$0xff]
        %v2742 = vld [vmem:[%s2716 + $0x1f0] sm:$0xff]
        %v2743 = vld [vmem:[%s2716 + $0x200] sm:$0xff]
        %v2744 = vld [vmem:[%s2716 + $0x210] sm:$0xff]
        %v2745 = vld [vmem:[%s2716 + $0x220] sm:$0xff]
        %v2746 = vld [vmem:[%s2716 + $0x230] sm:$0xff]
        %v2747 = vld [vmem:[%s2716 + $0x240] sm:$0xff]
        %v2748 = vld [vmem:[%s2716 + $0x250] sm:$0xff]
        %v2749 = vpack.c.bf16 %v2718, %v2717
        %v2750 = vpack.c.bf16 %v2720, %v2719
        %v2751 = vpack.c.bf16 %v2722, %v2721
        %v2752 = vpack.c.bf16 %v2724, %v2723
        %v2753 = vpack.c.bf16 %v2726, %v2725
        %v2754 = vpack.c.bf16 %v2728, %v2727
        %v2755 = vpack.c.bf16 %v2730, %v2729
        %v2756 = vpack.c.bf16 %v2732, %v2731
        %v2757 = vpack.c.bf16 %v2734, %v2733
        %v2758 = vpack.c.bf16 %v2736, %v2735
        %v2759 = vpack.c.bf16 %v2738, %v2737
        %v2760 = vpack.c.bf16 %v2740, %v2739
        %v2761 = vpack.c.bf16 %v2742, %v2741
        %v2762 = vpack.c.bf16 %v2744, %v2743
        %v2763 = vpack.c.bf16 %v2746, %v2745
        %v2764 = vpack.c.bf16 %v2748, %v2747
        %v2765 = vld [vmem:[%s2716 + $0x1] sm:$0xff]
        %v2766 = vld [vmem:[%s2716 + $0x11] sm:$0xff]
        %v2767 = vld [vmem:[%s2716 + $0x21] sm:$0xff]
        %v2768 = vld [vmem:[%s2716 + $0x31] sm:$0xff]
        %v2769 = vld [vmem:[%s2716 + $0x41] sm:$0xff]
        %v2770 = vld [vmem:[%s2716 + $0x51] sm:$0xff]
        %v2771 = vld [vmem:[%s2716 + $0x61] sm:$0xff]
        %v2772 = vld [vmem:[%s2716 + $0x71] sm:$0xff]
        %v2773 = vld [vmem:[%s2716 + $0xa1] sm:$0xff]
        %v2774 = vld [vmem:[%s2716 + $0xb1] sm:$0xff]
        %v2775 = vld [vmem:[%s2716 + $0xc1] sm:$0xff]
        %v2776 = vld [vmem:[%s2716 + $0xd1] sm:$0xff]
        %v2777 = vld [vmem:[%s2716 + $0xe1] sm:$0xff]
        %v2778 = vld [vmem:[%s2716 + $0xf1] sm:$0xff]
        %v2779 = vld [vmem:[%s2716 + $0x101] sm:$0xff]
        %v2780 = vld [vmem:[%s2716 + $0x111] sm:$0xff]
        %v2781 = vld [vmem:[%s2716 + $0x141] sm:$0xff]
        %v2782 = vld [vmem:[%s2716 + $0x151] sm:$0xff]
        %v2783 = vld [vmem:[%s2716 + $0x161] sm:$0xff]
        %v2784 = vld [vmem:[%s2716 + $0x171] sm:$0xff]
        %v2785 = vld [vmem:[%s2716 + $0x181] sm:$0xff]
        %v2786 = vld [vmem:[%s2716 + $0x191] sm:$0xff]
        %v2787 = vld [vmem:[%s2716 + $0x1a1] sm:$0xff]
        %v2788 = vld [vmem:[%s2716 + $0x1b1] sm:$0xff]
        %v2789 = vld [vmem:[%s2716 + $0x1e1] sm:$0xff]
        %v2790 = vld [vmem:[%s2716 + $0x1f1] sm:$0xff]
        %v2791 = vld [vmem:[%s2716 + $0x201] sm:$0xff]
        %v2792 = vld [vmem:[%s2716 + $0x211] sm:$0xff]
        %v2793 = vld [vmem:[%s2716 + $0x221] sm:$0xff]
        %v2794 = vld [vmem:[%s2716 + $0x231] sm:$0xff]
        %v2795 = vld [vmem:[%s2716 + $0x241] sm:$0xff]
        %v2796 = vld [vmem:[%s2716 + $0x251] sm:$0xff]
        %v2797 = vpack.c.bf16 %v2766, %v2765
        %v2798 = vpack.c.bf16 %v2768, %v2767
        %v2799 = vpack.c.bf16 %v2770, %v2769
        %v2800 = vpack.c.bf16 %v2772, %v2771
        %v2801 = vpack.c.bf16 %v2774, %v2773
        %v2802 = vpack.c.bf16 %v2776, %v2775
        %v2803 = vpack.c.bf16 %v2778, %v2777
        %v2804 = vpack.c.bf16 %v2780, %v2779
        %v2805 = vpack.c.bf16 %v2782, %v2781
        %v2806 = vpack.c.bf16 %v2784, %v2783
        %v2807 = vpack.c.bf16 %v2786, %v2785
        %v2808 = vpack.c.bf16 %v2788, %v2787
        %v2809 = vpack.c.bf16 %v2790, %v2789
        %v2810 = vpack.c.bf16 %v2792, %v2791
        %v2811 = vpack.c.bf16 %v2794, %v2793
        %v2812 = vpack.c.bf16 %v2796, %v2795
        %v2813 = vld [vmem:[%s2716 + $0x2] sm:$0xff]
        %v2814 = vld [vmem:[%s2716 + $0x12] sm:$0xff]
        %v2815 = vld [vmem:[%s2716 + $0x22] sm:$0xff]
        %v2816 = vld [vmem:[%s2716 + $0x32] sm:$0xff]
        %v2817 = vld [vmem:[%s2716 + $0x42] sm:$0xff]
        %v2818 = vld [vmem:[%s2716 + $0x52] sm:$0xff]
        %v2819 = vld [vmem:[%s2716 + $0x62] sm:$0xff]
        %v2820 = vld [vmem:[%s2716 + $0x72] sm:$0xff]
        %v2821 = vld [vmem:[%s2716 + $0xa2] sm:$0xff]
        %v2822 = vld [vmem:[%s2716 + $0xb2] sm:$0xff]
        %v2823 = vld [vmem:[%s2716 + $0xc2] sm:$0xff]
        %v2824 = vld [vmem:[%s2716 + $0xd2] sm:$0xff]
        %v2825 = vld [vmem:[%s2716 + $0xe2] sm:$0xff]
        %v2826 = vld [vmem:[%s2716 + $0xf2] sm:$0xff]
        %v2827 = vld [vmem:[%s2716 + $0x102] sm:$0xff]
        %v2828 = vld [vmem:[%s2716 + $0x112] sm:$0xff]
        %v2829 = vld [vmem:[%s2716 + $0x142] sm:$0xff]
        %v2830 = vld [vmem:[%s2716 + $0x152] sm:$0xff]
        %v2831 = vld [vmem:[%s2716 + $0x162] sm:$0xff]
        %v2832 = vld [vmem:[%s2716 + $0x172] sm:$0xff]
        %v2833 = vld [vmem:[%s2716 + $0x182] sm:$0xff]
        %v2834 = vld [vmem:[%s2716 + $0x192] sm:$0xff]
        %v2835 = vld [vmem:[%s2716 + $0x1a2] sm:$0xff]
        %v2836 = vld [vmem:[%s2716 + $0x1b2] sm:$0xff]
        %v2837 = vld [vmem:[%s2716 + $0x1e2] sm:$0xff]
        %v2838 = vld [vmem:[%s2716 + $0x1f2] sm:$0xff]
        %v2839 = vld [vmem:[%s2716 + $0x202] sm:$0xff]
        %v2840 = vld [vmem:[%s2716 + $0x212] sm:$0xff]
        %v2841 = vld [vmem:[%s2716 + $0x222] sm:$0xff]
        %v2842 = vld [vmem:[%s2716 + $0x232] sm:$0xff]
        %v2843 = vld [vmem:[%s2716 + $0x242] sm:$0xff]
        %v2844 = vld [vmem:[%s2716 + $0x252] sm:$0xff]
        %v2845 = vpack.c.bf16 %v2814, %v2813
        %v2846 = vpack.c.bf16 %v2816, %v2815
        %v2847 = vpack.c.bf16 %v2818, %v2817
        %v2848 = vpack.c.bf16 %v2820, %v2819
        %v2849 = vpack.c.bf16 %v2822, %v2821
        %v2850 = vpack.c.bf16 %v2824, %v2823
        %v2851 = vpack.c.bf16 %v2826, %v2825
        %v2852 = vpack.c.bf16 %v2828, %v2827
        %v2853 = vpack.c.bf16 %v2830, %v2829
        %v2854 = vpack.c.bf16 %v2832, %v2831
        %v2855 = vpack.c.bf16 %v2834, %v2833
        %v2856 = vpack.c.bf16 %v2836, %v2835
        %v2857 = vpack.c.bf16 %v2838, %v2837
        %v2858 = vpack.c.bf16 %v2840, %v2839
        %v2859 = vpack.c.bf16 %v2842, %v2841
        %v2860 = vpack.c.bf16 %v2844, %v2843
        %s2861 = scalar_lea.vmem [#allocation3], 576
        %v2862 = vld [vmem:[%s2861] sm:$0xf]
        %v2863 = vld [vmem:[%s2861 + $0x4] sm:$0xf]
        %v2864 = vld [vmem:[%s2861 + $0x8] sm:$0xf]
        %v2865 = vld [vmem:[%s2861 + $0xc] sm:$0xf]
        %v2866 = vld [vmem:[%s2861 + $0x10] sm:$0xf]
        %v2867 = vld [vmem:[%s2861 + $0x14] sm:$0xf]
        %v2868 = vld [vmem:[%s2861 + $0x18] sm:$0xf]
        %v2869 = vld [vmem:[%s2861 + $0x1c] sm:$0xf]
        %v2870 = vld [vmem:[%s2861 + $0x20] sm:$0xf]
        %v2871 = vld [vmem:[%s2861 + $0x24] sm:$0xf]
        %v2872 = vld [vmem:[%s2861 + $0x28] sm:$0xf]
        %v2873 = vld [vmem:[%s2861 + $0x2c] sm:$0xf]
        %v2874 = vld [vmem:[%s2861 + $0x30] sm:$0xf]
        %v2875 = vld [vmem:[%s2861 + $0x34] sm:$0xf]
        %v2876 = vld [vmem:[%s2861 + $0x38] sm:$0xf]
        %v2877 = vld [vmem:[%s2861 + $0x3c] sm:$0xf]
        %v2878 = vld [vmem:[%s2861 + $0x40] sm:$0xf]
        %v2879 = vld [vmem:[%s2861 + $0x44] sm:$0xf]
        %v2880 = vld [vmem:[%s2861 + $0x48] sm:$0xf]
        %v2881 = vld [vmem:[%s2861 + $0x4c] sm:$0xf]
        %v2882 = vld [vmem:[%s2861 + $0x50] sm:$0xf]
        %v2883 = vld [vmem:[%s2861 + $0x54] sm:$0xf]
        %v2884 = vld [vmem:[%s2861 + $0x58] sm:$0xf]
        %v2885 = vld [vmem:[%s2861 + $0x5c] sm:$0xf]
        %v2886 = vld [vmem:[%s2861 + $0x60] sm:$0xf]
        %v2887 = vld [vmem:[%s2861 + $0x64] sm:$0xf]
        %v2888 = vld [vmem:[%s2861 + $0x68] sm:$0xf]
        %v2889 = vld [vmem:[%s2861 + $0x6c] sm:$0xf]
        %v2890 = vld [vmem:[%s2861 + $0x70] sm:$0xf]
        %v2891 = vld [vmem:[%s2861 + $0x74] sm:$0xf]
        %v2892 = vld [vmem:[%s2861 + $0x78] sm:$0xf]
        %v2893 = vld [vmem:[%s2861 + $0x7c] sm:$0xf]
        %v2894 = vld [vmem:[%s2861 + $0x80] sm:$0xf]
        %v2895 = vld [vmem:[%s2861 + $0x84] sm:$0xf]
        %v2896 = vld [vmem:[%s2861 + $0x88] sm:$0xf]
        %v2897 = vld [vmem:[%s2861 + $0x8c] sm:$0xf]
        %v2898 = vld [vmem:[%s2861 + $0x90] sm:$0xf]
        %v2899 = vld [vmem:[%s2861 + $0x94] sm:$0xf]
        %v2900 = vld [vmem:[%s2861 + $0x98] sm:$0xf]
        %v2901 = vld [vmem:[%s2861 + $0x9c] sm:$0xf]
        %v2902 = vld [vmem:[%s2861 + $0xa0] sm:$0xf]
        %v2903 = vld [vmem:[%s2861 + $0xa4] sm:$0xf]
        %v2904 = vld [vmem:[%s2861 + $0xa8] sm:$0xf]
        %v2905 = vld [vmem:[%s2861 + $0xac] sm:$0xf]
        %v2906 = vld [vmem:[%s2861 + $0xb0] sm:$0xf]
        %v2907 = vld [vmem:[%s2861 + $0xb4] sm:$0xf]
        %v2908 = vld [vmem:[%s2861 + $0xb8] sm:$0xf]
        %v2909 = vld [vmem:[%s2861 + $0xbc] sm:$0xf]
        %v2910 = vld [vmem:[%s2861 + $0xc0] sm:$0xf]
        %v2911 = vld [vmem:[%s2861 + $0xc4] sm:$0xf]
        %v2912 = vld [vmem:[%s2861 + $0xc8] sm:$0xf]
        %v2913 = vld [vmem:[%s2861 + $0xcc] sm:$0xf]
        %v2914 = vld [vmem:[%s2861 + $0xd0] sm:$0xf]
        %v2915 = vld [vmem:[%s2861 + $0xd4] sm:$0xf]
        %v2916 = vld [vmem:[%s2861 + $0xd8] sm:$0xf]
        %v2917 = vld [vmem:[%s2861 + $0xdc] sm:$0xf]
        %v2918 = vld [vmem:[%s2861 + $0xe0] sm:$0xf]
        %v2919 = vld [vmem:[%s2861 + $0xe4] sm:$0xf]
        %v2920 = vld [vmem:[%s2861 + $0xe8] sm:$0xf]
        %v2921 = vld [vmem:[%s2861 + $0xec] sm:$0xf]
        %v2922 = vld [vmem:[%s2861 + $0xf0] sm:$0xf]
        %v2923 = vld [vmem:[%s2861 + $0xf4] sm:$0xf]
        %v2924 = vld [vmem:[%s2861 + $0xf8] sm:$0xf]
        %v2925 = vld [vmem:[%s2861 + $0xfc] sm:$0xf]
        %v2926 = vld [vmem:[%s2861 + $0x100] sm:$0xf]
        %v2927 = vld [vmem:[%s2861 + $0x104] sm:$0xf]
        %v2928 = vld [vmem:[%s2861 + $0x108] sm:$0xf]
        %v2929 = vld [vmem:[%s2861 + $0x10c] sm:$0xf]
        %v2930 = vld [vmem:[%s2861 + $0x110] sm:$0xf]
        %v2931 = vld [vmem:[%s2861 + $0x114] sm:$0xf]
        %v2932 = vld [vmem:[%s2861 + $0x118] sm:$0xf]
        %v2933 = vld [vmem:[%s2861 + $0x11c] sm:$0xf]
        %v2934 = vld [vmem:[%s2861 + $0x120] sm:$0xf]
        %v2935 = vld [vmem:[%s2861 + $0x124] sm:$0xf]
        %v2936 = vld [vmem:[%s2861 + $0x128] sm:$0xf]
        %v2937 = vld [vmem:[%s2861 + $0x12c] sm:$0xf]
        %v2938 = vld [vmem:[%s2861 + $0x130] sm:$0xf]
        %v2939 = vld [vmem:[%s2861 + $0x134] sm:$0xf]
        %v2940 = vld [vmem:[%s2861 + $0x138] sm:$0xf]
        %v2941 = vld [vmem:[%s2861 + $0x13c] sm:$0xf]
        %v2942 = vld [vmem:[%s2861 + $0x140] sm:$0xf]
        %v2943 = vld [vmem:[%s2861 + $0x144] sm:$0xf]
        %v2944 = vld [vmem:[%s2861 + $0x148] sm:$0xf]
        %v2945 = vld [vmem:[%s2861 + $0x14c] sm:$0xf]
        %v2946 = vld [vmem:[%s2861 + $0x150] sm:$0xf]
        %v2947 = vld [vmem:[%s2861 + $0x154] sm:$0xf]
        %v2948 = vld [vmem:[%s2861 + $0x158] sm:$0xf]
        %v2949 = vld [vmem:[%s2861 + $0x15c] sm:$0xf]
        %v2950 = vld [vmem:[%s2861 + $0x160] sm:$0xf]
        %v2951 = vld [vmem:[%s2861 + $0x164] sm:$0xf]
        %v2952 = vld [vmem:[%s2861 + $0x168] sm:$0xf]
        %v2953 = vld [vmem:[%s2861 + $0x16c] sm:$0xf]
        %v2954 = vld [vmem:[%s2861 + $0x170] sm:$0xf]
        %v2955 = vld [vmem:[%s2861 + $0x174] sm:$0xf]
        %v2956 = vld [vmem:[%s2861 + $0x178] sm:$0xf]
        %v2957 = vld [vmem:[%s2861 + $0x17c] sm:$0xf]
        %v2958 = vld [vmem:[%s2861 + $0x180] sm:$0xf]
        %v2959 = vld [vmem:[%s2861 + $0x184] sm:$0xf]
        %v2960 = vld [vmem:[%s2861 + $0x188] sm:$0xf]
        %v2961 = vld [vmem:[%s2861 + $0x18c] sm:$0xf]
        %v2962 = vld [vmem:[%s2861 + $0x190] sm:$0xf]
        %v2963 = vld [vmem:[%s2861 + $0x194] sm:$0xf]
        %v2964 = vld [vmem:[%s2861 + $0x198] sm:$0xf]
        %v2965 = vld [vmem:[%s2861 + $0x19c] sm:$0xf]
        %v2966 = vld [vmem:[%s2861 + $0x1a0] sm:$0xf]
        %v2967 = vld [vmem:[%s2861 + $0x1a4] sm:$0xf]
        %v2968 = vld [vmem:[%s2861 + $0x1a8] sm:$0xf]
        %v2969 = vld [vmem:[%s2861 + $0x1ac] sm:$0xf]
        %v2970 = vld [vmem:[%s2861 + $0x1b0] sm:$0xf]
        %v2971 = vld [vmem:[%s2861 + $0x1b4] sm:$0xf]
        %v2972 = vld [vmem:[%s2861 + $0x1b8] sm:$0xf]
        %v2973 = vld [vmem:[%s2861 + $0x1bc] sm:$0xf]
        %v2974 = vld [vmem:[%s2861 + $0x1c0] sm:$0xf]
        %v2975 = vld [vmem:[%s2861 + $0x1c4] sm:$0xf]
        %v2976 = vld [vmem:[%s2861 + $0x1c8] sm:$0xf]
        %v2977 = vld [vmem:[%s2861 + $0x1cc] sm:$0xf]
        %v2978 = vld [vmem:[%s2861 + $0x1d0] sm:$0xf]
        %v2979 = vld [vmem:[%s2861 + $0x1d4] sm:$0xf]
        %v2980 = vld [vmem:[%s2861 + $0x1d8] sm:$0xf]
        %v2981 = vld [vmem:[%s2861 + $0x1dc] sm:$0xf]
        %v2982 = vld [vmem:[%s2861 + $0x1e0] sm:$0xf]
        %v2983 = vld [vmem:[%s2861 + $0x1e4] sm:$0xf]
        %v2984 = vld [vmem:[%s2861 + $0x1e8] sm:$0xf]
        %v2985 = vld [vmem:[%s2861 + $0x1ec] sm:$0xf]
        %v2986 = vld [vmem:[%s2861 + $0x1f0] sm:$0xf]
        %v2987 = vld [vmem:[%s2861 + $0x1f4] sm:$0xf]
        %v2988 = vld [vmem:[%s2861 + $0x1f8] sm:$0xf]
        %v2989 = vld [vmem:[%s2861 + $0x1fc] sm:$0xf]
        %v2990 = vld [vmem:[%s2861 + $0x200] sm:$0xf]
        %v2991 = vld [vmem:[%s2861 + $0x204] sm:$0xf]
        %v2992 = vld [vmem:[%s2861 + $0x208] sm:$0xf]
        %v2993 = vld [vmem:[%s2861 + $0x20c] sm:$0xf]
        %v2994 = vld [vmem:[%s2861 + $0x210] sm:$0xf]
        %v2995 = vld [vmem:[%s2861 + $0x214] sm:$0xf]
        %v2996 = vld [vmem:[%s2861 + $0x218] sm:$0xf]
        %v2997 = vld [vmem:[%s2861 + $0x21c] sm:$0xf]
        %v2998 = vld [vmem:[%s2861 + $0x220] sm:$0xf]
        %v2999 = vld [vmem:[%s2861 + $0x224] sm:$0xf]
        %v3000 = vld [vmem:[%s2861 + $0x228] sm:$0xf]
        %v3001 = vld [vmem:[%s2861 + $0x22c] sm:$0xf]
        %v3002 = vld [vmem:[%s2861 + $0x230] sm:$0xf]
        %v3003 = vld [vmem:[%s2861 + $0x234] sm:$0xf]
        %v3004 = vld [vmem:[%s2861 + $0x238] sm:$0xf]
        %v3005 = vld [vmem:[%s2861 + $0x23c] sm:$0xf]
        %v3150 = vunpack.c.l.b16 %v2862
        %v3151 = vunpack.c.l.b16 %v2863
        %v3152 = vunpack.c.l.b16 %v2864
        %v3153 = vunpack.c.l.b16 %v2865
        %v3154 = vunpack.c.l.b16 %v2866
        %v3155 = vunpack.c.l.b16 %v2867
        %v3156 = vunpack.c.l.b16 %v2868
        %v3157 = vunpack.c.l.b16 %v2869
        %v3158 = vunpack.c.l.b16 %v2870
        %v3159 = vunpack.c.l.b16 %v2871
        %v3160 = vunpack.c.l.b16 %v2872
        %v3161 = vunpack.c.l.b16 %v2873
        %v3162 = vunpack.c.l.b16 %v2874
        %v3163 = vunpack.c.l.b16 %v2875
        %v3164 = vunpack.c.l.b16 %v2876
        %v3165 = vunpack.c.l.b16 %v2877
        %v3166 = vunpack.c.l.b16 %v2878
        %v3167 = vunpack.c.l.b16 %v2879
        %v3168 = vunpack.c.l.b16 %v2880
        %v3169 = vunpack.c.l.b16 %v2881
        %v3170 = vunpack.c.l.b16 %v2882
        %v3171 = vunpack.c.l.b16 %v2883
        %v3172 = vunpack.c.l.b16 %v2884
        %v3173 = vunpack.c.l.b16 %v2885
        %v3174 = vunpack.c.l.b16 %v2886
        %v3175 = vunpack.c.l.b16 %v2887
        %v3176 = vunpack.c.l.b16 %v2888
        %v3177 = vunpack.c.l.b16 %v2889
        %v3178 = vunpack.c.l.b16 %v2890
        %v3179 = vunpack.c.l.b16 %v2891
        %v3180 = vunpack.c.l.b16 %v2892
        %v3181 = vunpack.c.l.b16 %v2893
        %v3182 = vunpack.c.l.b16 %v2894
        %v3183 = vunpack.c.l.b16 %v2895
        %v3184 = vunpack.c.l.b16 %v2896
        %v3185 = vunpack.c.l.b16 %v2897
        %v3186 = vunpack.c.l.b16 %v2898
        %v3187 = vunpack.c.l.b16 %v2899
        %v3188 = vunpack.c.l.b16 %v2900
        %v3189 = vunpack.c.l.b16 %v2901
        %v3190 = vunpack.c.l.b16 %v2902
        %v3191 = vunpack.c.l.b16 %v2903
        %v3192 = vunpack.c.l.b16 %v2904
        %v3193 = vunpack.c.l.b16 %v2905
        %v3194 = vunpack.c.l.b16 %v2906
        %v3195 = vunpack.c.l.b16 %v2907
        %v3196 = vunpack.c.l.b16 %v2908
        %v3197 = vunpack.c.l.b16 %v2909
        %v3198 = vunpack.c.l.b16 %v2910
        %v3199 = vunpack.c.l.b16 %v2911
        %v3200 = vunpack.c.l.b16 %v2912
        %v3201 = vunpack.c.l.b16 %v2913
        %v3202 = vunpack.c.l.b16 %v2914
        %v3203 = vunpack.c.l.b16 %v2915
        %v3204 = vunpack.c.l.b16 %v2916
        %v3205 = vunpack.c.l.b16 %v2917
        %v3206 = vunpack.c.l.b16 %v2918
        %v3207 = vunpack.c.l.b16 %v2919
        %v3208 = vunpack.c.l.b16 %v2920
        %v3209 = vunpack.c.l.b16 %v2921
        %v3210 = vunpack.c.l.b16 %v2922
        %v3211 = vunpack.c.l.b16 %v2923
        %v3212 = vunpack.c.l.b16 %v2924
        %v3213 = vunpack.c.l.b16 %v2925
        %v3214 = vunpack.c.l.b16 %v2926
        %v3215 = vunpack.c.l.b16 %v2927
        %v3216 = vunpack.c.l.b16 %v2928
        %v3217 = vunpack.c.l.b16 %v2929
        %v3218 = vunpack.c.l.b16 %v2930
        %v3219 = vunpack.c.l.b16 %v2931
        %v3220 = vunpack.c.l.b16 %v2932
        %v3221 = vunpack.c.l.b16 %v2933
        %v3222 = vunpack.c.l.b16 %v2934
        %v3223 = vunpack.c.l.b16 %v2935
        %v3224 = vunpack.c.l.b16 %v2936
        %v3225 = vunpack.c.l.b16 %v2937
        %v3226 = vunpack.c.l.b16 %v2938
        %v3227 = vunpack.c.l.b16 %v2939
        %v3228 = vunpack.c.l.b16 %v2940
        %v3229 = vunpack.c.l.b16 %v2941
        %v3230 = vunpack.c.l.b16 %v2942
        %v3231 = vunpack.c.l.b16 %v2943
        %v3232 = vunpack.c.l.b16 %v2944
        %v3233 = vunpack.c.l.b16 %v2945
        %v3234 = vunpack.c.l.b16 %v2946
        %v3235 = vunpack.c.l.b16 %v2947
        %v3236 = vunpack.c.l.b16 %v2948
        %v3237 = vunpack.c.l.b16 %v2949
        %v3238 = vunpack.c.l.b16 %v2950
        %v3239 = vunpack.c.l.b16 %v2951
        %v3240 = vunpack.c.l.b16 %v2952
        %v3241 = vunpack.c.l.b16 %v2953
        %v3242 = vunpack.c.l.b16 %v2954
        %v3243 = vunpack.c.l.b16 %v2955
        %v3244 = vunpack.c.l.b16 %v2956
        %v3245 = vunpack.c.l.b16 %v2957
        %v3246 = vunpack.c.l.b16 %v2958
        %v3247 = vunpack.c.l.b16 %v2959
        %v3248 = vunpack.c.l.b16 %v2960
        %v3249 = vunpack.c.l.b16 %v2961
        %v3250 = vunpack.c.l.b16 %v2962
        %v3251 = vunpack.c.l.b16 %v2963
        %v3252 = vunpack.c.l.b16 %v2964
        %v3253 = vunpack.c.l.b16 %v2965
        %v3254 = vunpack.c.l.b16 %v2966
        %v3255 = vunpack.c.l.b16 %v2967
        %v3256 = vunpack.c.l.b16 %v2968
        %v3257 = vunpack.c.l.b16 %v2969
        %v3258 = vunpack.c.l.b16 %v2970
        %v3259 = vunpack.c.l.b16 %v2971
        %v3260 = vunpack.c.l.b16 %v2972
        %v3261 = vunpack.c.l.b16 %v2973
        %v3262 = vunpack.c.l.b16 %v2974
        %v3263 = vunpack.c.l.b16 %v2975
        %v3264 = vunpack.c.l.b16 %v2976
        %v3265 = vunpack.c.l.b16 %v2977
        %v3266 = vunpack.c.l.b16 %v2978
        %v3267 = vunpack.c.l.b16 %v2979
        %v3268 = vunpack.c.l.b16 %v2980
        %v3269 = vunpack.c.l.b16 %v2981
        %v3270 = vunpack.c.l.b16 %v2982
        %v3271 = vunpack.c.l.b16 %v2983
        %v3272 = vunpack.c.l.b16 %v2984
        %v3273 = vunpack.c.l.b16 %v2985
        %v3274 = vunpack.c.l.b16 %v2986
        %v3275 = vunpack.c.l.b16 %v2987
        %v3276 = vunpack.c.l.b16 %v2988
        %v3277 = vunpack.c.l.b16 %v2989
        %v3278 = vunpack.c.l.b16 %v2990
        %v3279 = vunpack.c.l.b16 %v2991
        %v3280 = vunpack.c.l.b16 %v2992
        %v3281 = vunpack.c.l.b16 %v2993
        %v3282 = vunpack.c.l.b16 %v2994
        %v3283 = vunpack.c.l.b16 %v2995
        %v3284 = vunpack.c.l.b16 %v2996
        %v3285 = vunpack.c.l.b16 %v2997
        %v3286 = vunpack.c.l.b16 %v2998
        %v3287 = vunpack.c.l.b16 %v2999
        %v3288 = vunpack.c.l.b16 %v3000
        %v3289 = vunpack.c.l.b16 %v3001
        %v3290 = vunpack.c.l.b16 %v3002
        %v3291 = vunpack.c.l.b16 %v3003
        %v3292 = vunpack.c.l.b16 %v3004
        %v3293 = vunpack.c.l.b16 %v3005
        %v3294 = vpack.c.b16 %v3151, %v3150
        %v3295 = vpack.c.b16 %v3153, %v3152
        %v3296 = vpack.c.b16 %v3155, %v3154
        %v3297 = vpack.c.b16 %v3157, %v3156
        %v3298 = vpack.c.b16 %v3159, %v3158
        %v3299 = vpack.c.b16 %v3161, %v3160
        %v3300 = vpack.c.b16 %v3163, %v3162
        %v3301 = vpack.c.b16 %v3165, %v3164
        %v3302 = vpack.c.b16 %v3167, %v3166
        %v3303 = vpack.c.b16 %v3169, %v3168
        %v3304 = vpack.c.b16 %v3171, %v3170
        %v3305 = vpack.c.b16 %v3173, %v3172
        %v3306 = vpack.c.b16 %v3175, %v3174
        %v3307 = vpack.c.b16 %v3177, %v3176
        %v3308 = vpack.c.b16 %v3179, %v3178
        %v3309 = vpack.c.b16 %v3181, %v3180
        %v3310 = vpack.c.b16 %v3183, %v3182
        %v3311 = vpack.c.b16 %v3185, %v3184
        %v3312 = vpack.c.b16 %v3187, %v3186
        %v3313 = vpack.c.b16 %v3189, %v3188
        %v3314 = vpack.c.b16 %v3191, %v3190
        %v3315 = vpack.c.b16 %v3193, %v3192
        %v3316 = vpack.c.b16 %v3195, %v3194
        %v3317 = vpack.c.b16 %v3197, %v3196
        %v3318 = vpack.c.b16 %v3199, %v3198
        %v3319 = vpack.c.b16 %v3201, %v3200
        %v3320 = vpack.c.b16 %v3203, %v3202
        %v3321 = vpack.c.b16 %v3205, %v3204
        %v3322 = vpack.c.b16 %v3207, %v3206
        %v3323 = vpack.c.b16 %v3209, %v3208
        %v3324 = vpack.c.b16 %v3211, %v3210
        %v3325 = vpack.c.b16 %v3213, %v3212
        %v3326 = vpack.c.b16 %v3215, %v3214
        %v3327 = vpack.c.b16 %v3217, %v3216
        %v3328 = vpack.c.b16 %v3219, %v3218
        %v3329 = vpack.c.b16 %v3221, %v3220
        %v3330 = vpack.c.b16 %v3223, %v3222
        %v3331 = vpack.c.b16 %v3225, %v3224
        %v3332 = vpack.c.b16 %v3227, %v3226
        %v3333 = vpack.c.b16 %v3229, %v3228
        %v3334 = vpack.c.b16 %v3231, %v3230
        %v3335 = vpack.c.b16 %v3233, %v3232
        %v3336 = vpack.c.b16 %v3235, %v3234
        %v3337 = vpack.c.b16 %v3237, %v3236
        %v3338 = vpack.c.b16 %v3239, %v3238
        %v3339 = vpack.c.b16 %v3241, %v3240
        %v3340 = vpack.c.b16 %v3243, %v3242
        %v3341 = vpack.c.b16 %v3245, %v3244
        %v3342 = vpack.c.b16 %v3247, %v3246
        %v3343 = vpack.c.b16 %v3249, %v3248
        %v3344 = vpack.c.b16 %v3251, %v3250
        %v3345 = vpack.c.b16 %v3253, %v3252
        %v3346 = vpack.c.b16 %v3255, %v3254
        %v3347 = vpack.c.b16 %v3257, %v3256
        %v3348 = vpack.c.b16 %v3259, %v3258
        %v3349 = vpack.c.b16 %v3261, %v3260
        %v3350 = vpack.c.b16 %v3263, %v3262
        %v3351 = vpack.c.b16 %v3265, %v3264
        %v3352 = vpack.c.b16 %v3267, %v3266
        %v3353 = vpack.c.b16 %v3269, %v3268
        %v3354 = vpack.c.b16 %v3271, %v3270
        %v3355 = vpack.c.b16 %v3273, %v3272
        %v3356 = vpack.c.b16 %v3275, %v3274
        %v3357 = vpack.c.b16 %v3277, %v3276
        %v3358 = vpack.c.b16 %v3279, %v3278
        %v3359 = vpack.c.b16 %v3281, %v3280
        %v3360 = vpack.c.b16 %v3283, %v3282
        %v3361 = vpack.c.b16 %v3285, %v3284
        %v3362 = vpack.c.b16 %v3287, %v3286
        %v3363 = vpack.c.b16 %v3289, %v3288
        %v3364 = vpack.c.b16 %v3291, %v3290
        %v3365 = vpack.c.b16 %v3293, %v3292
        %3438 = vmatprep.subr.bf16.mxu0 0
        %3439 = vmatpush1.bf16.msra.mxu0 %v3301
        %3440 = vmatprep.subr.bf16.mxu0 0
        %3441 = vmatpush1.bf16.msra.mxu0 %v3300
        %3442 = vmatprep.subr.bf16.mxu0 0
        %3443 = vmatpush1.bf16.msra.mxu0 %v3299
        %3444 = vmatprep.subr.bf16.mxu0 0
        %3445 = vmatpush1.bf16.msra.mxu0 %v3298
        %3446 = vmatprep.subr.bf16.mxu0 0
        %3447 = vmatpush1.bf16.msra.mxu0 %v3297
        %3448 = vmatprep.subr.bf16.mxu0 0
        %3449 = vmatpush1.bf16.msra.mxu0 %v3296
        %3450 = vmatprep.subr.bf16.mxu0 0
        %3451 = vmatpush1.bf16.msra.mxu0 %v3295
        %3452 = vmatprep.subr.bf16.mxu0 0
        %3453 = vmatpush1.bf16.msra.mxu0 %v3294
        %3454 = vmatprep.subr.bf16.mxu0 0
        %3455 = vmatpush2.bf16.msra.mxu0 %v3309
        %3456 = vmatprep.subr.bf16.mxu0 0
        %3457 = vmatpush2.bf16.msra.mxu0 %v3308
        %3458 = vmatprep.subr.bf16.mxu0 0
        %3459 = vmatpush2.bf16.msra.mxu0 %v3307
        %3460 = vmatprep.subr.bf16.mxu0 0
        %3461 = vmatpush2.bf16.msra.mxu0 %v3306
        %3462 = vmatprep.subr.bf16.mxu0 0
        %3463 = vmatpush2.bf16.msra.mxu0 %v3305
        %3464 = vmatprep.subr.bf16.mxu0 0
        %3465 = vmatpush2.bf16.msra.mxu0 %v3304
        %3466 = vmatprep.subr.bf16.mxu0 0
        %3467 = vmatpush2.bf16.msra.mxu0 %v3303
        %3468 = vmatprep.subr.bf16.mxu0 0
        %3469 = vmatpush2.bf16.msra.mxu0 %v3302
        %3470 = vmatprep.mubr.bf16.mxu0 %v2508
        %3471 = vmatmul.mubr.bf16.gmra.mxu0 %v2460
        %v3472 = vpop.f32.mrf.mxu0
        %v3473 = vadd.f32 0.0, %v3472
        %v3474 = vpop.f32.mrf.mxu0
        %v3475 = vpop.f32.mrf.mxu0
        %v3476 = vadd.f32 0.0, %v3475
        %v3477 = vpop.f32.mrf.mxu0
        %3478 = vmatprep.mubr.bf16.mxu0 %v2509
        %3479 = vmatmul.mubr.bf16.gmra.mxu0 %v2461
        %v3480 = vpop.f32.mrf.mxu0
        %v3481 = vadd.f32 0.0, %v3480
        %v3482 = vpop.f32.mrf.mxu0
        %v3483 = vpop.f32.mrf.mxu0
        %v3484 = vadd.f32 0.0, %v3483
        %v3485 = vpop.f32.mrf.mxu0
        %3486 = vmatprep.mubr.bf16.mxu0 %v2510
        %3487 = vmatmul.mubr.bf16.gmra.mxu0 %v2462
        %v3488 = vpop.f32.mrf.mxu0
        %v3489 = vadd.f32 0.0, %v3488
        %v3490 = vpop.f32.mrf.mxu0
        %v3491 = vpop.f32.mrf.mxu0
        %v3492 = vadd.f32 0.0, %v3491
        %v3493 = vpop.f32.mrf.mxu0
        %3494 = vmatprep.mubr.bf16.mxu0 %v2511
        %3495 = vmatmul.mubr.bf16.gmra.mxu0 %v2463
        %v3496 = vpop.f32.mrf.mxu0
        %v3497 = vadd.f32 0.0, %v3496
        %v3498 = vpop.f32.mrf.mxu0
        %v3499 = vpop.f32.mrf.mxu0
        %v3500 = vadd.f32 0.0, %v3499
        %v3501 = vpop.f32.mrf.mxu0
        %3502 = vmatprep.mubr.bf16.mxu0 %v2512
        %3503 = vmatmul.mubr.bf16.gmra.mxu0 %v2464
        %v3504 = vpop.f32.mrf.mxu0
        %v3505 = vadd.f32 0.0, %v3504
        %v3506 = vpop.f32.mrf.mxu0
        %v3507 = vpop.f32.mrf.mxu0
        %v3508 = vadd.f32 0.0, %v3507
        %v3509 = vpop.f32.mrf.mxu0
        %3510 = vmatprep.mubr.bf16.mxu0 %v2513
        %3511 = vmatmul.mubr.bf16.gmra.mxu0 %v2465
        %v3512 = vpop.f32.mrf.mxu0
        %v3513 = vadd.f32 0.0, %v3512
        %v3514 = vpop.f32.mrf.mxu0
        %v3515 = vpop.f32.mrf.mxu0
        %v3516 = vadd.f32 0.0, %v3515
        %v3517 = vpop.f32.mrf.mxu0
        %3518 = vmatprep.mubr.bf16.mxu0 %v2514
        %3519 = vmatmul.mubr.bf16.gmra.mxu0 %v2466
        %v3520 = vpop.f32.mrf.mxu0
        %v3521 = vadd.f32 0.0, %v3520
        %v3522 = vpop.f32.mrf.mxu0
        %v3523 = vpop.f32.mrf.mxu0
        %v3524 = vadd.f32 0.0, %v3523
        %v3525 = vpop.f32.mrf.mxu0
        %3526 = vmatprep.mubr.bf16.mxu0 %v2515
        %3527 = vmatmul.mubr.bf16.gmra.mxu0 %v2467
        %v3528 = vpop.f32.mrf.mxu0
        %v3529 = vadd.f32 0.0, %v3528
        %v3530 = vpop.f32.mrf.mxu0
        %v3531 = vpop.f32.mrf.mxu0
        %v3532 = vadd.f32 0.0, %v3531
        %v3533 = vpop.f32.mrf.mxu0
        %3534 = vmatprep.mubr.bf16.mxu0 %v2516
        %3535 = vmatmul.mubr.bf16.gmra.mxu0 %v2468
        %v3536 = vpop.f32.mrf.mxu0
        %v3537 = vadd.f32 0.0, %v3536
        %v3538 = vpop.f32.mrf.mxu0
        %v3539 = vpop.f32.mrf.mxu0
        %v3540 = vadd.f32 0.0, %v3539
        %v3541 = vpop.f32.mrf.mxu0
        %3542 = vmatprep.mubr.bf16.mxu0 %v2517
        %3543 = vmatmul.mubr.bf16.gmra.mxu0 %v2469
        %v3544 = vpop.f32.mrf.mxu0
        %v3545 = vadd.f32 0.0, %v3544
        %v3546 = vpop.f32.mrf.mxu0
        %v3547 = vpop.f32.mrf.mxu0
        %v3548 = vadd.f32 0.0, %v3547
        %v3549 = vpop.f32.mrf.mxu0
        %3550 = vmatprep.mubr.bf16.mxu0 %v2518
        %3551 = vmatmul.mubr.bf16.gmra.mxu0 %v2470
        %v3552 = vpop.f32.mrf.mxu0
        %v3553 = vadd.f32 0.0, %v3552
        %v3554 = vpop.f32.mrf.mxu0
        %v3555 = vpop.f32.mrf.mxu0
        %v3556 = vadd.f32 0.0, %v3555
        %v3557 = vpop.f32.mrf.mxu0
        %3558 = vmatprep.mubr.bf16.mxu0 %v2519
        %3559 = vmatmul.mubr.bf16.gmra.mxu0 %v2471
        %v3560 = vpop.f32.mrf.mxu0
        %v3561 = vadd.f32 0.0, %v3560
        %v3562 = vpop.f32.mrf.mxu0
        %v3563 = vpop.f32.mrf.mxu0
        %v3564 = vadd.f32 0.0, %v3563
        %v3565 = vpop.f32.mrf.mxu0
        %3566 = vmatprep.mubr.bf16.mxu0 %v2520
        %3567 = vmatmul.mubr.bf16.gmra.mxu0 %v2472
        %v3568 = vpop.f32.mrf.mxu0
        %v3569 = vadd.f32 0.0, %v3568
        %v3570 = vpop.f32.mrf.mxu0
        %v3571 = vpop.f32.mrf.mxu0
        %v3572 = vadd.f32 0.0, %v3571
        %v3573 = vpop.f32.mrf.mxu0
        %3574 = vmatprep.mubr.bf16.mxu0 %v2521
        %3575 = vmatmul.mubr.bf16.gmra.mxu0 %v2473
        %v3576 = vpop.f32.mrf.mxu0
        %v3577 = vadd.f32 0.0, %v3576
        %v3578 = vpop.f32.mrf.mxu0
        %v3579 = vpop.f32.mrf.mxu0
        %v3580 = vadd.f32 0.0, %v3579
        %v3581 = vpop.f32.mrf.mxu0
        %3582 = vmatprep.mubr.bf16.mxu0 %v2522
        %3583 = vmatmul.mubr.bf16.gmra.mxu0 %v2474
        %v3584 = vpop.f32.mrf.mxu0
        %v3585 = vadd.f32 0.0, %v3584
        %v3586 = vpop.f32.mrf.mxu0
        %v3587 = vpop.f32.mrf.mxu0
        %v3588 = vadd.f32 0.0, %v3587
        %v3589 = vpop.f32.mrf.mxu0
        %3590 = vmatprep.mubr.bf16.mxu0 %v2523
        %3591 = vmatmul.mubr.bf16.gmra.mxu0 %v2475
        %v3592 = vpop.f32.mrf.mxu0
        %v3593 = vadd.f32 0.0, %v3592
        %v3594 = vpop.f32.mrf.mxu0
        %v3595 = vpop.f32.mrf.mxu0
        %v3596 = vadd.f32 0.0, %v3595
        %v3597 = vpop.f32.mrf.mxu0
        %3598 = vdwg.mxu0
        %3599 = vmatprep.subr.bf16.mxu0 0
        %3600 = vmatpush1.bf16.msra.mxu0 %v3317
        %3601 = vmatprep.subr.bf16.mxu0 0
        %3602 = vmatpush1.bf16.msra.mxu0 %v3316
        %3603 = vmatprep.subr.bf16.mxu0 0
        %3604 = vmatpush1.bf16.msra.mxu0 %v3315
        %3605 = vmatprep.subr.bf16.mxu0 0
        %3606 = vmatpush1.bf16.msra.mxu0 %v3314
        %3607 = vmatprep.subr.bf16.mxu0 0
        %3608 = vmatpush1.bf16.msra.mxu0 %v3313
        %3609 = vmatprep.subr.bf16.mxu0 0
        %3610 = vmatpush1.bf16.msra.mxu0 %v3312
        %3611 = vmatprep.subr.bf16.mxu0 0
        %3612 = vmatpush1.bf16.msra.mxu0 %v3311
        %3613 = vmatprep.subr.bf16.mxu0 0
        %3614 = vmatpush1.bf16.msra.mxu0 %v3310
        %3615 = vmatprep.subr.bf16.mxu0 0
        %3616 = vmatpush2.bf16.msra.mxu0 %v3325
        %3617 = vmatprep.subr.bf16.mxu0 0
        %3618 = vmatpush2.bf16.msra.mxu0 %v3324
        %3619 = vmatprep.subr.bf16.mxu0 0
        %3620 = vmatpush2.bf16.msra.mxu0 %v3323
        %3621 = vmatprep.subr.bf16.mxu0 0
        %3622 = vmatpush2.bf16.msra.mxu0 %v3322
        %3623 = vmatprep.subr.bf16.mxu0 0
        %3624 = vmatpush2.bf16.msra.mxu0 %v3321
        %3625 = vmatprep.subr.bf16.mxu0 0
        %3626 = vmatpush2.bf16.msra.mxu0 %v3320
        %3627 = vmatprep.subr.bf16.mxu0 0
        %3628 = vmatpush2.bf16.msra.mxu0 %v3319
        %3629 = vmatprep.subr.bf16.mxu0 0
        %3630 = vmatpush2.bf16.msra.mxu0 %v3318
        %3631 = vmatprep.mubr.bf16.mxu0 %v2604
        %3632 = vmatmul.mubr.bf16.gmra.mxu0 %v2556
        %v3633 = vpop.f32.mrf.mxu0
        %v3634 = vadd.f32 %v3473, %v3633
        %v3635 = vpop.f32.mrf.mxu0
        %v3636 = vpop.f32.mrf.mxu0
        %v3637 = vadd.f32 %v3476, %v3636
        %v3638 = vpop.f32.mrf.mxu0
        %3639 = vmatprep.mubr.bf16.mxu0 %v2605
        %3640 = vmatmul.mubr.bf16.gmra.mxu0 %v2557
        %v3641 = vpop.f32.mrf.mxu0
        %v3642 = vadd.f32 %v3481, %v3641
        %v3643 = vpop.f32.mrf.mxu0
        %v3644 = vpop.f32.mrf.mxu0
        %v3645 = vadd.f32 %v3484, %v3644
        %v3646 = vpop.f32.mrf.mxu0
        %3647 = vmatprep.mubr.bf16.mxu0 %v2606
        %3648 = vmatmul.mubr.bf16.gmra.mxu0 %v2558
        %v3649 = vpop.f32.mrf.mxu0
        %v3650 = vadd.f32 %v3489, %v3649
        %v3651 = vpop.f32.mrf.mxu0
        %v3652 = vpop.f32.mrf.mxu0
        %v3653 = vadd.f32 %v3492, %v3652
        %v3654 = vpop.f32.mrf.mxu0
        %3655 = vmatprep.mubr.bf16.mxu0 %v2607
        %3656 = vmatmul.mubr.bf16.gmra.mxu0 %v2559
        %v3657 = vpop.f32.mrf.mxu0
        %v3658 = vadd.f32 %v3497, %v3657
        %v3659 = vpop.f32.mrf.mxu0
        %v3660 = vpop.f32.mrf.mxu0
        %v3661 = vadd.f32 %v3500, %v3660
        %v3662 = vpop.f32.mrf.mxu0
        %3663 = vmatprep.mubr.bf16.mxu0 %v2608
        %3664 = vmatmul.mubr.bf16.gmra.mxu0 %v2560
        %v3665 = vpop.f32.mrf.mxu0
        %v3666 = vadd.f32 %v3505, %v3665
        %v3667 = vpop.f32.mrf.mxu0
        %v3668 = vpop.f32.mrf.mxu0
        %v3669 = vadd.f32 %v3508, %v3668
        %v3670 = vpop.f32.mrf.mxu0
        %3671 = vmatprep.mubr.bf16.mxu0 %v2609
        %3672 = vmatmul.mubr.bf16.gmra.mxu0 %v2561
        %v3673 = vpop.f32.mrf.mxu0
        %v3674 = vadd.f32 %v3513, %v3673
        %v3675 = vpop.f32.mrf.mxu0
        %v3676 = vpop.f32.mrf.mxu0
        %v3677 = vadd.f32 %v3516, %v3676
        %v3678 = vpop.f32.mrf.mxu0
        %3679 = vmatprep.mubr.bf16.mxu0 %v2610
        %3680 = vmatmul.mubr.bf16.gmra.mxu0 %v2562
        %v3681 = vpop.f32.mrf.mxu0
        %v3682 = vadd.f32 %v3521, %v3681
        %v3683 = vpop.f32.mrf.mxu0
        %v3684 = vpop.f32.mrf.mxu0
        %v3685 = vadd.f32 %v3524, %v3684
        %v3686 = vpop.f32.mrf.mxu0
        %3687 = vmatprep.mubr.bf16.mxu0 %v2611
        %3688 = vmatmul.mubr.bf16.gmra.mxu0 %v2563
        %v3689 = vpop.f32.mrf.mxu0
        %v3690 = vadd.f32 %v3529, %v3689
        %v3691 = vpop.f32.mrf.mxu0
        %v3692 = vpop.f32.mrf.mxu0
        %v3693 = vadd.f32 %v3532, %v3692
        %v3694 = vpop.f32.mrf.mxu0
        %3695 = vmatprep.mubr.bf16.mxu0 %v2612
        %3696 = vmatmul.mubr.bf16.gmra.mxu0 %v2564
        %v3697 = vpop.f32.mrf.mxu0
        %v3698 = vadd.f32 %v3537, %v3697
        %v3699 = vpop.f32.mrf.mxu0
        %v3700 = vpop.f32.mrf.mxu0
        %v3701 = vadd.f32 %v3540, %v3700
        %v3702 = vpop.f32.mrf.mxu0
        %3703 = vmatprep.mubr.bf16.mxu0 %v2613
        %3704 = vmatmul.mubr.bf16.gmra.mxu0 %v2565
        %v3705 = vpop.f32.mrf.mxu0
        %v3706 = vadd.f32 %v3545, %v3705
        %v3707 = vpop.f32.mrf.mxu0
        %v3708 = vpop.f32.mrf.mxu0
        %v3709 = vadd.f32 %v3548, %v3708
        %v3710 = vpop.f32.mrf.mxu0
        %3711 = vmatprep.mubr.bf16.mxu0 %v2614
        %3712 = vmatmul.mubr.bf16.gmra.mxu0 %v2566
        %v3713 = vpop.f32.mrf.mxu0
        %v3714 = vadd.f32 %v3553, %v3713
        %v3715 = vpop.f32.mrf.mxu0
        %v3716 = vpop.f32.mrf.mxu0
        %v3717 = vadd.f32 %v3556, %v3716
        %v3718 = vpop.f32.mrf.mxu0
        %3719 = vmatprep.mubr.bf16.mxu0 %v2615
        %3720 = vmatmul.mubr.bf16.gmra.mxu0 %v2567
        %v3721 = vpop.f32.mrf.mxu0
        %v3722 = vadd.f32 %v3561, %v3721
        %v3723 = vpop.f32.mrf.mxu0
        %v3724 = vpop.f32.mrf.mxu0
        %v3725 = vadd.f32 %v3564, %v3724
        %v3726 = vpop.f32.mrf.mxu0
        %3727 = vmatprep.mubr.bf16.mxu0 %v2616
        %3728 = vmatmul.mubr.bf16.gmra.mxu0 %v2568
        %v3729 = vpop.f32.mrf.mxu0
        %v3730 = vadd.f32 %v3569, %v3729
        %v3731 = vpop.f32.mrf.mxu0
        %v3732 = vpop.f32.mrf.mxu0
        %v3733 = vadd.f32 %v3572, %v3732
        %v3734 = vpop.f32.mrf.mxu0
        %3735 = vmatprep.mubr.bf16.mxu0 %v2617
        %3736 = vmatmul.mubr.bf16.gmra.mxu0 %v2569
        %v3737 = vpop.f32.mrf.mxu0
        %v3738 = vadd.f32 %v3577, %v3737
        %v3739 = vpop.f32.mrf.mxu0
        %v3740 = vpop.f32.mrf.mxu0
        %v3741 = vadd.f32 %v3580, %v3740
        %v3742 = vpop.f32.mrf.mxu0
        %3743 = vmatprep.mubr.bf16.mxu0 %v2618
        %3744 = vmatmul.mubr.bf16.gmra.mxu0 %v2570
        %v3745 = vpop.f32.mrf.mxu0
        %v3746 = vadd.f32 %v3585, %v3745
        %v3747 = vpop.f32.mrf.mxu0
        %v3748 = vpop.f32.mrf.mxu0
        %v3749 = vadd.f32 %v3588, %v3748
        %v3750 = vpop.f32.mrf.mxu0
        %3751 = vmatprep.mubr.bf16.mxu0 %v2619
        %3752 = vmatmul.mubr.bf16.gmra.mxu0 %v2571
        %v3753 = vpop.f32.mrf.mxu0
        %v3754 = vadd.f32 %v3593, %v3753
        %v3755 = vpop.f32.mrf.mxu0
        %v3756 = vpop.f32.mrf.mxu0
        %v3757 = vadd.f32 %v3596, %v3756
        %v3758 = vpop.f32.mrf.mxu0
        %3759 = vdwg.mxu0
        %3760 = vmatprep.subr.bf16.mxu0 0
        %3761 = vmatpush1.bf16.msra.mxu0 %v3333
        %3762 = vmatprep.subr.bf16.mxu0 0
        %3763 = vmatpush1.bf16.msra.mxu0 %v3332
        %3764 = vmatprep.subr.bf16.mxu0 0
        %3765 = vmatpush1.bf16.msra.mxu0 %v3331
        %3766 = vmatprep.subr.bf16.mxu0 0
        %3767 = vmatpush1.bf16.msra.mxu0 %v3330
        %3768 = vmatprep.subr.bf16.mxu0 0
        %3769 = vmatpush1.bf16.msra.mxu0 %v3329
        %3770 = vmatprep.subr.bf16.mxu0 0
        %3771 = vmatpush1.bf16.msra.mxu0 %v3328
        %3772 = vmatprep.subr.bf16.mxu0 0
        %3773 = vmatpush1.bf16.msra.mxu0 %v3327
        %3774 = vmatprep.subr.bf16.mxu0 0
        %3775 = vmatpush1.bf16.msra.mxu0 %v3326
        %3776 = vmatprep.subr.bf16.mxu0 0
        %3777 = vmatpush2.bf16.msra.mxu0 %v3341
        %3778 = vmatprep.subr.bf16.mxu0 0
        %3779 = vmatpush2.bf16.msra.mxu0 %v3340
        %3780 = vmatprep.subr.bf16.mxu0 0
        %3781 = vmatpush2.bf16.msra.mxu0 %v3339
        %3782 = vmatprep.subr.bf16.mxu0 0
        %3783 = vmatpush2.bf16.msra.mxu0 %v3338
        %3784 = vmatprep.subr.bf16.mxu0 0
        %3785 = vmatpush2.bf16.msra.mxu0 %v3337
        %3786 = vmatprep.subr.bf16.mxu0 0
        %3787 = vmatpush2.bf16.msra.mxu0 %v3336
        %3788 = vmatprep.subr.bf16.mxu0 0
        %3789 = vmatpush2.bf16.msra.mxu0 %v3335
        %3790 = vmatprep.subr.bf16.mxu0 0
        %3791 = vmatpush2.bf16.msra.mxu0 %v3334
        %3792 = vmatprep.mubr.bf16.mxu0 %v2700
        %3793 = vmatmul.mubr.bf16.gmra.mxu0 %v2652
        %v3794 = vpop.f32.mrf.mxu0
        %v3795 = vadd.f32 %v3634, %v3794
        %v3796 = vpop.f32.mrf.mxu0
        %v3797 = vpop.f32.mrf.mxu0
        %v3798 = vadd.f32 %v3637, %v3797
        %v3799 = vpop.f32.mrf.mxu0
        %3800 = vmatprep.mubr.bf16.mxu0 %v2701
        %3801 = vmatmul.mubr.bf16.gmra.mxu0 %v2653
        %v3802 = vpop.f32.mrf.mxu0
        %v3803 = vadd.f32 %v3642, %v3802
        %v3804 = vpop.f32.mrf.mxu0
        %v3805 = vpop.f32.mrf.mxu0
        %v3806 = vadd.f32 %v3645, %v3805
        %v3807 = vpop.f32.mrf.mxu0
        %3808 = vmatprep.mubr.bf16.mxu0 %v2702
        %3809 = vmatmul.mubr.bf16.gmra.mxu0 %v2654
        %v3810 = vpop.f32.mrf.mxu0
        %v3811 = vadd.f32 %v3650, %v3810
        %v3812 = vpop.f32.mrf.mxu0
        %v3813 = vpop.f32.mrf.mxu0
        %v3814 = vadd.f32 %v3653, %v3813
        %v3815 = vpop.f32.mrf.mxu0
        %3816 = vmatprep.mubr.bf16.mxu0 %v2703
        %3817 = vmatmul.mubr.bf16.gmra.mxu0 %v2655
        %v3818 = vpop.f32.mrf.mxu0
        %v3819 = vadd.f32 %v3658, %v3818
        %v3820 = vpop.f32.mrf.mxu0
        %v3821 = vpop.f32.mrf.mxu0
        %v3822 = vadd.f32 %v3661, %v3821
        %v3823 = vpop.f32.mrf.mxu0
        %3824 = vmatprep.mubr.bf16.mxu0 %v2704
        %3825 = vmatmul.mubr.bf16.gmra.mxu0 %v2656
        %v3826 = vpop.f32.mrf.mxu0
        %v3827 = vadd.f32 %v3666, %v3826
        %v3828 = vpop.f32.mrf.mxu0
        %v3829 = vpop.f32.mrf.mxu0
        %v3830 = vadd.f32 %v3669, %v3829
        %v3831 = vpop.f32.mrf.mxu0
        %3832 = vmatprep.mubr.bf16.mxu0 %v2705
        %3833 = vmatmul.mubr.bf16.gmra.mxu0 %v2657
        %v3834 = vpop.f32.mrf.mxu0
        %v3835 = vadd.f32 %v3674, %v3834
        %v3836 = vpop.f32.mrf.mxu0
        %v3837 = vpop.f32.mrf.mxu0
        %v3838 = vadd.f32 %v3677, %v3837
        %v3839 = vpop.f32.mrf.mxu0
        %3840 = vmatprep.mubr.bf16.mxu0 %v2706
        %3841 = vmatmul.mubr.bf16.gmra.mxu0 %v2658
        %v3842 = vpop.f32.mrf.mxu0
        %v3843 = vadd.f32 %v3682, %v3842
        %v3844 = vpop.f32.mrf.mxu0
        %v3845 = vpop.f32.mrf.mxu0
        %v3846 = vadd.f32 %v3685, %v3845
        %v3847 = vpop.f32.mrf.mxu0
        %3848 = vmatprep.mubr.bf16.mxu0 %v2707
        %3849 = vmatmul.mubr.bf16.gmra.mxu0 %v2659
        %v3850 = vpop.f32.mrf.mxu0
        %v3851 = vadd.f32 %v3690, %v3850
        %v3852 = vpop.f32.mrf.mxu0
        %v3853 = vpop.f32.mrf.mxu0
        %v3854 = vadd.f32 %v3693, %v3853
        %v3855 = vpop.f32.mrf.mxu0
        %3856 = vmatprep.mubr.bf16.mxu0 %v2708
        %3857 = vmatmul.mubr.bf16.gmra.mxu0 %v2660
        %v3858 = vpop.f32.mrf.mxu0
        %v3859 = vadd.f32 %v3698, %v3858
        %v3860 = vpop.f32.mrf.mxu0
        %v3861 = vpop.f32.mrf.mxu0
        %v3862 = vadd.f32 %v3701, %v3861
        %v3863 = vpop.f32.mrf.mxu0
        %3864 = vmatprep.mubr.bf16.mxu0 %v2709
        %3865 = vmatmul.mubr.bf16.gmra.mxu0 %v2661
        %v3866 = vpop.f32.mrf.mxu0
        %v3867 = vadd.f32 %v3706, %v3866
        %v3868 = vpop.f32.mrf.mxu0
        %v3869 = vpop.f32.mrf.mxu0
        %v3870 = vadd.f32 %v3709, %v3869
        %v3871 = vpop.f32.mrf.mxu0
        %3872 = vmatprep.mubr.bf16.mxu0 %v2710
        %3873 = vmatmul.mubr.bf16.gmra.mxu0 %v2662
        %v3874 = vpop.f32.mrf.mxu0
        %v3875 = vadd.f32 %v3714, %v3874
        %v3876 = vpop.f32.mrf.mxu0
        %v3877 = vpop.f32.mrf.mxu0
        %v3878 = vadd.f32 %v3717, %v3877
        %v3879 = vpop.f32.mrf.mxu0
        %3880 = vmatprep.mubr.bf16.mxu0 %v2711
        %3881 = vmatmul.mubr.bf16.gmra.mxu0 %v2663
        %v3882 = vpop.f32.mrf.mxu0
        %v3883 = vadd.f32 %v3722, %v3882
        %v3884 = vpop.f32.mrf.mxu0
        %v3885 = vpop.f32.mrf.mxu0
        %v3886 = vadd.f32 %v3725, %v3885
        %v3887 = vpop.f32.mrf.mxu0
        %3888 = vmatprep.mubr.bf16.mxu0 %v2712
        %3889 = vmatmul.mubr.bf16.gmra.mxu0 %v2664
        %v3890 = vpop.f32.mrf.mxu0
        %v3891 = vadd.f32 %v3730, %v3890
        %v3892 = vpop.f32.mrf.mxu0
        %v3893 = vpop.f32.mrf.mxu0
        %v3894 = vadd.f32 %v3733, %v3893
        %v3895 = vpop.f32.mrf.mxu0
        %3896 = vmatprep.mubr.bf16.mxu0 %v2713
        %3897 = vmatmul.mubr.bf16.gmra.mxu0 %v2665
        %v3898 = vpop.f32.mrf.mxu0
        %v3899 = vadd.f32 %v3738, %v3898
        %v3900 = vpop.f32.mrf.mxu0
        %v3901 = vpop.f32.mrf.mxu0
        %v3902 = vadd.f32 %v3741, %v3901
        %v3903 = vpop.f32.mrf.mxu0
        %3904 = vmatprep.mubr.bf16.mxu0 %v2714
        %3905 = vmatmul.mubr.bf16.gmra.mxu0 %v2666
        %v3906 = vpop.f32.mrf.mxu0
        %v3907 = vadd.f32 %v3746, %v3906
        %v3908 = vpop.f32.mrf.mxu0
        %v3909 = vpop.f32.mrf.mxu0
        %v3910 = vadd.f32 %v3749, %v3909
        %v3911 = vpop.f32.mrf.mxu0
        %3912 = vmatprep.mubr.bf16.mxu0 %v2715
        %3913 = vmatmul.mubr.bf16.gmra.mxu0 %v2667
        %v3914 = vpop.f32.mrf.mxu0
        %v3915 = vadd.f32 %v3754, %v3914
        %v3916 = vpop.f32.mrf.mxu0
        %v3917 = vpop.f32.mrf.mxu0
        %v3918 = vadd.f32 %v3757, %v3917
        %v3919 = vpop.f32.mrf.mxu0
        %3920 = vdwg.mxu0
        %3921 = vmatprep.subr.bf16.mxu0 0
        %3922 = vmatpush1.bf16.msra.mxu0 %v3349
        %3923 = vmatprep.subr.bf16.mxu0 0
        %3924 = vmatpush1.bf16.msra.mxu0 %v3348
        %3925 = vmatprep.subr.bf16.mxu0 0
        %3926 = vmatpush1.bf16.msra.mxu0 %v3347
        %3927 = vmatprep.subr.bf16.mxu0 0
        %3928 = vmatpush1.bf16.msra.mxu0 %v3346
        %3929 = vmatprep.subr.bf16.mxu0 0
        %3930 = vmatpush1.bf16.msra.mxu0 %v3345
        %3931 = vmatprep.subr.bf16.mxu0 0
        %3932 = vmatpush1.bf16.msra.mxu0 %v3344
        %3933 = vmatprep.subr.bf16.mxu0 0
        %3934 = vmatpush1.bf16.msra.mxu0 %v3343
        %3935 = vmatprep.subr.bf16.mxu0 0
        %3936 = vmatpush1.bf16.msra.mxu0 %v3342
        %3937 = vmatprep.subr.bf16.mxu0 0
        %3938 = vmatpush2.bf16.msra.mxu0 %v3357
        %3939 = vmatprep.subr.bf16.mxu0 0
        %3940 = vmatpush2.bf16.msra.mxu0 %v3356
        %3941 = vmatprep.subr.bf16.mxu0 0
        %3942 = vmatpush2.bf16.msra.mxu0 %v3355
        %3943 = vmatprep.subr.bf16.mxu0 0
        %3944 = vmatpush2.bf16.msra.mxu0 %v3354
        %3945 = vmatprep.subr.bf16.mxu0 0
        %3946 = vmatpush2.bf16.msra.mxu0 %v3353
        %3947 = vmatprep.subr.bf16.mxu0 0
        %3948 = vmatpush2.bf16.msra.mxu0 %v3352
        %3949 = vmatprep.subr.bf16.mxu0 0
        %3950 = vmatpush2.bf16.msra.mxu0 %v3351
        %3951 = vmatprep.subr.bf16.mxu0 0
        %3952 = vmatpush2.bf16.msra.mxu0 %v3350
        %3953 = vmatprep.mubr.bf16.mxu0 %v2797
        %3954 = vmatmul.mubr.bf16.gmra.mxu0 %v2749
        %v3955 = vpop.f32.mrf.mxu0
        %v3956 = vadd.f32 %v3795, %v3955
        %v3957 = vpop.f32.mrf.mxu0
        %v3958 = vpop.f32.mrf.mxu0
        %v3959 = vadd.f32 %v3798, %v3958
        %v3960 = vpop.f32.mrf.mxu0
        %3961 = vmatprep.mubr.bf16.mxu0 %v2798
        %3962 = vmatmul.mubr.bf16.gmra.mxu0 %v2750
        %v3963 = vpop.f32.mrf.mxu0
        %v3964 = vadd.f32 %v3803, %v3963
        %v3965 = vpop.f32.mrf.mxu0
        %v3966 = vpop.f32.mrf.mxu0
        %v3967 = vadd.f32 %v3806, %v3966
        %v3968 = vpop.f32.mrf.mxu0
        %3969 = vmatprep.mubr.bf16.mxu0 %v2799
        %3970 = vmatmul.mubr.bf16.gmra.mxu0 %v2751
        %v3971 = vpop.f32.mrf.mxu0
        %v3972 = vadd.f32 %v3811, %v3971
        %v3973 = vpop.f32.mrf.mxu0
        %v3974 = vpop.f32.mrf.mxu0
        %v3975 = vadd.f32 %v3814, %v3974
        %v3976 = vpop.f32.mrf.mxu0
        %3977 = vmatprep.mubr.bf16.mxu0 %v2800
        %3978 = vmatmul.mubr.bf16.gmra.mxu0 %v2752
        %v3979 = vpop.f32.mrf.mxu0
        %v3980 = vadd.f32 %v3819, %v3979
        %v3981 = vpop.f32.mrf.mxu0
        %v3982 = vpop.f32.mrf.mxu0
        %v3983 = vadd.f32 %v3822, %v3982
        %v3984 = vpop.f32.mrf.mxu0
        %3985 = vmatprep.mubr.bf16.mxu0 %v2801
        %3986 = vmatmul.mubr.bf16.gmra.mxu0 %v2753
        %v3987 = vpop.f32.mrf.mxu0
        %v3988 = vadd.f32 %v3827, %v3987
        %v3989 = vpop.f32.mrf.mxu0
        %v3990 = vpop.f32.mrf.mxu0
        %v3991 = vadd.f32 %v3830, %v3990
        %v3992 = vpop.f32.mrf.mxu0
        %3993 = vmatprep.mubr.bf16.mxu0 %v2802
        %3994 = vmatmul.mubr.bf16.gmra.mxu0 %v2754
        %v3995 = vpop.f32.mrf.mxu0
        %v3996 = vadd.f32 %v3835, %v3995
        %v3997 = vpop.f32.mrf.mxu0
        %v3998 = vpop.f32.mrf.mxu0
        %v3999 = vadd.f32 %v3838, %v3998
        %v4000 = vpop.f32.mrf.mxu0
        %4001 = vmatprep.mubr.bf16.mxu0 %v2803
        %4002 = vmatmul.mubr.bf16.gmra.mxu0 %v2755
        %v4003 = vpop.f32.mrf.mxu0
        %v4004 = vadd.f32 %v3843, %v4003
        %v4005 = vpop.f32.mrf.mxu0
        %v4006 = vpop.f32.mrf.mxu0
        %v4007 = vadd.f32 %v3846, %v4006
        %v4008 = vpop.f32.mrf.mxu0
        %4009 = vmatprep.mubr.bf16.mxu0 %v2804
        %4010 = vmatmul.mubr.bf16.gmra.mxu0 %v2756
        %v4011 = vpop.f32.mrf.mxu0
        %v4012 = vadd.f32 %v3851, %v4011
        %v4013 = vpop.f32.mrf.mxu0
        %v4014 = vpop.f32.mrf.mxu0
        %v4015 = vadd.f32 %v3854, %v4014
        %v4016 = vpop.f32.mrf.mxu0
        %4017 = vmatprep.mubr.bf16.mxu0 %v2805
        %4018 = vmatmul.mubr.bf16.gmra.mxu0 %v2757
        %v4019 = vpop.f32.mrf.mxu0
        %v4020 = vadd.f32 %v3859, %v4019
        %v4021 = vpop.f32.mrf.mxu0
        %v4022 = vpop.f32.mrf.mxu0
        %v4023 = vadd.f32 %v3862, %v4022
        %v4024 = vpop.f32.mrf.mxu0
        %4025 = vmatprep.mubr.bf16.mxu0 %v2806
        %4026 = vmatmul.mubr.bf16.gmra.mxu0 %v2758
        %v4027 = vpop.f32.mrf.mxu0
        %v4028 = vadd.f32 %v3867, %v4027
        %v4029 = vpop.f32.mrf.mxu0
        %v4030 = vpop.f32.mrf.mxu0
        %v4031 = vadd.f32 %v3870, %v4030
        %v4032 = vpop.f32.mrf.mxu0
        %4033 = vmatprep.mubr.bf16.mxu0 %v2807
        %4034 = vmatmul.mubr.bf16.gmra.mxu0 %v2759
        %v4035 = vpop.f32.mrf.mxu0
        %v4036 = vadd.f32 %v3875, %v4035
        %v4037 = vpop.f32.mrf.mxu0
        %v4038 = vpop.f32.mrf.mxu0
        %v4039 = vadd.f32 %v3878, %v4038
        %v4040 = vpop.f32.mrf.mxu0
        %4041 = vmatprep.mubr.bf16.mxu0 %v2808
        %4042 = vmatmul.mubr.bf16.gmra.mxu0 %v2760
        %v4043 = vpop.f32.mrf.mxu0
        %v4044 = vadd.f32 %v3883, %v4043
        %v4045 = vpop.f32.mrf.mxu0
        %v4046 = vpop.f32.mrf.mxu0
        %v4047 = vadd.f32 %v3886, %v4046
        %v4048 = vpop.f32.mrf.mxu0
        %4049 = vmatprep.mubr.bf16.mxu0 %v2809
        %4050 = vmatmul.mubr.bf16.gmra.mxu0 %v2761
        %v4051 = vpop.f32.mrf.mxu0
        %v4052 = vadd.f32 %v3891, %v4051
        %v4053 = vpop.f32.mrf.mxu0
        %v4054 = vpop.f32.mrf.mxu0
        %v4055 = vadd.f32 %v3894, %v4054
        %v4056 = vpop.f32.mrf.mxu0
        %4057 = vmatprep.mubr.bf16.mxu0 %v2810
        %4058 = vmatmul.mubr.bf16.gmra.mxu0 %v2762
        %v4059 = vpop.f32.mrf.mxu0
        %v4060 = vadd.f32 %v3899, %v4059
        %v4061 = vpop.f32.mrf.mxu0
        %v4062 = vpop.f32.mrf.mxu0
        %v4063 = vadd.f32 %v3902, %v4062
        %v4064 = vpop.f32.mrf.mxu0
        %4065 = vmatprep.mubr.bf16.mxu0 %v2811
        %4066 = vmatmul.mubr.bf16.gmra.mxu0 %v2763
        %v4067 = vpop.f32.mrf.mxu0
        %v4068 = vadd.f32 %v3907, %v4067
        %v4069 = vpop.f32.mrf.mxu0
        %v4070 = vpop.f32.mrf.mxu0
        %v4071 = vadd.f32 %v3910, %v4070
        %v4072 = vpop.f32.mrf.mxu0
        %4073 = vmatprep.mubr.bf16.mxu0 %v2812
        %4074 = vmatmul.mubr.bf16.gmra.mxu0 %v2764
        %v4075 = vpop.f32.mrf.mxu0
        %v4076 = vadd.f32 %v3915, %v4075
        %v4077 = vpop.f32.mrf.mxu0
        %v4078 = vpop.f32.mrf.mxu0
        %v4079 = vadd.f32 %v3918, %v4078
        %v4080 = vpop.f32.mrf.mxu0
        %4081 = vdwg.mxu0
        %4082 = vmatprep.subr.bf16.mxu0 0
        %4083 = vmatpush1.bf16.msra.mxu0 %v3365
        %4084 = vmatprep.subr.bf16.mxu0 0
        %4085 = vmatpush1.bf16.msra.mxu0 %v3364
        %4086 = vmatprep.subr.bf16.mxu0 0
        %4087 = vmatpush1.bf16.msra.mxu0 %v3363
        %4088 = vmatprep.subr.bf16.mxu0 0
        %4089 = vmatpush1.bf16.msra.mxu0 %v3362
        %4090 = vmatprep.subr.bf16.mxu0 0
        %4091 = vmatpush1.bf16.msra.mxu0 %v3361
        %4092 = vmatprep.subr.bf16.mxu0 0
        %4093 = vmatpush1.bf16.msra.mxu0 %v3360
        %4094 = vmatprep.subr.bf16.mxu0 0
        %4095 = vmatpush1.bf16.msra.mxu0 %v3359
        %4096 = vmatprep.subr.bf16.mxu0 0
        %4097 = vmatpush1.bf16.msra.mxu0 %v3358
        %4098 = vmatprep.subr.bf16.mxu0 0
        %4099 = vmatpush2.bf16.msra.mxu0 0
        %4100 = vmatprep.subr.bf16.mxu0 0
        %4101 = vmatpush2.bf16.msra.mxu0 0
        %4102 = vmatprep.subr.bf16.mxu0 0
        %4103 = vmatpush2.bf16.msra.mxu0 0
        %4104 = vmatprep.subr.bf16.mxu0 0
        %4105 = vmatpush2.bf16.msra.mxu0 0
        %4106 = vmatprep.subr.bf16.mxu0 0
        %4107 = vmatpush2.bf16.msra.mxu0 0
        %4108 = vmatprep.subr.bf16.mxu0 0
        %4109 = vmatpush2.bf16.msra.mxu0 0
        %4110 = vmatprep.subr.bf16.mxu0 0
        %4111 = vmatpush2.bf16.msra.mxu0 0
        %4112 = vmatprep.subr.bf16.mxu0 0
        %4113 = vmatpush2.bf16.msra.mxu0 0
        %4114 = vmatprep.mubr.bf16.mxu0 0
        %4115 = vmatmul.mubr.bf16.gmra.mxu0 %v2845
        %v4116 = vpop.f32.mrf.mxu0
        %v4117 = vadd.f32 %v3956, %v4116
        %v4118 = vpop.f32.mrf.mxu0
        %v4119 = vpop.f32.mrf.mxu0
        %v4120 = vadd.f32 %v3959, %v4119
        %v4121 = vpop.f32.mrf.mxu0
        %4122 = vmatprep.mubr.bf16.mxu0 0
        %4123 = vmatmul.mubr.bf16.gmra.mxu0 %v2846
        %v4124 = vpop.f32.mrf.mxu0
        %v4125 = vadd.f32 %v3964, %v4124
        %v4126 = vpop.f32.mrf.mxu0
        %v4127 = vpop.f32.mrf.mxu0
        %v4128 = vadd.f32 %v3967, %v4127
        %v4129 = vpop.f32.mrf.mxu0
        %4130 = vmatprep.mubr.bf16.mxu0 0
        %4131 = vmatmul.mubr.bf16.gmra.mxu0 %v2847
        %v4132 = vpop.f32.mrf.mxu0
        %v4133 = vadd.f32 %v3972, %v4132
        %v4134 = vpop.f32.mrf.mxu0
        %v4135 = vpop.f32.mrf.mxu0
        %v4136 = vadd.f32 %v3975, %v4135
        %v4137 = vpop.f32.mrf.mxu0
        %4138 = vmatprep.mubr.bf16.mxu0 0
        %4139 = vmatmul.mubr.bf16.gmra.mxu0 %v2848
        %v4140 = vpop.f32.mrf.mxu0
        %v4141 = vadd.f32 %v3980, %v4140
        %v4142 = vpop.f32.mrf.mxu0
        %v4143 = vpop.f32.mrf.mxu0
        %v4144 = vadd.f32 %v3983, %v4143
        %v4145 = vpop.f32.mrf.mxu0
        %4146 = vmatprep.mubr.bf16.mxu0 0
        %4147 = vmatmul.mubr.bf16.gmra.mxu0 %v2849
        %v4148 = vpop.f32.mrf.mxu0
        %v4149 = vadd.f32 %v3988, %v4148
        %v4150 = vpop.f32.mrf.mxu0
        %v4151 = vpop.f32.mrf.mxu0
        %v4152 = vadd.f32 %v3991, %v4151
        %v4153 = vpop.f32.mrf.mxu0
        %4154 = vmatprep.mubr.bf16.mxu0 0
        %4155 = vmatmul.mubr.bf16.gmra.mxu0 %v2850
        %v4156 = vpop.f32.mrf.mxu0
        %v4157 = vadd.f32 %v3996, %v4156
        %v4158 = vpop.f32.mrf.mxu0
        %v4159 = vpop.f32.mrf.mxu0
        %v4160 = vadd.f32 %v3999, %v4159
        %v4161 = vpop.f32.mrf.mxu0
        %4162 = vmatprep.mubr.bf16.mxu0 0
        %4163 = vmatmul.mubr.bf16.gmra.mxu0 %v2851
        %v4164 = vpop.f32.mrf.mxu0
        %v4165 = vadd.f32 %v4004, %v4164
        %v4166 = vpop.f32.mrf.mxu0
        %v4167 = vpop.f32.mrf.mxu0
        %v4168 = vadd.f32 %v4007, %v4167
        %v4169 = vpop.f32.mrf.mxu0
        %4170 = vmatprep.mubr.bf16.mxu0 0
        %4171 = vmatmul.mubr.bf16.gmra.mxu0 %v2852
        %v4172 = vpop.f32.mrf.mxu0
        %v4173 = vadd.f32 %v4012, %v4172
        %v4174 = vpop.f32.mrf.mxu0
        %v4175 = vpop.f32.mrf.mxu0
        %v4176 = vadd.f32 %v4015, %v4175
        %v4177 = vpop.f32.mrf.mxu0
        %4178 = vmatprep.mubr.bf16.mxu0 0
        %4179 = vmatmul.mubr.bf16.gmra.mxu0 %v2853
        %v4180 = vpop.f32.mrf.mxu0
        %v4181 = vadd.f32 %v4020, %v4180
        %v4182 = vpop.f32.mrf.mxu0
        %v4183 = vpop.f32.mrf.mxu0
        %v4184 = vadd.f32 %v4023, %v4183
        %v4185 = vpop.f32.mrf.mxu0
        %4186 = vmatprep.mubr.bf16.mxu0 0
        %4187 = vmatmul.mubr.bf16.gmra.mxu0 %v2854
        %v4188 = vpop.f32.mrf.mxu0
        %v4189 = vadd.f32 %v4028, %v4188
        %v4190 = vpop.f32.mrf.mxu0
        %v4191 = vpop.f32.mrf.mxu0
        %v4192 = vadd.f32 %v4031, %v4191
        %v4193 = vpop.f32.mrf.mxu0
        %4194 = vmatprep.mubr.bf16.mxu0 0
        %4195 = vmatmul.mubr.bf16.gmra.mxu0 %v2855
        %v4196 = vpop.f32.mrf.mxu0
        %v4197 = vadd.f32 %v4036, %v4196
        %v4198 = vpop.f32.mrf.mxu0
        %v4199 = vpop.f32.mrf.mxu0
        %v4200 = vadd.f32 %v4039, %v4199
        %v4201 = vpop.f32.mrf.mxu0
        %4202 = vmatprep.mubr.bf16.mxu0 0
        %4203 = vmatmul.mubr.bf16.gmra.mxu0 %v2856
        %v4204 = vpop.f32.mrf.mxu0
        %v4205 = vadd.f32 %v4044, %v4204
        %v4206 = vpop.f32.mrf.mxu0
        %v4207 = vpop.f32.mrf.mxu0
        %v4208 = vadd.f32 %v4047, %v4207
        %v4209 = vpop.f32.mrf.mxu0
        %4210 = vmatprep.mubr.bf16.mxu0 0
        %4211 = vmatmul.mubr.bf16.gmra.mxu0 %v2857
        %v4212 = vpop.f32.mrf.mxu0
        %v4213 = vadd.f32 %v4052, %v4212
        %v4214 = vpop.f32.mrf.mxu0
        %v4215 = vpop.f32.mrf.mxu0
        %v4216 = vadd.f32 %v4055, %v4215
        %v4217 = vpop.f32.mrf.mxu0
        %4218 = vmatprep.mubr.bf16.mxu0 0
        %4219 = vmatmul.mubr.bf16.gmra.mxu0 %v2858
        %v4220 = vpop.f32.mrf.mxu0
        %v4221 = vadd.f32 %v4060, %v4220
        %v4222 = vpop.f32.mrf.mxu0
        %v4223 = vpop.f32.mrf.mxu0
        %v4224 = vadd.f32 %v4063, %v4223
        %v4225 = vpop.f32.mrf.mxu0
        %4226 = vmatprep.mubr.bf16.mxu0 0
        %4227 = vmatmul.mubr.bf16.gmra.mxu0 %v2859
        %v4228 = vpop.f32.mrf.mxu0
        %v4229 = vadd.f32 %v4068, %v4228
        %v4230 = vpop.f32.mrf.mxu0
        %v4231 = vpop.f32.mrf.mxu0
        %v4232 = vadd.f32 %v4071, %v4231
        %v4233 = vpop.f32.mrf.mxu0
        %4234 = vmatprep.mubr.bf16.mxu0 0
        %4235 = vmatmul.mubr.bf16.gmra.mxu0 %v2860
        %v4236 = vpop.f32.mrf.mxu0
        %v4237 = vadd.f32 %v4076, %v4236
        %v4238 = vpop.f32.mrf.mxu0
        %v4239 = vpop.f32.mrf.mxu0
        %v4240 = vadd.f32 %v4079, %v4239
        %v4241 = vpop.f32.mrf.mxu0
        %4242 = vdwg.mxu0
        %v4243 = vld [vmem:[%s277] sm:$0xff]
        %v4244 = vld [vmem:[%s277 + $0x8] sm:$0xff]
        %v4245 = vld [vmem:[%s277 + $0x10] sm:$0xff]
        %v4246 = vld [vmem:[%s277 + $0x18] sm:$0xff]
        %v4247 = vld [vmem:[%s277 + $0x20] sm:$0xff]
        %v4248 = vld [vmem:[%s277 + $0x28] sm:$0xff]
        %v4249 = vld [vmem:[%s277 + $0x30] sm:$0xff]
        %v4250 = vld [vmem:[%s277 + $0x38] sm:$0xff]
        %v4251 = vld [vmem:[%s277 + $0x40] sm:$0xff]
        %v4252 = vld [vmem:[%s277 + $0x48] sm:$0xff]
        %v4253 = vld [vmem:[%s277 + $0x50] sm:$0xff]
        %v4254 = vld [vmem:[%s277 + $0x58] sm:$0xff]
        %v4255 = vld [vmem:[%s277 + $0x60] sm:$0xff]
        %v4256 = vld [vmem:[%s277 + $0x68] sm:$0xff]
        %v4257 = vld [vmem:[%s277 + $0x70] sm:$0xff]
        %v4258 = vld [vmem:[%s277 + $0x78] sm:$0xff]
        %v4259 = vld [vmem:[%s277 + $0x80] sm:$0xff]
        %v4260 = vld [vmem:[%s277 + $0x88] sm:$0xff]
        %v4261 = vld [vmem:[%s277 + $0x90] sm:$0xff]
        %v4262 = vld [vmem:[%s277 + $0x98] sm:$0xff]
        %v4263 = vld [vmem:[%s277 + $0xa0] sm:$0xff]
        %v4264 = vld [vmem:[%s277 + $0xa8] sm:$0xff]
        %v4265 = vld [vmem:[%s277 + $0xb0] sm:$0xff]
        %v4266 = vld [vmem:[%s277 + $0xb8] sm:$0xff]
        %v4267 = vld [vmem:[%s277 + $0xc0] sm:$0xff]
        %v4268 = vld [vmem:[%s277 + $0xc8] sm:$0xff]
        %v4269 = vld [vmem:[%s277 + $0xd0] sm:$0xff]
        %v4270 = vld [vmem:[%s277 + $0xd8] sm:$0xff]
        %v4271 = vld [vmem:[%s277 + $0xe0] sm:$0xff]
        %v4272 = vld [vmem:[%s277 + $0xe8] sm:$0xff]
        %v4273 = vld [vmem:[%s277 + $0xf0] sm:$0xff]
        %v4274 = vld [vmem:[%s277 + $0xf8] sm:$0xff]
        %v4275 = vadd.f32 %v4243, %v4117
        %v4276 = vadd.f32 %v4244, %v4120
        %v4277 = vadd.f32 %v4245, %v4125
        %v4278 = vadd.f32 %v4246, %v4128
        %v4279 = vadd.f32 %v4247, %v4133
        %v4280 = vadd.f32 %v4248, %v4136
        %v4281 = vadd.f32 %v4249, %v4141
        %v4282 = vadd.f32 %v4250, %v4144
        %v4283 = vadd.f32 %v4251, %v4149
        %v4284 = vadd.f32 %v4252, %v4152
        %v4285 = vadd.f32 %v4253, %v4157
        %v4286 = vadd.f32 %v4254, %v4160
        %v4287 = vadd.f32 %v4255, %v4165
        %v4288 = vadd.f32 %v4256, %v4168
        %v4289 = vadd.f32 %v4257, %v4173
        %v4290 = vadd.f32 %v4258, %v4176
        %v4291 = vadd.f32 %v4259, %v4181
        %v4292 = vadd.f32 %v4260, %v4184
        %v4293 = vadd.f32 %v4261, %v4189
        %v4294 = vadd.f32 %v4262, %v4192
        %v4295 = vadd.f32 %v4263, %v4197
        %v4296 = vadd.f32 %v4264, %v4200
        %v4297 = vadd.f32 %v4265, %v4205
        %v4298 = vadd.f32 %v4266, %v4208
        %v4299 = vadd.f32 %v4267, %v4213
        %v4300 = vadd.f32 %v4268, %v4216
        %v4301 = vadd.f32 %v4269, %v4221
        %v4302 = vadd.f32 %v4270, %v4224
        %v4303 = vadd.f32 %v4271, %v4229
        %v4304 = vadd.f32 %v4272, %v4232
        %v4305 = vadd.f32 %v4273, %v4237
        %v4306 = vadd.f32 %v4274, %v4240
        %4307 = vst [vmem:[%s277] sm:$0xff] %v4275
        %4308 = vst [vmem:[%s277 + $0x8] sm:$0xff] %v4276
        %4309 = vst [vmem:[%s277 + $0x10] sm:$0xff] %v4277
        %4310 = vst [vmem:[%s277 + $0x18] sm:$0xff] %v4278
        %4311 = vst [vmem:[%s277 + $0x20] sm:$0xff] %v4279
        %4312 = vst [vmem:[%s277 + $0x28] sm:$0xff] %v4280
        %4313 = vst [vmem:[%s277 + $0x30] sm:$0xff] %v4281
        %4314 = vst [vmem:[%s277 + $0x38] sm:$0xff] %v4282
        %4315 = vst [vmem:[%s277 + $0x40] sm:$0xff] %v4283
        %4316 = vst [vmem:[%s277 + $0x48] sm:$0xff] %v4284
        %4317 = vst [vmem:[%s277 + $0x50] sm:$0xff] %v4285
        %4318 = vst [vmem:[%s277 + $0x58] sm:$0xff] %v4286
        %4319 = vst [vmem:[%s277 + $0x60] sm:$0xff] %v4287
        %4320 = vst [vmem:[%s277 + $0x68] sm:$0xff] %v4288
        %4321 = vst [vmem:[%s277 + $0x70] sm:$0xff] %v4289
        %4322 = vst [vmem:[%s277 + $0x78] sm:$0xff] %v4290
        %4323 = vst [vmem:[%s277 + $0x80] sm:$0xff] %v4291
        %4324 = vst [vmem:[%s277 + $0x88] sm:$0xff] %v4292
        %4325 = vst [vmem:[%s277 + $0x90] sm:$0xff] %v4293
        %4326 = vst [vmem:[%s277 + $0x98] sm:$0xff] %v4294
        %4327 = vst [vmem:[%s277 + $0xa0] sm:$0xff] %v4295
        %4328 = vst [vmem:[%s277 + $0xa8] sm:$0xff] %v4296
        %4329 = vst [vmem:[%s277 + $0xb0] sm:$0xff] %v4297
        %4330 = vst [vmem:[%s277 + $0xb8] sm:$0xff] %v4298
        %4331 = vst [vmem:[%s277 + $0xc0] sm:$0xff] %v4299
        %4332 = vst [vmem:[%s277 + $0xc8] sm:$0xff] %v4300
        %4333 = vst [vmem:[%s277 + $0xd0] sm:$0xff] %v4301
        %4334 = vst [vmem:[%s277 + $0xd8] sm:$0xff] %v4302
        %4335 = vst [vmem:[%s277 + $0xe0] sm:$0xff] %v4303
        %4336 = vst [vmem:[%s277 + $0xe8] sm:$0xff] %v4304
        %4337 = vst [vmem:[%s277 + $0xf0] sm:$0xff] %v4305
        %4338 = vst [vmem:[%s277 + $0xf8] sm:$0xff] %v4306
        %s4339 = scalar_lea.vmem [#allocation2], 320
        %v4340 = vld [vmem:[%s4339] sm:$0xff]
        %v4341 = vld [vmem:[%s4339 + $0x10] sm:$0xff]
        %v4342 = vld [vmem:[%s4339 + $0x20] sm:$0xff]
        %v4343 = vld [vmem:[%s4339 + $0x30] sm:$0xff]
        %v4344 = vld [vmem:[%s4339 + $0x40] sm:$0xff]
        %v4345 = vld [vmem:[%s4339 + $0x50] sm:$0xff]
        %v4346 = vld [vmem:[%s4339 + $0x60] sm:$0xff]
        %v4347 = vld [vmem:[%s4339 + $0x70] sm:$0xff]
        %v4348 = vld [vmem:[%s4339 + $0xa0] sm:$0xff]
        %v4349 = vld [vmem:[%s4339 + $0xb0] sm:$0xff]
        %v4350 = vld [vmem:[%s4339 + $0xc0] sm:$0xff]
        %v4351 = vld [vmem:[%s4339 + $0xd0] sm:$0xff]
        %v4352 = vld [vmem:[%s4339 + $0xe0] sm:$0xff]
        %v4353 = vld [vmem:[%s4339 + $0xf0] sm:$0xff]
        %v4354 = vld [vmem:[%s4339 + $0x100] sm:$0xff]
        %v4355 = vld [vmem:[%s4339 + $0x110] sm:$0xff]
        %v4356 = vld [vmem:[%s4339 + $0x140] sm:$0xff]
        %v4357 = vld [vmem:[%s4339 + $0x150] sm:$0xff]
        %v4358 = vld [vmem:[%s4339 + $0x160] sm:$0xff]
        %v4359 = vld [vmem:[%s4339 + $0x170] sm:$0xff]
        %v4360 = vld [vmem:[%s4339 + $0x180] sm:$0xff]
        %v4361 = vld [vmem:[%s4339 + $0x190] sm:$0xff]
        %v4362 = vld [vmem:[%s4339 + $0x1a0] sm:$0xff]
        %v4363 = vld [vmem:[%s4339 + $0x1b0] sm:$0xff]
        %v4364 = vld [vmem:[%s4339 + $0x1e0] sm:$0xff]
        %v4365 = vld [vmem:[%s4339 + $0x1f0] sm:$0xff]
        %v4366 = vld [vmem:[%s4339 + $0x200] sm:$0xff]
        %v4367 = vld [vmem:[%s4339 + $0x210] sm:$0xff]
        %v4368 = vld [vmem:[%s4339 + $0x220] sm:$0xff]
        %v4369 = vld [vmem:[%s4339 + $0x230] sm:$0xff]
        %v4370 = vld [vmem:[%s4339 + $0x240] sm:$0xff]
        %v4371 = vld [vmem:[%s4339 + $0x250] sm:$0xff]
        %v4372 = vpack.c.bf16 %v4341, %v4340
        %v4373 = vpack.c.bf16 %v4343, %v4342
        %v4374 = vpack.c.bf16 %v4345, %v4344
        %v4375 = vpack.c.bf16 %v4347, %v4346
        %v4376 = vpack.c.bf16 %v4349, %v4348
        %v4377 = vpack.c.bf16 %v4351, %v4350
        %v4378 = vpack.c.bf16 %v4353, %v4352
        %v4379 = vpack.c.bf16 %v4355, %v4354
        %v4380 = vpack.c.bf16 %v4357, %v4356
        %v4381 = vpack.c.bf16 %v4359, %v4358
        %v4382 = vpack.c.bf16 %v4361, %v4360
        %v4383 = vpack.c.bf16 %v4363, %v4362
        %v4384 = vpack.c.bf16 %v4365, %v4364
        %v4385 = vpack.c.bf16 %v4367, %v4366
        %v4386 = vpack.c.bf16 %v4369, %v4368
        %v4387 = vpack.c.bf16 %v4371, %v4370
        %v4388 = vld [vmem:[%s4339 + $0x1] sm:$0xff]
        %v4389 = vld [vmem:[%s4339 + $0x11] sm:$0xff]
        %v4390 = vld [vmem:[%s4339 + $0x21] sm:$0xff]
        %v4391 = vld [vmem:[%s4339 + $0x31] sm:$0xff]
        %v4392 = vld [vmem:[%s4339 + $0x41] sm:$0xff]
        %v4393 = vld [vmem:[%s4339 + $0x51] sm:$0xff]
        %v4394 = vld [vmem:[%s4339 + $0x61] sm:$0xff]
        %v4395 = vld [vmem:[%s4339 + $0x71] sm:$0xff]
        %v4396 = vld [vmem:[%s4339 + $0xa1] sm:$0xff]
        %v4397 = vld [vmem:[%s4339 + $0xb1] sm:$0xff]
        %v4398 = vld [vmem:[%s4339 + $0xc1] sm:$0xff]
        %v4399 = vld [vmem:[%s4339 + $0xd1] sm:$0xff]
        %v4400 = vld [vmem:[%s4339 + $0xe1] sm:$0xff]
        %v4401 = vld [vmem:[%s4339 + $0xf1] sm:$0xff]
        %v4402 = vld [vmem:[%s4339 + $0x101] sm:$0xff]
        %v4403 = vld [vmem:[%s4339 + $0x111] sm:$0xff]
        %v4404 = vld [vmem:[%s4339 + $0x141] sm:$0xff]
        %v4405 = vld [vmem:[%s4339 + $0x151] sm:$0xff]
        %v4406 = vld [vmem:[%s4339 + $0x161] sm:$0xff]
        %v4407 = vld [vmem:[%s4339 + $0x171] sm:$0xff]
        %v4408 = vld [vmem:[%s4339 + $0x181] sm:$0xff]
        %v4409 = vld [vmem:[%s4339 + $0x191] sm:$0xff]
        %v4410 = vld [vmem:[%s4339 + $0x1a1] sm:$0xff]
        %v4411 = vld [vmem:[%s4339 + $0x1b1] sm:$0xff]
        %v4412 = vld [vmem:[%s4339 + $0x1e1] sm:$0xff]
        %v4413 = vld [vmem:[%s4339 + $0x1f1] sm:$0xff]
        %v4414 = vld [vmem:[%s4339 + $0x201] sm:$0xff]
        %v4415 = vld [vmem:[%s4339 + $0x211] sm:$0xff]
        %v4416 = vld [vmem:[%s4339 + $0x221] sm:$0xff]
        %v4417 = vld [vmem:[%s4339 + $0x231] sm:$0xff]
        %v4418 = vld [vmem:[%s4339 + $0x241] sm:$0xff]
        %v4419 = vld [vmem:[%s4339 + $0x251] sm:$0xff]
        %v4420 = vpack.c.bf16 %v4389, %v4388
        %v4421 = vpack.c.bf16 %v4391, %v4390
        %v4422 = vpack.c.bf16 %v4393, %v4392
        %v4423 = vpack.c.bf16 %v4395, %v4394
        %v4424 = vpack.c.bf16 %v4397, %v4396
        %v4425 = vpack.c.bf16 %v4399, %v4398
        %v4426 = vpack.c.bf16 %v4401, %v4400
        %v4427 = vpack.c.bf16 %v4403, %v4402
        %v4428 = vpack.c.bf16 %v4405, %v4404
        %v4429 = vpack.c.bf16 %v4407, %v4406
        %v4430 = vpack.c.bf16 %v4409, %v4408
        %v4431 = vpack.c.bf16 %v4411, %v4410
        %v4432 = vpack.c.bf16 %v4413, %v4412
        %v4433 = vpack.c.bf16 %v4415, %v4414
        %v4434 = vpack.c.bf16 %v4417, %v4416
        %v4435 = vpack.c.bf16 %v4419, %v4418
        %v4436 = vld [vmem:[%s4339 + $0x2] sm:$0xff]
        %v4437 = vld [vmem:[%s4339 + $0x12] sm:$0xff]
        %v4438 = vld [vmem:[%s4339 + $0x22] sm:$0xff]
        %v4439 = vld [vmem:[%s4339 + $0x32] sm:$0xff]
        %v4440 = vld [vmem:[%s4339 + $0x42] sm:$0xff]
        %v4441 = vld [vmem:[%s4339 + $0x52] sm:$0xff]
        %v4442 = vld [vmem:[%s4339 + $0x62] sm:$0xff]
        %v4443 = vld [vmem:[%s4339 + $0x72] sm:$0xff]
        %v4444 = vld [vmem:[%s4339 + $0xa2] sm:$0xff]
        %v4445 = vld [vmem:[%s4339 + $0xb2] sm:$0xff]
        %v4446 = vld [vmem:[%s4339 + $0xc2] sm:$0xff]
        %v4447 = vld [vmem:[%s4339 + $0xd2] sm:$0xff]
        %v4448 = vld [vmem:[%s4339 + $0xe2] sm:$0xff]
        %v4449 = vld [vmem:[%s4339 + $0xf2] sm:$0xff]
        %v4450 = vld [vmem:[%s4339 + $0x102] sm:$0xff]
        %v4451 = vld [vmem:[%s4339 + $0x112] sm:$0xff]
        %v4452 = vld [vmem:[%s4339 + $0x142] sm:$0xff]
        %v4453 = vld [vmem:[%s4339 + $0x152] sm:$0xff]
        %v4454 = vld [vmem:[%s4339 + $0x162] sm:$0xff]
        %v4455 = vld [vmem:[%s4339 + $0x172] sm:$0xff]
        %v4456 = vld [vmem:[%s4339 + $0x182] sm:$0xff]
        %v4457 = vld [vmem:[%s4339 + $0x192] sm:$0xff]
        %v4458 = vld [vmem:[%s4339 + $0x1a2] sm:$0xff]
        %v4459 = vld [vmem:[%s4339 + $0x1b2] sm:$0xff]
        %v4460 = vld [vmem:[%s4339 + $0x1e2] sm:$0xff]
        %v4461 = vld [vmem:[%s4339 + $0x1f2] sm:$0xff]
        %v4462 = vld [vmem:[%s4339 + $0x202] sm:$0xff]
        %v4463 = vld [vmem:[%s4339 + $0x212] sm:$0xff]
        %v4464 = vld [vmem:[%s4339 + $0x222] sm:$0xff]
        %v4465 = vld [vmem:[%s4339 + $0x232] sm:$0xff]
        %v4466 = vld [vmem:[%s4339 + $0x242] sm:$0xff]
        %v4467 = vld [vmem:[%s4339 + $0x252] sm:$0xff]
        %v4468 = vpack.c.bf16 %v4437, %v4436
        %v4469 = vpack.c.bf16 %v4439, %v4438
        %v4470 = vpack.c.bf16 %v4441, %v4440
        %v4471 = vpack.c.bf16 %v4443, %v4442
        %v4472 = vpack.c.bf16 %v4445, %v4444
        %v4473 = vpack.c.bf16 %v4447, %v4446
        %v4474 = vpack.c.bf16 %v4449, %v4448
        %v4475 = vpack.c.bf16 %v4451, %v4450
        %v4476 = vpack.c.bf16 %v4453, %v4452
        %v4477 = vpack.c.bf16 %v4455, %v4454
        %v4478 = vpack.c.bf16 %v4457, %v4456
        %v4479 = vpack.c.bf16 %v4459, %v4458
        %v4480 = vpack.c.bf16 %v4461, %v4460
        %v4481 = vpack.c.bf16 %v4463, %v4462
        %v4482 = vpack.c.bf16 %v4465, %v4464
        %v4483 = vpack.c.bf16 %v4467, %v4466
        %s4484 = scalar_lea.vmem [#allocation2], 336
        %v4485 = vld [vmem:[%s4484] sm:$0xff]
        %v4486 = vld [vmem:[%s4484 + $0x10] sm:$0xff]
        %v4487 = vld [vmem:[%s4484 + $0x20] sm:$0xff]
        %v4488 = vld [vmem:[%s4484 + $0x30] sm:$0xff]
        %v4489 = vld [vmem:[%s4484 + $0x40] sm:$0xff]
        %v4490 = vld [vmem:[%s4484 + $0x50] sm:$0xff]
        %v4491 = vld [vmem:[%s4484 + $0x60] sm:$0xff]
        %v4492 = vld [vmem:[%s4484 + $0x70] sm:$0xff]
        %v4493 = vld [vmem:[%s4484 + $0xa0] sm:$0xff]
        %v4494 = vld [vmem:[%s4484 + $0xb0] sm:$0xff]
        %v4495 = vld [vmem:[%s4484 + $0xc0] sm:$0xff]
        %v4496 = vld [vmem:[%s4484 + $0xd0] sm:$0xff]
        %v4497 = vld [vmem:[%s4484 + $0xe0] sm:$0xff]
        %v4498 = vld [vmem:[%s4484 + $0xf0] sm:$0xff]
        %v4499 = vld [vmem:[%s4484 + $0x100] sm:$0xff]
        %v4500 = vld [vmem:[%s4484 + $0x110] sm:$0xff]
        %v4501 = vld [vmem:[%s4484 + $0x140] sm:$0xff]
        %v4502 = vld [vmem:[%s4484 + $0x150] sm:$0xff]
        %v4503 = vld [vmem:[%s4484 + $0x160] sm:$0xff]
        %v4504 = vld [vmem:[%s4484 + $0x170] sm:$0xff]
        %v4505 = vld [vmem:[%s4484 + $0x180] sm:$0xff]
        %v4506 = vld [vmem:[%s4484 + $0x190] sm:$0xff]
        %v4507 = vld [vmem:[%s4484 + $0x1a0] sm:$0xff]
        %v4508 = vld [vmem:[%s4484 + $0x1b0] sm:$0xff]
        %v4509 = vld [vmem:[%s4484 + $0x1e0] sm:$0xff]
        %v4510 = vld [vmem:[%s4484 + $0x1f0] sm:$0xff]
        %v4511 = vld [vmem:[%s4484 + $0x200] sm:$0xff]
        %v4512 = vld [vmem:[%s4484 + $0x210] sm:$0xff]
        %v4513 = vld [vmem:[%s4484 + $0x220] sm:$0xff]
        %v4514 = vld [vmem:[%s4484 + $0x230] sm:$0xff]
        %v4515 = vld [vmem:[%s4484 + $0x240] sm:$0xff]
        %v4516 = vld [vmem:[%s4484 + $0x250] sm:$0xff]
        %v4517 = vpack.c.bf16 %v4486, %v4485
        %v4518 = vpack.c.bf16 %v4488, %v4487
        %v4519 = vpack.c.bf16 %v4490, %v4489
        %v4520 = vpack.c.bf16 %v4492, %v4491
        %v4521 = vpack.c.bf16 %v4494, %v4493
        %v4522 = vpack.c.bf16 %v4496, %v4495
        %v4523 = vpack.c.bf16 %v4498, %v4497
        %v4524 = vpack.c.bf16 %v4500, %v4499
        %v4525 = vpack.c.bf16 %v4502, %v4501
        %v4526 = vpack.c.bf16 %v4504, %v4503
        %v4527 = vpack.c.bf16 %v4506, %v4505
        %v4528 = vpack.c.bf16 %v4508, %v4507
        %v4529 = vpack.c.bf16 %v4510, %v4509
        %v4530 = vpack.c.bf16 %v4512, %v4511
        %v4531 = vpack.c.bf16 %v4514, %v4513
        %v4532 = vpack.c.bf16 %v4516, %v4515
        %v4533 = vld [vmem:[%s4484 + $0x1] sm:$0xff]
        %v4534 = vld [vmem:[%s4484 + $0x11] sm:$0xff]
        %v4535 = vld [vmem:[%s4484 + $0x21] sm:$0xff]
        %v4536 = vld [vmem:[%s4484 + $0x31] sm:$0xff]
        %v4537 = vld [vmem:[%s4484 + $0x41] sm:$0xff]
        %v4538 = vld [vmem:[%s4484 + $0x51] sm:$0xff]
        %v4539 = vld [vmem:[%s4484 + $0x61] sm:$0xff]
        %v4540 = vld [vmem:[%s4484 + $0x71] sm:$0xff]
        %v4541 = vld [vmem:[%s4484 + $0xa1] sm:$0xff]
        %v4542 = vld [vmem:[%s4484 + $0xb1] sm:$0xff]
        %v4543 = vld [vmem:[%s4484 + $0xc1] sm:$0xff]
        %v4544 = vld [vmem:[%s4484 + $0xd1] sm:$0xff]
        %v4545 = vld [vmem:[%s4484 + $0xe1] sm:$0xff]
        %v4546 = vld [vmem:[%s4484 + $0xf1] sm:$0xff]
        %v4547 = vld [vmem:[%s4484 + $0x101] sm:$0xff]
        %v4548 = vld [vmem:[%s4484 + $0x111] sm:$0xff]
        %v4549 = vld [vmem:[%s4484 + $0x141] sm:$0xff]
        %v4550 = vld [vmem:[%s4484 + $0x151] sm:$0xff]
        %v4551 = vld [vmem:[%s4484 + $0x161] sm:$0xff]
        %v4552 = vld [vmem:[%s4484 + $0x171] sm:$0xff]
        %v4553 = vld [vmem:[%s4484 + $0x181] sm:$0xff]
        %v4554 = vld [vmem:[%s4484 + $0x191] sm:$0xff]
        %v4555 = vld [vmem:[%s4484 + $0x1a1] sm:$0xff]
        %v4556 = vld [vmem:[%s4484 + $0x1b1] sm:$0xff]
        %v4557 = vld [vmem:[%s4484 + $0x1e1] sm:$0xff]
        %v4558 = vld [vmem:[%s4484 + $0x1f1] sm:$0xff]
        %v4559 = vld [vmem:[%s4484 + $0x201] sm:$0xff]
        %v4560 = vld [vmem:[%s4484 + $0x211] sm:$0xff]
        %v4561 = vld [vmem:[%s4484 + $0x221] sm:$0xff]
        %v4562 = vld [vmem:[%s4484 + $0x231] sm:$0xff]
        %v4563 = vld [vmem:[%s4484 + $0x241] sm:$0xff]
        %v4564 = vld [vmem:[%s4484 + $0x251] sm:$0xff]
        %v4565 = vpack.c.bf16 %v4534, %v4533
        %v4566 = vpack.c.bf16 %v4536, %v4535
        %v4567 = vpack.c.bf16 %v4538, %v4537
        %v4568 = vpack.c.bf16 %v4540, %v4539
        %v4569 = vpack.c.bf16 %v4542, %v4541
        %v4570 = vpack.c.bf16 %v4544, %v4543
        %v4571 = vpack.c.bf16 %v4546, %v4545
        %v4572 = vpack.c.bf16 %v4548, %v4547
        %v4573 = vpack.c.bf16 %v4550, %v4549
        %v4574 = vpack.c.bf16 %v4552, %v4551
        %v4575 = vpack.c.bf16 %v4554, %v4553
        %v4576 = vpack.c.bf16 %v4556, %v4555
        %v4577 = vpack.c.bf16 %v4558, %v4557
        %v4578 = vpack.c.bf16 %v4560, %v4559
        %v4579 = vpack.c.bf16 %v4562, %v4561
        %v4580 = vpack.c.bf16 %v4564, %v4563
        %v4581 = vld [vmem:[%s4484 + $0x2] sm:$0xff]
        %v4582 = vld [vmem:[%s4484 + $0x12] sm:$0xff]
        %v4583 = vld [vmem:[%s4484 + $0x22] sm:$0xff]
        %v4584 = vld [vmem:[%s4484 + $0x32] sm:$0xff]
        %v4585 = vld [vmem:[%s4484 + $0x42] sm:$0xff]
        %v4586 = vld [vmem:[%s4484 + $0x52] sm:$0xff]
        %v4587 = vld [vmem:[%s4484 + $0x62] sm:$0xff]
        %v4588 = vld [vmem:[%s4484 + $0x72] sm:$0xff]
        %v4589 = vld [vmem:[%s4484 + $0xa2] sm:$0xff]
        %v4590 = vld [vmem:[%s4484 + $0xb2] sm:$0xff]
        %v4591 = vld [vmem:[%s4484 + $0xc2] sm:$0xff]
        %v4592 = vld [vmem:[%s4484 + $0xd2] sm:$0xff]
        %v4593 = vld [vmem:[%s4484 + $0xe2] sm:$0xff]
        %v4594 = vld [vmem:[%s4484 + $0xf2] sm:$0xff]
        %v4595 = vld [vmem:[%s4484 + $0x102] sm:$0xff]
        %v4596 = vld [vmem:[%s4484 + $0x112] sm:$0xff]
        %v4597 = vld [vmem:[%s4484 + $0x142] sm:$0xff]
        %v4598 = vld [vmem:[%s4484 + $0x152] sm:$0xff]
        %v4599 = vld [vmem:[%s4484 + $0x162] sm:$0xff]
        %v4600 = vld [vmem:[%s4484 + $0x172] sm:$0xff]
        %v4601 = vld [vmem:[%s4484 + $0x182] sm:$0xff]
        %v4602 = vld [vmem:[%s4484 + $0x192] sm:$0xff]
        %v4603 = vld [vmem:[%s4484 + $0x1a2] sm:$0xff]
        %v4604 = vld [vmem:[%s4484 + $0x1b2] sm:$0xff]
        %v4605 = vld [vmem:[%s4484 + $0x1e2] sm:$0xff]
        %v4606 = vld [vmem:[%s4484 + $0x1f2] sm:$0xff]
        %v4607 = vld [vmem:[%s4484 + $0x202] sm:$0xff]
        %v4608 = vld [vmem:[%s4484 + $0x212] sm:$0xff]
        %v4609 = vld [vmem:[%s4484 + $0x222] sm:$0xff]
        %v4610 = vld [vmem:[%s4484 + $0x232] sm:$0xff]
        %v4611 = vld [vmem:[%s4484 + $0x242] sm:$0xff]
        %v4612 = vld [vmem:[%s4484 + $0x252] sm:$0xff]
        %v4613 = vpack.c.bf16 %v4582, %v4581
        %v4614 = vpack.c.bf16 %v4584, %v4583
        %v4615 = vpack.c.bf16 %v4586, %v4585
        %v4616 = vpack.c.bf16 %v4588, %v4587
        %v4617 = vpack.c.bf16 %v4590, %v4589
        %v4618 = vpack.c.bf16 %v4592, %v4591
        %v4619 = vpack.c.bf16 %v4594, %v4593
        %v4620 = vpack.c.bf16 %v4596, %v4595
        %v4621 = vpack.c.bf16 %v4598, %v4597
        %v4622 = vpack.c.bf16 %v4600, %v4599
        %v4623 = vpack.c.bf16 %v4602, %v4601
        %v4624 = vpack.c.bf16 %v4604, %v4603
        %v4625 = vpack.c.bf16 %v4606, %v4605
        %v4626 = vpack.c.bf16 %v4608, %v4607
        %v4627 = vpack.c.bf16 %v4610, %v4609
        %v4628 = vpack.c.bf16 %v4612, %v4611
        %s4629 = scalar_lea.vmem [#allocation2], 352
        %v4630 = vld [vmem:[%s4629] sm:$0xff]
        %v4631 = vld [vmem:[%s4629 + $0x10] sm:$0xff]
        %v4632 = vld [vmem:[%s4629 + $0x20] sm:$0xff]
        %v4633 = vld [vmem:[%s4629 + $0x30] sm:$0xff]
        %v4634 = vld [vmem:[%s4629 + $0x40] sm:$0xff]
        %v4635 = vld [vmem:[%s4629 + $0x50] sm:$0xff]
        %v4636 = vld [vmem:[%s4629 + $0x60] sm:$0xff]
        %v4637 = vld [vmem:[%s4629 + $0x70] sm:$0xff]
        %v4638 = vld [vmem:[%s4629 + $0xa0] sm:$0xff]
        %v4639 = vld [vmem:[%s4629 + $0xb0] sm:$0xff]
        %v4640 = vld [vmem:[%s4629 + $0xc0] sm:$0xff]
        %v4641 = vld [vmem:[%s4629 + $0xd0] sm:$0xff]
        %v4642 = vld [vmem:[%s4629 + $0xe0] sm:$0xff]
        %v4643 = vld [vmem:[%s4629 + $0xf0] sm:$0xff]
        %v4644 = vld [vmem:[%s4629 + $0x100] sm:$0xff]
        %v4645 = vld [vmem:[%s4629 + $0x110] sm:$0xff]
        %v4646 = vld [vmem:[%s4629 + $0x140] sm:$0xff]
        %v4647 = vld [vmem:[%s4629 + $0x150] sm:$0xff]
        %v4648 = vld [vmem:[%s4629 + $0x160] sm:$0xff]
        %v4649 = vld [vmem:[%s4629 + $0x170] sm:$0xff]
        %v4650 = vld [vmem:[%s4629 + $0x180] sm:$0xff]
        %v4651 = vld [vmem:[%s4629 + $0x190] sm:$0xff]
        %v4652 = vld [vmem:[%s4629 + $0x1a0] sm:$0xff]
        %v4653 = vld [vmem:[%s4629 + $0x1b0] sm:$0xff]
        %v4654 = vld [vmem:[%s4629 + $0x1e0] sm:$0xff]
        %v4655 = vld [vmem:[%s4629 + $0x1f0] sm:$0xff]
        %v4656 = vld [vmem:[%s4629 + $0x200] sm:$0xff]
        %v4657 = vld [vmem:[%s4629 + $0x210] sm:$0xff]
        %v4658 = vld [vmem:[%s4629 + $0x220] sm:$0xff]
        %v4659 = vld [vmem:[%s4629 + $0x230] sm:$0xff]
        %v4660 = vld [vmem:[%s4629 + $0x240] sm:$0xff]
        %v4661 = vld [vmem:[%s4629 + $0x250] sm:$0xff]
        %v4662 = vpack.c.bf16 %v4631, %v4630
        %v4663 = vpack.c.bf16 %v4633, %v4632
        %v4664 = vpack.c.bf16 %v4635, %v4634
        %v4665 = vpack.c.bf16 %v4637, %v4636
        %v4666 = vpack.c.bf16 %v4639, %v4638
        %v4667 = vpack.c.bf16 %v4641, %v4640
        %v4668 = vpack.c.bf16 %v4643, %v4642
        %v4669 = vpack.c.bf16 %v4645, %v4644
        %v4670 = vpack.c.bf16 %v4647, %v4646
        %v4671 = vpack.c.bf16 %v4649, %v4648
        %v4672 = vpack.c.bf16 %v4651, %v4650
        %v4673 = vpack.c.bf16 %v4653, %v4652
        %v4674 = vpack.c.bf16 %v4655, %v4654
        %v4675 = vpack.c.bf16 %v4657, %v4656
        %v4676 = vpack.c.bf16 %v4659, %v4658
        %v4677 = vpack.c.bf16 %v4661, %v4660
        %v4678 = vld [vmem:[%s4629 + $0x1] sm:$0xff]
        %v4679 = vld [vmem:[%s4629 + $0x11] sm:$0xff]
        %v4680 = vld [vmem:[%s4629 + $0x21] sm:$0xff]
        %v4681 = vld [vmem:[%s4629 + $0x31] sm:$0xff]
        %v4682 = vld [vmem:[%s4629 + $0x41] sm:$0xff]
        %v4683 = vld [vmem:[%s4629 + $0x51] sm:$0xff]
        %v4684 = vld [vmem:[%s4629 + $0x61] sm:$0xff]
        %v4685 = vld [vmem:[%s4629 + $0x71] sm:$0xff]
        %v4686 = vld [vmem:[%s4629 + $0xa1] sm:$0xff]
        %v4687 = vld [vmem:[%s4629 + $0xb1] sm:$0xff]
        %v4688 = vld [vmem:[%s4629 + $0xc1] sm:$0xff]
        %v4689 = vld [vmem:[%s4629 + $0xd1] sm:$0xff]
        %v4690 = vld [vmem:[%s4629 + $0xe1] sm:$0xff]
        %v4691 = vld [vmem:[%s4629 + $0xf1] sm:$0xff]
        %v4692 = vld [vmem:[%s4629 + $0x101] sm:$0xff]
        %v4693 = vld [vmem:[%s4629 + $0x111] sm:$0xff]
        %v4694 = vld [vmem:[%s4629 + $0x141] sm:$0xff]
        %v4695 = vld [vmem:[%s4629 + $0x151] sm:$0xff]
        %v4696 = vld [vmem:[%s4629 + $0x161] sm:$0xff]
        %v4697 = vld [vmem:[%s4629 + $0x171] sm:$0xff]
        %v4698 = vld [vmem:[%s4629 + $0x181] sm:$0xff]
        %v4699 = vld [vmem:[%s4629 + $0x191] sm:$0xff]
        %v4700 = vld [vmem:[%s4629 + $0x1a1] sm:$0xff]
        %v4701 = vld [vmem:[%s4629 + $0x1b1] sm:$0xff]
        %v4702 = vld [vmem:[%s4629 + $0x1e1] sm:$0xff]
        %v4703 = vld [vmem:[%s4629 + $0x1f1] sm:$0xff]
        %v4704 = vld [vmem:[%s4629 + $0x201] sm:$0xff]
        %v4705 = vld [vmem:[%s4629 + $0x211] sm:$0xff]
        %v4706 = vld [vmem:[%s4629 + $0x221] sm:$0xff]
        %v4707 = vld [vmem:[%s4629 + $0x231] sm:$0xff]
        %v4708 = vld [vmem:[%s4629 + $0x241] sm:$0xff]
        %v4709 = vld [vmem:[%s4629 + $0x251] sm:$0xff]
        %v4710 = vpack.c.bf16 %v4679, %v4678
        %v4711 = vpack.c.bf16 %v4681, %v4680
        %v4712 = vpack.c.bf16 %v4683, %v4682
        %v4713 = vpack.c.bf16 %v4685, %v4684
        %v4714 = vpack.c.bf16 %v4687, %v4686
        %v4715 = vpack.c.bf16 %v4689, %v4688
        %v4716 = vpack.c.bf16 %v4691, %v4690
        %v4717 = vpack.c.bf16 %v4693, %v4692
        %v4718 = vpack.c.bf16 %v4695, %v4694
        %v4719 = vpack.c.bf16 %v4697, %v4696
        %v4720 = vpack.c.bf16 %v4699, %v4698
        %v4721 = vpack.c.bf16 %v4701, %v4700
        %v4722 = vpack.c.bf16 %v4703, %v4702
        %v4723 = vpack.c.bf16 %v4705, %v4704
        %v4724 = vpack.c.bf16 %v4707, %v4706
        %v4725 = vpack.c.bf16 %v4709, %v4708
        %v4726 = vld [vmem:[%s4629 + $0x2] sm:$0xff]
        %v4727 = vld [vmem:[%s4629 + $0x12] sm:$0xff]
        %v4728 = vld [vmem:[%s4629 + $0x22] sm:$0xff]
        %v4729 = vld [vmem:[%s4629 + $0x32] sm:$0xff]
        %v4730 = vld [vmem:[%s4629 + $0x42] sm:$0xff]
        %v4731 = vld [vmem:[%s4629 + $0x52] sm:$0xff]
        %v4732 = vld [vmem:[%s4629 + $0x62] sm:$0xff]
        %v4733 = vld [vmem:[%s4629 + $0x72] sm:$0xff]
        %v4734 = vld [vmem:[%s4629 + $0xa2] sm:$0xff]
        %v4735 = vld [vmem:[%s4629 + $0xb2] sm:$0xff]
        %v4736 = vld [vmem:[%s4629 + $0xc2] sm:$0xff]
        %v4737 = vld [vmem:[%s4629 + $0xd2] sm:$0xff]
        %v4738 = vld [vmem:[%s4629 + $0xe2] sm:$0xff]
        %v4739 = vld [vmem:[%s4629 + $0xf2] sm:$0xff]
        %v4740 = vld [vmem:[%s4629 + $0x102] sm:$0xff]
        %v4741 = vld [vmem:[%s4629 + $0x112] sm:$0xff]
        %v4742 = vld [vmem:[%s4629 + $0x142] sm:$0xff]
        %v4743 = vld [vmem:[%s4629 + $0x152] sm:$0xff]
        %v4744 = vld [vmem:[%s4629 + $0x162] sm:$0xff]
        %v4745 = vld [vmem:[%s4629 + $0x172] sm:$0xff]
        %v4746 = vld [vmem:[%s4629 + $0x182] sm:$0xff]
        %v4747 = vld [vmem:[%s4629 + $0x192] sm:$0xff]
        %v4748 = vld [vmem:[%s4629 + $0x1a2] sm:$0xff]
        %v4749 = vld [vmem:[%s4629 + $0x1b2] sm:$0xff]
        %v4750 = vld [vmem:[%s4629 + $0x1e2] sm:$0xff]
        %v4751 = vld [vmem:[%s4629 + $0x1f2] sm:$0xff]
        %v4752 = vld [vmem:[%s4629 + $0x202] sm:$0xff]
        %v4753 = vld [vmem:[%s4629 + $0x212] sm:$0xff]
        %v4754 = vld [vmem:[%s4629 + $0x222] sm:$0xff]
        %v4755 = vld [vmem:[%s4629 + $0x232] sm:$0xff]
        %v4756 = vld [vmem:[%s4629 + $0x242] sm:$0xff]
        %v4757 = vld [vmem:[%s4629 + $0x252] sm:$0xff]
        %v4758 = vpack.c.bf16 %v4727, %v4726
        %v4759 = vpack.c.bf16 %v4729, %v4728
        %v4760 = vpack.c.bf16 %v4731, %v4730
        %v4761 = vpack.c.bf16 %v4733, %v4732
        %v4762 = vpack.c.bf16 %v4735, %v4734
        %v4763 = vpack.c.bf16 %v4737, %v4736
        %v4764 = vpack.c.bf16 %v4739, %v4738
        %v4765 = vpack.c.bf16 %v4741, %v4740
        %v4766 = vpack.c.bf16 %v4743, %v4742
        %v4767 = vpack.c.bf16 %v4745, %v4744
        %v4768 = vpack.c.bf16 %v4747, %v4746
        %v4769 = vpack.c.bf16 %v4749, %v4748
        %v4770 = vpack.c.bf16 %v4751, %v4750
        %v4771 = vpack.c.bf16 %v4753, %v4752
        %v4772 = vpack.c.bf16 %v4755, %v4754
        %v4773 = vpack.c.bf16 %v4757, %v4756
        %s4774 = scalar_lea.vmem [#allocation3], 1152
        %v4775 = vld [vmem:[%s4774] sm:$0xf]
        %v4776 = vld [vmem:[%s4774 + $0x4] sm:$0xf]
        %v4777 = vld [vmem:[%s4774 + $0x8] sm:$0xf]
        %v4778 = vld [vmem:[%s4774 + $0xc] sm:$0xf]
        %v4779 = vld [vmem:[%s4774 + $0x10] sm:$0xf]
        %v4780 = vld [vmem:[%s4774 + $0x14] sm:$0xf]
        %v4781 = vld [vmem:[%s4774 + $0x18] sm:$0xf]
        %v4782 = vld [vmem:[%s4774 + $0x1c] sm:$0xf]
        %v4783 = vld [vmem:[%s4774 + $0x20] sm:$0xf]
        %v4784 = vld [vmem:[%s4774 + $0x24] sm:$0xf]
        %v4785 = vld [vmem:[%s4774 + $0x28] sm:$0xf]
        %v4786 = vld [vmem:[%s4774 + $0x2c] sm:$0xf]
        %v4787 = vld [vmem:[%s4774 + $0x30] sm:$0xf]
        %v4788 = vld [vmem:[%s4774 + $0x34] sm:$0xf]
        %v4789 = vld [vmem:[%s4774 + $0x38] sm:$0xf]
        %v4790 = vld [vmem:[%s4774 + $0x3c] sm:$0xf]
        %v4791 = vld [vmem:[%s4774 + $0x40] sm:$0xf]
        %v4792 = vld [vmem:[%s4774 + $0x44] sm:$0xf]
        %v4793 = vld [vmem:[%s4774 + $0x48] sm:$0xf]
        %v4794 = vld [vmem:[%s4774 + $0x4c] sm:$0xf]
        %v4795 = vld [vmem:[%s4774 + $0x50] sm:$0xf]
        %v4796 = vld [vmem:[%s4774 + $0x54] sm:$0xf]
        %v4797 = vld [vmem:[%s4774 + $0x58] sm:$0xf]
        %v4798 = vld [vmem:[%s4774 + $0x5c] sm:$0xf]
        %v4799 = vld [vmem:[%s4774 + $0x60] sm:$0xf]
        %v4800 = vld [vmem:[%s4774 + $0x64] sm:$0xf]
        %v4801 = vld [vmem:[%s4774 + $0x68] sm:$0xf]
        %v4802 = vld [vmem:[%s4774 + $0x6c] sm:$0xf]
        %v4803 = vld [vmem:[%s4774 + $0x70] sm:$0xf]
        %v4804 = vld [vmem:[%s4774 + $0x74] sm:$0xf]
        %v4805 = vld [vmem:[%s4774 + $0x78] sm:$0xf]
        %v4806 = vld [vmem:[%s4774 + $0x7c] sm:$0xf]
        %v4807 = vld [vmem:[%s4774 + $0x80] sm:$0xf]
        %v4808 = vld [vmem:[%s4774 + $0x84] sm:$0xf]
        %v4809 = vld [vmem:[%s4774 + $0x88] sm:$0xf]
        %v4810 = vld [vmem:[%s4774 + $0x8c] sm:$0xf]
        %v4811 = vld [vmem:[%s4774 + $0x90] sm:$0xf]
        %v4812 = vld [vmem:[%s4774 + $0x94] sm:$0xf]
        %v4813 = vld [vmem:[%s4774 + $0x98] sm:$0xf]
        %v4814 = vld [vmem:[%s4774 + $0x9c] sm:$0xf]
        %v4815 = vld [vmem:[%s4774 + $0xa0] sm:$0xf]
        %v4816 = vld [vmem:[%s4774 + $0xa4] sm:$0xf]
        %v4817 = vld [vmem:[%s4774 + $0xa8] sm:$0xf]
        %v4818 = vld [vmem:[%s4774 + $0xac] sm:$0xf]
        %v4819 = vld [vmem:[%s4774 + $0xb0] sm:$0xf]
        %v4820 = vld [vmem:[%s4774 + $0xb4] sm:$0xf]
        %v4821 = vld [vmem:[%s4774 + $0xb8] sm:$0xf]
        %v4822 = vld [vmem:[%s4774 + $0xbc] sm:$0xf]
        %v4823 = vld [vmem:[%s4774 + $0xc0] sm:$0xf]
        %v4824 = vld [vmem:[%s4774 + $0xc4] sm:$0xf]
        %v4825 = vld [vmem:[%s4774 + $0xc8] sm:$0xf]
        %v4826 = vld [vmem:[%s4774 + $0xcc] sm:$0xf]
        %v4827 = vld [vmem:[%s4774 + $0xd0] sm:$0xf]
        %v4828 = vld [vmem:[%s4774 + $0xd4] sm:$0xf]
        %v4829 = vld [vmem:[%s4774 + $0xd8] sm:$0xf]
        %v4830 = vld [vmem:[%s4774 + $0xdc] sm:$0xf]
        %v4831 = vld [vmem:[%s4774 + $0xe0] sm:$0xf]
        %v4832 = vld [vmem:[%s4774 + $0xe4] sm:$0xf]
        %v4833 = vld [vmem:[%s4774 + $0xe8] sm:$0xf]
        %v4834 = vld [vmem:[%s4774 + $0xec] sm:$0xf]
        %v4835 = vld [vmem:[%s4774 + $0xf0] sm:$0xf]
        %v4836 = vld [vmem:[%s4774 + $0xf4] sm:$0xf]
        %v4837 = vld [vmem:[%s4774 + $0xf8] sm:$0xf]
        %v4838 = vld [vmem:[%s4774 + $0xfc] sm:$0xf]
        %v4839 = vld [vmem:[%s4774 + $0x100] sm:$0xf]
        %v4840 = vld [vmem:[%s4774 + $0x104] sm:$0xf]
        %v4841 = vld [vmem:[%s4774 + $0x108] sm:$0xf]
        %v4842 = vld [vmem:[%s4774 + $0x10c] sm:$0xf]
        %v4843 = vld [vmem:[%s4774 + $0x110] sm:$0xf]
        %v4844 = vld [vmem:[%s4774 + $0x114] sm:$0xf]
        %v4845 = vld [vmem:[%s4774 + $0x118] sm:$0xf]
        %v4846 = vld [vmem:[%s4774 + $0x11c] sm:$0xf]
        %v4847 = vld [vmem:[%s4774 + $0x120] sm:$0xf]
        %v4848 = vld [vmem:[%s4774 + $0x124] sm:$0xf]
        %v4849 = vld [vmem:[%s4774 + $0x128] sm:$0xf]
        %v4850 = vld [vmem:[%s4774 + $0x12c] sm:$0xf]
        %v4851 = vld [vmem:[%s4774 + $0x130] sm:$0xf]
        %v4852 = vld [vmem:[%s4774 + $0x134] sm:$0xf]
        %v4853 = vld [vmem:[%s4774 + $0x138] sm:$0xf]
        %v4854 = vld [vmem:[%s4774 + $0x13c] sm:$0xf]
        %v4855 = vld [vmem:[%s4774 + $0x140] sm:$0xf]
        %v4856 = vld [vmem:[%s4774 + $0x144] sm:$0xf]
        %v4857 = vld [vmem:[%s4774 + $0x148] sm:$0xf]
        %v4858 = vld [vmem:[%s4774 + $0x14c] sm:$0xf]
        %v4859 = vld [vmem:[%s4774 + $0x150] sm:$0xf]
        %v4860 = vld [vmem:[%s4774 + $0x154] sm:$0xf]
        %v4861 = vld [vmem:[%s4774 + $0x158] sm:$0xf]
        %v4862 = vld [vmem:[%s4774 + $0x15c] sm:$0xf]
        %v4863 = vld [vmem:[%s4774 + $0x160] sm:$0xf]
        %v4864 = vld [vmem:[%s4774 + $0x164] sm:$0xf]
        %v4865 = vld [vmem:[%s4774 + $0x168] sm:$0xf]
        %v4866 = vld [vmem:[%s4774 + $0x16c] sm:$0xf]
        %v4867 = vld [vmem:[%s4774 + $0x170] sm:$0xf]
        %v4868 = vld [vmem:[%s4774 + $0x174] sm:$0xf]
        %v4869 = vld [vmem:[%s4774 + $0x178] sm:$0xf]
        %v4870 = vld [vmem:[%s4774 + $0x17c] sm:$0xf]
        %v4871 = vld [vmem:[%s4774 + $0x180] sm:$0xf]
        %v4872 = vld [vmem:[%s4774 + $0x184] sm:$0xf]
        %v4873 = vld [vmem:[%s4774 + $0x188] sm:$0xf]
        %v4874 = vld [vmem:[%s4774 + $0x18c] sm:$0xf]
        %v4875 = vld [vmem:[%s4774 + $0x190] sm:$0xf]
        %v4876 = vld [vmem:[%s4774 + $0x194] sm:$0xf]
        %v4877 = vld [vmem:[%s4774 + $0x198] sm:$0xf]
        %v4878 = vld [vmem:[%s4774 + $0x19c] sm:$0xf]
        %v4879 = vld [vmem:[%s4774 + $0x1a0] sm:$0xf]
        %v4880 = vld [vmem:[%s4774 + $0x1a4] sm:$0xf]
        %v4881 = vld [vmem:[%s4774 + $0x1a8] sm:$0xf]
        %v4882 = vld [vmem:[%s4774 + $0x1ac] sm:$0xf]
        %v4883 = vld [vmem:[%s4774 + $0x1b0] sm:$0xf]
        %v4884 = vld [vmem:[%s4774 + $0x1b4] sm:$0xf]
        %v4885 = vld [vmem:[%s4774 + $0x1b8] sm:$0xf]
        %v4886 = vld [vmem:[%s4774 + $0x1bc] sm:$0xf]
        %v4887 = vld [vmem:[%s4774 + $0x1c0] sm:$0xf]
        %v4888 = vld [vmem:[%s4774 + $0x1c4] sm:$0xf]
        %v4889 = vld [vmem:[%s4774 + $0x1c8] sm:$0xf]
        %v4890 = vld [vmem:[%s4774 + $0x1cc] sm:$0xf]
        %v4891 = vld [vmem:[%s4774 + $0x1d0] sm:$0xf]
        %v4892 = vld [vmem:[%s4774 + $0x1d4] sm:$0xf]
        %v4893 = vld [vmem:[%s4774 + $0x1d8] sm:$0xf]
        %v4894 = vld [vmem:[%s4774 + $0x1dc] sm:$0xf]
        %v4895 = vld [vmem:[%s4774 + $0x1e0] sm:$0xf]
        %v4896 = vld [vmem:[%s4774 + $0x1e4] sm:$0xf]
        %v4897 = vld [vmem:[%s4774 + $0x1e8] sm:$0xf]
        %v4898 = vld [vmem:[%s4774 + $0x1ec] sm:$0xf]
        %v4899 = vld [vmem:[%s4774 + $0x1f0] sm:$0xf]
        %v4900 = vld [vmem:[%s4774 + $0x1f4] sm:$0xf]
        %v4901 = vld [vmem:[%s4774 + $0x1f8] sm:$0xf]
        %v4902 = vld [vmem:[%s4774 + $0x1fc] sm:$0xf]
        %v4903 = vld [vmem:[%s4774 + $0x200] sm:$0xf]
        %v4904 = vld [vmem:[%s4774 + $0x204] sm:$0xf]
        %v4905 = vld [vmem:[%s4774 + $0x208] sm:$0xf]
        %v4906 = vld [vmem:[%s4774 + $0x20c] sm:$0xf]
        %v4907 = vld [vmem:[%s4774 + $0x210] sm:$0xf]
        %v4908 = vld [vmem:[%s4774 + $0x214] sm:$0xf]
        %v4909 = vld [vmem:[%s4774 + $0x218] sm:$0xf]
        %v4910 = vld [vmem:[%s4774 + $0x21c] sm:$0xf]
        %v4911 = vld [vmem:[%s4774 + $0x220] sm:$0xf]
        %v4912 = vld [vmem:[%s4774 + $0x224] sm:$0xf]
        %v4913 = vld [vmem:[%s4774 + $0x228] sm:$0xf]
        %v4914 = vld [vmem:[%s4774 + $0x22c] sm:$0xf]
        %v4915 = vld [vmem:[%s4774 + $0x230] sm:$0xf]
        %v4916 = vld [vmem:[%s4774 + $0x234] sm:$0xf]
        %v4917 = vld [vmem:[%s4774 + $0x238] sm:$0xf]
        %v4918 = vld [vmem:[%s4774 + $0x23c] sm:$0xf]
        %v5063 = vunpack.c.l.b16 %v4775
        %v5064 = vunpack.c.l.b16 %v4776
        %v5065 = vunpack.c.l.b16 %v4777
        %v5066 = vunpack.c.l.b16 %v4778
        %v5067 = vunpack.c.l.b16 %v4779
        %v5068 = vunpack.c.l.b16 %v4780
        %v5069 = vunpack.c.l.b16 %v4781
        %v5070 = vunpack.c.l.b16 %v4782
        %v5071 = vunpack.c.l.b16 %v4783
        %v5072 = vunpack.c.l.b16 %v4784
        %v5073 = vunpack.c.l.b16 %v4785
        %v5074 = vunpack.c.l.b16 %v4786
        %v5075 = vunpack.c.l.b16 %v4787
        %v5076 = vunpack.c.l.b16 %v4788
        %v5077 = vunpack.c.l.b16 %v4789
        %v5078 = vunpack.c.l.b16 %v4790
        %v5079 = vunpack.c.l.b16 %v4791
        %v5080 = vunpack.c.l.b16 %v4792
        %v5081 = vunpack.c.l.b16 %v4793
        %v5082 = vunpack.c.l.b16 %v4794
        %v5083 = vunpack.c.l.b16 %v4795
        %v5084 = vunpack.c.l.b16 %v4796
        %v5085 = vunpack.c.l.b16 %v4797
        %v5086 = vunpack.c.l.b16 %v4798
        %v5087 = vunpack.c.l.b16 %v4799
        %v5088 = vunpack.c.l.b16 %v4800
        %v5089 = vunpack.c.l.b16 %v4801
        %v5090 = vunpack.c.l.b16 %v4802
        %v5091 = vunpack.c.l.b16 %v4803
        %v5092 = vunpack.c.l.b16 %v4804
        %v5093 = vunpack.c.l.b16 %v4805
        %v5094 = vunpack.c.l.b16 %v4806
        %v5095 = vunpack.c.l.b16 %v4807
        %v5096 = vunpack.c.l.b16 %v4808
        %v5097 = vunpack.c.l.b16 %v4809
        %v5098 = vunpack.c.l.b16 %v4810
        %v5099 = vunpack.c.l.b16 %v4811
        %v5100 = vunpack.c.l.b16 %v4812
        %v5101 = vunpack.c.l.b16 %v4813
        %v5102 = vunpack.c.l.b16 %v4814
        %v5103 = vunpack.c.l.b16 %v4815
        %v5104 = vunpack.c.l.b16 %v4816
        %v5105 = vunpack.c.l.b16 %v4817
        %v5106 = vunpack.c.l.b16 %v4818
        %v5107 = vunpack.c.l.b16 %v4819
        %v5108 = vunpack.c.l.b16 %v4820
        %v5109 = vunpack.c.l.b16 %v4821
        %v5110 = vunpack.c.l.b16 %v4822
        %v5111 = vunpack.c.l.b16 %v4823
        %v5112 = vunpack.c.l.b16 %v4824
        %v5113 = vunpack.c.l.b16 %v4825
        %v5114 = vunpack.c.l.b16 %v4826
        %v5115 = vunpack.c.l.b16 %v4827
        %v5116 = vunpack.c.l.b16 %v4828
        %v5117 = vunpack.c.l.b16 %v4829
        %v5118 = vunpack.c.l.b16 %v4830
        %v5119 = vunpack.c.l.b16 %v4831
        %v5120 = vunpack.c.l.b16 %v4832
        %v5121 = vunpack.c.l.b16 %v4833
        %v5122 = vunpack.c.l.b16 %v4834
        %v5123 = vunpack.c.l.b16 %v4835
        %v5124 = vunpack.c.l.b16 %v4836
        %v5125 = vunpack.c.l.b16 %v4837
        %v5126 = vunpack.c.l.b16 %v4838
        %v5127 = vunpack.c.l.b16 %v4839
        %v5128 = vunpack.c.l.b16 %v4840
        %v5129 = vunpack.c.l.b16 %v4841
        %v5130 = vunpack.c.l.b16 %v4842
        %v5131 = vunpack.c.l.b16 %v4843
        %v5132 = vunpack.c.l.b16 %v4844
        %v5133 = vunpack.c.l.b16 %v4845
        %v5134 = vunpack.c.l.b16 %v4846
        %v5135 = vunpack.c.l.b16 %v4847
        %v5136 = vunpack.c.l.b16 %v4848
        %v5137 = vunpack.c.l.b16 %v4849
        %v5138 = vunpack.c.l.b16 %v4850
        %v5139 = vunpack.c.l.b16 %v4851
        %v5140 = vunpack.c.l.b16 %v4852
        %v5141 = vunpack.c.l.b16 %v4853
        %v5142 = vunpack.c.l.b16 %v4854
        %v5143 = vunpack.c.l.b16 %v4855
        %v5144 = vunpack.c.l.b16 %v4856
        %v5145 = vunpack.c.l.b16 %v4857
        %v5146 = vunpack.c.l.b16 %v4858
        %v5147 = vunpack.c.l.b16 %v4859
        %v5148 = vunpack.c.l.b16 %v4860
        %v5149 = vunpack.c.l.b16 %v4861
        %v5150 = vunpack.c.l.b16 %v4862
        %v5151 = vunpack.c.l.b16 %v4863
        %v5152 = vunpack.c.l.b16 %v4864
        %v5153 = vunpack.c.l.b16 %v4865
        %v5154 = vunpack.c.l.b16 %v4866
        %v5155 = vunpack.c.l.b16 %v4867
        %v5156 = vunpack.c.l.b16 %v4868
        %v5157 = vunpack.c.l.b16 %v4869
        %v5158 = vunpack.c.l.b16 %v4870
        %v5159 = vunpack.c.l.b16 %v4871
        %v5160 = vunpack.c.l.b16 %v4872
        %v5161 = vunpack.c.l.b16 %v4873
        %v5162 = vunpack.c.l.b16 %v4874
        %v5163 = vunpack.c.l.b16 %v4875
        %v5164 = vunpack.c.l.b16 %v4876
        %v5165 = vunpack.c.l.b16 %v4877
        %v5166 = vunpack.c.l.b16 %v4878
        %v5167 = vunpack.c.l.b16 %v4879
        %v5168 = vunpack.c.l.b16 %v4880
        %v5169 = vunpack.c.l.b16 %v4881
        %v5170 = vunpack.c.l.b16 %v4882
        %v5171 = vunpack.c.l.b16 %v4883
        %v5172 = vunpack.c.l.b16 %v4884
        %v5173 = vunpack.c.l.b16 %v4885
        %v5174 = vunpack.c.l.b16 %v4886
        %v5175 = vunpack.c.l.b16 %v4887
        %v5176 = vunpack.c.l.b16 %v4888
        %v5177 = vunpack.c.l.b16 %v4889
        %v5178 = vunpack.c.l.b16 %v4890
        %v5179 = vunpack.c.l.b16 %v4891
        %v5180 = vunpack.c.l.b16 %v4892
        %v5181 = vunpack.c.l.b16 %v4893
        %v5182 = vunpack.c.l.b16 %v4894
        %v5183 = vunpack.c.l.b16 %v4895
        %v5184 = vunpack.c.l.b16 %v4896
        %v5185 = vunpack.c.l.b16 %v4897
        %v5186 = vunpack.c.l.b16 %v4898
        %v5187 = vunpack.c.l.b16 %v4899
        %v5188 = vunpack.c.l.b16 %v4900
        %v5189 = vunpack.c.l.b16 %v4901
        %v5190 = vunpack.c.l.b16 %v4902
        %v5191 = vunpack.c.l.b16 %v4903
        %v5192 = vunpack.c.l.b16 %v4904
        %v5193 = vunpack.c.l.b16 %v4905
        %v5194 = vunpack.c.l.b16 %v4906
        %v5195 = vunpack.c.l.b16 %v4907
        %v5196 = vunpack.c.l.b16 %v4908
        %v5197 = vunpack.c.l.b16 %v4909
        %v5198 = vunpack.c.l.b16 %v4910
        %v5199 = vunpack.c.l.b16 %v4911
        %v5200 = vunpack.c.l.b16 %v4912
        %v5201 = vunpack.c.l.b16 %v4913
        %v5202 = vunpack.c.l.b16 %v4914
        %v5203 = vunpack.c.l.b16 %v4915
        %v5204 = vunpack.c.l.b16 %v4916
        %v5205 = vunpack.c.l.b16 %v4917
        %v5206 = vunpack.c.l.b16 %v4918
        %v5207 = vpack.c.b16 %v5064, %v5063
        %v5208 = vpack.c.b16 %v5066, %v5065
        %v5209 = vpack.c.b16 %v5068, %v5067
        %v5210 = vpack.c.b16 %v5070, %v5069
        %v5211 = vpack.c.b16 %v5072, %v5071
        %v5212 = vpack.c.b16 %v5074, %v5073
        %v5213 = vpack.c.b16 %v5076, %v5075
        %v5214 = vpack.c.b16 %v5078, %v5077
        %v5215 = vpack.c.b16 %v5080, %v5079
        %v5216 = vpack.c.b16 %v5082, %v5081
        %v5217 = vpack.c.b16 %v5084, %v5083
        %v5218 = vpack.c.b16 %v5086, %v5085
        %v5219 = vpack.c.b16 %v5088, %v5087
        %v5220 = vpack.c.b16 %v5090, %v5089
        %v5221 = vpack.c.b16 %v5092, %v5091
        %v5222 = vpack.c.b16 %v5094, %v5093
        %v5223 = vpack.c.b16 %v5096, %v5095
        %v5224 = vpack.c.b16 %v5098, %v5097
        %v5225 = vpack.c.b16 %v5100, %v5099
        %v5226 = vpack.c.b16 %v5102, %v5101
        %v5227 = vpack.c.b16 %v5104, %v5103
        %v5228 = vpack.c.b16 %v5106, %v5105
        %v5229 = vpack.c.b16 %v5108, %v5107
        %v5230 = vpack.c.b16 %v5110, %v5109
        %v5231 = vpack.c.b16 %v5112, %v5111
        %v5232 = vpack.c.b16 %v5114, %v5113
        %v5233 = vpack.c.b16 %v5116, %v5115
        %v5234 = vpack.c.b16 %v5118, %v5117
        %v5235 = vpack.c.b16 %v5120, %v5119
        %v5236 = vpack.c.b16 %v5122, %v5121
        %v5237 = vpack.c.b16 %v5124, %v5123
        %v5238 = vpack.c.b16 %v5126, %v5125
        %v5239 = vpack.c.b16 %v5128, %v5127
        %v5240 = vpack.c.b16 %v5130, %v5129
        %v5241 = vpack.c.b16 %v5132, %v5131
        %v5242 = vpack.c.b16 %v5134, %v5133
        %v5243 = vpack.c.b16 %v5136, %v5135
        %v5244 = vpack.c.b16 %v5138, %v5137
        %v5245 = vpack.c.b16 %v5140, %v5139
        %v5246 = vpack.c.b16 %v5142, %v5141
        %v5247 = vpack.c.b16 %v5144, %v5143
        %v5248 = vpack.c.b16 %v5146, %v5145
        %v5249 = vpack.c.b16 %v5148, %v5147
        %v5250 = vpack.c.b16 %v5150, %v5149
        %v5251 = vpack.c.b16 %v5152, %v5151
        %v5252 = vpack.c.b16 %v5154, %v5153
        %v5253 = vpack.c.b16 %v5156, %v5155
        %v5254 = vpack.c.b16 %v5158, %v5157
        %v5255 = vpack.c.b16 %v5160, %v5159
        %v5256 = vpack.c.b16 %v5162, %v5161
        %v5257 = vpack.c.b16 %v5164, %v5163
        %v5258 = vpack.c.b16 %v5166, %v5165
        %v5259 = vpack.c.b16 %v5168, %v5167
        %v5260 = vpack.c.b16 %v5170, %v5169
        %v5261 = vpack.c.b16 %v5172, %v5171
        %v5262 = vpack.c.b16 %v5174, %v5173
        %v5263 = vpack.c.b16 %v5176, %v5175
        %v5264 = vpack.c.b16 %v5178, %v5177
        %v5265 = vpack.c.b16 %v5180, %v5179
        %v5266 = vpack.c.b16 %v5182, %v5181
        %v5267 = vpack.c.b16 %v5184, %v5183
        %v5268 = vpack.c.b16 %v5186, %v5185
        %v5269 = vpack.c.b16 %v5188, %v5187
        %v5270 = vpack.c.b16 %v5190, %v5189
        %v5271 = vpack.c.b16 %v5192, %v5191
        %v5272 = vpack.c.b16 %v5194, %v5193
        %v5273 = vpack.c.b16 %v5196, %v5195
        %v5274 = vpack.c.b16 %v5198, %v5197
        %v5275 = vpack.c.b16 %v5200, %v5199
        %v5276 = vpack.c.b16 %v5202, %v5201
        %v5277 = vpack.c.b16 %v5204, %v5203
        %v5278 = vpack.c.b16 %v5206, %v5205
        %5351 = vmatprep.subr.bf16.mxu0 0
        %5352 = vmatpush1.bf16.msra.mxu0 %v5214
        %5353 = vmatprep.subr.bf16.mxu0 0
        %5354 = vmatpush1.bf16.msra.mxu0 %v5213
        %5355 = vmatprep.subr.bf16.mxu0 0
        %5356 = vmatpush1.bf16.msra.mxu0 %v5212
        %5357 = vmatprep.subr.bf16.mxu0 0
        %5358 = vmatpush1.bf16.msra.mxu0 %v5211
        %5359 = vmatprep.subr.bf16.mxu0 0
        %5360 = vmatpush1.bf16.msra.mxu0 %v5210
        %5361 = vmatprep.subr.bf16.mxu0 0
        %5362 = vmatpush1.bf16.msra.mxu0 %v5209
        %5363 = vmatprep.subr.bf16.mxu0 0
        %5364 = vmatpush1.bf16.msra.mxu0 %v5208
        %5365 = vmatprep.subr.bf16.mxu0 0
        %5366 = vmatpush1.bf16.msra.mxu0 %v5207
        %5367 = vmatprep.subr.bf16.mxu0 0
        %5368 = vmatpush2.bf16.msra.mxu0 %v5222
        %5369 = vmatprep.subr.bf16.mxu0 0
        %5370 = vmatpush2.bf16.msra.mxu0 %v5221
        %5371 = vmatprep.subr.bf16.mxu0 0
        %5372 = vmatpush2.bf16.msra.mxu0 %v5220
        %5373 = vmatprep.subr.bf16.mxu0 0
        %5374 = vmatpush2.bf16.msra.mxu0 %v5219
        %5375 = vmatprep.subr.bf16.mxu0 0
        %5376 = vmatpush2.bf16.msra.mxu0 %v5218
        %5377 = vmatprep.subr.bf16.mxu0 0
        %5378 = vmatpush2.bf16.msra.mxu0 %v5217
        %5379 = vmatprep.subr.bf16.mxu0 0
        %5380 = vmatpush2.bf16.msra.mxu0 %v5216
        %5381 = vmatprep.subr.bf16.mxu0 0
        %5382 = vmatpush2.bf16.msra.mxu0 %v5215
        %5383 = vmatprep.mubr.bf16.mxu0 %v4420
        %5384 = vmatmul.mubr.bf16.gmra.mxu0 %v4372
        %v5385 = vpop.f32.mrf.mxu0
        %v5386 = vadd.f32 0.0, %v5385
        %v5387 = vpop.f32.mrf.mxu0
        %v5388 = vpop.f32.mrf.mxu0
        %v5389 = vadd.f32 0.0, %v5388
        %v5390 = vpop.f32.mrf.mxu0
        %5391 = vmatprep.mubr.bf16.mxu0 %v4421
        %5392 = vmatmul.mubr.bf16.gmra.mxu0 %v4373
        %v5393 = vpop.f32.mrf.mxu0
        %v5394 = vadd.f32 0.0, %v5393
        %v5395 = vpop.f32.mrf.mxu0
        %v5396 = vpop.f32.mrf.mxu0
        %v5397 = vadd.f32 0.0, %v5396
        %v5398 = vpop.f32.mrf.mxu0
        %5399 = vmatprep.mubr.bf16.mxu0 %v4422
        %5400 = vmatmul.mubr.bf16.gmra.mxu0 %v4374
        %v5401 = vpop.f32.mrf.mxu0
        %v5402 = vadd.f32 0.0, %v5401
        %v5403 = vpop.f32.mrf.mxu0
        %v5404 = vpop.f32.mrf.mxu0
        %v5405 = vadd.f32 0.0, %v5404
        %v5406 = vpop.f32.mrf.mxu0
        %5407 = vmatprep.mubr.bf16.mxu0 %v4423
        %5408 = vmatmul.mubr.bf16.gmra.mxu0 %v4375
        %v5409 = vpop.f32.mrf.mxu0
        %v5410 = vadd.f32 0.0, %v5409
        %v5411 = vpop.f32.mrf.mxu0
        %v5412 = vpop.f32.mrf.mxu0
        %v5413 = vadd.f32 0.0, %v5412
        %v5414 = vpop.f32.mrf.mxu0
        %5415 = vmatprep.mubr.bf16.mxu0 %v4424
        %5416 = vmatmul.mubr.bf16.gmra.mxu0 %v4376
        %v5417 = vpop.f32.mrf.mxu0
        %v5418 = vadd.f32 0.0, %v5417
        %v5419 = vpop.f32.mrf.mxu0
        %v5420 = vpop.f32.mrf.mxu0
        %v5421 = vadd.f32 0.0, %v5420
        %v5422 = vpop.f32.mrf.mxu0
        %5423 = vmatprep.mubr.bf16.mxu0 %v4425
        %5424 = vmatmul.mubr.bf16.gmra.mxu0 %v4377
        %v5425 = vpop.f32.mrf.mxu0
        %v5426 = vadd.f32 0.0, %v5425
        %v5427 = vpop.f32.mrf.mxu0
        %v5428 = vpop.f32.mrf.mxu0
        %v5429 = vadd.f32 0.0, %v5428
        %v5430 = vpop.f32.mrf.mxu0
        %5431 = vmatprep.mubr.bf16.mxu0 %v4426
        %5432 = vmatmul.mubr.bf16.gmra.mxu0 %v4378
        %v5433 = vpop.f32.mrf.mxu0
        %v5434 = vadd.f32 0.0, %v5433
        %v5435 = vpop.f32.mrf.mxu0
        %v5436 = vpop.f32.mrf.mxu0
        %v5437 = vadd.f32 0.0, %v5436
        %v5438 = vpop.f32.mrf.mxu0
        %5439 = vmatprep.mubr.bf16.mxu0 %v4427
        %5440 = vmatmul.mubr.bf16.gmra.mxu0 %v4379
        %v5441 = vpop.f32.mrf.mxu0
        %v5442 = vadd.f32 0.0, %v5441
        %v5443 = vpop.f32.mrf.mxu0
        %v5444 = vpop.f32.mrf.mxu0
        %v5445 = vadd.f32 0.0, %v5444
        %v5446 = vpop.f32.mrf.mxu0
        %5447 = vmatprep.mubr.bf16.mxu0 %v4428
        %5448 = vmatmul.mubr.bf16.gmra.mxu0 %v4380
        %v5449 = vpop.f32.mrf.mxu0
        %v5450 = vadd.f32 0.0, %v5449
        %v5451 = vpop.f32.mrf.mxu0
        %v5452 = vpop.f32.mrf.mxu0
        %v5453 = vadd.f32 0.0, %v5452
        %v5454 = vpop.f32.mrf.mxu0
        %5455 = vmatprep.mubr.bf16.mxu0 %v4429
        %5456 = vmatmul.mubr.bf16.gmra.mxu0 %v4381
        %v5457 = vpop.f32.mrf.mxu0
        %v5458 = vadd.f32 0.0, %v5457
        %v5459 = vpop.f32.mrf.mxu0
        %v5460 = vpop.f32.mrf.mxu0
        %v5461 = vadd.f32 0.0, %v5460
        %v5462 = vpop.f32.mrf.mxu0
        %5463 = vmatprep.mubr.bf16.mxu0 %v4430
        %5464 = vmatmul.mubr.bf16.gmra.mxu0 %v4382
        %v5465 = vpop.f32.mrf.mxu0
        %v5466 = vadd.f32 0.0, %v5465
        %v5467 = vpop.f32.mrf.mxu0
        %v5468 = vpop.f32.mrf.mxu0
        %v5469 = vadd.f32 0.0, %v5468
        %v5470 = vpop.f32.mrf.mxu0
        %5471 = vmatprep.mubr.bf16.mxu0 %v4431
        %5472 = vmatmul.mubr.bf16.gmra.mxu0 %v4383
        %v5473 = vpop.f32.mrf.mxu0
        %v5474 = vadd.f32 0.0, %v5473
        %v5475 = vpop.f32.mrf.mxu0
        %v5476 = vpop.f32.mrf.mxu0
        %v5477 = vadd.f32 0.0, %v5476
        %v5478 = vpop.f32.mrf.mxu0
        %5479 = vmatprep.mubr.bf16.mxu0 %v4432
        %5480 = vmatmul.mubr.bf16.gmra.mxu0 %v4384
        %v5481 = vpop.f32.mrf.mxu0
        %v5482 = vadd.f32 0.0, %v5481
        %v5483 = vpop.f32.mrf.mxu0
        %v5484 = vpop.f32.mrf.mxu0
        %v5485 = vadd.f32 0.0, %v5484
        %v5486 = vpop.f32.mrf.mxu0
        %5487 = vmatprep.mubr.bf16.mxu0 %v4433
        %5488 = vmatmul.mubr.bf16.gmra.mxu0 %v4385
        %v5489 = vpop.f32.mrf.mxu0
        %v5490 = vadd.f32 0.0, %v5489
        %v5491 = vpop.f32.mrf.mxu0
        %v5492 = vpop.f32.mrf.mxu0
        %v5493 = vadd.f32 0.0, %v5492
        %v5494 = vpop.f32.mrf.mxu0
        %5495 = vmatprep.mubr.bf16.mxu0 %v4434
        %5496 = vmatmul.mubr.bf16.gmra.mxu0 %v4386
        %v5497 = vpop.f32.mrf.mxu0
        %v5498 = vadd.f32 0.0, %v5497
        %v5499 = vpop.f32.mrf.mxu0
        %v5500 = vpop.f32.mrf.mxu0
        %v5501 = vadd.f32 0.0, %v5500
        %v5502 = vpop.f32.mrf.mxu0
        %5503 = vmatprep.mubr.bf16.mxu0 %v4435
        %5504 = vmatmul.mubr.bf16.gmra.mxu0 %v4387
        %v5505 = vpop.f32.mrf.mxu0
        %v5506 = vadd.f32 0.0, %v5505
        %v5507 = vpop.f32.mrf.mxu0
        %v5508 = vpop.f32.mrf.mxu0
        %v5509 = vadd.f32 0.0, %v5508
        %v5510 = vpop.f32.mrf.mxu0
        %5511 = vdwg.mxu0
        %5512 = vmatprep.subr.bf16.mxu0 0
        %5513 = vmatpush1.bf16.msra.mxu0 %v5230
        %5514 = vmatprep.subr.bf16.mxu0 0
        %5515 = vmatpush1.bf16.msra.mxu0 %v5229
        %5516 = vmatprep.subr.bf16.mxu0 0
        %5517 = vmatpush1.bf16.msra.mxu0 %v5228
        %5518 = vmatprep.subr.bf16.mxu0 0
        %5519 = vmatpush1.bf16.msra.mxu0 %v5227
        %5520 = vmatprep.subr.bf16.mxu0 0
        %5521 = vmatpush1.bf16.msra.mxu0 %v5226
        %5522 = vmatprep.subr.bf16.mxu0 0
        %5523 = vmatpush1.bf16.msra.mxu0 %v5225
        %5524 = vmatprep.subr.bf16.mxu0 0
        %5525 = vmatpush1.bf16.msra.mxu0 %v5224
        %5526 = vmatprep.subr.bf16.mxu0 0
        %5527 = vmatpush1.bf16.msra.mxu0 %v5223
        %5528 = vmatprep.subr.bf16.mxu0 0
        %5529 = vmatpush2.bf16.msra.mxu0 %v5238
        %5530 = vmatprep.subr.bf16.mxu0 0
        %5531 = vmatpush2.bf16.msra.mxu0 %v5237
        %5532 = vmatprep.subr.bf16.mxu0 0
        %5533 = vmatpush2.bf16.msra.mxu0 %v5236
        %5534 = vmatprep.subr.bf16.mxu0 0
        %5535 = vmatpush2.bf16.msra.mxu0 %v5235
        %5536 = vmatprep.subr.bf16.mxu0 0
        %5537 = vmatpush2.bf16.msra.mxu0 %v5234
        %5538 = vmatprep.subr.bf16.mxu0 0
        %5539 = vmatpush2.bf16.msra.mxu0 %v5233
        %5540 = vmatprep.subr.bf16.mxu0 0
        %5541 = vmatpush2.bf16.msra.mxu0 %v5232
        %5542 = vmatprep.subr.bf16.mxu0 0
        %5543 = vmatpush2.bf16.msra.mxu0 %v5231
        %5544 = vmatprep.mubr.bf16.mxu0 %v4517
        %5545 = vmatmul.mubr.bf16.gmra.mxu0 %v4468
        %v5546 = vpop.f32.mrf.mxu0
        %v5547 = vadd.f32 %v5386, %v5546
        %v5548 = vpop.f32.mrf.mxu0
        %v5549 = vpop.f32.mrf.mxu0
        %v5550 = vadd.f32 %v5389, %v5549
        %v5551 = vpop.f32.mrf.mxu0
        %5552 = vmatprep.mubr.bf16.mxu0 %v4518
        %5553 = vmatmul.mubr.bf16.gmra.mxu0 %v4469
        %v5554 = vpop.f32.mrf.mxu0
        %v5555 = vadd.f32 %v5394, %v5554
        %v5556 = vpop.f32.mrf.mxu0
        %v5557 = vpop.f32.mrf.mxu0
        %v5558 = vadd.f32 %v5397, %v5557
        %v5559 = vpop.f32.mrf.mxu0
        %5560 = vmatprep.mubr.bf16.mxu0 %v4519
        %5561 = vmatmul.mubr.bf16.gmra.mxu0 %v4470
        %v5562 = vpop.f32.mrf.mxu0
        %v5563 = vadd.f32 %v5402, %v5562
        %v5564 = vpop.f32.mrf.mxu0
        %v5565 = vpop.f32.mrf.mxu0
        %v5566 = vadd.f32 %v5405, %v5565
        %v5567 = vpop.f32.mrf.mxu0
        %5568 = vmatprep.mubr.bf16.mxu0 %v4520
        %5569 = vmatmul.mubr.bf16.gmra.mxu0 %v4471
        %v5570 = vpop.f32.mrf.mxu0
        %v5571 = vadd.f32 %v5410, %v5570
        %v5572 = vpop.f32.mrf.mxu0
        %v5573 = vpop.f32.mrf.mxu0
        %v5574 = vadd.f32 %v5413, %v5573
        %v5575 = vpop.f32.mrf.mxu0
        %5576 = vmatprep.mubr.bf16.mxu0 %v4521
        %5577 = vmatmul.mubr.bf16.gmra.mxu0 %v4472
        %v5578 = vpop.f32.mrf.mxu0
        %v5579 = vadd.f32 %v5418, %v5578
        %v5580 = vpop.f32.mrf.mxu0
        %v5581 = vpop.f32.mrf.mxu0
        %v5582 = vadd.f32 %v5421, %v5581
        %v5583 = vpop.f32.mrf.mxu0
        %5584 = vmatprep.mubr.bf16.mxu0 %v4522
        %5585 = vmatmul.mubr.bf16.gmra.mxu0 %v4473
        %v5586 = vpop.f32.mrf.mxu0
        %v5587 = vadd.f32 %v5426, %v5586
        %v5588 = vpop.f32.mrf.mxu0
        %v5589 = vpop.f32.mrf.mxu0
        %v5590 = vadd.f32 %v5429, %v5589
        %v5591 = vpop.f32.mrf.mxu0
        %5592 = vmatprep.mubr.bf16.mxu0 %v4523
        %5593 = vmatmul.mubr.bf16.gmra.mxu0 %v4474
        %v5594 = vpop.f32.mrf.mxu0
        %v5595 = vadd.f32 %v5434, %v5594
        %v5596 = vpop.f32.mrf.mxu0
        %v5597 = vpop.f32.mrf.mxu0
        %v5598 = vadd.f32 %v5437, %v5597
        %v5599 = vpop.f32.mrf.mxu0
        %5600 = vmatprep.mubr.bf16.mxu0 %v4524
        %5601 = vmatmul.mubr.bf16.gmra.mxu0 %v4475
        %v5602 = vpop.f32.mrf.mxu0
        %v5603 = vadd.f32 %v5442, %v5602
        %v5604 = vpop.f32.mrf.mxu0
        %v5605 = vpop.f32.mrf.mxu0
        %v5606 = vadd.f32 %v5445, %v5605
        %v5607 = vpop.f32.mrf.mxu0
        %5608 = vmatprep.mubr.bf16.mxu0 %v4525
        %5609 = vmatmul.mubr.bf16.gmra.mxu0 %v4476
        %v5610 = vpop.f32.mrf.mxu0
        %v5611 = vadd.f32 %v5450, %v5610
        %v5612 = vpop.f32.mrf.mxu0
        %v5613 = vpop.f32.mrf.mxu0
        %v5614 = vadd.f32 %v5453, %v5613
        %v5615 = vpop.f32.mrf.mxu0
        %5616 = vmatprep.mubr.bf16.mxu0 %v4526
        %5617 = vmatmul.mubr.bf16.gmra.mxu0 %v4477
        %v5618 = vpop.f32.mrf.mxu0
        %v5619 = vadd.f32 %v5458, %v5618
        %v5620 = vpop.f32.mrf.mxu0
        %v5621 = vpop.f32.mrf.mxu0
        %v5622 = vadd.f32 %v5461, %v5621
        %v5623 = vpop.f32.mrf.mxu0
        %5624 = vmatprep.mubr.bf16.mxu0 %v4527
        %5625 = vmatmul.mubr.bf16.gmra.mxu0 %v4478
        %v5626 = vpop.f32.mrf.mxu0
        %v5627 = vadd.f32 %v5466, %v5626
        %v5628 = vpop.f32.mrf.mxu0
        %v5629 = vpop.f32.mrf.mxu0
        %v5630 = vadd.f32 %v5469, %v5629
        %v5631 = vpop.f32.mrf.mxu0
        %5632 = vmatprep.mubr.bf16.mxu0 %v4528
        %5633 = vmatmul.mubr.bf16.gmra.mxu0 %v4479
        %v5634 = vpop.f32.mrf.mxu0
        %v5635 = vadd.f32 %v5474, %v5634
        %v5636 = vpop.f32.mrf.mxu0
        %v5637 = vpop.f32.mrf.mxu0
        %v5638 = vadd.f32 %v5477, %v5637
        %v5639 = vpop.f32.mrf.mxu0
        %5640 = vmatprep.mubr.bf16.mxu0 %v4529
        %5641 = vmatmul.mubr.bf16.gmra.mxu0 %v4480
        %v5642 = vpop.f32.mrf.mxu0
        %v5643 = vadd.f32 %v5482, %v5642
        %v5644 = vpop.f32.mrf.mxu0
        %v5645 = vpop.f32.mrf.mxu0
        %v5646 = vadd.f32 %v5485, %v5645
        %v5647 = vpop.f32.mrf.mxu0
        %5648 = vmatprep.mubr.bf16.mxu0 %v4530
        %5649 = vmatmul.mubr.bf16.gmra.mxu0 %v4481
        %v5650 = vpop.f32.mrf.mxu0
        %v5651 = vadd.f32 %v5490, %v5650
        %v5652 = vpop.f32.mrf.mxu0
        %v5653 = vpop.f32.mrf.mxu0
        %v5654 = vadd.f32 %v5493, %v5653
        %v5655 = vpop.f32.mrf.mxu0
        %5656 = vmatprep.mubr.bf16.mxu0 %v4531
        %5657 = vmatmul.mubr.bf16.gmra.mxu0 %v4482
        %v5658 = vpop.f32.mrf.mxu0
        %v5659 = vadd.f32 %v5498, %v5658
        %v5660 = vpop.f32.mrf.mxu0
        %v5661 = vpop.f32.mrf.mxu0
        %v5662 = vadd.f32 %v5501, %v5661
        %v5663 = vpop.f32.mrf.mxu0
        %5664 = vmatprep.mubr.bf16.mxu0 %v4532
        %5665 = vmatmul.mubr.bf16.gmra.mxu0 %v4483
        %v5666 = vpop.f32.mrf.mxu0
        %v5667 = vadd.f32 %v5506, %v5666
        %v5668 = vpop.f32.mrf.mxu0
        %v5669 = vpop.f32.mrf.mxu0
        %v5670 = vadd.f32 %v5509, %v5669
        %v5671 = vpop.f32.mrf.mxu0
        %5672 = vdwg.mxu0
        %5673 = vmatprep.subr.bf16.mxu0 0
        %5674 = vmatpush1.bf16.msra.mxu0 %v5246
        %5675 = vmatprep.subr.bf16.mxu0 0
        %5676 = vmatpush1.bf16.msra.mxu0 %v5245
        %5677 = vmatprep.subr.bf16.mxu0 0
        %5678 = vmatpush1.bf16.msra.mxu0 %v5244
        %5679 = vmatprep.subr.bf16.mxu0 0
        %5680 = vmatpush1.bf16.msra.mxu0 %v5243
        %5681 = vmatprep.subr.bf16.mxu0 0
        %5682 = vmatpush1.bf16.msra.mxu0 %v5242
        %5683 = vmatprep.subr.bf16.mxu0 0
        %5684 = vmatpush1.bf16.msra.mxu0 %v5241
        %5685 = vmatprep.subr.bf16.mxu0 0
        %5686 = vmatpush1.bf16.msra.mxu0 %v5240
        %5687 = vmatprep.subr.bf16.mxu0 0
        %5688 = vmatpush1.bf16.msra.mxu0 %v5239
        %5689 = vmatprep.subr.bf16.mxu0 0
        %5690 = vmatpush2.bf16.msra.mxu0 %v5254
        %5691 = vmatprep.subr.bf16.mxu0 0
        %5692 = vmatpush2.bf16.msra.mxu0 %v5253
        %5693 = vmatprep.subr.bf16.mxu0 0
        %5694 = vmatpush2.bf16.msra.mxu0 %v5252
        %5695 = vmatprep.subr.bf16.mxu0 0
        %5696 = vmatpush2.bf16.msra.mxu0 %v5251
        %5697 = vmatprep.subr.bf16.mxu0 0
        %5698 = vmatpush2.bf16.msra.mxu0 %v5250
        %5699 = vmatprep.subr.bf16.mxu0 0
        %5700 = vmatpush2.bf16.msra.mxu0 %v5249
        %5701 = vmatprep.subr.bf16.mxu0 0
        %5702 = vmatpush2.bf16.msra.mxu0 %v5248
        %5703 = vmatprep.subr.bf16.mxu0 0
        %5704 = vmatpush2.bf16.msra.mxu0 %v5247
        %5705 = vmatprep.mubr.bf16.mxu0 %v4613
        %5706 = vmatmul.mubr.bf16.gmra.mxu0 %v4565
        %v5707 = vpop.f32.mrf.mxu0
        %v5708 = vadd.f32 %v5547, %v5707
        %v5709 = vpop.f32.mrf.mxu0
        %v5710 = vpop.f32.mrf.mxu0
        %v5711 = vadd.f32 %v5550, %v5710
        %v5712 = vpop.f32.mrf.mxu0
        %5713 = vmatprep.mubr.bf16.mxu0 %v4614
        %5714 = vmatmul.mubr.bf16.gmra.mxu0 %v4566
        %v5715 = vpop.f32.mrf.mxu0
        %v5716 = vadd.f32 %v5555, %v5715
        %v5717 = vpop.f32.mrf.mxu0
        %v5718 = vpop.f32.mrf.mxu0
        %v5719 = vadd.f32 %v5558, %v5718
        %v5720 = vpop.f32.mrf.mxu0
        %5721 = vmatprep.mubr.bf16.mxu0 %v4615
        %5722 = vmatmul.mubr.bf16.gmra.mxu0 %v4567
        %v5723 = vpop.f32.mrf.mxu0
        %v5724 = vadd.f32 %v5563, %v5723
        %v5725 = vpop.f32.mrf.mxu0
        %v5726 = vpop.f32.mrf.mxu0
        %v5727 = vadd.f32 %v5566, %v5726
        %v5728 = vpop.f32.mrf.mxu0
        %5729 = vmatprep.mubr.bf16.mxu0 %v4616
        %5730 = vmatmul.mubr.bf16.gmra.mxu0 %v4568
        %v5731 = vpop.f32.mrf.mxu0
        %v5732 = vadd.f32 %v5571, %v5731
        %v5733 = vpop.f32.mrf.mxu0
        %v5734 = vpop.f32.mrf.mxu0
        %v5735 = vadd.f32 %v5574, %v5734
        %v5736 = vpop.f32.mrf.mxu0
        %5737 = vmatprep.mubr.bf16.mxu0 %v4617
        %5738 = vmatmul.mubr.bf16.gmra.mxu0 %v4569
        %v5739 = vpop.f32.mrf.mxu0
        %v5740 = vadd.f32 %v5579, %v5739
        %v5741 = vpop.f32.mrf.mxu0
        %v5742 = vpop.f32.mrf.mxu0
        %v5743 = vadd.f32 %v5582, %v5742
        %v5744 = vpop.f32.mrf.mxu0
        %5745 = vmatprep.mubr.bf16.mxu0 %v4618
        %5746 = vmatmul.mubr.bf16.gmra.mxu0 %v4570
        %v5747 = vpop.f32.mrf.mxu0
        %v5748 = vadd.f32 %v5587, %v5747
        %v5749 = vpop.f32.mrf.mxu0
        %v5750 = vpop.f32.mrf.mxu0
        %v5751 = vadd.f32 %v5590, %v5750
        %v5752 = vpop.f32.mrf.mxu0
        %5753 = vmatprep.mubr.bf16.mxu0 %v4619
        %5754 = vmatmul.mubr.bf16.gmra.mxu0 %v4571
        %v5755 = vpop.f32.mrf.mxu0
        %v5756 = vadd.f32 %v5595, %v5755
        %v5757 = vpop.f32.mrf.mxu0
        %v5758 = vpop.f32.mrf.mxu0
        %v5759 = vadd.f32 %v5598, %v5758
        %v5760 = vpop.f32.mrf.mxu0
        %5761 = vmatprep.mubr.bf16.mxu0 %v4620
        %5762 = vmatmul.mubr.bf16.gmra.mxu0 %v4572
        %v5763 = vpop.f32.mrf.mxu0
        %v5764 = vadd.f32 %v5603, %v5763
        %v5765 = vpop.f32.mrf.mxu0
        %v5766 = vpop.f32.mrf.mxu0
        %v5767 = vadd.f32 %v5606, %v5766
        %v5768 = vpop.f32.mrf.mxu0
        %5769 = vmatprep.mubr.bf16.mxu0 %v4621
        %5770 = vmatmul.mubr.bf16.gmra.mxu0 %v4573
        %v5771 = vpop.f32.mrf.mxu0
        %v5772 = vadd.f32 %v5611, %v5771
        %v5773 = vpop.f32.mrf.mxu0
        %v5774 = vpop.f32.mrf.mxu0
        %v5775 = vadd.f32 %v5614, %v5774
        %v5776 = vpop.f32.mrf.mxu0
        %5777 = vmatprep.mubr.bf16.mxu0 %v4622
        %5778 = vmatmul.mubr.bf16.gmra.mxu0 %v4574
        %v5779 = vpop.f32.mrf.mxu0
        %v5780 = vadd.f32 %v5619, %v5779
        %v5781 = vpop.f32.mrf.mxu0
        %v5782 = vpop.f32.mrf.mxu0
        %v5783 = vadd.f32 %v5622, %v5782
        %v5784 = vpop.f32.mrf.mxu0
        %5785 = vmatprep.mubr.bf16.mxu0 %v4623
        %5786 = vmatmul.mubr.bf16.gmra.mxu0 %v4575
        %v5787 = vpop.f32.mrf.mxu0
        %v5788 = vadd.f32 %v5627, %v5787
        %v5789 = vpop.f32.mrf.mxu0
        %v5790 = vpop.f32.mrf.mxu0
        %v5791 = vadd.f32 %v5630, %v5790
        %v5792 = vpop.f32.mrf.mxu0
        %5793 = vmatprep.mubr.bf16.mxu0 %v4624
        %5794 = vmatmul.mubr.bf16.gmra.mxu0 %v4576
        %v5795 = vpop.f32.mrf.mxu0
        %v5796 = vadd.f32 %v5635, %v5795
        %v5797 = vpop.f32.mrf.mxu0
        %v5798 = vpop.f32.mrf.mxu0
        %v5799 = vadd.f32 %v5638, %v5798
        %v5800 = vpop.f32.mrf.mxu0
        %5801 = vmatprep.mubr.bf16.mxu0 %v4625
        %5802 = vmatmul.mubr.bf16.gmra.mxu0 %v4577
        %v5803 = vpop.f32.mrf.mxu0
        %v5804 = vadd.f32 %v5643, %v5803
        %v5805 = vpop.f32.mrf.mxu0
        %v5806 = vpop.f32.mrf.mxu0
        %v5807 = vadd.f32 %v5646, %v5806
        %v5808 = vpop.f32.mrf.mxu0
        %5809 = vmatprep.mubr.bf16.mxu0 %v4626
        %5810 = vmatmul.mubr.bf16.gmra.mxu0 %v4578
        %v5811 = vpop.f32.mrf.mxu0
        %v5812 = vadd.f32 %v5651, %v5811
        %v5813 = vpop.f32.mrf.mxu0
        %v5814 = vpop.f32.mrf.mxu0
        %v5815 = vadd.f32 %v5654, %v5814
        %v5816 = vpop.f32.mrf.mxu0
        %5817 = vmatprep.mubr.bf16.mxu0 %v4627
        %5818 = vmatmul.mubr.bf16.gmra.mxu0 %v4579
        %v5819 = vpop.f32.mrf.mxu0
        %v5820 = vadd.f32 %v5659, %v5819
        %v5821 = vpop.f32.mrf.mxu0
        %v5822 = vpop.f32.mrf.mxu0
        %v5823 = vadd.f32 %v5662, %v5822
        %v5824 = vpop.f32.mrf.mxu0
        %5825 = vmatprep.mubr.bf16.mxu0 %v4628
        %5826 = vmatmul.mubr.bf16.gmra.mxu0 %v4580
        %v5827 = vpop.f32.mrf.mxu0
        %v5828 = vadd.f32 %v5667, %v5827
        %v5829 = vpop.f32.mrf.mxu0
        %v5830 = vpop.f32.mrf.mxu0
        %v5831 = vadd.f32 %v5670, %v5830
        %v5832 = vpop.f32.mrf.mxu0
        %5833 = vdwg.mxu0
        %5834 = vmatprep.subr.bf16.mxu0 0
        %5835 = vmatpush1.bf16.msra.mxu0 %v5262
        %5836 = vmatprep.subr.bf16.mxu0 0
        %5837 = vmatpush1.bf16.msra.mxu0 %v5261
        %5838 = vmatprep.subr.bf16.mxu0 0
        %5839 = vmatpush1.bf16.msra.mxu0 %v5260
        %5840 = vmatprep.subr.bf16.mxu0 0
        %5841 = vmatpush1.bf16.msra.mxu0 %v5259
        %5842 = vmatprep.subr.bf16.mxu0 0
        %5843 = vmatpush1.bf16.msra.mxu0 %v5258
        %5844 = vmatprep.subr.bf16.mxu0 0
        %5845 = vmatpush1.bf16.msra.mxu0 %v5257
        %5846 = vmatprep.subr.bf16.mxu0 0
        %5847 = vmatpush1.bf16.msra.mxu0 %v5256
        %5848 = vmatprep.subr.bf16.mxu0 0
        %5849 = vmatpush1.bf16.msra.mxu0 %v5255
        %5850 = vmatprep.subr.bf16.mxu0 0
        %5851 = vmatpush2.bf16.msra.mxu0 %v5270
        %5852 = vmatprep.subr.bf16.mxu0 0
        %5853 = vmatpush2.bf16.msra.mxu0 %v5269
        %5854 = vmatprep.subr.bf16.mxu0 0
        %5855 = vmatpush2.bf16.msra.mxu0 %v5268
        %5856 = vmatprep.subr.bf16.mxu0 0
        %5857 = vmatpush2.bf16.msra.mxu0 %v5267
        %5858 = vmatprep.subr.bf16.mxu0 0
        %5859 = vmatpush2.bf16.msra.mxu0 %v5266
        %5860 = vmatprep.subr.bf16.mxu0 0
        %5861 = vmatpush2.bf16.msra.mxu0 %v5265
        %5862 = vmatprep.subr.bf16.mxu0 0
        %5863 = vmatpush2.bf16.msra.mxu0 %v5264
        %5864 = vmatprep.subr.bf16.mxu0 0
        %5865 = vmatpush2.bf16.msra.mxu0 %v5263
        %5866 = vmatprep.mubr.bf16.mxu0 %v4710
        %5867 = vmatmul.mubr.bf16.gmra.mxu0 %v4662
        %v5868 = vpop.f32.mrf.mxu0
        %v5869 = vadd.f32 %v5708, %v5868
        %v5870 = vpop.f32.mrf.mxu0
        %v5871 = vpop.f32.mrf.mxu0
        %v5872 = vadd.f32 %v5711, %v5871
        %v5873 = vpop.f32.mrf.mxu0
        %5874 = vmatprep.mubr.bf16.mxu0 %v4711
        %5875 = vmatmul.mubr.bf16.gmra.mxu0 %v4663
        %v5876 = vpop.f32.mrf.mxu0
        %v5877 = vadd.f32 %v5716, %v5876
        %v5878 = vpop.f32.mrf.mxu0
        %v5879 = vpop.f32.mrf.mxu0
        %v5880 = vadd.f32 %v5719, %v5879
        %v5881 = vpop.f32.mrf.mxu0
        %5882 = vmatprep.mubr.bf16.mxu0 %v4712
        %5883 = vmatmul.mubr.bf16.gmra.mxu0 %v4664
        %v5884 = vpop.f32.mrf.mxu0
        %v5885 = vadd.f32 %v5724, %v5884
        %v5886 = vpop.f32.mrf.mxu0
        %v5887 = vpop.f32.mrf.mxu0
        %v5888 = vadd.f32 %v5727, %v5887
        %v5889 = vpop.f32.mrf.mxu0
        %5890 = vmatprep.mubr.bf16.mxu0 %v4713
        %5891 = vmatmul.mubr.bf16.gmra.mxu0 %v4665
        %v5892 = vpop.f32.mrf.mxu0
        %v5893 = vadd.f32 %v5732, %v5892
        %v5894 = vpop.f32.mrf.mxu0
        %v5895 = vpop.f32.mrf.mxu0
        %v5896 = vadd.f32 %v5735, %v5895
        %v5897 = vpop.f32.mrf.mxu0
        %5898 = vmatprep.mubr.bf16.mxu0 %v4714
        %5899 = vmatmul.mubr.bf16.gmra.mxu0 %v4666
        %v5900 = vpop.f32.mrf.mxu0
        %v5901 = vadd.f32 %v5740, %v5900
        %v5902 = vpop.f32.mrf.mxu0
        %v5903 = vpop.f32.mrf.mxu0
        %v5904 = vadd.f32 %v5743, %v5903
        %v5905 = vpop.f32.mrf.mxu0
        %5906 = vmatprep.mubr.bf16.mxu0 %v4715
        %5907 = vmatmul.mubr.bf16.gmra.mxu0 %v4667
        %v5908 = vpop.f32.mrf.mxu0
        %v5909 = vadd.f32 %v5748, %v5908
        %v5910 = vpop.f32.mrf.mxu0
        %v5911 = vpop.f32.mrf.mxu0
        %v5912 = vadd.f32 %v5751, %v5911
        %v5913 = vpop.f32.mrf.mxu0
        %5914 = vmatprep.mubr.bf16.mxu0 %v4716
        %5915 = vmatmul.mubr.bf16.gmra.mxu0 %v4668
        %v5916 = vpop.f32.mrf.mxu0
        %v5917 = vadd.f32 %v5756, %v5916
        %v5918 = vpop.f32.mrf.mxu0
        %v5919 = vpop.f32.mrf.mxu0
        %v5920 = vadd.f32 %v5759, %v5919
        %v5921 = vpop.f32.mrf.mxu0
        %5922 = vmatprep.mubr.bf16.mxu0 %v4717
        %5923 = vmatmul.mubr.bf16.gmra.mxu0 %v4669
        %v5924 = vpop.f32.mrf.mxu0
        %v5925 = vadd.f32 %v5764, %v5924
        %v5926 = vpop.f32.mrf.mxu0
        %v5927 = vpop.f32.mrf.mxu0
        %v5928 = vadd.f32 %v5767, %v5927
        %v5929 = vpop.f32.mrf.mxu0
        %5930 = vmatprep.mubr.bf16.mxu0 %v4718
        %5931 = vmatmul.mubr.bf16.gmra.mxu0 %v4670
        %v5932 = vpop.f32.mrf.mxu0
        %v5933 = vadd.f32 %v5772, %v5932
        %v5934 = vpop.f32.mrf.mxu0
        %v5935 = vpop.f32.mrf.mxu0
        %v5936 = vadd.f32 %v5775, %v5935
        %v5937 = vpop.f32.mrf.mxu0
        %5938 = vmatprep.mubr.bf16.mxu0 %v4719
        %5939 = vmatmul.mubr.bf16.gmra.mxu0 %v4671
        %v5940 = vpop.f32.mrf.mxu0
        %v5941 = vadd.f32 %v5780, %v5940
        %v5942 = vpop.f32.mrf.mxu0
        %v5943 = vpop.f32.mrf.mxu0
        %v5944 = vadd.f32 %v5783, %v5943
        %v5945 = vpop.f32.mrf.mxu0
        %5946 = vmatprep.mubr.bf16.mxu0 %v4720
        %5947 = vmatmul.mubr.bf16.gmra.mxu0 %v4672
        %v5948 = vpop.f32.mrf.mxu0
        %v5949 = vadd.f32 %v5788, %v5948
        %v5950 = vpop.f32.mrf.mxu0
        %v5951 = vpop.f32.mrf.mxu0
        %v5952 = vadd.f32 %v5791, %v5951
        %v5953 = vpop.f32.mrf.mxu0
        %5954 = vmatprep.mubr.bf16.mxu0 %v4721
        %5955 = vmatmul.mubr.bf16.gmra.mxu0 %v4673
        %v5956 = vpop.f32.mrf.mxu0
        %v5957 = vadd.f32 %v5796, %v5956
        %v5958 = vpop.f32.mrf.mxu0
        %v5959 = vpop.f32.mrf.mxu0
        %v5960 = vadd.f32 %v5799, %v5959
        %v5961 = vpop.f32.mrf.mxu0
        %5962 = vmatprep.mubr.bf16.mxu0 %v4722
        %5963 = vmatmul.mubr.bf16.gmra.mxu0 %v4674
        %v5964 = vpop.f32.mrf.mxu0
        %v5965 = vadd.f32 %v5804, %v5964
        %v5966 = vpop.f32.mrf.mxu0
        %v5967 = vpop.f32.mrf.mxu0
        %v5968 = vadd.f32 %v5807, %v5967
        %v5969 = vpop.f32.mrf.mxu0
        %5970 = vmatprep.mubr.bf16.mxu0 %v4723
        %5971 = vmatmul.mubr.bf16.gmra.mxu0 %v4675
        %v5972 = vpop.f32.mrf.mxu0
        %v5973 = vadd.f32 %v5812, %v5972
        %v5974 = vpop.f32.mrf.mxu0
        %v5975 = vpop.f32.mrf.mxu0
        %v5976 = vadd.f32 %v5815, %v5975
        %v5977 = vpop.f32.mrf.mxu0
        %5978 = vmatprep.mubr.bf16.mxu0 %v4724
        %5979 = vmatmul.mubr.bf16.gmra.mxu0 %v4676
        %v5980 = vpop.f32.mrf.mxu0
        %v5981 = vadd.f32 %v5820, %v5980
        %v5982 = vpop.f32.mrf.mxu0
        %v5983 = vpop.f32.mrf.mxu0
        %v5984 = vadd.f32 %v5823, %v5983
        %v5985 = vpop.f32.mrf.mxu0
        %5986 = vmatprep.mubr.bf16.mxu0 %v4725
        %5987 = vmatmul.mubr.bf16.gmra.mxu0 %v4677
        %v5988 = vpop.f32.mrf.mxu0
        %v5989 = vadd.f32 %v5828, %v5988
        %v5990 = vpop.f32.mrf.mxu0
        %v5991 = vpop.f32.mrf.mxu0
        %v5992 = vadd.f32 %v5831, %v5991
        %v5993 = vpop.f32.mrf.mxu0
        %5994 = vdwg.mxu0
        %5995 = vmatprep.subr.bf16.mxu0 0
        %5996 = vmatpush1.bf16.msra.mxu0 %v5278
        %5997 = vmatprep.subr.bf16.mxu0 0
        %5998 = vmatpush1.bf16.msra.mxu0 %v5277
        %5999 = vmatprep.subr.bf16.mxu0 0
        %6000 = vmatpush1.bf16.msra.mxu0 %v5276
        %6001 = vmatprep.subr.bf16.mxu0 0
        %6002 = vmatpush1.bf16.msra.mxu0 %v5275
        %6003 = vmatprep.subr.bf16.mxu0 0
        %6004 = vmatpush1.bf16.msra.mxu0 %v5274
        %6005 = vmatprep.subr.bf16.mxu0 0
        %6006 = vmatpush1.bf16.msra.mxu0 %v5273
        %6007 = vmatprep.subr.bf16.mxu0 0
        %6008 = vmatpush1.bf16.msra.mxu0 %v5272
        %6009 = vmatprep.subr.bf16.mxu0 0
        %6010 = vmatpush1.bf16.msra.mxu0 %v5271
        %6011 = vmatprep.subr.bf16.mxu0 0
        %6012 = vmatpush2.bf16.msra.mxu0 0
        %6013 = vmatprep.subr.bf16.mxu0 0
        %6014 = vmatpush2.bf16.msra.mxu0 0
        %6015 = vmatprep.subr.bf16.mxu0 0
        %6016 = vmatpush2.bf16.msra.mxu0 0
        %6017 = vmatprep.subr.bf16.mxu0 0
        %6018 = vmatpush2.bf16.msra.mxu0 0
        %6019 = vmatprep.subr.bf16.mxu0 0
        %6020 = vmatpush2.bf16.msra.mxu0 0
        %6021 = vmatprep.subr.bf16.mxu0 0
        %6022 = vmatpush2.bf16.msra.mxu0 0
        %6023 = vmatprep.subr.bf16.mxu0 0
        %6024 = vmatpush2.bf16.msra.mxu0 0
        %6025 = vmatprep.subr.bf16.mxu0 0
        %6026 = vmatpush2.bf16.msra.mxu0 0
        %6027 = vmatprep.mubr.bf16.mxu0 0
        %6028 = vmatmul.mubr.bf16.gmra.mxu0 %v4758
        %v6029 = vpop.f32.mrf.mxu0
        %v6030 = vadd.f32 %v5869, %v6029
        %v6031 = vpop.f32.mrf.mxu0
        %v6032 = vpop.f32.mrf.mxu0
        %v6033 = vadd.f32 %v5872, %v6032
        %v6034 = vpop.f32.mrf.mxu0
        %6035 = vmatprep.mubr.bf16.mxu0 0
        %6036 = vmatmul.mubr.bf16.gmra.mxu0 %v4759
        %v6037 = vpop.f32.mrf.mxu0
        %v6038 = vadd.f32 %v5877, %v6037
        %v6039 = vpop.f32.mrf.mxu0
        %v6040 = vpop.f32.mrf.mxu0
        %v6041 = vadd.f32 %v5880, %v6040
        %v6042 = vpop.f32.mrf.mxu0
        %6043 = vmatprep.mubr.bf16.mxu0 0
        %6044 = vmatmul.mubr.bf16.gmra.mxu0 %v4760
        %v6045 = vpop.f32.mrf.mxu0
        %v6046 = vadd.f32 %v5885, %v6045
        %v6047 = vpop.f32.mrf.mxu0
        %v6048 = vpop.f32.mrf.mxu0
        %v6049 = vadd.f32 %v5888, %v6048
        %v6050 = vpop.f32.mrf.mxu0
        %6051 = vmatprep.mubr.bf16.mxu0 0
        %6052 = vmatmul.mubr.bf16.gmra.mxu0 %v4761
        %v6053 = vpop.f32.mrf.mxu0
        %v6054 = vadd.f32 %v5893, %v6053
        %v6055 = vpop.f32.mrf.mxu0
        %v6056 = vpop.f32.mrf.mxu0
        %v6057 = vadd.f32 %v5896, %v6056
        %v6058 = vpop.f32.mrf.mxu0
        %6059 = vmatprep.mubr.bf16.mxu0 0
        %6060 = vmatmul.mubr.bf16.gmra.mxu0 %v4762
        %v6061 = vpop.f32.mrf.mxu0
        %v6062 = vadd.f32 %v5901, %v6061
        %v6063 = vpop.f32.mrf.mxu0
        %v6064 = vpop.f32.mrf.mxu0
        %v6065 = vadd.f32 %v5904, %v6064
        %v6066 = vpop.f32.mrf.mxu0
        %6067 = vmatprep.mubr.bf16.mxu0 0
        %6068 = vmatmul.mubr.bf16.gmra.mxu0 %v4763
        %v6069 = vpop.f32.mrf.mxu0
        %v6070 = vadd.f32 %v5909, %v6069
        %v6071 = vpop.f32.mrf.mxu0
        %v6072 = vpop.f32.mrf.mxu0
        %v6073 = vadd.f32 %v5912, %v6072
        %v6074 = vpop.f32.mrf.mxu0
        %6075 = vmatprep.mubr.bf16.mxu0 0
        %6076 = vmatmul.mubr.bf16.gmra.mxu0 %v4764
        %v6077 = vpop.f32.mrf.mxu0
        %v6078 = vadd.f32 %v5917, %v6077
        %v6079 = vpop.f32.mrf.mxu0
        %v6080 = vpop.f32.mrf.mxu0
        %v6081 = vadd.f32 %v5920, %v6080
        %v6082 = vpop.f32.mrf.mxu0
        %6083 = vmatprep.mubr.bf16.mxu0 0
        %6084 = vmatmul.mubr.bf16.gmra.mxu0 %v4765
        %v6085 = vpop.f32.mrf.mxu0
        %v6086 = vadd.f32 %v5925, %v6085
        %v6087 = vpop.f32.mrf.mxu0
        %v6088 = vpop.f32.mrf.mxu0
        %v6089 = vadd.f32 %v5928, %v6088
        %v6090 = vpop.f32.mrf.mxu0
        %6091 = vmatprep.mubr.bf16.mxu0 0
        %6092 = vmatmul.mubr.bf16.gmra.mxu0 %v4766
        %v6093 = vpop.f32.mrf.mxu0
        %v6094 = vadd.f32 %v5933, %v6093
        %v6095 = vpop.f32.mrf.mxu0
        %v6096 = vpop.f32.mrf.mxu0
        %v6097 = vadd.f32 %v5936, %v6096
        %v6098 = vpop.f32.mrf.mxu0
        %6099 = vmatprep.mubr.bf16.mxu0 0
        %6100 = vmatmul.mubr.bf16.gmra.mxu0 %v4767
        %v6101 = vpop.f32.mrf.mxu0
        %v6102 = vadd.f32 %v5941, %v6101
        %v6103 = vpop.f32.mrf.mxu0
        %v6104 = vpop.f32.mrf.mxu0
        %v6105 = vadd.f32 %v5944, %v6104
        %v6106 = vpop.f32.mrf.mxu0
        %6107 = vmatprep.mubr.bf16.mxu0 0
        %6108 = vmatmul.mubr.bf16.gmra.mxu0 %v4768
        %v6109 = vpop.f32.mrf.mxu0
        %v6110 = vadd.f32 %v5949, %v6109
        %v6111 = vpop.f32.mrf.mxu0
        %v6112 = vpop.f32.mrf.mxu0
        %v6113 = vadd.f32 %v5952, %v6112
        %v6114 = vpop.f32.mrf.mxu0
        %6115 = vmatprep.mubr.bf16.mxu0 0
        %6116 = vmatmul.mubr.bf16.gmra.mxu0 %v4769
        %v6117 = vpop.f32.mrf.mxu0
        %v6118 = vadd.f32 %v5957, %v6117
        %v6119 = vpop.f32.mrf.mxu0
        %v6120 = vpop.f32.mrf.mxu0
        %v6121 = vadd.f32 %v5960, %v6120
        %v6122 = vpop.f32.mrf.mxu0
        %6123 = vmatprep.mubr.bf16.mxu0 0
        %6124 = vmatmul.mubr.bf16.gmra.mxu0 %v4770
        %v6125 = vpop.f32.mrf.mxu0
        %v6126 = vadd.f32 %v5965, %v6125
        %v6127 = vpop.f32.mrf.mxu0
        %v6128 = vpop.f32.mrf.mxu0
        %v6129 = vadd.f32 %v5968, %v6128
        %v6130 = vpop.f32.mrf.mxu0
        %6131 = vmatprep.mubr.bf16.mxu0 0
        %6132 = vmatmul.mubr.bf16.gmra.mxu0 %v4771
        %v6133 = vpop.f32.mrf.mxu0
        %v6134 = vadd.f32 %v5973, %v6133
        %v6135 = vpop.f32.mrf.mxu0
        %v6136 = vpop.f32.mrf.mxu0
        %v6137 = vadd.f32 %v5976, %v6136
        %v6138 = vpop.f32.mrf.mxu0
        %6139 = vmatprep.mubr.bf16.mxu0 0
        %6140 = vmatmul.mubr.bf16.gmra.mxu0 %v4772
        %v6141 = vpop.f32.mrf.mxu0
        %v6142 = vadd.f32 %v5981, %v6141
        %v6143 = vpop.f32.mrf.mxu0
        %v6144 = vpop.f32.mrf.mxu0
        %v6145 = vadd.f32 %v5984, %v6144
        %v6146 = vpop.f32.mrf.mxu0
        %6147 = vmatprep.mubr.bf16.mxu0 0
        %6148 = vmatmul.mubr.bf16.gmra.mxu0 %v4773
        %v6149 = vpop.f32.mrf.mxu0
        %v6150 = vadd.f32 %v5989, %v6149
        %v6151 = vpop.f32.mrf.mxu0
        %v6152 = vpop.f32.mrf.mxu0
        %v6153 = vadd.f32 %v5992, %v6152
        %v6154 = vpop.f32.mrf.mxu0
        %6155 = vdwg.mxu0
        %v6156 = vld [vmem:[%s277] sm:$0xff]
        %v6157 = vld [vmem:[%s277 + $0x8] sm:$0xff]
        %v6158 = vld [vmem:[%s277 + $0x10] sm:$0xff]
        %v6159 = vld [vmem:[%s277 + $0x18] sm:$0xff]
        %v6160 = vld [vmem:[%s277 + $0x20] sm:$0xff]
        %v6161 = vld [vmem:[%s277 + $0x28] sm:$0xff]
        %v6162 = vld [vmem:[%s277 + $0x30] sm:$0xff]
        %v6163 = vld [vmem:[%s277 + $0x38] sm:$0xff]
        %v6164 = vld [vmem:[%s277 + $0x40] sm:$0xff]
        %v6165 = vld [vmem:[%s277 + $0x48] sm:$0xff]
        %v6166 = vld [vmem:[%s277 + $0x50] sm:$0xff]
        %v6167 = vld [vmem:[%s277 + $0x58] sm:$0xff]
        %v6168 = vld [vmem:[%s277 + $0x60] sm:$0xff]
        %v6169 = vld [vmem:[%s277 + $0x68] sm:$0xff]
        %v6170 = vld [vmem:[%s277 + $0x70] sm:$0xff]
        %v6171 = vld [vmem:[%s277 + $0x78] sm:$0xff]
        %v6172 = vld [vmem:[%s277 + $0x80] sm:$0xff]
        %v6173 = vld [vmem:[%s277 + $0x88] sm:$0xff]
        %v6174 = vld [vmem:[%s277 + $0x90] sm:$0xff]
        %v6175 = vld [vmem:[%s277 + $0x98] sm:$0xff]
        %v6176 = vld [vmem:[%s277 + $0xa0] sm:$0xff]
        %v6177 = vld [vmem:[%s277 + $0xa8] sm:$0xff]
        %v6178 = vld [vmem:[%s277 + $0xb0] sm:$0xff]
        %v6179 = vld [vmem:[%s277 + $0xb8] sm:$0xff]
        %v6180 = vld [vmem:[%s277 + $0xc0] sm:$0xff]
        %v6181 = vld [vmem:[%s277 + $0xc8] sm:$0xff]
        %v6182 = vld [vmem:[%s277 + $0xd0] sm:$0xff]
        %v6183 = vld [vmem:[%s277 + $0xd8] sm:$0xff]
        %v6184 = vld [vmem:[%s277 + $0xe0] sm:$0xff]
        %v6185 = vld [vmem:[%s277 + $0xe8] sm:$0xff]
        %v6186 = vld [vmem:[%s277 + $0xf0] sm:$0xff]
        %v6187 = vld [vmem:[%s277 + $0xf8] sm:$0xff]
        %v6188 = vadd.f32 %v6156, %v6030
        %v6189 = vadd.f32 %v6157, %v6033
        %v6190 = vadd.f32 %v6158, %v6038
        %v6191 = vadd.f32 %v6159, %v6041
        %v6192 = vadd.f32 %v6160, %v6046
        %v6193 = vadd.f32 %v6161, %v6049
        %v6194 = vadd.f32 %v6162, %v6054
        %v6195 = vadd.f32 %v6163, %v6057
        %v6196 = vadd.f32 %v6164, %v6062
        %v6197 = vadd.f32 %v6165, %v6065
        %v6198 = vadd.f32 %v6166, %v6070
        %v6199 = vadd.f32 %v6167, %v6073
        %v6200 = vadd.f32 %v6168, %v6078
        %v6201 = vadd.f32 %v6169, %v6081
        %v6202 = vadd.f32 %v6170, %v6086
        %v6203 = vadd.f32 %v6171, %v6089
        %v6204 = vadd.f32 %v6172, %v6094
        %v6205 = vadd.f32 %v6173, %v6097
        %v6206 = vadd.f32 %v6174, %v6102
        %v6207 = vadd.f32 %v6175, %v6105
        %v6208 = vadd.f32 %v6176, %v6110
        %v6209 = vadd.f32 %v6177, %v6113
        %v6210 = vadd.f32 %v6178, %v6118
        %v6211 = vadd.f32 %v6179, %v6121
        %v6212 = vadd.f32 %v6180, %v6126
        %v6213 = vadd.f32 %v6181, %v6129
        %v6214 = vadd.f32 %v6182, %v6134
        %v6215 = vadd.f32 %v6183, %v6137
        %v6216 = vadd.f32 %v6184, %v6142
        %v6217 = vadd.f32 %v6185, %v6145
        %v6218 = vadd.f32 %v6186, %v6150
        %v6219 = vadd.f32 %v6187, %v6153
        %6220 = vst [vmem:[%s277] sm:$0xff] %v6188
        %6221 = vst [vmem:[%s277 + $0x8] sm:$0xff] %v6189
        %6222 = vst [vmem:[%s277 + $0x10] sm:$0xff] %v6190
        %6223 = vst [vmem:[%s277 + $0x18] sm:$0xff] %v6191
        %6224 = vst [vmem:[%s277 + $0x20] sm:$0xff] %v6192
        %6225 = vst [vmem:[%s277 + $0x28] sm:$0xff] %v6193
        %6226 = vst [vmem:[%s277 + $0x30] sm:$0xff] %v6194
        %6227 = vst [vmem:[%s277 + $0x38] sm:$0xff] %v6195
        %6228 = vst [vmem:[%s277 + $0x40] sm:$0xff] %v6196
        %6229 = vst [vmem:[%s277 + $0x48] sm:$0xff] %v6197
        %6230 = vst [vmem:[%s277 + $0x50] sm:$0xff] %v6198
        %6231 = vst [vmem:[%s277 + $0x58] sm:$0xff] %v6199
        %6232 = vst [vmem:[%s277 + $0x60] sm:$0xff] %v6200
        %6233 = vst [vmem:[%s277 + $0x68] sm:$0xff] %v6201
        %6234 = vst [vmem:[%s277 + $0x70] sm:$0xff] %v6202
        %6235 = vst [vmem:[%s277 + $0x78] sm:$0xff] %v6203
        %6236 = vst [vmem:[%s277 + $0x80] sm:$0xff] %v6204
        %6237 = vst [vmem:[%s277 + $0x88] sm:$0xff] %v6205
        %6238 = vst [vmem:[%s277 + $0x90] sm:$0xff] %v6206
        %6239 = vst [vmem:[%s277 + $0x98] sm:$0xff] %v6207
        %6240 = vst [vmem:[%s277 + $0xa0] sm:$0xff] %v6208
        %6241 = vst [vmem:[%s277 + $0xa8] sm:$0xff] %v6209
        %6242 = vst [vmem:[%s277 + $0xb0] sm:$0xff] %v6210
        %6243 = vst [vmem:[%s277 + $0xb8] sm:$0xff] %v6211
        %6244 = vst [vmem:[%s277 + $0xc0] sm:$0xff] %v6212
        %6245 = vst [vmem:[%s277 + $0xc8] sm:$0xff] %v6213
        %6246 = vst [vmem:[%s277 + $0xd0] sm:$0xff] %v6214
        %6247 = vst [vmem:[%s277 + $0xd8] sm:$0xff] %v6215
        %6248 = vst [vmem:[%s277 + $0xe0] sm:$0xff] %v6216
        %6249 = vst [vmem:[%s277 + $0xe8] sm:$0xff] %v6217
        %6250 = vst [vmem:[%s277 + $0xf0] sm:$0xff] %v6218
        %6251 = vst [vmem:[%s277 + $0xf8] sm:$0xff] %v6219
        %v6252 = vld [vmem:[%s277] sm:$0xff]
        %v6253 = vld [vmem:[%s277 + $0x8] sm:$0xff]
        %v6254 = vld [vmem:[%s277 + $0x10] sm:$0xff]
        %v6255 = vld [vmem:[%s277 + $0x18] sm:$0xff]
        %v6256 = vld [vmem:[%s277 + $0x20] sm:$0xff]
        %v6257 = vld [vmem:[%s277 + $0x28] sm:$0xff]
        %v6258 = vld [vmem:[%s277 + $0x30] sm:$0xff]
        %v6259 = vld [vmem:[%s277 + $0x38] sm:$0xff]
        %v6260 = vld [vmem:[%s277 + $0x40] sm:$0xff]
        %v6261 = vld [vmem:[%s277 + $0x48] sm:$0xff]
        %v6262 = vld [vmem:[%s277 + $0x50] sm:$0xff]
        %v6263 = vld [vmem:[%s277 + $0x58] sm:$0xff]
        %v6264 = vld [vmem:[%s277 + $0x60] sm:$0xff]
        %v6265 = vld [vmem:[%s277 + $0x68] sm:$0xff]
        %v6266 = vld [vmem:[%s277 + $0x70] sm:$0xff]
        %v6267 = vld [vmem:[%s277 + $0x78] sm:$0xff]
        %v6268 = vld [vmem:[%s277 + $0x80] sm:$0xff]
        %v6269 = vld [vmem:[%s277 + $0x88] sm:$0xff]
        %v6270 = vld [vmem:[%s277 + $0x90] sm:$0xff]
        %v6271 = vld [vmem:[%s277 + $0x98] sm:$0xff]
        %v6272 = vld [vmem:[%s277 + $0xa0] sm:$0xff]
        %v6273 = vld [vmem:[%s277 + $0xa8] sm:$0xff]
        %v6274 = vld [vmem:[%s277 + $0xb0] sm:$0xff]
        %v6275 = vld [vmem:[%s277 + $0xb8] sm:$0xff]
        %v6276 = vld [vmem:[%s277 + $0xc0] sm:$0xff]
        %v6277 = vld [vmem:[%s277 + $0xc8] sm:$0xff]
        %v6278 = vld [vmem:[%s277 + $0xd0] sm:$0xff]
        %v6279 = vld [vmem:[%s277 + $0xd8] sm:$0xff]
        %v6280 = vld [vmem:[%s277 + $0xe0] sm:$0xff]
        %v6281 = vld [vmem:[%s277 + $0xe8] sm:$0xff]
        %v6282 = vld [vmem:[%s277 + $0xf0] sm:$0xff]
        %v6283 = vld [vmem:[%s277 + $0xf8] sm:$0xff]
        %v6284 = vadd.f32 %v6252, %v6253
        %v6285 = vadd.f32 %v6284, %v6254
        %v6286 = vadd.f32 %v6285, %v6255
        %v6287 = vadd.f32 %v6286, %v6256
        %v6288 = vadd.f32 %v6287, %v6257
        %v6289 = vadd.f32 %v6288, %v6258
        %v6290 = vadd.f32 %v6289, %v6259
        %v6291 = vadd.f32 %v6290, %v6260
        %v6292 = vadd.f32 %v6291, %v6261
        %v6293 = vadd.f32 %v6292, %v6262
        %v6294 = vadd.f32 %v6293, %v6263
        %v6295 = vadd.f32 %v6294, %v6264
        %v6296 = vadd.f32 %v6295, %v6265
        %v6297 = vadd.f32 %v6296, %v6266
        %v6298 = vadd.f32 %v6297, %v6267
        %v6299 = vadd.f32 %v6298, %v6268
        %v6300 = vadd.f32 %v6299, %v6269
        %v6301 = vadd.f32 %v6300, %v6270
        %v6302 = vadd.f32 %v6301, %v6271
        %v6303 = vadd.f32 %v6302, %v6272
        %v6304 = vadd.f32 %v6303, %v6273
        %v6305 = vadd.f32 %v6304, %v6274
        %v6306 = vadd.f32 %v6305, %v6275
        %v6307 = vadd.f32 %v6306, %v6276
        %v6308 = vadd.f32 %v6307, %v6277
        %v6309 = vadd.f32 %v6308, %v6278
        %v6310 = vadd.f32 %v6309, %v6279
        %v6311 = vadd.f32 %v6310, %v6280
        %v6312 = vadd.f32 %v6311, %v6281
        %v6313 = vadd.f32 %v6312, %v6282
        %v6314 = vadd.f32 %v6313, %v6283
        %v6315 = vrot.slane %v6314, 4
        %v6316 = vadd.f32 %v6314, %v6315
        %v6317 = vrot.slane %v6316, 2
        %v6318 = vadd.f32 %v6316, %v6317
        %v6319 = vrot.slane %v6318, 1
        %v6320 = vadd.f32 %v6318, %v6319
        %6321 = vst [vmem:[%s280] sm:$0x1] %v6320
        %v6322 = vmul.f32 %v6252, %v6252
        %v6323 = vmul.f32 %v6253, %v6253
        %v6324 = vmul.f32 %v6254, %v6254
        %v6325 = vmul.f32 %v6255, %v6255
        %v6326 = vmul.f32 %v6256, %v6256
        %v6327 = vmul.f32 %v6257, %v6257
        %v6328 = vmul.f32 %v6258, %v6258
        %v6329 = vmul.f32 %v6259, %v6259
        %v6330 = vmul.f32 %v6260, %v6260
        %v6331 = vmul.f32 %v6261, %v6261
        %v6332 = vmul.f32 %v6262, %v6262
        %v6333 = vmul.f32 %v6263, %v6263
        %v6334 = vmul.f32 %v6264, %v6264
        %v6335 = vmul.f32 %v6265, %v6265
        %v6336 = vmul.f32 %v6266, %v6266
        %v6337 = vmul.f32 %v6267, %v6267
        %v6338 = vmul.f32 %v6268, %v6268
        %v6339 = vmul.f32 %v6269, %v6269
        %v6340 = vmul.f32 %v6270, %v6270
        %v6341 = vmul.f32 %v6271, %v6271
        %v6342 = vmul.f32 %v6272, %v6272
        %v6343 = vmul.f32 %v6273, %v6273
        %v6344 = vmul.f32 %v6274, %v6274
        %v6345 = vmul.f32 %v6275, %v6275
        %v6346 = vmul.f32 %v6276, %v6276
        %v6347 = vmul.f32 %v6277, %v6277
        %v6348 = vmul.f32 %v6278, %v6278
        %v6349 = vmul.f32 %v6279, %v6279
        %v6350 = vmul.f32 %v6280, %v6280
        %v6351 = vmul.f32 %v6281, %v6281
        %v6352 = vmul.f32 %v6282, %v6282
        %v6353 = vmul.f32 %v6283, %v6283
        %v6354 = vadd.f32 %v6322, %v6323
        %v6355 = vadd.f32 %v6354, %v6324
        %v6356 = vadd.f32 %v6355, %v6325
        %v6357 = vadd.f32 %v6356, %v6326
        %v6358 = vadd.f32 %v6357, %v6327
        %v6359 = vadd.f32 %v6358, %v6328
        %v6360 = vadd.f32 %v6359, %v6329
        %v6361 = vadd.f32 %v6360, %v6330
        %v6362 = vadd.f32 %v6361, %v6331
        %v6363 = vadd.f32 %v6362, %v6332
        %v6364 = vadd.f32 %v6363, %v6333
        %v6365 = vadd.f32 %v6364, %v6334
        %v6366 = vadd.f32 %v6365, %v6335
        %v6367 = vadd.f32 %v6366, %v6336
        %v6368 = vadd.f32 %v6367, %v6337
        %v6369 = vadd.f32 %v6368, %v6338
        %v6370 = vadd.f32 %v6369, %v6339
        %v6371 = vadd.f32 %v6370, %v6340
        %v6372 = vadd.f32 %v6371, %v6341
        %v6373 = vadd.f32 %v6372, %v6342
        %v6374 = vadd.f32 %v6373, %v6343
        %v6375 = vadd.f32 %v6374, %v6344
        %v6376 = vadd.f32 %v6375, %v6345
        %v6377 = vadd.f32 %v6376, %v6346
        %v6378 = vadd.f32 %v6377, %v6347
        %v6379 = vadd.f32 %v6378, %v6348
        %v6380 = vadd.f32 %v6379, %v6349
        %v6381 = vadd.f32 %v6380, %v6350
        %v6382 = vadd.f32 %v6381, %v6351
        %v6383 = vadd.f32 %v6382, %v6352
        %v6384 = vadd.f32 %v6383, %v6353
        %v6385 = vrot.slane %v6384, 4
        %v6386 = vadd.f32 %v6384, %v6385
        %v6387 = vrot.slane %v6386, 2
        %v6388 = vadd.f32 %v6386, %v6387
        %v6389 = vrot.slane %v6388, 1
        %v6390 = vadd.f32 %v6388, %v6389
        %6391 = vst [vmem:[%s283] sm:$0x1] %v6390
        %p6392 = scmp.lt.s32.totalorder %s19, 1
        %s6393 = scalar_select %p6392, %s19, 1
        %s6394 = smul.addr %s6393, 32
        %s6395 = smul.addr %s6394, 8
        %s6396 = scalar_lea.vmem %s4, %s6395
        %p6397 = scmp.lt.s32.totalorder %s19, 1
        %s6398 = scalar_select %p6397, %s19, 1
        %s6399 = scalar_lea.vmem %s5, %s6398
        %p6400 = scmp.lt.s32.totalorder %s19, 1
        %s6401 = scalar_select %p6400, %s19, 1
        %s6402 = scalar_lea.vmem %s6, %s6401
        // Predicated region
        $region41: #{resnext_bottleneck_forward.5} parent=35 // pred_check
          %p6403 = pneg %p126
        $region42: #{resnext_bottleneck_forward.5} parent=35 // pred_check_branch
          %6405 = sbr.rel (%p6403) target = $region44
        $region43: #{resnext_bottleneck_forward.5} parent=35 // pred_region
          _
        $region44: #{resnext_bottleneck_forward.5} parent=35 // pred_fallthru
          _
        // Predicated region
        $region45: #{resnext_bottleneck_forward.5} parent=35 // pred_check
          %p6406 = pneg %p152
        $region46: #{resnext_bottleneck_forward.5} parent=35 // pred_check_branch
          %6408 = sbr.rel (%p6406) target = $region48
        $region47: #{resnext_bottleneck_forward.5} parent=35 // pred_region
          _
        $region48: #{resnext_bottleneck_forward.5} parent=35 // pred_fallthru
          _
        // Predicated region
        $region49: #{resnext_bottleneck_forward.5} parent=35 // pred_check
          %p6409 = pneg %p178
        $region50: #{resnext_bottleneck_forward.5} parent=35 // pred_check_branch
          %6411 = sbr.rel (%p6409) target = $region52
        $region51: #{resnext_bottleneck_forward.5} parent=35 // pred_region
          _
        $region52: #{resnext_bottleneck_forward.5} parent=35 // pred_fallthru
          _
      $region36: #{resnext_bottleneck_forward.5} parent=5 // pred_fallthru
        _
      %p6412 = scmp.le.s32.totalorder 2, %s14
      // Predicated region
      $region53: #{resnext_bottleneck_forward.5} parent=5 // pred_check
        %p6413 = pneg %p6412
      $region54: #{resnext_bottleneck_forward.5} parent=5 // pred_check_branch
        %6415 = sbr.rel (%p6413) target = $region56
      $region55: #{resnext_bottleneck_forward.5} parent=5 // pred_region
        %s6416 = ssub.s32 %s14, 2
        // Predicated region
        $region57: #{resnext_bottleneck_forward.5} parent=55 // pred_check
          %p6417 = pneg %p132
        $region58: #{resnext_bottleneck_forward.5} parent=55 // pred_check_branch
          %6419 = sbr.rel (%p6417) target = $region60
        $region59: #{resnext_bottleneck_forward.5} parent=55 // pred_region
          %p6420 = scmp.lt.s32.totalorder %s20, 1
          %s6421 = scalar_select %p6420, %s20, 1
          %s6422 = smul.addr %s6421, 32
          %s6423 = smul.addr %s6422, 8
          %s6424 = scalar_lea.vmem %s4, %s6423
        $region60: #{resnext_bottleneck_forward.5} parent=55 // pred_fallthru
          _
        // Predicated region
        $region61: #{resnext_bottleneck_forward.5} parent=55 // pred_check
          %p6425 = pneg %p158
        $region62: #{resnext_bottleneck_forward.5} parent=55 // pred_check_branch
          %6427 = sbr.rel (%p6425) target = $region64
        $region63: #{resnext_bottleneck_forward.5} parent=55 // pred_region
          %p6428 = scmp.lt.s32.totalorder %s20, 1
          %s6429 = scalar_select %p6428, %s20, 1
          %s6430 = scalar_lea.vmem %s5, %s6429
        $region64: #{resnext_bottleneck_forward.5} parent=55 // pred_fallthru
          _
        // Predicated region
        $region65: #{resnext_bottleneck_forward.5} parent=55 // pred_check
          %p6431 = pneg %p184
        $region66: #{resnext_bottleneck_forward.5} parent=55 // pred_check_branch
          %6433 = sbr.rel (%p6431) target = $region68
        $region67: #{resnext_bottleneck_forward.5} parent=55 // pred_region
          %p6434 = scmp.lt.s32.totalorder %s20, 1
          %s6435 = scalar_select %p6434, %s20, 1
          %s6436 = scalar_lea.vmem %s6, %s6435
        $region68: #{resnext_bottleneck_forward.5} parent=55 // pred_fallthru
          _
      $region56: #{resnext_bottleneck_forward.5} parent=5 // pred_fallthru
        _
    $region6: #{resnext_bottleneck_forward.5} parent=1 // loop_footer
      %s18 = sadd.s32 1, %s14
    $region7: #{resnext_bottleneck_forward.5} parent=1 // loop_footer_branch
      %13 = sbr.rel target = $region3
    $region8: #{resnext_bottleneck_forward.5} parent=1 // loop_exit
      _
    %6437 = vsyncpa [#allocation4], 1
    %s6438 = scalar_lea.sflag [#allocation4], 1
    %6439 = vsyncpa %s6438, 1

</llo_original>
